<compile_context>
chip_gen: v7x
topology: tpu7x:2x2x1
jax: 0.10.0
libtpu: 0.0.40
codegen_flags: <defaults>
</compile_context>

<pallas_src>
import functools

import jax
import jax.numpy as jnp
from jax.experimental import pallas as pl
from jax.experimental.pallas import tpu as pltpu


# ----------------------------------------------------------------------------
# Pallas kernel: fused partial-conv matmul + renormalization + bias + ReLU
# ----------------------------------------------------------------------------
def _partial_conv_kernel(xw_ref, msum_ref, w_ref, b_ref, out_ref, *, apply_relu):
    """Partial 3x3 conv (NVIDIA PartialConv2d, multi_channel=False) core.

    xw_ref:   (M, 9*Cin) bf16 -- im2col slab of the ALREADY mask-multiplied input
    msum_ref: (M, 1)     f32  -- 3x3 box-sum of the mask (conv with ones kernel)
    w_ref:    (9*Cin, Cout) bf16 -- conv weight, tap-major (kh, kw, cin)
    b_ref:    (1, Cout)  f32
    out_ref:  (M, Cout)  f32  -- activation output (lane-dense)
    """
    # One big MXU matmul, K = 9*Cin, f32 accumulation.
    acc = jnp.dot(xw_ref[...], w_ref[...], preferred_element_type=jnp.float32)

    msum = msum_ref[...]                                   # (M, 1)
    update_mask = jnp.clip(msum, 0.0, 1.0)
    # slide_winsize = 1*3*3 = 9 ; reciprocal on the (otherwise idle) EUP slot.
    mask_ratio = 9.0 * pl.reciprocal(msum + 1e-8, approx=True) * update_mask

    # PartialConv2d: (raw_out - bias)*mask_ratio + bias == acc*mask_ratio + bias
    out = (acc * mask_ratio + b_ref[...]) * update_mask
    if apply_relu:
        out = jnp.maximum(out, 0.0)
    out_ref[...] = out


# ----------------------------------------------------------------------------
# Wrapper: masking, padding, im2col slab construction, pallas_call plumbing
# ----------------------------------------------------------------------------
def partial_conv(x, m, w, b, apply_relu=True):
    """x: (N,H,W,Cin) f32, m: (N,H,W,1) f32, w: (3,3,Cin,Cout), b: (Cout,)."""
    n, h, wd, cin = x.shape
    cout = w.shape[-1]
    M = n * h * wd

    # Mask the input ONCE before window extraction (identical to per-tap masking).
    xm = x * m
    xp = jnp.pad(xm, ((0, 0), (1, 1), (1, 1), (0, 0)))
    mp = jnp.pad(m, ((0, 0), (1, 1), (1, 1), (0, 0)))

    # im2col, tap-major along channels so it matches w.reshape(9*Cin, Cout).
    taps = [xp[:, kh:kh + h, kw:kw + wd, :]
            for kh in range(3) for kw in range(3)]
    xw = jnp.concatenate(taps, axis=-1).reshape(M, 9 * cin).astype(jnp.bfloat16)

    # 3x3 box-sum of the mask (= conv with the ones mask-update kernel).
    msum = sum(mp[:, kh:kh + h, kw:kw + wd, :]
               for kh in range(3) for kw in range(3))      # (N,H,W,1) f32
    msum_flat = msum.reshape(M, 1)

    w2 = w.reshape(9 * cin, cout).astype(jnp.bfloat16)
    b2 = b.reshape(1, cout).astype(jnp.float32)

    kernel = functools.partial(_partial_conv_kernel, apply_relu=apply_relu)
    out = pl.pallas_call(
        kernel,
        out_shape=jax.ShapeDtypeStruct((M, cout), jnp.float32),
        grid=(1,),
        in_specs=[
            pl.BlockSpec((M, 9 * cin), lambda i: (0, 0)),
            pl.BlockSpec((M, 1), lambda i: (0, 0)),
            pl.BlockSpec((9 * cin, cout), lambda i: (0, 0)),
            pl.BlockSpec((1, cout), lambda i: (0, 0)),
        ],
        out_specs=pl.BlockSpec((M, cout), lambda i: (0, 0)),
        compiler_params=pltpu.CompilerParams(
            dimension_semantics=("arbitrary",)),
    )(xw, msum_flat, w2, b2)

    out = out.reshape(n, h, wd, cout)
    update_mask = jnp.clip(msum, 0.0, 1.0)                 # (N,H,W,1), returned mask
    return out, update_mask


# ----------------------------------------------------------------------------
# Plain-JAX glue: bilinear upsample (align_corners=True) and block composition
# ----------------------------------------------------------------------------
def _interp_matrix(n_in, n_out):
    # bilinear, align_corners=True  (matches nn.Upsample(..., align_corners=True))
    if n_in == 1:
        return jnp.ones((n_out, 1), jnp.float32)
    pos = jnp.arange(n_out, dtype=jnp.float32) * (n_in - 1) / (n_out - 1)
    lo = jnp.clip(jnp.floor(pos).astype(jnp.int32), 0, n_in - 2)
    frac = pos - lo.astype(jnp.float32)
    rows = jnp.arange(n_out)
    mat = jnp.zeros((n_out, n_in), jnp.float32)
    mat = mat.at[rows, lo].add(1.0 - frac)
    mat = mat.at[rows, lo + 1].add(frac)
    return mat


def upsample2_bilinear_align(x):  # NHWC, scale_factor=2
    n, h, w, c = x.shape
    ah = _interp_matrix(h, 2 * h)
    aw = _interp_matrix(w, 2 * w)
    y = jnp.einsum('oh,nhwc->nowc', ah, x)
    y = jnp.einsum('pw,nowc->nopc', aw, y)
    return y


def upsample_partial_block(params, x, m, x_skip, m_skip):
    """UpSamplePartialBlock.forward.  NCHW in, NCHW out.  m_skip unused (as in PyTorch)."""
    del m_skip
    xh = jnp.transpose(x, (0, 2, 3, 1))                    # NCHW -> NHWC
    mh = jnp.transpose(m, (0, 2, 3, 1))
    sh = jnp.transpose(x_skip, (0, 2, 3, 1))

    xu = upsample2_bilinear_align(xh)
    mu = upsample2_bilinear_align(mh)
    xc = jnp.concatenate([xu, sh], axis=-1)                # cat([x, x_skip], dim=C)

    # DoublePartialConv: two partial convs, ReLU after each, mask chained.
    y, mo = partial_conv(xc, mu, params['w1'], params['b1'], apply_relu=True)
    y, mo = partial_conv(y, mo, params['w2'], params['b2'], apply_relu=True)

    return jnp.transpose(y, (0, 3, 1, 2)), jnp.transpose(mo, (0, 3, 1, 2))


# ----------------------------------------------------------------------------
# Deterministic example
# ----------------------------------------------------------------------------
if __name__ == "__main__":
    key = jax.random.PRNGKey(0)
    k1, k2, k3, k4, k5, k6 = jax.random.split(key, 6)

    N, Cx, Cs, H = 2, 128, 128, 8          # x at 8x8, skip at 16x16
    Cin, Cout = Cx + Cs, 128               # UpSamplePartialBlock(256, 128)

    x = jax.random.normal(k1, (N, Cx, H, H), jnp.float32)
    x_skip = jax.random.normal(k2, (N, Cs, 2 * H, 2 * H), jnp.float32)
    # binary mask with a hole so the partial-conv renormalization is exercised
    m = jnp.ones((N, 1, H, H), jnp.float32).at[:, :, 2:5, 3:7].set(0.0)
    m_skip = jnp.ones((N, 1, 2 * H, 2 * H), jnp.float32)   # unused by forward

    params = {
        'w1': jax.random.normal(k3, (3, 3, Cin, Cout), jnp.float32)
              / jnp.sqrt(9.0 * Cin),
        'b1': 0.01 * jax.random.normal(k4, (Cout,), jnp.float32),
        'w2': jax.random.normal(k5, (3, 3, Cout, Cout), jnp.float32)
              / jnp.sqrt(9.0 * Cout),
        'b2': 0.01 * jax.random.normal(k6, (Cout,), jnp.float32),
    }

    fwd = jax.jit(upsample_partial_block)
    y, mo = fwd(params, x, m, x_skip, m_skip)
    y, mo = jax.block_until_ready((y, mo))

    assert y.shape == (N, Cout, 2 * H, 2 * H), y.shape
    assert mo.shape == (N, 1, 2 * H, 2 * H), mo.shape
    assert y.dtype == jnp.float32
    assert bool(jnp.all(jnp.isfinite(y)))
    assert bool(jnp.all(jnp.isfinite(mo)))
    print("KERNEL_OK")
</pallas_src>

<mosaic_0001>
module attributes {stable_mosaic.version = 11 : i64} {
  func.func private @main(%arg0: i32) attributes {dimension_semantics = [#tpu.dimension_semantics<core_parallel>], iteration_bounds = array<i64: 2>, tpu.core_type = #tpu.core_type<sc_scalar_subcore>, window_params = []} {
    return
  }
}

module attributes {stable_mosaic.version = 11 : i64} {
  func.func private @main(%arg0: i32) attributes {dimension_semantics = [#tpu.dimension_semantics<core_parallel>], iteration_bounds = array<i64: 2>, tpu.core_type = #tpu.core_type<sc_scalar_subcore>, window_params = []} {
    return
  }
}

module attributes {stable_mosaic.version = 11 : i64} {
  func.func @_partial_conv_kernel(%arg0: i32, %arg1: memref<512x2304xbf16, #tpu.memory_space<vmem>>, %arg2: memref<512x1xf32, #tpu.memory_space<vmem>>, %arg3: memref<2304x128xbf16, #tpu.memory_space<vmem>>, %arg4: memref<1x128xf32, #tpu.memory_space<vmem>>, %arg5: memref<512x128xf32, #tpu.memory_space<vmem>>) attributes {dimension_semantics = [#tpu.dimension_semantics<arbitrary>], iteration_bounds = array<i64: 1>, scalar_prefetch = 0 : i64, scratch_operands = 0 : i64, tpu.core_type = #tpu.core_type<tc>, window_params = [{pipeline_mode = #tpu.pipeline_mode<synchronous>, transform_indices = @transform_0, window_bounds = array<i64: 512, 2304>}, {pipeline_mode = #tpu.pipeline_mode<synchronous>, transform_indices = @transform_1, window_bounds = array<i64: 512, 1>}, {pipeline_mode = #tpu.pipeline_mode<synchronous>, transform_indices = @transform_2, window_bounds = array<i64: 2304, 128>}, {pipeline_mode = #tpu.pipeline_mode<synchronous>, transform_indices = @transform_3, window_bounds = array<i64: 1, 128>}, {pipeline_mode = #tpu.pipeline_mode<synchronous>, transform_indices = @transform_4, window_bounds = array<i64: 512, 128>}]} {
    %c0 = arith.constant 0 : index
    %c0_0 = arith.constant 0 : index
    %0 = vector.load %arg1[%c0, %c0_0] : memref<512x2304xbf16, #tpu.memory_space<vmem>>, vector<512x2304xbf16>
    %c0_1 = arith.constant 0 : index
    %c0_2 = arith.constant 0 : index
    %1 = vector.load %arg3[%c0_1, %c0_2] : memref<2304x128xbf16, #tpu.memory_space<vmem>>, vector<2304x128xbf16>
    %cst = arith.constant dense<0.000000e+00> : vector<512x128xf32>
    %2 = tpu.matmul %0, %1, %cst {dimension_numbers = #tpu.dot_dimension_numbers<[1], [0], [0], [1], [0, 0, 1, 1], [], []>} : vector<512x2304xbf16>, vector<2304x128xbf16>, vector<512x128xf32> -> vector<512x128xf32>
    %c0_3 = arith.constant 0 : index
    %c0_4 = arith.constant 0 : index
    %3 = vector.load %arg2[%c0_3, %c0_4] : memref<512x1xf32, #tpu.memory_space<vmem>>, vector<512x1xf32>
    %cst_5 = arith.constant 0.000000e+00 : f32
    %cst_6 = arith.constant 1.000000e+00 : f32
    %4 = vector.broadcast %cst_5 : f32 to vector<512x1xf32>
    %5 = arith.maximumf %4, %3 : vector<512x1xf32>
    %6 = vector.broadcast %cst_6 : f32 to vector<512x1xf32>
    %7 = arith.minimumf %6, %5 : vector<512x1xf32>
    %cst_7 = arith.constant 9.99999993E-9 : f32
    %8 = vector.broadcast %cst_7 : f32 to vector<512x1xf32>
    %9 = arith.addf %3, %8 : vector<512x1xf32>
    %10 = tpu.reciprocal %9 {approx = true} : vector<512x1xf32> -> vector<512x1xf32>
    %cst_8 = arith.constant 9.000000e+00 : f32
    %11 = vector.broadcast %cst_8 : f32 to vector<512x1xf32>
    %12 = arith.mulf %11, %10 : vector<512x1xf32>
    %13 = arith.mulf %12, %7 : vector<512x1xf32>
    %14 = vector.broadcast %13 : vector<512x1xf32> to vector<512x128xf32>
    %15 = arith.mulf %2, %14 : vector<512x128xf32>
    %c0_9 = arith.constant 0 : index
    %c0_10 = arith.constant 0 : index
    %16 = vector.load %arg4[%c0_9, %c0_10] : memref<1x128xf32, #tpu.memory_space<vmem>>, vector<1x128xf32>
    %17 = vector.broadcast %16 : vector<1x128xf32> to vector<512x128xf32>
    %18 = arith.addf %15, %17 : vector<512x128xf32>
    %19 = vector.broadcast %7 : vector<512x1xf32> to vector<512x128xf32>
    %20 = arith.mulf %18, %19 : vector<512x128xf32>
    %cst_11 = arith.constant 0.000000e+00 : f32
    %21 = vector.broadcast %cst_11 : f32 to vector<512x128xf32>
    %22 = arith.maximumf %20, %21 : vector<512x128xf32>
    %c0_12 = arith.constant 0 : index
    %c0_13 = arith.constant 0 : index
    %23 = vector.load %arg5[%c0_12, %c0_13] : memref<512x128xf32, #tpu.memory_space<vmem>>, vector<512x128xf32>
    tpu.vector_store %arg5[%c0_12, %c0_13], %22 {strides = array<i32>} : memref<512x128xf32, #tpu.memory_space<vmem>>, vector<512x128xf32>,
    return
  }
  func.func @transform_0(%arg0: i32) -> (i32, i32) {
    %c0_i32 = arith.constant 0 : i32
    %c0_i32_0 = arith.constant 0 : i32
    %c0_i32_1 = arith.constant 0 : i32
    return %c0_i32, %c0_i32_0 : i32, i32
  }
  func.func @transform_1(%arg0: i32) -> (i32, i32) {
    %c0_i32 = arith.constant 0 : i32
    %c0_i32_0 = arith.constant 0 : i32
    %c0_i32_1 = arith.constant 0 : i32
    return %c0_i32, %c0_i32_0 : i32, i32
  }
  func.func @transform_2(%arg0: i32) -> (i32, i32) {
    %c0_i32 = arith.constant 0 : i32
    %c0_i32_0 = arith.constant 0 : i32
    %c0_i32_1 = arith.constant 0 : i32
    return %c0_i32, %c0_i32_0 : i32, i32
  }
  func.func @transform_3(%arg0: i32) -> (i32, i32) {
    %c0_i32 = arith.constant 0 : i32
    %c0_i32_0 = arith.constant 0 : i32
    %c0_i32_1 = arith.constant 0 : i32
    return %c0_i32, %c0_i32_0 : i32, i32
  }
  func.func @transform_4(%arg0: i32) -> (i32, i32) {
    %c0_i32 = arith.constant 0 : i32
    %c0_i32_0 = arith.constant 0 : i32
    %c0_i32_1 = arith.constant 0 : i32
    return %c0_i32, %c0_i32_0 : i32, i32
  }
}

module attributes {stable_mosaic.version = 11 : i64} {
  func.func @_partial_conv_kernel(%arg0: i32, %arg1: memref<512x1152xbf16, #tpu.memory_space<vmem>>, %arg2: memref<512x1xf32, #tpu.memory_space<vmem>>, %arg3: memref<1152x128xbf16, #tpu.memory_space<vmem>>, %arg4: memref<1x128xf32, #tpu.memory_space<vmem>>, %arg5: memref<512x128xf32, #tpu.memory_space<vmem>>) attributes {dimension_semantics = [#tpu.dimension_semantics<arbitrary>], iteration_bounds = array<i64: 1>, scalar_prefetch = 0 : i64, scratch_operands = 0 : i64, tpu.core_type = #tpu.core_type<tc>, window_params = [{pipeline_mode = #tpu.pipeline_mode<synchronous>, transform_indices = @transform_0, window_bounds = array<i64: 512, 1152>}, {pipeline_mode = #tpu.pipeline_mode<synchronous>, transform_indices = @transform_1, window_bounds = array<i64: 512, 1>}, {pipeline_mode = #tpu.pipeline_mode<synchronous>, transform_indices = @transform_2, window_bounds = array<i64: 1152, 128>}, {pipeline_mode = #tpu.pipeline_mode<synchronous>, transform_indices = @transform_3, window_bounds = array<i64: 1, 128>}, {pipeline_mode = #tpu.pipeline_mode<synchronous>, transform_indices = @transform_4, window_bounds = array<i64: 512, 128>}]} {
    %c0 = arith.constant 0 : index
    %c0_0 = arith.constant 0 : index
    %0 = vector.load %arg1[%c0, %c0_0] : memref<512x1152xbf16, #tpu.memory_space<vmem>>, vector<512x1152xbf16>
    %c0_1 = arith.constant 0 : index
    %c0_2 = arith.constant 0 : index
    %1 = vector.load %arg3[%c0_1, %c0_2] : memref<1152x128xbf16, #tpu.memory_space<vmem>>, vector<1152x128xbf16>
    %cst = arith.constant dense<0.000000e+00> : vector<512x128xf32>
    %2 = tpu.matmul %0, %1, %cst {dimension_numbers = #tpu.dot_dimension_numbers<[1], [0], [0], [1], [0, 0, 1, 1], [], []>} : vector<512x1152xbf16>, vector<1152x128xbf16>, vector<512x128xf32> -> vector<512x128xf32>
    %c0_3 = arith.constant 0 : index
    %c0_4 = arith.constant 0 : index
    %3 = vector.load %arg2[%c0_3, %c0_4] : memref<512x1xf32, #tpu.memory_space<vmem>>, vector<512x1xf32>
    %cst_5 = arith.constant 0.000000e+00 : f32
    %cst_6 = arith.constant 1.000000e+00 : f32
    %4 = vector.broadcast %cst_5 : f32 to vector<512x1xf32>
    %5 = arith.maximumf %4, %3 : vector<512x1xf32>
    %6 = vector.broadcast %cst_6 : f32 to vector<512x1xf32>
    %7 = arith.minimumf %6, %5 : vector<512x1xf32>
    %cst_7 = arith.constant 9.99999993E-9 : f32
    %8 = vector.broadcast %cst_7 : f32 to vector<512x1xf32>
    %9 = arith.addf %3, %8 : vector<512x1xf32>
    %10 = tpu.reciprocal %9 {approx = true} : vector<512x1xf32> -> vector<512x1xf32>
    %cst_8 = arith.constant 9.000000e+00 : f32
    %11 = vector.broadcast %cst_8 : f32 to vector<512x1xf32>
    %12 = arith.mulf %11, %10 : vector<512x1xf32>
    %13 = arith.mulf %12, %7 : vector<512x1xf32>
    %14 = vector.broadcast %13 : vector<512x1xf32> to vector<512x128xf32>
    %15 = arith.mulf %2, %14 : vector<512x128xf32>
    %c0_9 = arith.constant 0 : index
    %c0_10 = arith.constant 0 : index
    %16 = vector.load %arg4[%c0_9, %c0_10] : memref<1x128xf32, #tpu.memory_space<vmem>>, vector<1x128xf32>
    %17 = vector.broadcast %16 : vector<1x128xf32> to vector<512x128xf32>
    %18 = arith.addf %15, %17 : vector<512x128xf32>
    %19 = vector.broadcast %7 : vector<512x1xf32> to vector<512x128xf32>
    %20 = arith.mulf %18, %19 : vector<512x128xf32>
    %cst_11 = arith.constant 0.000000e+00 : f32
    %21 = vector.broadcast %cst_11 : f32 to vector<512x128xf32>
    %22 = arith.maximumf %20, %21 : vector<512x128xf32>
    %c0_12 = arith.constant 0 : index
    %c0_13 = arith.constant 0 : index
    %23 = vector.load %arg5[%c0_12, %c0_13] : memref<512x128xf32, #tpu.memory_space<vmem>>, vector<512x128xf32>
    tpu.vector_store %arg5[%c0_12, %c0_13], %22 {strides = array<i32>} : memref<512x128xf32, #tpu.memory_space<vmem>>, vector<512x128xf32>,
    return
  }
  func.func @transform_0(%arg0: i32) -> (i32, i32) {
    %c0_i32 = arith.constant 0 : i32
    %c0_i32_0 = arith.constant 0 : i32
    %c0_i32_1 = arith.constant 0 : i32
    return %c0_i32, %c0_i32_0 : i32, i32
  }
  func.func @transform_1(%arg0: i32) -> (i32, i32) {
    %c0_i32 = arith.constant 0 : i32
    %c0_i32_0 = arith.constant 0 : i32
    %c0_i32_1 = arith.constant 0 : i32
    return %c0_i32, %c0_i32_0 : i32, i32
  }
  func.func @transform_2(%arg0: i32) -> (i32, i32) {
    %c0_i32 = arith.constant 0 : i32
    %c0_i32_0 = arith.constant 0 : i32
    %c0_i32_1 = arith.constant 0 : i32
    return %c0_i32, %c0_i32_0 : i32, i32
  }
  func.func @transform_3(%arg0: i32) -> (i32, i32) {
    %c0_i32 = arith.constant 0 : i32
    %c0_i32_0 = arith.constant 0 : i32
    %c0_i32_1 = arith.constant 0 : i32
    return %c0_i32, %c0_i32_0 : i32, i32
  }
  func.func @transform_4(%arg0: i32) -> (i32, i32) {
    %c0_i32 = arith.constant 0 : i32
    %c0_i32_0 = arith.constant 0 : i32
    %c0_i32_1 = arith.constant 0 : i32
    return %c0_i32, %c0_i32_0 : i32, i32
  }
}

</mosaic_0001>

<llo_original>
// kernel: upsample_partial_block.2
$region0: #{upsample_partial_block.2}
  #allocation0 [shape = 'u32[]', space=smem, size = 0x4, offset = 0x4, fixed_abs, tag = 'smem constant byte address 0x4 - core index']
  #allocation1 [shape = 'u32[144,128]{1,0:T(1,128)}', space=vmem, size = 0x12000, scoped, tag = 'internal scratch']
  %s0 = inlined_call_operand.vmem [shape: bf16[512,2304], index: 0, kind: input, shape index: {}]
  %s1 = inlined_call_operand.vmem [shape: f32[512,1], index: 1, kind: input, shape index: {}]
  %s2 = inlined_call_operand.vmem [shape: bf16[2304,128], index: 2, kind: input, shape index: {}]
  %s3 = inlined_call_operand.vmem [shape: f32[1,128], index: 3, kind: input, shape index: {}]
  %s4 = inlined_call_operand.vmem [shape: f32[512,128], index: 4, kind: output, shape index: {}]
  %s5 = sld [smem:[#allocation0]]
  $region26: #{upsample_partial_block.2} parent=0
    _
  %s7 = ssub.s32 1, %s5
  %s8 = scalar_select 0, %s7, %s5
  // Predicated region
  $region2: #{upsample_partial_block.2} parent=0 // pred_check
    _
  $region3: #{upsample_partial_block.2} parent=0 // pred_check_branch
    %10 = sbr.rel (0) target = $region5
  $region4: #{upsample_partial_block.2} parent=0 // pred_region
    _
  $region5: #{upsample_partial_block.2} parent=0 // pred_fallthru
    _
  // Predicated region
  $region6: #{upsample_partial_block.2} parent=0 // pred_check
    _
  $region7: #{upsample_partial_block.2} parent=0 // pred_check_branch
    %12 = sbr.rel (0) target = $region9
  $region8: #{upsample_partial_block.2} parent=0 // pred_region
    _
  $region9: #{upsample_partial_block.2} parent=0 // pred_fallthru
    _
  // Predicated region
  $region10: #{upsample_partial_block.2} parent=0 // pred_check
    _
  $region11: #{upsample_partial_block.2} parent=0 // pred_check_branch
    %14 = sbr.rel (0) target = $region13
  $region12: #{upsample_partial_block.2} parent=0 // pred_region
    _
  $region13: #{upsample_partial_block.2} parent=0 // pred_fallthru
    _
  // Predicated region
  $region14: #{upsample_partial_block.2} parent=0 // pred_check
    _
  $region15: #{upsample_partial_block.2} parent=0 // pred_check_branch
    %16 = sbr.rel (0) target = $region17
  $region16: #{upsample_partial_block.2} parent=0 // pred_region
    _
  $region17: #{upsample_partial_block.2} parent=0 // pred_fallthru
    _
  %v18 = vld [vmem:[%s0] sm:$0xff]
  %v19 = vld [vmem:[%s0 + $0x8] sm:$0xff]
  %v20 = vld [vmem:[%s0 + $0x10] sm:$0xff]
  %v21 = vld [vmem:[%s0 + $0x18] sm:$0xff]
  %v22 = vld [vmem:[%s0 + $0x20] sm:$0xff]
  %v23 = vld [vmem:[%s0 + $0x28] sm:$0xff]
  %v24 = vld [vmem:[%s0 + $0x30] sm:$0xff]
  %v25 = vld [vmem:[%s0 + $0x38] sm:$0xff]
  %v26 = vld [vmem:[%s0 + $0x40] sm:$0xff]
  %v27 = vld [vmem:[%s0 + $0x48] sm:$0xff]
  %v28 = vld [vmem:[%s0 + $0x50] sm:$0xff]
  %v29 = vld [vmem:[%s0 + $0x58] sm:$0xff]
  %v30 = vld [vmem:[%s0 + $0x60] sm:$0xff]
  %v31 = vld [vmem:[%s0 + $0x68] sm:$0xff]
  %v32 = vld [vmem:[%s0 + $0x70] sm:$0xff]
  %v33 = vld [vmem:[%s0 + $0x78] sm:$0xff]
  %v34 = vld [vmem:[%s0 + $0x80] sm:$0xff]
  %v35 = vld [vmem:[%s0 + $0x88] sm:$0xff]
  %v36 = vld [vmem:[%s0 + $0x90] sm:$0xff]
  %v37 = vld [vmem:[%s0 + $0x98] sm:$0xff]
  %v38 = vld [vmem:[%s0 + $0xa0] sm:$0xff]
  %v39 = vld [vmem:[%s0 + $0xa8] sm:$0xff]
  %v40 = vld [vmem:[%s0 + $0xb0] sm:$0xff]
  %v41 = vld [vmem:[%s0 + $0xb8] sm:$0xff]
  %v42 = vld [vmem:[%s0 + $0xc0] sm:$0xff]
  %v43 = vld [vmem:[%s0 + $0xc8] sm:$0xff]
  %v44 = vld [vmem:[%s0 + $0xd0] sm:$0xff]
  %v45 = vld [vmem:[%s0 + $0xd8] sm:$0xff]
  %v46 = vld [vmem:[%s0 + $0xe0] sm:$0xff]
  %v47 = vld [vmem:[%s0 + $0xe8] sm:$0xff]
  %v48 = vld [vmem:[%s0 + $0xf0] sm:$0xff]
  %v49 = vld [vmem:[%s0 + $0xf8] sm:$0xff]
  %v50 = vld [vmem:[%s0 + $0x100] sm:$0xff]
  %v51 = vld [vmem:[%s0 + $0x108] sm:$0xff]
  %v52 = vld [vmem:[%s0 + $0x110] sm:$0xff]
  %v53 = vld [vmem:[%s0 + $0x118] sm:$0xff]
  %v54 = vld [vmem:[%s0 + $0x120] sm:$0xff]
  %v55 = vld [vmem:[%s0 + $0x128] sm:$0xff]
  %v56 = vld [vmem:[%s0 + $0x130] sm:$0xff]
  %v57 = vld [vmem:[%s0 + $0x138] sm:$0xff]
  %v58 = vld [vmem:[%s0 + $0x140] sm:$0xff]
  %v59 = vld [vmem:[%s0 + $0x148] sm:$0xff]
  %v60 = vld [vmem:[%s0 + $0x150] sm:$0xff]
  %v61 = vld [vmem:[%s0 + $0x158] sm:$0xff]
  %v62 = vld [vmem:[%s0 + $0x160] sm:$0xff]
  %v63 = vld [vmem:[%s0 + $0x168] sm:$0xff]
  %v64 = vld [vmem:[%s0 + $0x170] sm:$0xff]
  %v65 = vld [vmem:[%s0 + $0x178] sm:$0xff]
  %v66 = vld [vmem:[%s0 + $0x180] sm:$0xff]
  %v67 = vld [vmem:[%s0 + $0x188] sm:$0xff]
  %v68 = vld [vmem:[%s0 + $0x190] sm:$0xff]
  %v69 = vld [vmem:[%s0 + $0x198] sm:$0xff]
  %v70 = vld [vmem:[%s0 + $0x1a0] sm:$0xff]
  %v71 = vld [vmem:[%s0 + $0x1a8] sm:$0xff]
  %v72 = vld [vmem:[%s0 + $0x1b0] sm:$0xff]
  %v73 = vld [vmem:[%s0 + $0x1b8] sm:$0xff]
  %v74 = vld [vmem:[%s0 + $0x1c0] sm:$0xff]
  %v75 = vld [vmem:[%s0 + $0x1c8] sm:$0xff]
  %v76 = vld [vmem:[%s0 + $0x1d0] sm:$0xff]
  %v77 = vld [vmem:[%s0 + $0x1d8] sm:$0xff]
  %v78 = vld [vmem:[%s0 + $0x1e0] sm:$0xff]
  %v79 = vld [vmem:[%s0 + $0x1e8] sm:$0xff]
  %v80 = vld [vmem:[%s0 + $0x1f0] sm:$0xff]
  %v81 = vld [vmem:[%s0 + $0x1f8] sm:$0xff]
  %v82 = vld [vmem:[%s0 + $0x200] sm:$0xff]
  %v83 = vld [vmem:[%s0 + $0x208] sm:$0xff]
  %v84 = vld [vmem:[%s0 + $0x210] sm:$0xff]
  %v85 = vld [vmem:[%s0 + $0x218] sm:$0xff]
  %v86 = vld [vmem:[%s0 + $0x220] sm:$0xff]
  %v87 = vld [vmem:[%s0 + $0x228] sm:$0xff]
  %v88 = vld [vmem:[%s0 + $0x230] sm:$0xff]
  %v89 = vld [vmem:[%s0 + $0x238] sm:$0xff]
  %v90 = vld [vmem:[%s0 + $0x240] sm:$0xff]
  %v91 = vld [vmem:[%s0 + $0x248] sm:$0xff]
  %v92 = vld [vmem:[%s0 + $0x250] sm:$0xff]
  %v93 = vld [vmem:[%s0 + $0x258] sm:$0xff]
  %v94 = vld [vmem:[%s0 + $0x260] sm:$0xff]
  %v95 = vld [vmem:[%s0 + $0x268] sm:$0xff]
  %v96 = vld [vmem:[%s0 + $0x270] sm:$0xff]
  %v97 = vld [vmem:[%s0 + $0x278] sm:$0xff]
  %v98 = vld [vmem:[%s0 + $0x280] sm:$0xff]
  %v99 = vld [vmem:[%s0 + $0x288] sm:$0xff]
  %v100 = vld [vmem:[%s0 + $0x290] sm:$0xff]
  %v101 = vld [vmem:[%s0 + $0x298] sm:$0xff]
  %v102 = vld [vmem:[%s0 + $0x2a0] sm:$0xff]
  %v103 = vld [vmem:[%s0 + $0x2a8] sm:$0xff]
  %v104 = vld [vmem:[%s0 + $0x2b0] sm:$0xff]
  %v105 = vld [vmem:[%s0 + $0x2b8] sm:$0xff]
  %v106 = vld [vmem:[%s0 + $0x2c0] sm:$0xff]
  %v107 = vld [vmem:[%s0 + $0x2c8] sm:$0xff]
  %v108 = vld [vmem:[%s0 + $0x2d0] sm:$0xff]
  %v109 = vld [vmem:[%s0 + $0x2d8] sm:$0xff]
  %v110 = vld [vmem:[%s0 + $0x2e0] sm:$0xff]
  %v111 = vld [vmem:[%s0 + $0x2e8] sm:$0xff]
  %v112 = vld [vmem:[%s0 + $0x2f0] sm:$0xff]
  %v113 = vld [vmem:[%s0 + $0x2f8] sm:$0xff]
  %v114 = vld [vmem:[%s0 + $0x300] sm:$0xff]
  %v115 = vld [vmem:[%s0 + $0x308] sm:$0xff]
  %v116 = vld [vmem:[%s0 + $0x310] sm:$0xff]
  %v117 = vld [vmem:[%s0 + $0x318] sm:$0xff]
  %v118 = vld [vmem:[%s0 + $0x320] sm:$0xff]
  %v119 = vld [vmem:[%s0 + $0x328] sm:$0xff]
  %v120 = vld [vmem:[%s0 + $0x330] sm:$0xff]
  %v121 = vld [vmem:[%s0 + $0x338] sm:$0xff]
  %v122 = vld [vmem:[%s0 + $0x340] sm:$0xff]
  %v123 = vld [vmem:[%s0 + $0x348] sm:$0xff]
  %v124 = vld [vmem:[%s0 + $0x350] sm:$0xff]
  %v125 = vld [vmem:[%s0 + $0x358] sm:$0xff]
  %v126 = vld [vmem:[%s0 + $0x360] sm:$0xff]
  %v127 = vld [vmem:[%s0 + $0x368] sm:$0xff]
  %v128 = vld [vmem:[%s0 + $0x370] sm:$0xff]
  %v129 = vld [vmem:[%s0 + $0x378] sm:$0xff]
  %v130 = vld [vmem:[%s0 + $0x380] sm:$0xff]
  %v131 = vld [vmem:[%s0 + $0x388] sm:$0xff]
  %v132 = vld [vmem:[%s0 + $0x390] sm:$0xff]
  %v133 = vld [vmem:[%s0 + $0x398] sm:$0xff]
  %v134 = vld [vmem:[%s0 + $0x3a0] sm:$0xff]
  %v135 = vld [vmem:[%s0 + $0x3a8] sm:$0xff]
  %v136 = vld [vmem:[%s0 + $0x3b0] sm:$0xff]
  %v137 = vld [vmem:[%s0 + $0x3b8] sm:$0xff]
  %v138 = vld [vmem:[%s0 + $0x3c0] sm:$0xff]
  %v139 = vld [vmem:[%s0 + $0x3c8] sm:$0xff]
  %v140 = vld [vmem:[%s0 + $0x3d0] sm:$0xff]
  %v141 = vld [vmem:[%s0 + $0x3d8] sm:$0xff]
  %v142 = vld [vmem:[%s0 + $0x3e0] sm:$0xff]
  %v143 = vld [vmem:[%s0 + $0x3e8] sm:$0xff]
  %v144 = vld [vmem:[%s0 + $0x3f0] sm:$0xff]
  %v145 = vld [vmem:[%s0 + $0x3f8] sm:$0xff]
  %v146 = vld [vmem:[%s0 + $0x400] sm:$0xff]
  %v147 = vld [vmem:[%s0 + $0x408] sm:$0xff]
  %v148 = vld [vmem:[%s0 + $0x410] sm:$0xff]
  %v149 = vld [vmem:[%s0 + $0x418] sm:$0xff]
  %v150 = vld [vmem:[%s0 + $0x420] sm:$0xff]
  %v151 = vld [vmem:[%s0 + $0x428] sm:$0xff]
  %v152 = vld [vmem:[%s0 + $0x430] sm:$0xff]
  %v153 = vld [vmem:[%s0 + $0x438] sm:$0xff]
  %v154 = vld [vmem:[%s0 + $0x440] sm:$0xff]
  %v155 = vld [vmem:[%s0 + $0x448] sm:$0xff]
  %v156 = vld [vmem:[%s0 + $0x450] sm:$0xff]
  %v157 = vld [vmem:[%s0 + $0x458] sm:$0xff]
  %v158 = vld [vmem:[%s0 + $0x460] sm:$0xff]
  %v159 = vld [vmem:[%s0 + $0x468] sm:$0xff]
  %v160 = vld [vmem:[%s0 + $0x470] sm:$0xff]
  %v161 = vld [vmem:[%s0 + $0x478] sm:$0xff]
  %v162 = vld [vmem:[%s0 + $0x480] sm:$0xff]
  %v163 = vld [vmem:[%s0 + $0x488] sm:$0xff]
  %v164 = vld [vmem:[%s0 + $0x490] sm:$0xff]
  %v165 = vld [vmem:[%s0 + $0x498] sm:$0xff]
  %v166 = vld [vmem:[%s0 + $0x4a0] sm:$0xff]
  %v167 = vld [vmem:[%s0 + $0x4a8] sm:$0xff]
  %v168 = vld [vmem:[%s0 + $0x4b0] sm:$0xff]
  %v169 = vld [vmem:[%s0 + $0x4b8] sm:$0xff]
  %v170 = vld [vmem:[%s0 + $0x4c0] sm:$0xff]
  %v171 = vld [vmem:[%s0 + $0x4c8] sm:$0xff]
  %v172 = vld [vmem:[%s0 + $0x4d0] sm:$0xff]
  %v173 = vld [vmem:[%s0 + $0x4d8] sm:$0xff]
  %v174 = vld [vmem:[%s0 + $0x4e0] sm:$0xff]
  %v175 = vld [vmem:[%s0 + $0x4e8] sm:$0xff]
  %v176 = vld [vmem:[%s0 + $0x4f0] sm:$0xff]
  %v177 = vld [vmem:[%s0 + $0x4f8] sm:$0xff]
  %v178 = vld [vmem:[%s0 + $0x500] sm:$0xff]
  %v179 = vld [vmem:[%s0 + $0x508] sm:$0xff]
  %v180 = vld [vmem:[%s0 + $0x510] sm:$0xff]
  %v181 = vld [vmem:[%s0 + $0x518] sm:$0xff]
  %v182 = vld [vmem:[%s0 + $0x520] sm:$0xff]
  %v183 = vld [vmem:[%s0 + $0x528] sm:$0xff]
  %v184 = vld [vmem:[%s0 + $0x530] sm:$0xff]
  %v185 = vld [vmem:[%s0 + $0x538] sm:$0xff]
  %v186 = vld [vmem:[%s0 + $0x540] sm:$0xff]
  %v187 = vld [vmem:[%s0 + $0x548] sm:$0xff]
  %v188 = vld [vmem:[%s0 + $0x550] sm:$0xff]
  %v189 = vld [vmem:[%s0 + $0x558] sm:$0xff]
  %v190 = vld [vmem:[%s0 + $0x560] sm:$0xff]
  %v191 = vld [vmem:[%s0 + $0x568] sm:$0xff]
  %v192 = vld [vmem:[%s0 + $0x570] sm:$0xff]
  %v193 = vld [vmem:[%s0 + $0x578] sm:$0xff]
  %v194 = vld [vmem:[%s0 + $0x580] sm:$0xff]
  %v195 = vld [vmem:[%s0 + $0x588] sm:$0xff]
  %v196 = vld [vmem:[%s0 + $0x590] sm:$0xff]
  %v197 = vld [vmem:[%s0 + $0x598] sm:$0xff]
  %v198 = vld [vmem:[%s0 + $0x5a0] sm:$0xff]
  %v199 = vld [vmem:[%s0 + $0x5a8] sm:$0xff]
  %v200 = vld [vmem:[%s0 + $0x5b0] sm:$0xff]
  %v201 = vld [vmem:[%s0 + $0x5b8] sm:$0xff]
  %v202 = vld [vmem:[%s0 + $0x5c0] sm:$0xff]
  %v203 = vld [vmem:[%s0 + $0x5c8] sm:$0xff]
  %v204 = vld [vmem:[%s0 + $0x5d0] sm:$0xff]
  %v205 = vld [vmem:[%s0 + $0x5d8] sm:$0xff]
  %v206 = vld [vmem:[%s0 + $0x5e0] sm:$0xff]
  %v207 = vld [vmem:[%s0 + $0x5e8] sm:$0xff]
  %v208 = vld [vmem:[%s0 + $0x5f0] sm:$0xff]
  %v209 = vld [vmem:[%s0 + $0x5f8] sm:$0xff]
  %v210 = vld [vmem:[%s0 + $0x600] sm:$0xff]
  %v211 = vld [vmem:[%s0 + $0x608] sm:$0xff]
  %v212 = vld [vmem:[%s0 + $0x610] sm:$0xff]
  %v213 = vld [vmem:[%s0 + $0x618] sm:$0xff]
  %v214 = vld [vmem:[%s0 + $0x620] sm:$0xff]
  %v215 = vld [vmem:[%s0 + $0x628] sm:$0xff]
  %v216 = vld [vmem:[%s0 + $0x630] sm:$0xff]
  %v217 = vld [vmem:[%s0 + $0x638] sm:$0xff]
  %v218 = vld [vmem:[%s0 + $0x640] sm:$0xff]
  %v219 = vld [vmem:[%s0 + $0x648] sm:$0xff]
  %v220 = vld [vmem:[%s0 + $0x650] sm:$0xff]
  %v221 = vld [vmem:[%s0 + $0x658] sm:$0xff]
  %v222 = vld [vmem:[%s0 + $0x660] sm:$0xff]
  %v223 = vld [vmem:[%s0 + $0x668] sm:$0xff]
  %v224 = vld [vmem:[%s0 + $0x670] sm:$0xff]
  %v225 = vld [vmem:[%s0 + $0x678] sm:$0xff]
  %v226 = vld [vmem:[%s0 + $0x680] sm:$0xff]
  %v227 = vld [vmem:[%s0 + $0x688] sm:$0xff]
  %v228 = vld [vmem:[%s0 + $0x690] sm:$0xff]
  %v229 = vld [vmem:[%s0 + $0x698] sm:$0xff]
  %v230 = vld [vmem:[%s0 + $0x6a0] sm:$0xff]
  %v231 = vld [vmem:[%s0 + $0x6a8] sm:$0xff]
  %v232 = vld [vmem:[%s0 + $0x6b0] sm:$0xff]
  %v233 = vld [vmem:[%s0 + $0x6b8] sm:$0xff]
  %v234 = vld [vmem:[%s0 + $0x6c0] sm:$0xff]
  %v235 = vld [vmem:[%s0 + $0x6c8] sm:$0xff]
  %v236 = vld [vmem:[%s0 + $0x6d0] sm:$0xff]
  %v237 = vld [vmem:[%s0 + $0x6d8] sm:$0xff]
  %v238 = vld [vmem:[%s0 + $0x6e0] sm:$0xff]
  %v239 = vld [vmem:[%s0 + $0x6e8] sm:$0xff]
  %v240 = vld [vmem:[%s0 + $0x6f0] sm:$0xff]
  %v241 = vld [vmem:[%s0 + $0x6f8] sm:$0xff]
  %v242 = vld [vmem:[%s0 + $0x700] sm:$0xff]
  %v243 = vld [vmem:[%s0 + $0x708] sm:$0xff]
  %v244 = vld [vmem:[%s0 + $0x710] sm:$0xff]
  %v245 = vld [vmem:[%s0 + $0x718] sm:$0xff]
  %v246 = vld [vmem:[%s0 + $0x720] sm:$0xff]
  %v247 = vld [vmem:[%s0 + $0x728] sm:$0xff]
  %v248 = vld [vmem:[%s0 + $0x730] sm:$0xff]
  %v249 = vld [vmem:[%s0 + $0x738] sm:$0xff]
  %v250 = vld [vmem:[%s0 + $0x740] sm:$0xff]
  %v251 = vld [vmem:[%s0 + $0x748] sm:$0xff]
  %v252 = vld [vmem:[%s0 + $0x750] sm:$0xff]
  %v253 = vld [vmem:[%s0 + $0x758] sm:$0xff]
  %v254 = vld [vmem:[%s0 + $0x760] sm:$0xff]
  %v255 = vld [vmem:[%s0 + $0x768] sm:$0xff]
  %v256 = vld [vmem:[%s0 + $0x770] sm:$0xff]
  %v257 = vld [vmem:[%s0 + $0x778] sm:$0xff]
  %v258 = vld [vmem:[%s0 + $0x780] sm:$0xff]
  %v259 = vld [vmem:[%s0 + $0x788] sm:$0xff]
  %v260 = vld [vmem:[%s0 + $0x790] sm:$0xff]
  %v261 = vld [vmem:[%s0 + $0x798] sm:$0xff]
  %v262 = vld [vmem:[%s0 + $0x7a0] sm:$0xff]
  %v263 = vld [vmem:[%s0 + $0x7a8] sm:$0xff]
  %v264 = vld [vmem:[%s0 + $0x7b0] sm:$0xff]
  %v265 = vld [vmem:[%s0 + $0x7b8] sm:$0xff]
  %v266 = vld [vmem:[%s0 + $0x7c0] sm:$0xff]
  %v267 = vld [vmem:[%s0 + $0x7c8] sm:$0xff]
  %v268 = vld [vmem:[%s0 + $0x7d0] sm:$0xff]
  %v269 = vld [vmem:[%s0 + $0x7d8] sm:$0xff]
  %v270 = vld [vmem:[%s0 + $0x7e0] sm:$0xff]
  %v271 = vld [vmem:[%s0 + $0x7e8] sm:$0xff]
  %v272 = vld [vmem:[%s0 + $0x7f0] sm:$0xff]
  %v273 = vld [vmem:[%s0 + $0x7f8] sm:$0xff]
  %v274 = vld [vmem:[%s0 + $0x800] sm:$0xff]
  %v275 = vld [vmem:[%s0 + $0x808] sm:$0xff]
  %v276 = vld [vmem:[%s0 + $0x810] sm:$0xff]
  %v277 = vld [vmem:[%s0 + $0x818] sm:$0xff]
  %v278 = vld [vmem:[%s0 + $0x820] sm:$0xff]
  %v279 = vld [vmem:[%s0 + $0x828] sm:$0xff]
  %v280 = vld [vmem:[%s0 + $0x830] sm:$0xff]
  %v281 = vld [vmem:[%s0 + $0x838] sm:$0xff]
  %v282 = vld [vmem:[%s0 + $0x840] sm:$0xff]
  %v283 = vld [vmem:[%s0 + $0x848] sm:$0xff]
  %v284 = vld [vmem:[%s0 + $0x850] sm:$0xff]
  %v285 = vld [vmem:[%s0 + $0x858] sm:$0xff]
  %v286 = vld [vmem:[%s0 + $0x860] sm:$0xff]
  %v287 = vld [vmem:[%s0 + $0x868] sm:$0xff]
  %v288 = vld [vmem:[%s0 + $0x870] sm:$0xff]
  %v289 = vld [vmem:[%s0 + $0x878] sm:$0xff]
  %v290 = vld [vmem:[%s0 + $0x880] sm:$0xff]
  %v291 = vld [vmem:[%s0 + $0x888] sm:$0xff]
  %v292 = vld [vmem:[%s0 + $0x890] sm:$0xff]
  %v293 = vld [vmem:[%s0 + $0x898] sm:$0xff]
  %v294 = vld [vmem:[%s0 + $0x8a0] sm:$0xff]
  %v295 = vld [vmem:[%s0 + $0x8a8] sm:$0xff]
  %v296 = vld [vmem:[%s0 + $0x8b0] sm:$0xff]
  %v297 = vld [vmem:[%s0 + $0x8b8] sm:$0xff]
  %v298 = vld [vmem:[%s0 + $0x8c0] sm:$0xff]
  %v299 = vld [vmem:[%s0 + $0x8c8] sm:$0xff]
  %v300 = vld [vmem:[%s0 + $0x8d0] sm:$0xff]
  %v301 = vld [vmem:[%s0 + $0x8d8] sm:$0xff]
  %v302 = vld [vmem:[%s0 + $0x8e0] sm:$0xff]
  %v303 = vld [vmem:[%s0 + $0x8e8] sm:$0xff]
  %v304 = vld [vmem:[%s0 + $0x8f0] sm:$0xff]
  %v305 = vld [vmem:[%s0 + $0x8f8] sm:$0xff]
  %v306 = vld [vmem:[%s0 + $0x900] sm:$0xff]
  %v307 = vld [vmem:[%s0 + $0x908] sm:$0xff]
  %v308 = vld [vmem:[%s0 + $0x910] sm:$0xff]
  %v309 = vld [vmem:[%s0 + $0x918] sm:$0xff]
  %v310 = vld [vmem:[%s0 + $0x920] sm:$0xff]
  %v311 = vld [vmem:[%s0 + $0x928] sm:$0xff]
  %v312 = vld [vmem:[%s0 + $0x930] sm:$0xff]
  %v313 = vld [vmem:[%s0 + $0x938] sm:$0xff]
  %v314 = vld [vmem:[%s0 + $0x940] sm:$0xff]
  %v315 = vld [vmem:[%s0 + $0x948] sm:$0xff]
  %v316 = vld [vmem:[%s0 + $0x950] sm:$0xff]
  %v317 = vld [vmem:[%s0 + $0x958] sm:$0xff]
  %v318 = vld [vmem:[%s0 + $0x960] sm:$0xff]
  %v319 = vld [vmem:[%s0 + $0x968] sm:$0xff]
  %v320 = vld [vmem:[%s0 + $0x970] sm:$0xff]
  %v321 = vld [vmem:[%s0 + $0x978] sm:$0xff]
  %v322 = vld [vmem:[%s0 + $0x980] sm:$0xff]
  %v323 = vld [vmem:[%s0 + $0x988] sm:$0xff]
  %v324 = vld [vmem:[%s0 + $0x990] sm:$0xff]
  %v325 = vld [vmem:[%s0 + $0x998] sm:$0xff]
  %v326 = vld [vmem:[%s0 + $0x9a0] sm:$0xff]
  %v327 = vld [vmem:[%s0 + $0x9a8] sm:$0xff]
  %v328 = vld [vmem:[%s0 + $0x9b0] sm:$0xff]
  %v329 = vld [vmem:[%s0 + $0x9b8] sm:$0xff]
  %v330 = vld [vmem:[%s0 + $0x9c0] sm:$0xff]
  %v331 = vld [vmem:[%s0 + $0x9c8] sm:$0xff]
  %v332 = vld [vmem:[%s0 + $0x9d0] sm:$0xff]
  %v333 = vld [vmem:[%s0 + $0x9d8] sm:$0xff]
  %v334 = vld [vmem:[%s0 + $0x9e0] sm:$0xff]
  %v335 = vld [vmem:[%s0 + $0x9e8] sm:$0xff]
  %v336 = vld [vmem:[%s0 + $0x9f0] sm:$0xff]
  %v337 = vld [vmem:[%s0 + $0x9f8] sm:$0xff]
  %v338 = vld [vmem:[%s0 + $0xa00] sm:$0xff]
  %v339 = vld [vmem:[%s0 + $0xa08] sm:$0xff]
  %v340 = vld [vmem:[%s0 + $0xa10] sm:$0xff]
  %v341 = vld [vmem:[%s0 + $0xa18] sm:$0xff]
  %v342 = vld [vmem:[%s0 + $0xa20] sm:$0xff]
  %v343 = vld [vmem:[%s0 + $0xa28] sm:$0xff]
  %v344 = vld [vmem:[%s0 + $0xa30] sm:$0xff]
  %v345 = vld [vmem:[%s0 + $0xa38] sm:$0xff]
  %v346 = vld [vmem:[%s0 + $0xa40] sm:$0xff]
  %v347 = vld [vmem:[%s0 + $0xa48] sm:$0xff]
  %v348 = vld [vmem:[%s0 + $0xa50] sm:$0xff]
  %v349 = vld [vmem:[%s0 + $0xa58] sm:$0xff]
  %v350 = vld [vmem:[%s0 + $0xa60] sm:$0xff]
  %v351 = vld [vmem:[%s0 + $0xa68] sm:$0xff]
  %v352 = vld [vmem:[%s0 + $0xa70] sm:$0xff]
  %v353 = vld [vmem:[%s0 + $0xa78] sm:$0xff]
  %v354 = vld [vmem:[%s0 + $0xa80] sm:$0xff]
  %v355 = vld [vmem:[%s0 + $0xa88] sm:$0xff]
  %v356 = vld [vmem:[%s0 + $0xa90] sm:$0xff]
  %v357 = vld [vmem:[%s0 + $0xa98] sm:$0xff]
  %v358 = vld [vmem:[%s0 + $0xaa0] sm:$0xff]
  %v359 = vld [vmem:[%s0 + $0xaa8] sm:$0xff]
  %v360 = vld [vmem:[%s0 + $0xab0] sm:$0xff]
  %v361 = vld [vmem:[%s0 + $0xab8] sm:$0xff]
  %v362 = vld [vmem:[%s0 + $0xac0] sm:$0xff]
  %v363 = vld [vmem:[%s0 + $0xac8] sm:$0xff]
  %v364 = vld [vmem:[%s0 + $0xad0] sm:$0xff]
  %v365 = vld [vmem:[%s0 + $0xad8] sm:$0xff]
  %v366 = vld [vmem:[%s0 + $0xae0] sm:$0xff]
  %v367 = vld [vmem:[%s0 + $0xae8] sm:$0xff]
  %v368 = vld [vmem:[%s0 + $0xaf0] sm:$0xff]
  %v369 = vld [vmem:[%s0 + $0xaf8] sm:$0xff]
  %v370 = vld [vmem:[%s0 + $0xb00] sm:$0xff]
  %v371 = vld [vmem:[%s0 + $0xb08] sm:$0xff]
  %v372 = vld [vmem:[%s0 + $0xb10] sm:$0xff]
  %v373 = vld [vmem:[%s0 + $0xb18] sm:$0xff]
  %v374 = vld [vmem:[%s0 + $0xb20] sm:$0xff]
  %v375 = vld [vmem:[%s0 + $0xb28] sm:$0xff]
  %v376 = vld [vmem:[%s0 + $0xb30] sm:$0xff]
  %v377 = vld [vmem:[%s0 + $0xb38] sm:$0xff]
  %v378 = vld [vmem:[%s0 + $0xb40] sm:$0xff]
  %v379 = vld [vmem:[%s0 + $0xb48] sm:$0xff]
  %v380 = vld [vmem:[%s0 + $0xb50] sm:$0xff]
  %v381 = vld [vmem:[%s0 + $0xb58] sm:$0xff]
  %v382 = vld [vmem:[%s0 + $0xb60] sm:$0xff]
  %v383 = vld [vmem:[%s0 + $0xb68] sm:$0xff]
  %v384 = vld [vmem:[%s0 + $0xb70] sm:$0xff]
  %v385 = vld [vmem:[%s0 + $0xb78] sm:$0xff]
  %v386 = vld [vmem:[%s0 + $0xb80] sm:$0xff]
  %v387 = vld [vmem:[%s0 + $0xb88] sm:$0xff]
  %v388 = vld [vmem:[%s0 + $0xb90] sm:$0xff]
  %v389 = vld [vmem:[%s0 + $0xb98] sm:$0xff]
  %v390 = vld [vmem:[%s0 + $0xba0] sm:$0xff]
  %v391 = vld [vmem:[%s0 + $0xba8] sm:$0xff]
  %v392 = vld [vmem:[%s0 + $0xbb0] sm:$0xff]
  %v393 = vld [vmem:[%s0 + $0xbb8] sm:$0xff]
  %v394 = vld [vmem:[%s0 + $0xbc0] sm:$0xff]
  %v395 = vld [vmem:[%s0 + $0xbc8] sm:$0xff]
  %v396 = vld [vmem:[%s0 + $0xbd0] sm:$0xff]
  %v397 = vld [vmem:[%s0 + $0xbd8] sm:$0xff]
  %v398 = vld [vmem:[%s0 + $0xbe0] sm:$0xff]
  %v399 = vld [vmem:[%s0 + $0xbe8] sm:$0xff]
  %v400 = vld [vmem:[%s0 + $0xbf0] sm:$0xff]
  %v401 = vld [vmem:[%s0 + $0xbf8] sm:$0xff]
  %v402 = vld [vmem:[%s0 + $0xc00] sm:$0xff]
  %v403 = vld [vmem:[%s0 + $0xc08] sm:$0xff]
  %v404 = vld [vmem:[%s0 + $0xc10] sm:$0xff]
  %v405 = vld [vmem:[%s0 + $0xc18] sm:$0xff]
  %v406 = vld [vmem:[%s0 + $0xc20] sm:$0xff]
  %v407 = vld [vmem:[%s0 + $0xc28] sm:$0xff]
  %v408 = vld [vmem:[%s0 + $0xc30] sm:$0xff]
  %v409 = vld [vmem:[%s0 + $0xc38] sm:$0xff]
  %v410 = vld [vmem:[%s0 + $0xc40] sm:$0xff]
  %v411 = vld [vmem:[%s0 + $0xc48] sm:$0xff]
  %v412 = vld [vmem:[%s0 + $0xc50] sm:$0xff]
  %v413 = vld [vmem:[%s0 + $0xc58] sm:$0xff]
  %v414 = vld [vmem:[%s0 + $0xc60] sm:$0xff]
  %v415 = vld [vmem:[%s0 + $0xc68] sm:$0xff]
  %v416 = vld [vmem:[%s0 + $0xc70] sm:$0xff]
  %v417 = vld [vmem:[%s0 + $0xc78] sm:$0xff]
  %v418 = vld [vmem:[%s0 + $0xc80] sm:$0xff]
  %v419 = vld [vmem:[%s0 + $0xc88] sm:$0xff]
  %v420 = vld [vmem:[%s0 + $0xc90] sm:$0xff]
  %v421 = vld [vmem:[%s0 + $0xc98] sm:$0xff]
  %v422 = vld [vmem:[%s0 + $0xca0] sm:$0xff]
  %v423 = vld [vmem:[%s0 + $0xca8] sm:$0xff]
  %v424 = vld [vmem:[%s0 + $0xcb0] sm:$0xff]
  %v425 = vld [vmem:[%s0 + $0xcb8] sm:$0xff]
  %v426 = vld [vmem:[%s0 + $0xcc0] sm:$0xff]
  %v427 = vld [vmem:[%s0 + $0xcc8] sm:$0xff]
  %v428 = vld [vmem:[%s0 + $0xcd0] sm:$0xff]
  %v429 = vld [vmem:[%s0 + $0xcd8] sm:$0xff]
  %v430 = vld [vmem:[%s0 + $0xce0] sm:$0xff]
  %v431 = vld [vmem:[%s0 + $0xce8] sm:$0xff]
  %v432 = vld [vmem:[%s0 + $0xcf0] sm:$0xff]
  %v433 = vld [vmem:[%s0 + $0xcf8] sm:$0xff]
  %v434 = vld [vmem:[%s0 + $0xd00] sm:$0xff]
  %v435 = vld [vmem:[%s0 + $0xd08] sm:$0xff]
  %v436 = vld [vmem:[%s0 + $0xd10] sm:$0xff]
  %v437 = vld [vmem:[%s0 + $0xd18] sm:$0xff]
  %v438 = vld [vmem:[%s0 + $0xd20] sm:$0xff]
  %v439 = vld [vmem:[%s0 + $0xd28] sm:$0xff]
  %v440 = vld [vmem:[%s0 + $0xd30] sm:$0xff]
  %v441 = vld [vmem:[%s0 + $0xd38] sm:$0xff]
  %v442 = vld [vmem:[%s0 + $0xd40] sm:$0xff]
  %v443 = vld [vmem:[%s0 + $0xd48] sm:$0xff]
  %v444 = vld [vmem:[%s0 + $0xd50] sm:$0xff]
  %v445 = vld [vmem:[%s0 + $0xd58] sm:$0xff]
  %v446 = vld [vmem:[%s0 + $0xd60] sm:$0xff]
  %v447 = vld [vmem:[%s0 + $0xd68] sm:$0xff]
  %v448 = vld [vmem:[%s0 + $0xd70] sm:$0xff]
  %v449 = vld [vmem:[%s0 + $0xd78] sm:$0xff]
  %v450 = vld [vmem:[%s0 + $0xd80] sm:$0xff]
  %v451 = vld [vmem:[%s0 + $0xd88] sm:$0xff]
  %v452 = vld [vmem:[%s0 + $0xd90] sm:$0xff]
  %v453 = vld [vmem:[%s0 + $0xd98] sm:$0xff]
  %v454 = vld [vmem:[%s0 + $0xda0] sm:$0xff]
  %v455 = vld [vmem:[%s0 + $0xda8] sm:$0xff]
  %v456 = vld [vmem:[%s0 + $0xdb0] sm:$0xff]
  %v457 = vld [vmem:[%s0 + $0xdb8] sm:$0xff]
  %v458 = vld [vmem:[%s0 + $0xdc0] sm:$0xff]
  %v459 = vld [vmem:[%s0 + $0xdc8] sm:$0xff]
  %v460 = vld [vmem:[%s0 + $0xdd0] sm:$0xff]
  %v461 = vld [vmem:[%s0 + $0xdd8] sm:$0xff]
  %v462 = vld [vmem:[%s0 + $0xde0] sm:$0xff]
  %v463 = vld [vmem:[%s0 + $0xde8] sm:$0xff]
  %v464 = vld [vmem:[%s0 + $0xdf0] sm:$0xff]
  %v465 = vld [vmem:[%s0 + $0xdf8] sm:$0xff]
  %v466 = vld [vmem:[%s0 + $0xe00] sm:$0xff]
  %v467 = vld [vmem:[%s0 + $0xe08] sm:$0xff]
  %v468 = vld [vmem:[%s0 + $0xe10] sm:$0xff]
  %v469 = vld [vmem:[%s0 + $0xe18] sm:$0xff]
  %v470 = vld [vmem:[%s0 + $0xe20] sm:$0xff]
  %v471 = vld [vmem:[%s0 + $0xe28] sm:$0xff]
  %v472 = vld [vmem:[%s0 + $0xe30] sm:$0xff]
  %v473 = vld [vmem:[%s0 + $0xe38] sm:$0xff]
  %v474 = vld [vmem:[%s0 + $0xe40] sm:$0xff]
  %v475 = vld [vmem:[%s0 + $0xe48] sm:$0xff]
  %v476 = vld [vmem:[%s0 + $0xe50] sm:$0xff]
  %v477 = vld [vmem:[%s0 + $0xe58] sm:$0xff]
  %v478 = vld [vmem:[%s0 + $0xe60] sm:$0xff]
  %v479 = vld [vmem:[%s0 + $0xe68] sm:$0xff]
  %v480 = vld [vmem:[%s0 + $0xe70] sm:$0xff]
  %v481 = vld [vmem:[%s0 + $0xe78] sm:$0xff]
  %v482 = vld [vmem:[%s0 + $0xe80] sm:$0xff]
  %v483 = vld [vmem:[%s0 + $0xe88] sm:$0xff]
  %v484 = vld [vmem:[%s0 + $0xe90] sm:$0xff]
  %v485 = vld [vmem:[%s0 + $0xe98] sm:$0xff]
  %v486 = vld [vmem:[%s0 + $0xea0] sm:$0xff]
  %v487 = vld [vmem:[%s0 + $0xea8] sm:$0xff]
  %v488 = vld [vmem:[%s0 + $0xeb0] sm:$0xff]
  %v489 = vld [vmem:[%s0 + $0xeb8] sm:$0xff]
  %v490 = vld [vmem:[%s0 + $0xec0] sm:$0xff]
  %v491 = vld [vmem:[%s0 + $0xec8] sm:$0xff]
  %v492 = vld [vmem:[%s0 + $0xed0] sm:$0xff]
  %v493 = vld [vmem:[%s0 + $0xed8] sm:$0xff]
  %v494 = vld [vmem:[%s0 + $0xee0] sm:$0xff]
  %v495 = vld [vmem:[%s0 + $0xee8] sm:$0xff]
  %v496 = vld [vmem:[%s0 + $0xef0] sm:$0xff]
  %v497 = vld [vmem:[%s0 + $0xef8] sm:$0xff]
  %v498 = vld [vmem:[%s0 + $0xf00] sm:$0xff]
  %v499 = vld [vmem:[%s0 + $0xf08] sm:$0xff]
  %v500 = vld [vmem:[%s0 + $0xf10] sm:$0xff]
  %v501 = vld [vmem:[%s0 + $0xf18] sm:$0xff]
  %v502 = vld [vmem:[%s0 + $0xf20] sm:$0xff]
  %v503 = vld [vmem:[%s0 + $0xf28] sm:$0xff]
  %v504 = vld [vmem:[%s0 + $0xf30] sm:$0xff]
  %v505 = vld [vmem:[%s0 + $0xf38] sm:$0xff]
  %v506 = vld [vmem:[%s0 + $0xf40] sm:$0xff]
  %v507 = vld [vmem:[%s0 + $0xf48] sm:$0xff]
  %v508 = vld [vmem:[%s0 + $0xf50] sm:$0xff]
  %v509 = vld [vmem:[%s0 + $0xf58] sm:$0xff]
  %v510 = vld [vmem:[%s0 + $0xf60] sm:$0xff]
  %v511 = vld [vmem:[%s0 + $0xf68] sm:$0xff]
  %v512 = vld [vmem:[%s0 + $0xf70] sm:$0xff]
  %v513 = vld [vmem:[%s0 + $0xf78] sm:$0xff]
  %v514 = vld [vmem:[%s0 + $0xf80] sm:$0xff]
  %v515 = vld [vmem:[%s0 + $0xf88] sm:$0xff]
  %v516 = vld [vmem:[%s0 + $0xf90] sm:$0xff]
  %v517 = vld [vmem:[%s0 + $0xf98] sm:$0xff]
  %v518 = vld [vmem:[%s0 + $0xfa0] sm:$0xff]
  %v519 = vld [vmem:[%s0 + $0xfa8] sm:$0xff]
  %v520 = vld [vmem:[%s0 + $0xfb0] sm:$0xff]
  %v521 = vld [vmem:[%s0 + $0xfb8] sm:$0xff]
  %v522 = vld [vmem:[%s0 + $0xfc0] sm:$0xff]
  %v523 = vld [vmem:[%s0 + $0xfc8] sm:$0xff]
  %v524 = vld [vmem:[%s0 + $0xfd0] sm:$0xff]
  %v525 = vld [vmem:[%s0 + $0xfd8] sm:$0xff]
  %v526 = vld [vmem:[%s0 + $0xfe0] sm:$0xff]
  %v527 = vld [vmem:[%s0 + $0xfe8] sm:$0xff]
  %v528 = vld [vmem:[%s0 + $0xff0] sm:$0xff]
  %v529 = vld [vmem:[%s0 + $0xff8] sm:$0xff]
  %v530 = vld [vmem:[%s0 + $0x1000] sm:$0xff]
  %v531 = vld [vmem:[%s0 + $0x1008] sm:$0xff]
  %v532 = vld [vmem:[%s0 + $0x1010] sm:$0xff]
  %v533 = vld [vmem:[%s0 + $0x1018] sm:$0xff]
  %v534 = vld [vmem:[%s0 + $0x1020] sm:$0xff]
  %v535 = vld [vmem:[%s0 + $0x1028] sm:$0xff]
  %v536 = vld [vmem:[%s0 + $0x1030] sm:$0xff]
  %v537 = vld [vmem:[%s0 + $0x1038] sm:$0xff]
  %v538 = vld [vmem:[%s0 + $0x1040] sm:$0xff]
  %v539 = vld [vmem:[%s0 + $0x1048] sm:$0xff]
  %v540 = vld [vmem:[%s0 + $0x1050] sm:$0xff]
  %v541 = vld [vmem:[%s0 + $0x1058] sm:$0xff]
  %v542 = vld [vmem:[%s0 + $0x1060] sm:$0xff]
  %v543 = vld [vmem:[%s0 + $0x1068] sm:$0xff]
  %v544 = vld [vmem:[%s0 + $0x1070] sm:$0xff]
  %v545 = vld [vmem:[%s0 + $0x1078] sm:$0xff]
  %v546 = vld [vmem:[%s0 + $0x1080] sm:$0xff]
  %v547 = vld [vmem:[%s0 + $0x1088] sm:$0xff]
  %v548 = vld [vmem:[%s0 + $0x1090] sm:$0xff]
  %v549 = vld [vmem:[%s0 + $0x1098] sm:$0xff]
  %v550 = vld [vmem:[%s0 + $0x10a0] sm:$0xff]
  %v551 = vld [vmem:[%s0 + $0x10a8] sm:$0xff]
  %v552 = vld [vmem:[%s0 + $0x10b0] sm:$0xff]
  %v553 = vld [vmem:[%s0 + $0x10b8] sm:$0xff]
  %v554 = vld [vmem:[%s0 + $0x10c0] sm:$0xff]
  %v555 = vld [vmem:[%s0 + $0x10c8] sm:$0xff]
  %v556 = vld [vmem:[%s0 + $0x10d0] sm:$0xff]
  %v557 = vld [vmem:[%s0 + $0x10d8] sm:$0xff]
  %v558 = vld [vmem:[%s0 + $0x10e0] sm:$0xff]
  %v559 = vld [vmem:[%s0 + $0x10e8] sm:$0xff]
  %v560 = vld [vmem:[%s0 + $0x10f0] sm:$0xff]
  %v561 = vld [vmem:[%s0 + $0x10f8] sm:$0xff]
  %v562 = vld [vmem:[%s0 + $0x1100] sm:$0xff]
  %v563 = vld [vmem:[%s0 + $0x1108] sm:$0xff]
  %v564 = vld [vmem:[%s0 + $0x1110] sm:$0xff]
  %v565 = vld [vmem:[%s0 + $0x1118] sm:$0xff]
  %v566 = vld [vmem:[%s0 + $0x1120] sm:$0xff]
  %v567 = vld [vmem:[%s0 + $0x1128] sm:$0xff]
  %v568 = vld [vmem:[%s0 + $0x1130] sm:$0xff]
  %v569 = vld [vmem:[%s0 + $0x1138] sm:$0xff]
  %v570 = vld [vmem:[%s0 + $0x1140] sm:$0xff]
  %v571 = vld [vmem:[%s0 + $0x1148] sm:$0xff]
  %v572 = vld [vmem:[%s0 + $0x1150] sm:$0xff]
  %v573 = vld [vmem:[%s0 + $0x1158] sm:$0xff]
  %v574 = vld [vmem:[%s0 + $0x1160] sm:$0xff]
  %v575 = vld [vmem:[%s0 + $0x1168] sm:$0xff]
  %v576 = vld [vmem:[%s0 + $0x1170] sm:$0xff]
  %v577 = vld [vmem:[%s0 + $0x1178] sm:$0xff]
  %v578 = vld [vmem:[%s0 + $0x1180] sm:$0xff]
  %v579 = vld [vmem:[%s0 + $0x1188] sm:$0xff]
  %v580 = vld [vmem:[%s0 + $0x1190] sm:$0xff]
  %v581 = vld [vmem:[%s0 + $0x1198] sm:$0xff]
  %v582 = vld [vmem:[%s0 + $0x11a0] sm:$0xff]
  %v583 = vld [vmem:[%s0 + $0x11a8] sm:$0xff]
  %v584 = vld [vmem:[%s0 + $0x11b0] sm:$0xff]
  %v585 = vld [vmem:[%s0 + $0x11b8] sm:$0xff]
  %v586 = vld [vmem:[%s0 + $0x11c0] sm:$0xff]
  %v587 = vld [vmem:[%s0 + $0x11c8] sm:$0xff]
  %v588 = vld [vmem:[%s0 + $0x11d0] sm:$0xff]
  %v589 = vld [vmem:[%s0 + $0x11d8] sm:$0xff]
  %v590 = vld [vmem:[%s0 + $0x11e0] sm:$0xff]
  %v591 = vld [vmem:[%s0 + $0x11e8] sm:$0xff]
  %v592 = vld [vmem:[%s0 + $0x11f0] sm:$0xff]
  %v593 = vld [vmem:[%s0 + $0x11f8] sm:$0xff]
  %v594 = vld [vmem:[%s2] sm:$0xf]
  %v595 = vld [vmem:[%s2 + $0x4] sm:$0xf]
  %v596 = vld [vmem:[%s2 + $0x8] sm:$0xf]
  %v597 = vld [vmem:[%s2 + $0xc] sm:$0xf]
  %v598 = vld [vmem:[%s2 + $0x10] sm:$0xf]
  %v599 = vld [vmem:[%s2 + $0x14] sm:$0xf]
  %v600 = vld [vmem:[%s2 + $0x18] sm:$0xf]
  %v601 = vld [vmem:[%s2 + $0x1c] sm:$0xf]
  %v602 = vld [vmem:[%s2 + $0x20] sm:$0xf]
  %v603 = vld [vmem:[%s2 + $0x24] sm:$0xf]
  %v604 = vld [vmem:[%s2 + $0x28] sm:$0xf]
  %v605 = vld [vmem:[%s2 + $0x2c] sm:$0xf]
  %v606 = vld [vmem:[%s2 + $0x30] sm:$0xf]
  %v607 = vld [vmem:[%s2 + $0x34] sm:$0xf]
  %v608 = vld [vmem:[%s2 + $0x38] sm:$0xf]
  %v609 = vld [vmem:[%s2 + $0x3c] sm:$0xf]
  %v610 = vld [vmem:[%s2 + $0x40] sm:$0xf]
  %v611 = vld [vmem:[%s2 + $0x44] sm:$0xf]
  %v612 = vld [vmem:[%s2 + $0x48] sm:$0xf]
  %v613 = vld [vmem:[%s2 + $0x4c] sm:$0xf]
  %v614 = vld [vmem:[%s2 + $0x50] sm:$0xf]
  %v615 = vld [vmem:[%s2 + $0x54] sm:$0xf]
  %v616 = vld [vmem:[%s2 + $0x58] sm:$0xf]
  %v617 = vld [vmem:[%s2 + $0x5c] sm:$0xf]
  %v618 = vld [vmem:[%s2 + $0x60] sm:$0xf]
  %v619 = vld [vmem:[%s2 + $0x64] sm:$0xf]
  %v620 = vld [vmem:[%s2 + $0x68] sm:$0xf]
  %v621 = vld [vmem:[%s2 + $0x6c] sm:$0xf]
  %v622 = vld [vmem:[%s2 + $0x70] sm:$0xf]
  %v623 = vld [vmem:[%s2 + $0x74] sm:$0xf]
  %v624 = vld [vmem:[%s2 + $0x78] sm:$0xf]
  %v625 = vld [vmem:[%s2 + $0x7c] sm:$0xf]
  %v626 = vld [vmem:[%s2 + $0x80] sm:$0xf]
  %v627 = vld [vmem:[%s2 + $0x84] sm:$0xf]
  %v628 = vld [vmem:[%s2 + $0x88] sm:$0xf]
  %v629 = vld [vmem:[%s2 + $0x8c] sm:$0xf]
  %v630 = vld [vmem:[%s2 + $0x90] sm:$0xf]
  %v631 = vld [vmem:[%s2 + $0x94] sm:$0xf]
  %v632 = vld [vmem:[%s2 + $0x98] sm:$0xf]
  %v633 = vld [vmem:[%s2 + $0x9c] sm:$0xf]
  %v634 = vld [vmem:[%s2 + $0xa0] sm:$0xf]
  %v635 = vld [vmem:[%s2 + $0xa4] sm:$0xf]
  %v636 = vld [vmem:[%s2 + $0xa8] sm:$0xf]
  %v637 = vld [vmem:[%s2 + $0xac] sm:$0xf]
  %v638 = vld [vmem:[%s2 + $0xb0] sm:$0xf]
  %v639 = vld [vmem:[%s2 + $0xb4] sm:$0xf]
  %v640 = vld [vmem:[%s2 + $0xb8] sm:$0xf]
  %v641 = vld [vmem:[%s2 + $0xbc] sm:$0xf]
  %v642 = vld [vmem:[%s2 + $0xc0] sm:$0xf]
  %v643 = vld [vmem:[%s2 + $0xc4] sm:$0xf]
  %v644 = vld [vmem:[%s2 + $0xc8] sm:$0xf]
  %v645 = vld [vmem:[%s2 + $0xcc] sm:$0xf]
  %v646 = vld [vmem:[%s2 + $0xd0] sm:$0xf]
  %v647 = vld [vmem:[%s2 + $0xd4] sm:$0xf]
  %v648 = vld [vmem:[%s2 + $0xd8] sm:$0xf]
  %v649 = vld [vmem:[%s2 + $0xdc] sm:$0xf]
  %v650 = vld [vmem:[%s2 + $0xe0] sm:$0xf]
  %v651 = vld [vmem:[%s2 + $0xe4] sm:$0xf]
  %v652 = vld [vmem:[%s2 + $0xe8] sm:$0xf]
  %v653 = vld [vmem:[%s2 + $0xec] sm:$0xf]
  %v654 = vld [vmem:[%s2 + $0xf0] sm:$0xf]
  %v655 = vld [vmem:[%s2 + $0xf4] sm:$0xf]
  %v656 = vld [vmem:[%s2 + $0xf8] sm:$0xf]
  %v657 = vld [vmem:[%s2 + $0xfc] sm:$0xf]
  %v658 = vld [vmem:[%s2 + $0x100] sm:$0xf]
  %v659 = vld [vmem:[%s2 + $0x104] sm:$0xf]
  %v660 = vld [vmem:[%s2 + $0x108] sm:$0xf]
  %v661 = vld [vmem:[%s2 + $0x10c] sm:$0xf]
  %v662 = vld [vmem:[%s2 + $0x110] sm:$0xf]
  %v663 = vld [vmem:[%s2 + $0x114] sm:$0xf]
  %v664 = vld [vmem:[%s2 + $0x118] sm:$0xf]
  %v665 = vld [vmem:[%s2 + $0x11c] sm:$0xf]
  %v666 = vld [vmem:[%s2 + $0x120] sm:$0xf]
  %v667 = vld [vmem:[%s2 + $0x124] sm:$0xf]
  %v668 = vld [vmem:[%s2 + $0x128] sm:$0xf]
  %v669 = vld [vmem:[%s2 + $0x12c] sm:$0xf]
  %v670 = vld [vmem:[%s2 + $0x130] sm:$0xf]
  %v671 = vld [vmem:[%s2 + $0x134] sm:$0xf]
  %v672 = vld [vmem:[%s2 + $0x138] sm:$0xf]
  %v673 = vld [vmem:[%s2 + $0x13c] sm:$0xf]
  %v674 = vld [vmem:[%s2 + $0x140] sm:$0xf]
  %v675 = vld [vmem:[%s2 + $0x144] sm:$0xf]
  %v676 = vld [vmem:[%s2 + $0x148] sm:$0xf]
  %v677 = vld [vmem:[%s2 + $0x14c] sm:$0xf]
  %v678 = vld [vmem:[%s2 + $0x150] sm:$0xf]
  %v679 = vld [vmem:[%s2 + $0x154] sm:$0xf]
  %v680 = vld [vmem:[%s2 + $0x158] sm:$0xf]
  %v681 = vld [vmem:[%s2 + $0x15c] sm:$0xf]
  %v682 = vld [vmem:[%s2 + $0x160] sm:$0xf]
  %v683 = vld [vmem:[%s2 + $0x164] sm:$0xf]
  %v684 = vld [vmem:[%s2 + $0x168] sm:$0xf]
  %v685 = vld [vmem:[%s2 + $0x16c] sm:$0xf]
  %v686 = vld [vmem:[%s2 + $0x170] sm:$0xf]
  %v687 = vld [vmem:[%s2 + $0x174] sm:$0xf]
  %v688 = vld [vmem:[%s2 + $0x178] sm:$0xf]
  %v689 = vld [vmem:[%s2 + $0x17c] sm:$0xf]
  %v690 = vld [vmem:[%s2 + $0x180] sm:$0xf]
  %v691 = vld [vmem:[%s2 + $0x184] sm:$0xf]
  %v692 = vld [vmem:[%s2 + $0x188] sm:$0xf]
  %v693 = vld [vmem:[%s2 + $0x18c] sm:$0xf]
  %v694 = vld [vmem:[%s2 + $0x190] sm:$0xf]
  %v695 = vld [vmem:[%s2 + $0x194] sm:$0xf]
  %v696 = vld [vmem:[%s2 + $0x198] sm:$0xf]
  %v697 = vld [vmem:[%s2 + $0x19c] sm:$0xf]
  %v698 = vld [vmem:[%s2 + $0x1a0] sm:$0xf]
  %v699 = vld [vmem:[%s2 + $0x1a4] sm:$0xf]
  %v700 = vld [vmem:[%s2 + $0x1a8] sm:$0xf]
  %v701 = vld [vmem:[%s2 + $0x1ac] sm:$0xf]
  %v702 = vld [vmem:[%s2 + $0x1b0] sm:$0xf]
  %v703 = vld [vmem:[%s2 + $0x1b4] sm:$0xf]
  %v704 = vld [vmem:[%s2 + $0x1b8] sm:$0xf]
  %v705 = vld [vmem:[%s2 + $0x1bc] sm:$0xf]
  %v706 = vld [vmem:[%s2 + $0x1c0] sm:$0xf]
  %v707 = vld [vmem:[%s2 + $0x1c4] sm:$0xf]
  %v708 = vld [vmem:[%s2 + $0x1c8] sm:$0xf]
  %v709 = vld [vmem:[%s2 + $0x1cc] sm:$0xf]
  %v710 = vld [vmem:[%s2 + $0x1d0] sm:$0xf]
  %v711 = vld [vmem:[%s2 + $0x1d4] sm:$0xf]
  %v712 = vld [vmem:[%s2 + $0x1d8] sm:$0xf]
  %v713 = vld [vmem:[%s2 + $0x1dc] sm:$0xf]
  %v714 = vld [vmem:[%s2 + $0x1e0] sm:$0xf]
  %v715 = vld [vmem:[%s2 + $0x1e4] sm:$0xf]
  %v716 = vld [vmem:[%s2 + $0x1e8] sm:$0xf]
  %v717 = vld [vmem:[%s2 + $0x1ec] sm:$0xf]
  %v718 = vld [vmem:[%s2 + $0x1f0] sm:$0xf]
  %v719 = vld [vmem:[%s2 + $0x1f4] sm:$0xf]
  %v720 = vld [vmem:[%s2 + $0x1f8] sm:$0xf]
  %v721 = vld [vmem:[%s2 + $0x1fc] sm:$0xf]
  %v722 = vld [vmem:[%s2 + $0x200] sm:$0xf]
  %v723 = vld [vmem:[%s2 + $0x204] sm:$0xf]
  %v724 = vld [vmem:[%s2 + $0x208] sm:$0xf]
  %v725 = vld [vmem:[%s2 + $0x20c] sm:$0xf]
  %v726 = vld [vmem:[%s2 + $0x210] sm:$0xf]
  %v727 = vld [vmem:[%s2 + $0x214] sm:$0xf]
  %v728 = vld [vmem:[%s2 + $0x218] sm:$0xf]
  %v729 = vld [vmem:[%s2 + $0x21c] sm:$0xf]
  %v730 = vld [vmem:[%s2 + $0x220] sm:$0xf]
  %v731 = vld [vmem:[%s2 + $0x224] sm:$0xf]
  %v732 = vld [vmem:[%s2 + $0x228] sm:$0xf]
  %v733 = vld [vmem:[%s2 + $0x22c] sm:$0xf]
  %v734 = vld [vmem:[%s2 + $0x230] sm:$0xf]
  %v735 = vld [vmem:[%s2 + $0x234] sm:$0xf]
  %v736 = vld [vmem:[%s2 + $0x238] sm:$0xf]
  %v737 = vld [vmem:[%s2 + $0x23c] sm:$0xf]
  %v738 = vld [vmem:[%s2 + $0x240] sm:$0xf]
  %v739 = vld [vmem:[%s2 + $0x244] sm:$0xf]
  %v740 = vld [vmem:[%s2 + $0x248] sm:$0xf]
  %v741 = vld [vmem:[%s2 + $0x24c] sm:$0xf]
  %v742 = vld [vmem:[%s2 + $0x250] sm:$0xf]
  %v743 = vld [vmem:[%s2 + $0x254] sm:$0xf]
  %v744 = vld [vmem:[%s2 + $0x258] sm:$0xf]
  %v745 = vld [vmem:[%s2 + $0x25c] sm:$0xf]
  %v746 = vld [vmem:[%s2 + $0x260] sm:$0xf]
  %v747 = vld [vmem:[%s2 + $0x264] sm:$0xf]
  %v748 = vld [vmem:[%s2 + $0x268] sm:$0xf]
  %v749 = vld [vmem:[%s2 + $0x26c] sm:$0xf]
  %v750 = vld [vmem:[%s2 + $0x270] sm:$0xf]
  %v751 = vld [vmem:[%s2 + $0x274] sm:$0xf]
  %v752 = vld [vmem:[%s2 + $0x278] sm:$0xf]
  %v753 = vld [vmem:[%s2 + $0x27c] sm:$0xf]
  %v754 = vld [vmem:[%s2 + $0x280] sm:$0xf]
  %v755 = vld [vmem:[%s2 + $0x284] sm:$0xf]
  %v756 = vld [vmem:[%s2 + $0x288] sm:$0xf]
  %v757 = vld [vmem:[%s2 + $0x28c] sm:$0xf]
  %v758 = vld [vmem:[%s2 + $0x290] sm:$0xf]
  %v759 = vld [vmem:[%s2 + $0x294] sm:$0xf]
  %v760 = vld [vmem:[%s2 + $0x298] sm:$0xf]
  %v761 = vld [vmem:[%s2 + $0x29c] sm:$0xf]
  %v762 = vld [vmem:[%s2 + $0x2a0] sm:$0xf]
  %v763 = vld [vmem:[%s2 + $0x2a4] sm:$0xf]
  %v764 = vld [vmem:[%s2 + $0x2a8] sm:$0xf]
  %v765 = vld [vmem:[%s2 + $0x2ac] sm:$0xf]
  %v766 = vld [vmem:[%s2 + $0x2b0] sm:$0xf]
  %v767 = vld [vmem:[%s2 + $0x2b4] sm:$0xf]
  %v768 = vld [vmem:[%s2 + $0x2b8] sm:$0xf]
  %v769 = vld [vmem:[%s2 + $0x2bc] sm:$0xf]
  %v770 = vld [vmem:[%s2 + $0x2c0] sm:$0xf]
  %v771 = vld [vmem:[%s2 + $0x2c4] sm:$0xf]
  %v772 = vld [vmem:[%s2 + $0x2c8] sm:$0xf]
  %v773 = vld [vmem:[%s2 + $0x2cc] sm:$0xf]
  %v774 = vld [vmem:[%s2 + $0x2d0] sm:$0xf]
  %v775 = vld [vmem:[%s2 + $0x2d4] sm:$0xf]
  %v776 = vld [vmem:[%s2 + $0x2d8] sm:$0xf]
  %v777 = vld [vmem:[%s2 + $0x2dc] sm:$0xf]
  %v778 = vld [vmem:[%s2 + $0x2e0] sm:$0xf]
  %v779 = vld [vmem:[%s2 + $0x2e4] sm:$0xf]
  %v780 = vld [vmem:[%s2 + $0x2e8] sm:$0xf]
  %v781 = vld [vmem:[%s2 + $0x2ec] sm:$0xf]
  %v782 = vld [vmem:[%s2 + $0x2f0] sm:$0xf]
  %v783 = vld [vmem:[%s2 + $0x2f4] sm:$0xf]
  %v784 = vld [vmem:[%s2 + $0x2f8] sm:$0xf]
  %v785 = vld [vmem:[%s2 + $0x2fc] sm:$0xf]
  %v786 = vld [vmem:[%s2 + $0x300] sm:$0xf]
  %v787 = vld [vmem:[%s2 + $0x304] sm:$0xf]
  %v788 = vld [vmem:[%s2 + $0x308] sm:$0xf]
  %v789 = vld [vmem:[%s2 + $0x30c] sm:$0xf]
  %v790 = vld [vmem:[%s2 + $0x310] sm:$0xf]
  %v791 = vld [vmem:[%s2 + $0x314] sm:$0xf]
  %v792 = vld [vmem:[%s2 + $0x318] sm:$0xf]
  %v793 = vld [vmem:[%s2 + $0x31c] sm:$0xf]
  %v794 = vld [vmem:[%s2 + $0x320] sm:$0xf]
  %v795 = vld [vmem:[%s2 + $0x324] sm:$0xf]
  %v796 = vld [vmem:[%s2 + $0x328] sm:$0xf]
  %v797 = vld [vmem:[%s2 + $0x32c] sm:$0xf]
  %v798 = vld [vmem:[%s2 + $0x330] sm:$0xf]
  %v799 = vld [vmem:[%s2 + $0x334] sm:$0xf]
  %v800 = vld [vmem:[%s2 + $0x338] sm:$0xf]
  %v801 = vld [vmem:[%s2 + $0x33c] sm:$0xf]
  %v802 = vld [vmem:[%s2 + $0x340] sm:$0xf]
  %v803 = vld [vmem:[%s2 + $0x344] sm:$0xf]
  %v804 = vld [vmem:[%s2 + $0x348] sm:$0xf]
  %v805 = vld [vmem:[%s2 + $0x34c] sm:$0xf]
  %v806 = vld [vmem:[%s2 + $0x350] sm:$0xf]
  %v807 = vld [vmem:[%s2 + $0x354] sm:$0xf]
  %v808 = vld [vmem:[%s2 + $0x358] sm:$0xf]
  %v809 = vld [vmem:[%s2 + $0x35c] sm:$0xf]
  %v810 = vld [vmem:[%s2 + $0x360] sm:$0xf]
  %v811 = vld [vmem:[%s2 + $0x364] sm:$0xf]
  %v812 = vld [vmem:[%s2 + $0x368] sm:$0xf]
  %v813 = vld [vmem:[%s2 + $0x36c] sm:$0xf]
  %v814 = vld [vmem:[%s2 + $0x370] sm:$0xf]
  %v815 = vld [vmem:[%s2 + $0x374] sm:$0xf]
  %v816 = vld [vmem:[%s2 + $0x378] sm:$0xf]
  %v817 = vld [vmem:[%s2 + $0x37c] sm:$0xf]
  %v818 = vld [vmem:[%s2 + $0x380] sm:$0xf]
  %v819 = vld [vmem:[%s2 + $0x384] sm:$0xf]
  %v820 = vld [vmem:[%s2 + $0x388] sm:$0xf]
  %v821 = vld [vmem:[%s2 + $0x38c] sm:$0xf]
  %v822 = vld [vmem:[%s2 + $0x390] sm:$0xf]
  %v823 = vld [vmem:[%s2 + $0x394] sm:$0xf]
  %v824 = vld [vmem:[%s2 + $0x398] sm:$0xf]
  %v825 = vld [vmem:[%s2 + $0x39c] sm:$0xf]
  %v826 = vld [vmem:[%s2 + $0x3a0] sm:$0xf]
  %v827 = vld [vmem:[%s2 + $0x3a4] sm:$0xf]
  %v828 = vld [vmem:[%s2 + $0x3a8] sm:$0xf]
  %v829 = vld [vmem:[%s2 + $0x3ac] sm:$0xf]
  %v830 = vld [vmem:[%s2 + $0x3b0] sm:$0xf]
  %v831 = vld [vmem:[%s2 + $0x3b4] sm:$0xf]
  %v832 = vld [vmem:[%s2 + $0x3b8] sm:$0xf]
  %v833 = vld [vmem:[%s2 + $0x3bc] sm:$0xf]
  %v834 = vld [vmem:[%s2 + $0x3c0] sm:$0xf]
  %v835 = vld [vmem:[%s2 + $0x3c4] sm:$0xf]
  %v836 = vld [vmem:[%s2 + $0x3c8] sm:$0xf]
  %v837 = vld [vmem:[%s2 + $0x3cc] sm:$0xf]
  %v838 = vld [vmem:[%s2 + $0x3d0] sm:$0xf]
  %v839 = vld [vmem:[%s2 + $0x3d4] sm:$0xf]
  %v840 = vld [vmem:[%s2 + $0x3d8] sm:$0xf]
  %v841 = vld [vmem:[%s2 + $0x3dc] sm:$0xf]
  %v842 = vld [vmem:[%s2 + $0x3e0] sm:$0xf]
  %v843 = vld [vmem:[%s2 + $0x3e4] sm:$0xf]
  %v844 = vld [vmem:[%s2 + $0x3e8] sm:$0xf]
  %v845 = vld [vmem:[%s2 + $0x3ec] sm:$0xf]
  %v846 = vld [vmem:[%s2 + $0x3f0] sm:$0xf]
  %v847 = vld [vmem:[%s2 + $0x3f4] sm:$0xf]
  %v848 = vld [vmem:[%s2 + $0x3f8] sm:$0xf]
  %v849 = vld [vmem:[%s2 + $0x3fc] sm:$0xf]
  %v850 = vld [vmem:[%s2 + $0x400] sm:$0xf]
  %v851 = vld [vmem:[%s2 + $0x404] sm:$0xf]
  %v852 = vld [vmem:[%s2 + $0x408] sm:$0xf]
  %v853 = vld [vmem:[%s2 + $0x40c] sm:$0xf]
  %v854 = vld [vmem:[%s2 + $0x410] sm:$0xf]
  %v855 = vld [vmem:[%s2 + $0x414] sm:$0xf]
  %v856 = vld [vmem:[%s2 + $0x418] sm:$0xf]
  %v857 = vld [vmem:[%s2 + $0x41c] sm:$0xf]
  %v858 = vld [vmem:[%s2 + $0x420] sm:$0xf]
  %v859 = vld [vmem:[%s2 + $0x424] sm:$0xf]
  %v860 = vld [vmem:[%s2 + $0x428] sm:$0xf]
  %v861 = vld [vmem:[%s2 + $0x42c] sm:$0xf]
  %v862 = vld [vmem:[%s2 + $0x430] sm:$0xf]
  %v863 = vld [vmem:[%s2 + $0x434] sm:$0xf]
  %v864 = vld [vmem:[%s2 + $0x438] sm:$0xf]
  %v865 = vld [vmem:[%s2 + $0x43c] sm:$0xf]
  %v866 = vld [vmem:[%s2 + $0x440] sm:$0xf]
  %v867 = vld [vmem:[%s2 + $0x444] sm:$0xf]
  %v868 = vld [vmem:[%s2 + $0x448] sm:$0xf]
  %v869 = vld [vmem:[%s2 + $0x44c] sm:$0xf]
  %v870 = vld [vmem:[%s2 + $0x450] sm:$0xf]
  %v871 = vld [vmem:[%s2 + $0x454] sm:$0xf]
  %v872 = vld [vmem:[%s2 + $0x458] sm:$0xf]
  %v873 = vld [vmem:[%s2 + $0x45c] sm:$0xf]
  %v874 = vld [vmem:[%s2 + $0x460] sm:$0xf]
  %v875 = vld [vmem:[%s2 + $0x464] sm:$0xf]
  %v876 = vld [vmem:[%s2 + $0x468] sm:$0xf]
  %v877 = vld [vmem:[%s2 + $0x46c] sm:$0xf]
  %v878 = vld [vmem:[%s2 + $0x470] sm:$0xf]
  %v879 = vld [vmem:[%s2 + $0x474] sm:$0xf]
  %v880 = vld [vmem:[%s2 + $0x478] sm:$0xf]
  %v881 = vld [vmem:[%s2 + $0x47c] sm:$0xf]
  %v1458 = vunpack.c.l.b16 %v18
  %v1459 = vunpack.c.h.b16 %v18
  %v1460 = vunpack.c.l.b16 %v19
  %v1461 = vunpack.c.h.b16 %v19
  %v1462 = vunpack.c.l.b16 %v20
  %v1463 = vunpack.c.h.b16 %v20
  %v1464 = vunpack.c.l.b16 %v21
  %v1465 = vunpack.c.h.b16 %v21
  %v1466 = vunpack.c.l.b16 %v22
  %v1467 = vunpack.c.h.b16 %v22
  %v1468 = vunpack.c.l.b16 %v23
  %v1469 = vunpack.c.h.b16 %v23
  %v1470 = vunpack.c.l.b16 %v24
  %v1471 = vunpack.c.h.b16 %v24
  %v1472 = vunpack.c.l.b16 %v25
  %v1473 = vunpack.c.h.b16 %v25
  %v1474 = vunpack.c.l.b16 %v26
  %v1475 = vunpack.c.h.b16 %v26
  %v1476 = vunpack.c.l.b16 %v27
  %v1477 = vunpack.c.h.b16 %v27
  %v1478 = vunpack.c.l.b16 %v28
  %v1479 = vunpack.c.h.b16 %v28
  %v1480 = vunpack.c.l.b16 %v29
  %v1481 = vunpack.c.h.b16 %v29
  %v1482 = vunpack.c.l.b16 %v30
  %v1483 = vunpack.c.h.b16 %v30
  %v1484 = vunpack.c.l.b16 %v31
  %v1485 = vunpack.c.h.b16 %v31
  %v1486 = vunpack.c.l.b16 %v32
  %v1487 = vunpack.c.h.b16 %v32
  %v1488 = vunpack.c.l.b16 %v33
  %v1489 = vunpack.c.h.b16 %v33
  %v1490 = vunpack.c.l.b16 %v34
  %v1491 = vunpack.c.h.b16 %v34
  %v1492 = vunpack.c.l.b16 %v35
  %v1493 = vunpack.c.h.b16 %v35
  %v1494 = vunpack.c.l.b16 %v36
  %v1495 = vunpack.c.h.b16 %v36
  %v1496 = vunpack.c.l.b16 %v37
  %v1497 = vunpack.c.h.b16 %v37
  %v1498 = vunpack.c.l.b16 %v38
  %v1499 = vunpack.c.h.b16 %v38
  %v1500 = vunpack.c.l.b16 %v39
  %v1501 = vunpack.c.h.b16 %v39
  %v1502 = vunpack.c.l.b16 %v40
  %v1503 = vunpack.c.h.b16 %v40
  %v1504 = vunpack.c.l.b16 %v41
  %v1505 = vunpack.c.h.b16 %v41
  %v1506 = vunpack.c.l.b16 %v42
  %v1507 = vunpack.c.h.b16 %v42
  %v1508 = vunpack.c.l.b16 %v43
  %v1509 = vunpack.c.h.b16 %v43
  %v1510 = vunpack.c.l.b16 %v44
  %v1511 = vunpack.c.h.b16 %v44
  %v1512 = vunpack.c.l.b16 %v45
  %v1513 = vunpack.c.h.b16 %v45
  %v1514 = vunpack.c.l.b16 %v46
  %v1515 = vunpack.c.h.b16 %v46
  %v1516 = vunpack.c.l.b16 %v47
  %v1517 = vunpack.c.h.b16 %v47
  %v1518 = vunpack.c.l.b16 %v48
  %v1519 = vunpack.c.h.b16 %v48
  %v1520 = vunpack.c.l.b16 %v49
  %v1521 = vunpack.c.h.b16 %v49
  %v1522 = vunpack.c.l.b16 %v50
  %v1523 = vunpack.c.h.b16 %v50
  %v1524 = vunpack.c.l.b16 %v51
  %v1525 = vunpack.c.h.b16 %v51
  %v1526 = vunpack.c.l.b16 %v52
  %v1527 = vunpack.c.h.b16 %v52
  %v1528 = vunpack.c.l.b16 %v53
  %v1529 = vunpack.c.h.b16 %v53
  %v1530 = vunpack.c.l.b16 %v54
  %v1531 = vunpack.c.h.b16 %v54
  %v1532 = vunpack.c.l.b16 %v55
  %v1533 = vunpack.c.h.b16 %v55
  %v1534 = vunpack.c.l.b16 %v56
  %v1535 = vunpack.c.h.b16 %v56
  %v1536 = vunpack.c.l.b16 %v57
  %v1537 = vunpack.c.h.b16 %v57
  %v1538 = vunpack.c.l.b16 %v58
  %v1539 = vunpack.c.h.b16 %v58
  %v1540 = vunpack.c.l.b16 %v59
  %v1541 = vunpack.c.h.b16 %v59
  %v1542 = vunpack.c.l.b16 %v60
  %v1543 = vunpack.c.h.b16 %v60
  %v1544 = vunpack.c.l.b16 %v61
  %v1545 = vunpack.c.h.b16 %v61
  %v1546 = vunpack.c.l.b16 %v62
  %v1547 = vunpack.c.h.b16 %v62
  %v1548 = vunpack.c.l.b16 %v63
  %v1549 = vunpack.c.h.b16 %v63
  %v1550 = vunpack.c.l.b16 %v64
  %v1551 = vunpack.c.h.b16 %v64
  %v1552 = vunpack.c.l.b16 %v65
  %v1553 = vunpack.c.h.b16 %v65
  %v1554 = vunpack.c.l.b16 %v66
  %v1555 = vunpack.c.h.b16 %v66
  %v1556 = vunpack.c.l.b16 %v67
  %v1557 = vunpack.c.h.b16 %v67
  %v1558 = vunpack.c.l.b16 %v68
  %v1559 = vunpack.c.h.b16 %v68
  %v1560 = vunpack.c.l.b16 %v69
  %v1561 = vunpack.c.h.b16 %v69
  %v1562 = vunpack.c.l.b16 %v70
  %v1563 = vunpack.c.h.b16 %v70
  %v1564 = vunpack.c.l.b16 %v71
  %v1565 = vunpack.c.h.b16 %v71
  %v1566 = vunpack.c.l.b16 %v72
  %v1567 = vunpack.c.h.b16 %v72
  %v1568 = vunpack.c.l.b16 %v73
  %v1569 = vunpack.c.h.b16 %v73
  %v1570 = vunpack.c.l.b16 %v74
  %v1571 = vunpack.c.h.b16 %v74
  %v1572 = vunpack.c.l.b16 %v75
  %v1573 = vunpack.c.h.b16 %v75
  %v1574 = vunpack.c.l.b16 %v76
  %v1575 = vunpack.c.h.b16 %v76
  %v1576 = vunpack.c.l.b16 %v77
  %v1577 = vunpack.c.h.b16 %v77
  %v1578 = vunpack.c.l.b16 %v78
  %v1579 = vunpack.c.h.b16 %v78
  %v1580 = vunpack.c.l.b16 %v79
  %v1581 = vunpack.c.h.b16 %v79
  %v1582 = vunpack.c.l.b16 %v80
  %v1583 = vunpack.c.h.b16 %v80
  %v1584 = vunpack.c.l.b16 %v81
  %v1585 = vunpack.c.h.b16 %v81
  %v1586 = vunpack.c.l.b16 %v82
  %v1587 = vunpack.c.h.b16 %v82
  %v1588 = vunpack.c.l.b16 %v83
  %v1589 = vunpack.c.h.b16 %v83
  %v1590 = vunpack.c.l.b16 %v84
  %v1591 = vunpack.c.h.b16 %v84
  %v1592 = vunpack.c.l.b16 %v85
  %v1593 = vunpack.c.h.b16 %v85
  %v1594 = vunpack.c.l.b16 %v86
  %v1595 = vunpack.c.h.b16 %v86
  %v1596 = vunpack.c.l.b16 %v87
  %v1597 = vunpack.c.h.b16 %v87
  %v1598 = vunpack.c.l.b16 %v88
  %v1599 = vunpack.c.h.b16 %v88
  %v1600 = vunpack.c.l.b16 %v89
  %v1601 = vunpack.c.h.b16 %v89
  %v1602 = vunpack.c.l.b16 %v90
  %v1603 = vunpack.c.h.b16 %v90
  %v1604 = vunpack.c.l.b16 %v91
  %v1605 = vunpack.c.h.b16 %v91
  %v1606 = vunpack.c.l.b16 %v92
  %v1607 = vunpack.c.h.b16 %v92
  %v1608 = vunpack.c.l.b16 %v93
  %v1609 = vunpack.c.h.b16 %v93
  %v1610 = vunpack.c.l.b16 %v94
  %v1611 = vunpack.c.h.b16 %v94
  %v1612 = vunpack.c.l.b16 %v95
  %v1613 = vunpack.c.h.b16 %v95
  %v1614 = vunpack.c.l.b16 %v96
  %v1615 = vunpack.c.h.b16 %v96
  %v1616 = vunpack.c.l.b16 %v97
  %v1617 = vunpack.c.h.b16 %v97
  %v1618 = vunpack.c.l.b16 %v98
  %v1619 = vunpack.c.h.b16 %v98
  %v1620 = vunpack.c.l.b16 %v99
  %v1621 = vunpack.c.h.b16 %v99
  %v1622 = vunpack.c.l.b16 %v100
  %v1623 = vunpack.c.h.b16 %v100
  %v1624 = vunpack.c.l.b16 %v101
  %v1625 = vunpack.c.h.b16 %v101
  %v1626 = vunpack.c.l.b16 %v102
  %v1627 = vunpack.c.h.b16 %v102
  %v1628 = vunpack.c.l.b16 %v103
  %v1629 = vunpack.c.h.b16 %v103
  %v1630 = vunpack.c.l.b16 %v104
  %v1631 = vunpack.c.h.b16 %v104
  %v1632 = vunpack.c.l.b16 %v105
  %v1633 = vunpack.c.h.b16 %v105
  %v1634 = vunpack.c.l.b16 %v106
  %v1635 = vunpack.c.h.b16 %v106
  %v1636 = vunpack.c.l.b16 %v107
  %v1637 = vunpack.c.h.b16 %v107
  %v1638 = vunpack.c.l.b16 %v108
  %v1639 = vunpack.c.h.b16 %v108
  %v1640 = vunpack.c.l.b16 %v109
  %v1641 = vunpack.c.h.b16 %v109
  %v1642 = vunpack.c.l.b16 %v110
  %v1643 = vunpack.c.h.b16 %v110
  %v1644 = vunpack.c.l.b16 %v111
  %v1645 = vunpack.c.h.b16 %v111
  %v1646 = vunpack.c.l.b16 %v112
  %v1647 = vunpack.c.h.b16 %v112
  %v1648 = vunpack.c.l.b16 %v113
  %v1649 = vunpack.c.h.b16 %v113
  %v1650 = vunpack.c.l.b16 %v114
  %v1651 = vunpack.c.h.b16 %v114
  %v1652 = vunpack.c.l.b16 %v115
  %v1653 = vunpack.c.h.b16 %v115
  %v1654 = vunpack.c.l.b16 %v116
  %v1655 = vunpack.c.h.b16 %v116
  %v1656 = vunpack.c.l.b16 %v117
  %v1657 = vunpack.c.h.b16 %v117
  %v1658 = vunpack.c.l.b16 %v118
  %v1659 = vunpack.c.h.b16 %v118
  %v1660 = vunpack.c.l.b16 %v119
  %v1661 = vunpack.c.h.b16 %v119
  %v1662 = vunpack.c.l.b16 %v120
  %v1663 = vunpack.c.h.b16 %v120
  %v1664 = vunpack.c.l.b16 %v121
  %v1665 = vunpack.c.h.b16 %v121
  %v1666 = vunpack.c.l.b16 %v122
  %v1667 = vunpack.c.h.b16 %v122
  %v1668 = vunpack.c.l.b16 %v123
  %v1669 = vunpack.c.h.b16 %v123
  %v1670 = vunpack.c.l.b16 %v124
  %v1671 = vunpack.c.h.b16 %v124
  %v1672 = vunpack.c.l.b16 %v125
  %v1673 = vunpack.c.h.b16 %v125
  %v1674 = vunpack.c.l.b16 %v126
  %v1675 = vunpack.c.h.b16 %v126
  %v1676 = vunpack.c.l.b16 %v127
  %v1677 = vunpack.c.h.b16 %v127
  %v1678 = vunpack.c.l.b16 %v128
  %v1679 = vunpack.c.h.b16 %v128
  %v1680 = vunpack.c.l.b16 %v129
  %v1681 = vunpack.c.h.b16 %v129
  %v1682 = vunpack.c.l.b16 %v130
  %v1683 = vunpack.c.h.b16 %v130
  %v1684 = vunpack.c.l.b16 %v131
  %v1685 = vunpack.c.h.b16 %v131
  %v1686 = vunpack.c.l.b16 %v132
  %v1687 = vunpack.c.h.b16 %v132
  %v1688 = vunpack.c.l.b16 %v133
  %v1689 = vunpack.c.h.b16 %v133
  %v1690 = vunpack.c.l.b16 %v134
  %v1691 = vunpack.c.h.b16 %v134
  %v1692 = vunpack.c.l.b16 %v135
  %v1693 = vunpack.c.h.b16 %v135
  %v1694 = vunpack.c.l.b16 %v136
  %v1695 = vunpack.c.h.b16 %v136
  %v1696 = vunpack.c.l.b16 %v137
  %v1697 = vunpack.c.h.b16 %v137
  %v1698 = vunpack.c.l.b16 %v138
  %v1699 = vunpack.c.h.b16 %v138
  %v1700 = vunpack.c.l.b16 %v139
  %v1701 = vunpack.c.h.b16 %v139
  %v1702 = vunpack.c.l.b16 %v140
  %v1703 = vunpack.c.h.b16 %v140
  %v1704 = vunpack.c.l.b16 %v141
  %v1705 = vunpack.c.h.b16 %v141
  %v1706 = vunpack.c.l.b16 %v142
  %v1707 = vunpack.c.h.b16 %v142
  %v1708 = vunpack.c.l.b16 %v143
  %v1709 = vunpack.c.h.b16 %v143
  %v1710 = vunpack.c.l.b16 %v144
  %v1711 = vunpack.c.h.b16 %v144
  %v1712 = vunpack.c.l.b16 %v145
  %v1713 = vunpack.c.h.b16 %v145
  %v1714 = vunpack.c.l.b16 %v146
  %v1715 = vunpack.c.h.b16 %v146
  %v1716 = vunpack.c.l.b16 %v147
  %v1717 = vunpack.c.h.b16 %v147
  %v1718 = vunpack.c.l.b16 %v148
  %v1719 = vunpack.c.h.b16 %v148
  %v1720 = vunpack.c.l.b16 %v149
  %v1721 = vunpack.c.h.b16 %v149
  %v1722 = vunpack.c.l.b16 %v150
  %v1723 = vunpack.c.h.b16 %v150
  %v1724 = vunpack.c.l.b16 %v151
  %v1725 = vunpack.c.h.b16 %v151
  %v1726 = vunpack.c.l.b16 %v152
  %v1727 = vunpack.c.h.b16 %v152
  %v1728 = vunpack.c.l.b16 %v153
  %v1729 = vunpack.c.h.b16 %v153
  %v1730 = vunpack.c.l.b16 %v154
  %v1731 = vunpack.c.h.b16 %v154
  %v1732 = vunpack.c.l.b16 %v155
  %v1733 = vunpack.c.h.b16 %v155
  %v1734 = vunpack.c.l.b16 %v156
  %v1735 = vunpack.c.h.b16 %v156
  %v1736 = vunpack.c.l.b16 %v157
  %v1737 = vunpack.c.h.b16 %v157
  %v1738 = vunpack.c.l.b16 %v158
  %v1739 = vunpack.c.h.b16 %v158
  %v1740 = vunpack.c.l.b16 %v159
  %v1741 = vunpack.c.h.b16 %v159
  %v1742 = vunpack.c.l.b16 %v160
  %v1743 = vunpack.c.h.b16 %v160
  %v1744 = vunpack.c.l.b16 %v161
  %v1745 = vunpack.c.h.b16 %v161
  %v1746 = vunpack.c.l.b16 %v162
  %v1747 = vunpack.c.h.b16 %v162
  %v1748 = vunpack.c.l.b16 %v163
  %v1749 = vunpack.c.h.b16 %v163
  %v1750 = vunpack.c.l.b16 %v164
  %v1751 = vunpack.c.h.b16 %v164
  %v1752 = vunpack.c.l.b16 %v165
  %v1753 = vunpack.c.h.b16 %v165
  %v1754 = vunpack.c.l.b16 %v166
  %v1755 = vunpack.c.h.b16 %v166
  %v1756 = vunpack.c.l.b16 %v167
  %v1757 = vunpack.c.h.b16 %v167
  %v1758 = vunpack.c.l.b16 %v168
  %v1759 = vunpack.c.h.b16 %v168
  %v1760 = vunpack.c.l.b16 %v169
  %v1761 = vunpack.c.h.b16 %v169
  %v1762 = vunpack.c.l.b16 %v170
  %v1763 = vunpack.c.h.b16 %v170
  %v1764 = vunpack.c.l.b16 %v171
  %v1765 = vunpack.c.h.b16 %v171
  %v1766 = vunpack.c.l.b16 %v172
  %v1767 = vunpack.c.h.b16 %v172
  %v1768 = vunpack.c.l.b16 %v173
  %v1769 = vunpack.c.h.b16 %v173
  %v1770 = vunpack.c.l.b16 %v174
  %v1771 = vunpack.c.h.b16 %v174
  %v1772 = vunpack.c.l.b16 %v175
  %v1773 = vunpack.c.h.b16 %v175
  %v1774 = vunpack.c.l.b16 %v176
  %v1775 = vunpack.c.h.b16 %v176
  %v1776 = vunpack.c.l.b16 %v177
  %v1777 = vunpack.c.h.b16 %v177
  %v1778 = vunpack.c.l.b16 %v178
  %v1779 = vunpack.c.h.b16 %v178
  %v1780 = vunpack.c.l.b16 %v179
  %v1781 = vunpack.c.h.b16 %v179
  %v1782 = vunpack.c.l.b16 %v180
  %v1783 = vunpack.c.h.b16 %v180
  %v1784 = vunpack.c.l.b16 %v181
  %v1785 = vunpack.c.h.b16 %v181
  %v1786 = vunpack.c.l.b16 %v182
  %v1787 = vunpack.c.h.b16 %v182
  %v1788 = vunpack.c.l.b16 %v183
  %v1789 = vunpack.c.h.b16 %v183
  %v1790 = vunpack.c.l.b16 %v184
  %v1791 = vunpack.c.h.b16 %v184
  %v1792 = vunpack.c.l.b16 %v185
  %v1793 = vunpack.c.h.b16 %v185
  %v1794 = vunpack.c.l.b16 %v186
  %v1795 = vunpack.c.h.b16 %v186
  %v1796 = vunpack.c.l.b16 %v187
  %v1797 = vunpack.c.h.b16 %v187
  %v1798 = vunpack.c.l.b16 %v188
  %v1799 = vunpack.c.h.b16 %v188
  %v1800 = vunpack.c.l.b16 %v189
  %v1801 = vunpack.c.h.b16 %v189
  %v1802 = vunpack.c.l.b16 %v190
  %v1803 = vunpack.c.h.b16 %v190
  %v1804 = vunpack.c.l.b16 %v191
  %v1805 = vunpack.c.h.b16 %v191
  %v1806 = vunpack.c.l.b16 %v192
  %v1807 = vunpack.c.h.b16 %v192
  %v1808 = vunpack.c.l.b16 %v193
  %v1809 = vunpack.c.h.b16 %v193
  %v1810 = vunpack.c.l.b16 %v194
  %v1811 = vunpack.c.h.b16 %v194
  %v1812 = vunpack.c.l.b16 %v195
  %v1813 = vunpack.c.h.b16 %v195
  %v1814 = vunpack.c.l.b16 %v196
  %v1815 = vunpack.c.h.b16 %v196
  %v1816 = vunpack.c.l.b16 %v197
  %v1817 = vunpack.c.h.b16 %v197
  %v1818 = vunpack.c.l.b16 %v198
  %v1819 = vunpack.c.h.b16 %v198
  %v1820 = vunpack.c.l.b16 %v199
  %v1821 = vunpack.c.h.b16 %v199
  %v1822 = vunpack.c.l.b16 %v200
  %v1823 = vunpack.c.h.b16 %v200
  %v1824 = vunpack.c.l.b16 %v201
  %v1825 = vunpack.c.h.b16 %v201
  %v1826 = vunpack.c.l.b16 %v202
  %v1827 = vunpack.c.h.b16 %v202
  %v1828 = vunpack.c.l.b16 %v203
  %v1829 = vunpack.c.h.b16 %v203
  %v1830 = vunpack.c.l.b16 %v204
  %v1831 = vunpack.c.h.b16 %v204
  %v1832 = vunpack.c.l.b16 %v205
  %v1833 = vunpack.c.h.b16 %v205
  %v1834 = vunpack.c.l.b16 %v206
  %v1835 = vunpack.c.h.b16 %v206
  %v1836 = vunpack.c.l.b16 %v207
  %v1837 = vunpack.c.h.b16 %v207
  %v1838 = vunpack.c.l.b16 %v208
  %v1839 = vunpack.c.h.b16 %v208
  %v1840 = vunpack.c.l.b16 %v209
  %v1841 = vunpack.c.h.b16 %v209
  %v1842 = vunpack.c.l.b16 %v210
  %v1843 = vunpack.c.h.b16 %v210
  %v1844 = vunpack.c.l.b16 %v211
  %v1845 = vunpack.c.h.b16 %v211
  %v1846 = vunpack.c.l.b16 %v212
  %v1847 = vunpack.c.h.b16 %v212
  %v1848 = vunpack.c.l.b16 %v213
  %v1849 = vunpack.c.h.b16 %v213
  %v1850 = vunpack.c.l.b16 %v214
  %v1851 = vunpack.c.h.b16 %v214
  %v1852 = vunpack.c.l.b16 %v215
  %v1853 = vunpack.c.h.b16 %v215
  %v1854 = vunpack.c.l.b16 %v216
  %v1855 = vunpack.c.h.b16 %v216
  %v1856 = vunpack.c.l.b16 %v217
  %v1857 = vunpack.c.h.b16 %v217
  %v1858 = vunpack.c.l.b16 %v218
  %v1859 = vunpack.c.h.b16 %v218
  %v1860 = vunpack.c.l.b16 %v219
  %v1861 = vunpack.c.h.b16 %v219
  %v1862 = vunpack.c.l.b16 %v220
  %v1863 = vunpack.c.h.b16 %v220
  %v1864 = vunpack.c.l.b16 %v221
  %v1865 = vunpack.c.h.b16 %v221
  %v1866 = vunpack.c.l.b16 %v222
  %v1867 = vunpack.c.h.b16 %v222
  %v1868 = vunpack.c.l.b16 %v223
  %v1869 = vunpack.c.h.b16 %v223
  %v1870 = vunpack.c.l.b16 %v224
  %v1871 = vunpack.c.h.b16 %v224
  %v1872 = vunpack.c.l.b16 %v225
  %v1873 = vunpack.c.h.b16 %v225
  %v1874 = vunpack.c.l.b16 %v226
  %v1875 = vunpack.c.h.b16 %v226
  %v1876 = vunpack.c.l.b16 %v227
  %v1877 = vunpack.c.h.b16 %v227
  %v1878 = vunpack.c.l.b16 %v228
  %v1879 = vunpack.c.h.b16 %v228
  %v1880 = vunpack.c.l.b16 %v229
  %v1881 = vunpack.c.h.b16 %v229
  %v1882 = vunpack.c.l.b16 %v230
  %v1883 = vunpack.c.h.b16 %v230
  %v1884 = vunpack.c.l.b16 %v231
  %v1885 = vunpack.c.h.b16 %v231
  %v1886 = vunpack.c.l.b16 %v232
  %v1887 = vunpack.c.h.b16 %v232
  %v1888 = vunpack.c.l.b16 %v233
  %v1889 = vunpack.c.h.b16 %v233
  %v1890 = vunpack.c.l.b16 %v234
  %v1891 = vunpack.c.h.b16 %v234
  %v1892 = vunpack.c.l.b16 %v235
  %v1893 = vunpack.c.h.b16 %v235
  %v1894 = vunpack.c.l.b16 %v236
  %v1895 = vunpack.c.h.b16 %v236
  %v1896 = vunpack.c.l.b16 %v237
  %v1897 = vunpack.c.h.b16 %v237
  %v1898 = vunpack.c.l.b16 %v238
  %v1899 = vunpack.c.h.b16 %v238
  %v1900 = vunpack.c.l.b16 %v239
  %v1901 = vunpack.c.h.b16 %v239
  %v1902 = vunpack.c.l.b16 %v240
  %v1903 = vunpack.c.h.b16 %v240
  %v1904 = vunpack.c.l.b16 %v241
  %v1905 = vunpack.c.h.b16 %v241
  %v1906 = vunpack.c.l.b16 %v242
  %v1907 = vunpack.c.h.b16 %v242
  %v1908 = vunpack.c.l.b16 %v243
  %v1909 = vunpack.c.h.b16 %v243
  %v1910 = vunpack.c.l.b16 %v244
  %v1911 = vunpack.c.h.b16 %v244
  %v1912 = vunpack.c.l.b16 %v245
  %v1913 = vunpack.c.h.b16 %v245
  %v1914 = vunpack.c.l.b16 %v246
  %v1915 = vunpack.c.h.b16 %v246
  %v1916 = vunpack.c.l.b16 %v247
  %v1917 = vunpack.c.h.b16 %v247
  %v1918 = vunpack.c.l.b16 %v248
  %v1919 = vunpack.c.h.b16 %v248
  %v1920 = vunpack.c.l.b16 %v249
  %v1921 = vunpack.c.h.b16 %v249
  %v1922 = vunpack.c.l.b16 %v250
  %v1923 = vunpack.c.h.b16 %v250
  %v1924 = vunpack.c.l.b16 %v251
  %v1925 = vunpack.c.h.b16 %v251
  %v1926 = vunpack.c.l.b16 %v252
  %v1927 = vunpack.c.h.b16 %v252
  %v1928 = vunpack.c.l.b16 %v253
  %v1929 = vunpack.c.h.b16 %v253
  %v1930 = vunpack.c.l.b16 %v254
  %v1931 = vunpack.c.h.b16 %v254
  %v1932 = vunpack.c.l.b16 %v255
  %v1933 = vunpack.c.h.b16 %v255
  %v1934 = vunpack.c.l.b16 %v256
  %v1935 = vunpack.c.h.b16 %v256
  %v1936 = vunpack.c.l.b16 %v257
  %v1937 = vunpack.c.h.b16 %v257
  %v1938 = vunpack.c.l.b16 %v258
  %v1939 = vunpack.c.h.b16 %v258
  %v1940 = vunpack.c.l.b16 %v259
  %v1941 = vunpack.c.h.b16 %v259
  %v1942 = vunpack.c.l.b16 %v260
  %v1943 = vunpack.c.h.b16 %v260
  %v1944 = vunpack.c.l.b16 %v261
  %v1945 = vunpack.c.h.b16 %v261
  %v1946 = vunpack.c.l.b16 %v262
  %v1947 = vunpack.c.h.b16 %v262
  %v1948 = vunpack.c.l.b16 %v263
  %v1949 = vunpack.c.h.b16 %v263
  %v1950 = vunpack.c.l.b16 %v264
  %v1951 = vunpack.c.h.b16 %v264
  %v1952 = vunpack.c.l.b16 %v265
  %v1953 = vunpack.c.h.b16 %v265
  %v1954 = vunpack.c.l.b16 %v266
  %v1955 = vunpack.c.h.b16 %v266
  %v1956 = vunpack.c.l.b16 %v267
  %v1957 = vunpack.c.h.b16 %v267
  %v1958 = vunpack.c.l.b16 %v268
  %v1959 = vunpack.c.h.b16 %v268
  %v1960 = vunpack.c.l.b16 %v269
  %v1961 = vunpack.c.h.b16 %v269
  %v1962 = vunpack.c.l.b16 %v270
  %v1963 = vunpack.c.h.b16 %v270
  %v1964 = vunpack.c.l.b16 %v271
  %v1965 = vunpack.c.h.b16 %v271
  %v1966 = vunpack.c.l.b16 %v272
  %v1967 = vunpack.c.h.b16 %v272
  %v1968 = vunpack.c.l.b16 %v273
  %v1969 = vunpack.c.h.b16 %v273
  %v1970 = vunpack.c.l.b16 %v274
  %v1971 = vunpack.c.h.b16 %v274
  %v1972 = vunpack.c.l.b16 %v275
  %v1973 = vunpack.c.h.b16 %v275
  %v1974 = vunpack.c.l.b16 %v276
  %v1975 = vunpack.c.h.b16 %v276
  %v1976 = vunpack.c.l.b16 %v277
  %v1977 = vunpack.c.h.b16 %v277
  %v1978 = vunpack.c.l.b16 %v278
  %v1979 = vunpack.c.h.b16 %v278
  %v1980 = vunpack.c.l.b16 %v279
  %v1981 = vunpack.c.h.b16 %v279
  %v1982 = vunpack.c.l.b16 %v280
  %v1983 = vunpack.c.h.b16 %v280
  %v1984 = vunpack.c.l.b16 %v281
  %v1985 = vunpack.c.h.b16 %v281
  %v1986 = vunpack.c.l.b16 %v282
  %v1987 = vunpack.c.h.b16 %v282
  %v1988 = vunpack.c.l.b16 %v283
  %v1989 = vunpack.c.h.b16 %v283
  %v1990 = vunpack.c.l.b16 %v284
  %v1991 = vunpack.c.h.b16 %v284
  %v1992 = vunpack.c.l.b16 %v285
  %v1993 = vunpack.c.h.b16 %v285
  %v1994 = vunpack.c.l.b16 %v286
  %v1995 = vunpack.c.h.b16 %v286
  %v1996 = vunpack.c.l.b16 %v287
  %v1997 = vunpack.c.h.b16 %v287
  %v1998 = vunpack.c.l.b16 %v288
  %v1999 = vunpack.c.h.b16 %v288
  %v2000 = vunpack.c.l.b16 %v289
  %v2001 = vunpack.c.h.b16 %v289
  %v2002 = vunpack.c.l.b16 %v290
  %v2003 = vunpack.c.h.b16 %v290
  %v2004 = vunpack.c.l.b16 %v291
  %v2005 = vunpack.c.h.b16 %v291
  %v2006 = vunpack.c.l.b16 %v292
  %v2007 = vunpack.c.h.b16 %v292
  %v2008 = vunpack.c.l.b16 %v293
  %v2009 = vunpack.c.h.b16 %v293
  %v2010 = vunpack.c.l.b16 %v294
  %v2011 = vunpack.c.h.b16 %v294
  %v2012 = vunpack.c.l.b16 %v295
  %v2013 = vunpack.c.h.b16 %v295
  %v2014 = vunpack.c.l.b16 %v296
  %v2015 = vunpack.c.h.b16 %v296
  %v2016 = vunpack.c.l.b16 %v297
  %v2017 = vunpack.c.h.b16 %v297
  %v2018 = vunpack.c.l.b16 %v298
  %v2019 = vunpack.c.h.b16 %v298
  %v2020 = vunpack.c.l.b16 %v299
  %v2021 = vunpack.c.h.b16 %v299
  %v2022 = vunpack.c.l.b16 %v300
  %v2023 = vunpack.c.h.b16 %v300
  %v2024 = vunpack.c.l.b16 %v301
  %v2025 = vunpack.c.h.b16 %v301
  %v2026 = vunpack.c.l.b16 %v302
  %v2027 = vunpack.c.h.b16 %v302
  %v2028 = vunpack.c.l.b16 %v303
  %v2029 = vunpack.c.h.b16 %v303
  %v2030 = vunpack.c.l.b16 %v304
  %v2031 = vunpack.c.h.b16 %v304
  %v2032 = vunpack.c.l.b16 %v305
  %v2033 = vunpack.c.h.b16 %v305
  %v2034 = vunpack.c.l.b16 %v306
  %v2035 = vunpack.c.h.b16 %v306
  %v2036 = vunpack.c.l.b16 %v307
  %v2037 = vunpack.c.h.b16 %v307
  %v2038 = vunpack.c.l.b16 %v308
  %v2039 = vunpack.c.h.b16 %v308
  %v2040 = vunpack.c.l.b16 %v309
  %v2041 = vunpack.c.h.b16 %v309
  %v2042 = vunpack.c.l.b16 %v310
  %v2043 = vunpack.c.h.b16 %v310
  %v2044 = vunpack.c.l.b16 %v311
  %v2045 = vunpack.c.h.b16 %v311
  %v2046 = vunpack.c.l.b16 %v312
  %v2047 = vunpack.c.h.b16 %v312
  %v2048 = vunpack.c.l.b16 %v313
  %v2049 = vunpack.c.h.b16 %v313
  %v2050 = vunpack.c.l.b16 %v314
  %v2051 = vunpack.c.h.b16 %v314
  %v2052 = vunpack.c.l.b16 %v315
  %v2053 = vunpack.c.h.b16 %v315
  %v2054 = vunpack.c.l.b16 %v316
  %v2055 = vunpack.c.h.b16 %v316
  %v2056 = vunpack.c.l.b16 %v317
  %v2057 = vunpack.c.h.b16 %v317
  %v2058 = vunpack.c.l.b16 %v318
  %v2059 = vunpack.c.h.b16 %v318
  %v2060 = vunpack.c.l.b16 %v319
  %v2061 = vunpack.c.h.b16 %v319
  %v2062 = vunpack.c.l.b16 %v320
  %v2063 = vunpack.c.h.b16 %v320
  %v2064 = vunpack.c.l.b16 %v321
  %v2065 = vunpack.c.h.b16 %v321
  %v2066 = vunpack.c.l.b16 %v322
  %v2067 = vunpack.c.h.b16 %v322
  %v2068 = vunpack.c.l.b16 %v323
  %v2069 = vunpack.c.h.b16 %v323
  %v2070 = vunpack.c.l.b16 %v324
  %v2071 = vunpack.c.h.b16 %v324
  %v2072 = vunpack.c.l.b16 %v325
  %v2073 = vunpack.c.h.b16 %v325
  %v2074 = vunpack.c.l.b16 %v326
  %v2075 = vunpack.c.h.b16 %v326
  %v2076 = vunpack.c.l.b16 %v327
  %v2077 = vunpack.c.h.b16 %v327
  %v2078 = vunpack.c.l.b16 %v328
  %v2079 = vunpack.c.h.b16 %v328
  %v2080 = vunpack.c.l.b16 %v329
  %v2081 = vunpack.c.h.b16 %v329
  %v2082 = vunpack.c.l.b16 %v330
  %v2083 = vunpack.c.h.b16 %v330
  %v2084 = vunpack.c.l.b16 %v331
  %v2085 = vunpack.c.h.b16 %v331
  %v2086 = vunpack.c.l.b16 %v332
  %v2087 = vunpack.c.h.b16 %v332
  %v2088 = vunpack.c.l.b16 %v333
  %v2089 = vunpack.c.h.b16 %v333
  %v2090 = vunpack.c.l.b16 %v334
  %v2091 = vunpack.c.h.b16 %v334
  %v2092 = vunpack.c.l.b16 %v335
  %v2093 = vunpack.c.h.b16 %v335
  %v2094 = vunpack.c.l.b16 %v336
  %v2095 = vunpack.c.h.b16 %v336
  %v2096 = vunpack.c.l.b16 %v337
  %v2097 = vunpack.c.h.b16 %v337
  %v2098 = vunpack.c.l.b16 %v338
  %v2099 = vunpack.c.h.b16 %v338
  %v2100 = vunpack.c.l.b16 %v339
  %v2101 = vunpack.c.h.b16 %v339
  %v2102 = vunpack.c.l.b16 %v340
  %v2103 = vunpack.c.h.b16 %v340
  %v2104 = vunpack.c.l.b16 %v341
  %v2105 = vunpack.c.h.b16 %v341
  %v2106 = vunpack.c.l.b16 %v342
  %v2107 = vunpack.c.h.b16 %v342
  %v2108 = vunpack.c.l.b16 %v343
  %v2109 = vunpack.c.h.b16 %v343
  %v2110 = vunpack.c.l.b16 %v344
  %v2111 = vunpack.c.h.b16 %v344
  %v2112 = vunpack.c.l.b16 %v345
  %v2113 = vunpack.c.h.b16 %v345
  %v2114 = vunpack.c.l.b16 %v346
  %v2115 = vunpack.c.h.b16 %v346
  %v2116 = vunpack.c.l.b16 %v347
  %v2117 = vunpack.c.h.b16 %v347
  %v2118 = vunpack.c.l.b16 %v348
  %v2119 = vunpack.c.h.b16 %v348
  %v2120 = vunpack.c.l.b16 %v349
  %v2121 = vunpack.c.h.b16 %v349
  %v2122 = vunpack.c.l.b16 %v350
  %v2123 = vunpack.c.h.b16 %v350
  %v2124 = vunpack.c.l.b16 %v351
  %v2125 = vunpack.c.h.b16 %v351
  %v2126 = vunpack.c.l.b16 %v352
  %v2127 = vunpack.c.h.b16 %v352
  %v2128 = vunpack.c.l.b16 %v353
  %v2129 = vunpack.c.h.b16 %v353
  %v2130 = vunpack.c.l.b16 %v354
  %v2131 = vunpack.c.h.b16 %v354
  %v2132 = vunpack.c.l.b16 %v355
  %v2133 = vunpack.c.h.b16 %v355
  %v2134 = vunpack.c.l.b16 %v356
  %v2135 = vunpack.c.h.b16 %v356
  %v2136 = vunpack.c.l.b16 %v357
  %v2137 = vunpack.c.h.b16 %v357
  %v2138 = vunpack.c.l.b16 %v358
  %v2139 = vunpack.c.h.b16 %v358
  %v2140 = vunpack.c.l.b16 %v359
  %v2141 = vunpack.c.h.b16 %v359
  %v2142 = vunpack.c.l.b16 %v360
  %v2143 = vunpack.c.h.b16 %v360
  %v2144 = vunpack.c.l.b16 %v361
  %v2145 = vunpack.c.h.b16 %v361
  %v2146 = vunpack.c.l.b16 %v362
  %v2147 = vunpack.c.h.b16 %v362
  %v2148 = vunpack.c.l.b16 %v363
  %v2149 = vunpack.c.h.b16 %v363
  %v2150 = vunpack.c.l.b16 %v364
  %v2151 = vunpack.c.h.b16 %v364
  %v2152 = vunpack.c.l.b16 %v365
  %v2153 = vunpack.c.h.b16 %v365
  %v2154 = vunpack.c.l.b16 %v366
  %v2155 = vunpack.c.h.b16 %v366
  %v2156 = vunpack.c.l.b16 %v367
  %v2157 = vunpack.c.h.b16 %v367
  %v2158 = vunpack.c.l.b16 %v368
  %v2159 = vunpack.c.h.b16 %v368
  %v2160 = vunpack.c.l.b16 %v369
  %v2161 = vunpack.c.h.b16 %v369
  %v2162 = vunpack.c.l.b16 %v370
  %v2163 = vunpack.c.h.b16 %v370
  %v2164 = vunpack.c.l.b16 %v371
  %v2165 = vunpack.c.h.b16 %v371
  %v2166 = vunpack.c.l.b16 %v372
  %v2167 = vunpack.c.h.b16 %v372
  %v2168 = vunpack.c.l.b16 %v373
  %v2169 = vunpack.c.h.b16 %v373
  %v2170 = vunpack.c.l.b16 %v374
  %v2171 = vunpack.c.h.b16 %v374
  %v2172 = vunpack.c.l.b16 %v375
  %v2173 = vunpack.c.h.b16 %v375
  %v2174 = vunpack.c.l.b16 %v376
  %v2175 = vunpack.c.h.b16 %v376
  %v2176 = vunpack.c.l.b16 %v377
  %v2177 = vunpack.c.h.b16 %v377
  %v2178 = vunpack.c.l.b16 %v378
  %v2179 = vunpack.c.h.b16 %v378
  %v2180 = vunpack.c.l.b16 %v379
  %v2181 = vunpack.c.h.b16 %v379
  %v2182 = vunpack.c.l.b16 %v380
  %v2183 = vunpack.c.h.b16 %v380
  %v2184 = vunpack.c.l.b16 %v381
  %v2185 = vunpack.c.h.b16 %v381
  %v2186 = vunpack.c.l.b16 %v382
  %v2187 = vunpack.c.h.b16 %v382
  %v2188 = vunpack.c.l.b16 %v383
  %v2189 = vunpack.c.h.b16 %v383
  %v2190 = vunpack.c.l.b16 %v384
  %v2191 = vunpack.c.h.b16 %v384
  %v2192 = vunpack.c.l.b16 %v385
  %v2193 = vunpack.c.h.b16 %v385
  %v2194 = vunpack.c.l.b16 %v386
  %v2195 = vunpack.c.h.b16 %v386
  %v2196 = vunpack.c.l.b16 %v387
  %v2197 = vunpack.c.h.b16 %v387
  %v2198 = vunpack.c.l.b16 %v388
  %v2199 = vunpack.c.h.b16 %v388
  %v2200 = vunpack.c.l.b16 %v389
  %v2201 = vunpack.c.h.b16 %v389
  %v2202 = vunpack.c.l.b16 %v390
  %v2203 = vunpack.c.h.b16 %v390
  %v2204 = vunpack.c.l.b16 %v391
  %v2205 = vunpack.c.h.b16 %v391
  %v2206 = vunpack.c.l.b16 %v392
  %v2207 = vunpack.c.h.b16 %v392
  %v2208 = vunpack.c.l.b16 %v393
  %v2209 = vunpack.c.h.b16 %v393
  %v2210 = vunpack.c.l.b16 %v394
  %v2211 = vunpack.c.h.b16 %v394
  %v2212 = vunpack.c.l.b16 %v395
  %v2213 = vunpack.c.h.b16 %v395
  %v2214 = vunpack.c.l.b16 %v396
  %v2215 = vunpack.c.h.b16 %v396
  %v2216 = vunpack.c.l.b16 %v397
  %v2217 = vunpack.c.h.b16 %v397
  %v2218 = vunpack.c.l.b16 %v398
  %v2219 = vunpack.c.h.b16 %v398
  %v2220 = vunpack.c.l.b16 %v399
  %v2221 = vunpack.c.h.b16 %v399
  %v2222 = vunpack.c.l.b16 %v400
  %v2223 = vunpack.c.h.b16 %v400
  %v2224 = vunpack.c.l.b16 %v401
  %v2225 = vunpack.c.h.b16 %v401
  %v2226 = vunpack.c.l.b16 %v402
  %v2227 = vunpack.c.h.b16 %v402
  %v2228 = vunpack.c.l.b16 %v403
  %v2229 = vunpack.c.h.b16 %v403
  %v2230 = vunpack.c.l.b16 %v404
  %v2231 = vunpack.c.h.b16 %v404
  %v2232 = vunpack.c.l.b16 %v405
  %v2233 = vunpack.c.h.b16 %v405
  %v2234 = vunpack.c.l.b16 %v406
  %v2235 = vunpack.c.h.b16 %v406
  %v2236 = vunpack.c.l.b16 %v407
  %v2237 = vunpack.c.h.b16 %v407
  %v2238 = vunpack.c.l.b16 %v408
  %v2239 = vunpack.c.h.b16 %v408
  %v2240 = vunpack.c.l.b16 %v409
  %v2241 = vunpack.c.h.b16 %v409
  %v2242 = vunpack.c.l.b16 %v410
  %v2243 = vunpack.c.h.b16 %v410
  %v2244 = vunpack.c.l.b16 %v411
  %v2245 = vunpack.c.h.b16 %v411
  %v2246 = vunpack.c.l.b16 %v412
  %v2247 = vunpack.c.h.b16 %v412
  %v2248 = vunpack.c.l.b16 %v413
  %v2249 = vunpack.c.h.b16 %v413
  %v2250 = vunpack.c.l.b16 %v414
  %v2251 = vunpack.c.h.b16 %v414
  %v2252 = vunpack.c.l.b16 %v415
  %v2253 = vunpack.c.h.b16 %v415
  %v2254 = vunpack.c.l.b16 %v416
  %v2255 = vunpack.c.h.b16 %v416
  %v2256 = vunpack.c.l.b16 %v417
  %v2257 = vunpack.c.h.b16 %v417
  %v2258 = vunpack.c.l.b16 %v418
  %v2259 = vunpack.c.h.b16 %v418
  %v2260 = vunpack.c.l.b16 %v419
  %v2261 = vunpack.c.h.b16 %v419
  %v2262 = vunpack.c.l.b16 %v420
  %v2263 = vunpack.c.h.b16 %v420
  %v2264 = vunpack.c.l.b16 %v421
  %v2265 = vunpack.c.h.b16 %v421
  %v2266 = vunpack.c.l.b16 %v422
  %v2267 = vunpack.c.h.b16 %v422
  %v2268 = vunpack.c.l.b16 %v423
  %v2269 = vunpack.c.h.b16 %v423
  %v2270 = vunpack.c.l.b16 %v424
  %v2271 = vunpack.c.h.b16 %v424
  %v2272 = vunpack.c.l.b16 %v425
  %v2273 = vunpack.c.h.b16 %v425
  %v2274 = vunpack.c.l.b16 %v426
  %v2275 = vunpack.c.h.b16 %v426
  %v2276 = vunpack.c.l.b16 %v427
  %v2277 = vunpack.c.h.b16 %v427
  %v2278 = vunpack.c.l.b16 %v428
  %v2279 = vunpack.c.h.b16 %v428
  %v2280 = vunpack.c.l.b16 %v429
  %v2281 = vunpack.c.h.b16 %v429
  %v2282 = vunpack.c.l.b16 %v430
  %v2283 = vunpack.c.h.b16 %v430
  %v2284 = vunpack.c.l.b16 %v431
  %v2285 = vunpack.c.h.b16 %v431
  %v2286 = vunpack.c.l.b16 %v432
  %v2287 = vunpack.c.h.b16 %v432
  %v2288 = vunpack.c.l.b16 %v433
  %v2289 = vunpack.c.h.b16 %v433
  %v2290 = vunpack.c.l.b16 %v434
  %v2291 = vunpack.c.h.b16 %v434
  %v2292 = vunpack.c.l.b16 %v435
  %v2293 = vunpack.c.h.b16 %v435
  %v2294 = vunpack.c.l.b16 %v436
  %v2295 = vunpack.c.h.b16 %v436
  %v2296 = vunpack.c.l.b16 %v437
  %v2297 = vunpack.c.h.b16 %v437
  %v2298 = vunpack.c.l.b16 %v438
  %v2299 = vunpack.c.h.b16 %v438
  %v2300 = vunpack.c.l.b16 %v439
  %v2301 = vunpack.c.h.b16 %v439
  %v2302 = vunpack.c.l.b16 %v440
  %v2303 = vunpack.c.h.b16 %v440
  %v2304 = vunpack.c.l.b16 %v441
  %v2305 = vunpack.c.h.b16 %v441
  %v2306 = vunpack.c.l.b16 %v442
  %v2307 = vunpack.c.h.b16 %v442
  %v2308 = vunpack.c.l.b16 %v443
  %v2309 = vunpack.c.h.b16 %v443
  %v2310 = vunpack.c.l.b16 %v444
  %v2311 = vunpack.c.h.b16 %v444
  %v2312 = vunpack.c.l.b16 %v445
  %v2313 = vunpack.c.h.b16 %v445
  %v2314 = vunpack.c.l.b16 %v446
  %v2315 = vunpack.c.h.b16 %v446
  %v2316 = vunpack.c.l.b16 %v447
  %v2317 = vunpack.c.h.b16 %v447
  %v2318 = vunpack.c.l.b16 %v448
  %v2319 = vunpack.c.h.b16 %v448
  %v2320 = vunpack.c.l.b16 %v449
  %v2321 = vunpack.c.h.b16 %v449
  %v2322 = vunpack.c.l.b16 %v450
  %v2323 = vunpack.c.h.b16 %v450
  %v2324 = vunpack.c.l.b16 %v451
  %v2325 = vunpack.c.h.b16 %v451
  %v2326 = vunpack.c.l.b16 %v452
  %v2327 = vunpack.c.h.b16 %v452
  %v2328 = vunpack.c.l.b16 %v453
  %v2329 = vunpack.c.h.b16 %v453
  %v2330 = vunpack.c.l.b16 %v454
  %v2331 = vunpack.c.h.b16 %v454
  %v2332 = vunpack.c.l.b16 %v455
  %v2333 = vunpack.c.h.b16 %v455
  %v2334 = vunpack.c.l.b16 %v456
  %v2335 = vunpack.c.h.b16 %v456
  %v2336 = vunpack.c.l.b16 %v457
  %v2337 = vunpack.c.h.b16 %v457
  %v2338 = vunpack.c.l.b16 %v458
  %v2339 = vunpack.c.h.b16 %v458
  %v2340 = vunpack.c.l.b16 %v459
  %v2341 = vunpack.c.h.b16 %v459
  %v2342 = vunpack.c.l.b16 %v460
  %v2343 = vunpack.c.h.b16 %v460
  %v2344 = vunpack.c.l.b16 %v461
  %v2345 = vunpack.c.h.b16 %v461
  %v2346 = vunpack.c.l.b16 %v462
  %v2347 = vunpack.c.h.b16 %v462
  %v2348 = vunpack.c.l.b16 %v463
  %v2349 = vunpack.c.h.b16 %v463
  %v2350 = vunpack.c.l.b16 %v464
  %v2351 = vunpack.c.h.b16 %v464
  %v2352 = vunpack.c.l.b16 %v465
  %v2353 = vunpack.c.h.b16 %v465
  %v2354 = vunpack.c.l.b16 %v466
  %v2355 = vunpack.c.h.b16 %v466
  %v2356 = vunpack.c.l.b16 %v467
  %v2357 = vunpack.c.h.b16 %v467
  %v2358 = vunpack.c.l.b16 %v468
  %v2359 = vunpack.c.h.b16 %v468
  %v2360 = vunpack.c.l.b16 %v469
  %v2361 = vunpack.c.h.b16 %v469
  %v2362 = vunpack.c.l.b16 %v470
  %v2363 = vunpack.c.h.b16 %v470
  %v2364 = vunpack.c.l.b16 %v471
  %v2365 = vunpack.c.h.b16 %v471
  %v2366 = vunpack.c.l.b16 %v472
  %v2367 = vunpack.c.h.b16 %v472
  %v2368 = vunpack.c.l.b16 %v473
  %v2369 = vunpack.c.h.b16 %v473
  %v2370 = vunpack.c.l.b16 %v474
  %v2371 = vunpack.c.h.b16 %v474
  %v2372 = vunpack.c.l.b16 %v475
  %v2373 = vunpack.c.h.b16 %v475
  %v2374 = vunpack.c.l.b16 %v476
  %v2375 = vunpack.c.h.b16 %v476
  %v2376 = vunpack.c.l.b16 %v477
  %v2377 = vunpack.c.h.b16 %v477
  %v2378 = vunpack.c.l.b16 %v478
  %v2379 = vunpack.c.h.b16 %v478
  %v2380 = vunpack.c.l.b16 %v479
  %v2381 = vunpack.c.h.b16 %v479
  %v2382 = vunpack.c.l.b16 %v480
  %v2383 = vunpack.c.h.b16 %v480
  %v2384 = vunpack.c.l.b16 %v481
  %v2385 = vunpack.c.h.b16 %v481
  %v2386 = vunpack.c.l.b16 %v482
  %v2387 = vunpack.c.h.b16 %v482
  %v2388 = vunpack.c.l.b16 %v483
  %v2389 = vunpack.c.h.b16 %v483
  %v2390 = vunpack.c.l.b16 %v484
  %v2391 = vunpack.c.h.b16 %v484
  %v2392 = vunpack.c.l.b16 %v485
  %v2393 = vunpack.c.h.b16 %v485
  %v2394 = vunpack.c.l.b16 %v486
  %v2395 = vunpack.c.h.b16 %v486
  %v2396 = vunpack.c.l.b16 %v487
  %v2397 = vunpack.c.h.b16 %v487
  %v2398 = vunpack.c.l.b16 %v488
  %v2399 = vunpack.c.h.b16 %v488
  %v2400 = vunpack.c.l.b16 %v489
  %v2401 = vunpack.c.h.b16 %v489
  %v2402 = vunpack.c.l.b16 %v490
  %v2403 = vunpack.c.h.b16 %v490
  %v2404 = vunpack.c.l.b16 %v491
  %v2405 = vunpack.c.h.b16 %v491
  %v2406 = vunpack.c.l.b16 %v492
  %v2407 = vunpack.c.h.b16 %v492
  %v2408 = vunpack.c.l.b16 %v493
  %v2409 = vunpack.c.h.b16 %v493
  %v2410 = vunpack.c.l.b16 %v494
  %v2411 = vunpack.c.h.b16 %v494
  %v2412 = vunpack.c.l.b16 %v495
  %v2413 = vunpack.c.h.b16 %v495
  %v2414 = vunpack.c.l.b16 %v496
  %v2415 = vunpack.c.h.b16 %v496
  %v2416 = vunpack.c.l.b16 %v497
  %v2417 = vunpack.c.h.b16 %v497
  %v2418 = vunpack.c.l.b16 %v498
  %v2419 = vunpack.c.h.b16 %v498
  %v2420 = vunpack.c.l.b16 %v499
  %v2421 = vunpack.c.h.b16 %v499
  %v2422 = vunpack.c.l.b16 %v500
  %v2423 = vunpack.c.h.b16 %v500
  %v2424 = vunpack.c.l.b16 %v501
  %v2425 = vunpack.c.h.b16 %v501
  %v2426 = vunpack.c.l.b16 %v502
  %v2427 = vunpack.c.h.b16 %v502
  %v2428 = vunpack.c.l.b16 %v503
  %v2429 = vunpack.c.h.b16 %v503
  %v2430 = vunpack.c.l.b16 %v504
  %v2431 = vunpack.c.h.b16 %v504
  %v2432 = vunpack.c.l.b16 %v505
  %v2433 = vunpack.c.h.b16 %v505
  %v2434 = vunpack.c.l.b16 %v506
  %v2435 = vunpack.c.h.b16 %v506
  %v2436 = vunpack.c.l.b16 %v507
  %v2437 = vunpack.c.h.b16 %v507
  %v2438 = vunpack.c.l.b16 %v508
  %v2439 = vunpack.c.h.b16 %v508
  %v2440 = vunpack.c.l.b16 %v509
  %v2441 = vunpack.c.h.b16 %v509
  %v2442 = vunpack.c.l.b16 %v510
  %v2443 = vunpack.c.h.b16 %v510
  %v2444 = vunpack.c.l.b16 %v511
  %v2445 = vunpack.c.h.b16 %v511
  %v2446 = vunpack.c.l.b16 %v512
  %v2447 = vunpack.c.h.b16 %v512
  %v2448 = vunpack.c.l.b16 %v513
  %v2449 = vunpack.c.h.b16 %v513
  %v2450 = vunpack.c.l.b16 %v514
  %v2451 = vunpack.c.h.b16 %v514
  %v2452 = vunpack.c.l.b16 %v515
  %v2453 = vunpack.c.h.b16 %v515
  %v2454 = vunpack.c.l.b16 %v516
  %v2455 = vunpack.c.h.b16 %v516
  %v2456 = vunpack.c.l.b16 %v517
  %v2457 = vunpack.c.h.b16 %v517
  %v2458 = vunpack.c.l.b16 %v518
  %v2459 = vunpack.c.h.b16 %v518
  %v2460 = vunpack.c.l.b16 %v519
  %v2461 = vunpack.c.h.b16 %v519
  %v2462 = vunpack.c.l.b16 %v520
  %v2463 = vunpack.c.h.b16 %v520
  %v2464 = vunpack.c.l.b16 %v521
  %v2465 = vunpack.c.h.b16 %v521
  %v2466 = vunpack.c.l.b16 %v522
  %v2467 = vunpack.c.h.b16 %v522
  %v2468 = vunpack.c.l.b16 %v523
  %v2469 = vunpack.c.h.b16 %v523
  %v2470 = vunpack.c.l.b16 %v524
  %v2471 = vunpack.c.h.b16 %v524
  %v2472 = vunpack.c.l.b16 %v525
  %v2473 = vunpack.c.h.b16 %v525
  %v2474 = vunpack.c.l.b16 %v526
  %v2475 = vunpack.c.h.b16 %v526
  %v2476 = vunpack.c.l.b16 %v527
  %v2477 = vunpack.c.h.b16 %v527
  %v2478 = vunpack.c.l.b16 %v528
  %v2479 = vunpack.c.h.b16 %v528
  %v2480 = vunpack.c.l.b16 %v529
  %v2481 = vunpack.c.h.b16 %v529
  %v2482 = vunpack.c.l.b16 %v530
  %v2483 = vunpack.c.h.b16 %v530
  %v2484 = vunpack.c.l.b16 %v531
  %v2485 = vunpack.c.h.b16 %v531
  %v2486 = vunpack.c.l.b16 %v532
  %v2487 = vunpack.c.h.b16 %v532
  %v2488 = vunpack.c.l.b16 %v533
  %v2489 = vunpack.c.h.b16 %v533
  %v2490 = vunpack.c.l.b16 %v534
  %v2491 = vunpack.c.h.b16 %v534
  %v2492 = vunpack.c.l.b16 %v535
  %v2493 = vunpack.c.h.b16 %v535
  %v2494 = vunpack.c.l.b16 %v536
  %v2495 = vunpack.c.h.b16 %v536
  %v2496 = vunpack.c.l.b16 %v537
  %v2497 = vunpack.c.h.b16 %v537
  %v2498 = vunpack.c.l.b16 %v538
  %v2499 = vunpack.c.h.b16 %v538
  %v2500 = vunpack.c.l.b16 %v539
  %v2501 = vunpack.c.h.b16 %v539
  %v2502 = vunpack.c.l.b16 %v540
  %v2503 = vunpack.c.h.b16 %v540
  %v2504 = vunpack.c.l.b16 %v541
  %v2505 = vunpack.c.h.b16 %v541
  %v2506 = vunpack.c.l.b16 %v542
  %v2507 = vunpack.c.h.b16 %v542
  %v2508 = vunpack.c.l.b16 %v543
  %v2509 = vunpack.c.h.b16 %v543
  %v2510 = vunpack.c.l.b16 %v544
  %v2511 = vunpack.c.h.b16 %v544
  %v2512 = vunpack.c.l.b16 %v545
  %v2513 = vunpack.c.h.b16 %v545
  %v2514 = vunpack.c.l.b16 %v546
  %v2515 = vunpack.c.h.b16 %v546
  %v2516 = vunpack.c.l.b16 %v547
  %v2517 = vunpack.c.h.b16 %v547
  %v2518 = vunpack.c.l.b16 %v548
  %v2519 = vunpack.c.h.b16 %v548
  %v2520 = vunpack.c.l.b16 %v549
  %v2521 = vunpack.c.h.b16 %v549
  %v2522 = vunpack.c.l.b16 %v550
  %v2523 = vunpack.c.h.b16 %v550
  %v2524 = vunpack.c.l.b16 %v551
  %v2525 = vunpack.c.h.b16 %v551
  %v2526 = vunpack.c.l.b16 %v552
  %v2527 = vunpack.c.h.b16 %v552
  %v2528 = vunpack.c.l.b16 %v553
  %v2529 = vunpack.c.h.b16 %v553
  %v2530 = vunpack.c.l.b16 %v554
  %v2531 = vunpack.c.h.b16 %v554
  %v2532 = vunpack.c.l.b16 %v555
  %v2533 = vunpack.c.h.b16 %v555
  %v2534 = vunpack.c.l.b16 %v556
  %v2535 = vunpack.c.h.b16 %v556
  %v2536 = vunpack.c.l.b16 %v557
  %v2537 = vunpack.c.h.b16 %v557
  %v2538 = vunpack.c.l.b16 %v558
  %v2539 = vunpack.c.h.b16 %v558
  %v2540 = vunpack.c.l.b16 %v559
  %v2541 = vunpack.c.h.b16 %v559
  %v2542 = vunpack.c.l.b16 %v560
  %v2543 = vunpack.c.h.b16 %v560
  %v2544 = vunpack.c.l.b16 %v561
  %v2545 = vunpack.c.h.b16 %v561
  %v2546 = vunpack.c.l.b16 %v562
  %v2547 = vunpack.c.h.b16 %v562
  %v2548 = vunpack.c.l.b16 %v563
  %v2549 = vunpack.c.h.b16 %v563
  %v2550 = vunpack.c.l.b16 %v564
  %v2551 = vunpack.c.h.b16 %v564
  %v2552 = vunpack.c.l.b16 %v565
  %v2553 = vunpack.c.h.b16 %v565
  %v2554 = vunpack.c.l.b16 %v566
  %v2555 = vunpack.c.h.b16 %v566
  %v2556 = vunpack.c.l.b16 %v567
  %v2557 = vunpack.c.h.b16 %v567
  %v2558 = vunpack.c.l.b16 %v568
  %v2559 = vunpack.c.h.b16 %v568
  %v2560 = vunpack.c.l.b16 %v569
  %v2561 = vunpack.c.h.b16 %v569
  %v2562 = vunpack.c.l.b16 %v570
  %v2563 = vunpack.c.h.b16 %v570
  %v2564 = vunpack.c.l.b16 %v571
  %v2565 = vunpack.c.h.b16 %v571
  %v2566 = vunpack.c.l.b16 %v572
  %v2567 = vunpack.c.h.b16 %v572
  %v2568 = vunpack.c.l.b16 %v573
  %v2569 = vunpack.c.h.b16 %v573
  %v2570 = vunpack.c.l.b16 %v574
  %v2571 = vunpack.c.h.b16 %v574
  %v2572 = vunpack.c.l.b16 %v575
  %v2573 = vunpack.c.h.b16 %v575
  %v2574 = vunpack.c.l.b16 %v576
  %v2575 = vunpack.c.h.b16 %v576
  %v2576 = vunpack.c.l.b16 %v577
  %v2577 = vunpack.c.h.b16 %v577
  %v2578 = vunpack.c.l.b16 %v578
  %v2579 = vunpack.c.h.b16 %v578
  %v2580 = vunpack.c.l.b16 %v579
  %v2581 = vunpack.c.h.b16 %v579
  %v2582 = vunpack.c.l.b16 %v580
  %v2583 = vunpack.c.h.b16 %v580
  %v2584 = vunpack.c.l.b16 %v581
  %v2585 = vunpack.c.h.b16 %v581
  %v2586 = vunpack.c.l.b16 %v582
  %v2587 = vunpack.c.h.b16 %v582
  %v2588 = vunpack.c.l.b16 %v583
  %v2589 = vunpack.c.h.b16 %v583
  %v2590 = vunpack.c.l.b16 %v584
  %v2591 = vunpack.c.h.b16 %v584
  %v2592 = vunpack.c.l.b16 %v585
  %v2593 = vunpack.c.h.b16 %v585
  %v2594 = vunpack.c.l.b16 %v586
  %v2595 = vunpack.c.h.b16 %v586
  %v2596 = vunpack.c.l.b16 %v587
  %v2597 = vunpack.c.h.b16 %v587
  %v2598 = vunpack.c.l.b16 %v588
  %v2599 = vunpack.c.h.b16 %v588
  %v2600 = vunpack.c.l.b16 %v589
  %v2601 = vunpack.c.h.b16 %v589
  %v2602 = vunpack.c.l.b16 %v590
  %v2603 = vunpack.c.h.b16 %v590
  %v2604 = vunpack.c.l.b16 %v591
  %v2605 = vunpack.c.h.b16 %v591
  %v2606 = vunpack.c.l.b16 %v592
  %v2607 = vunpack.c.h.b16 %v592
  %v2608 = vunpack.c.l.b16 %v593
  %v2609 = vunpack.c.h.b16 %v593
  %v2610 = vpack.c.b16 %v1476, %v1458
  %v2611 = vpack.c.b16 %v1477, %v1459
  %v2612 = vpack.c.b16 %v1478, %v1460
  %v2613 = vpack.c.b16 %v1479, %v1461
  %v2614 = vpack.c.b16 %v1480, %v1462
  %v2615 = vpack.c.b16 %v1481, %v1463
  %v2616 = vpack.c.b16 %v1482, %v1464
  %v2617 = vpack.c.b16 %v1483, %v1465
  %v2618 = vpack.c.b16 %v1484, %v1466
  %v2619 = vpack.c.b16 %v1485, %v1467
  %v2620 = vpack.c.b16 %v1486, %v1468
  %v2621 = vpack.c.b16 %v1487, %v1469
  %v2622 = vpack.c.b16 %v1488, %v1470
  %v2623 = vpack.c.b16 %v1489, %v1471
  %v2624 = vpack.c.b16 %v1490, %v1472
  %v2625 = vpack.c.b16 %v1491, %v1473
  %v2626 = vpack.c.b16 %v1492, %v1474
  %v2627 = vpack.c.b16 %v1493, %v1475
  %v2628 = vpack.c.b16 %v1512, %v1494
  %v2629 = vpack.c.b16 %v1513, %v1495
  %v2630 = vpack.c.b16 %v1514, %v1496
  %v2631 = vpack.c.b16 %v1515, %v1497
  %v2632 = vpack.c.b16 %v1516, %v1498
  %v2633 = vpack.c.b16 %v1517, %v1499
  %v2634 = vpack.c.b16 %v1518, %v1500
  %v2635 = vpack.c.b16 %v1519, %v1501
  %v2636 = vpack.c.b16 %v1520, %v1502
  %v2637 = vpack.c.b16 %v1521, %v1503
  %v2638 = vpack.c.b16 %v1522, %v1504
  %v2639 = vpack.c.b16 %v1523, %v1505
  %v2640 = vpack.c.b16 %v1524, %v1506
  %v2641 = vpack.c.b16 %v1525, %v1507
  %v2642 = vpack.c.b16 %v1526, %v1508
  %v2643 = vpack.c.b16 %v1527, %v1509
  %v2644 = vpack.c.b16 %v1528, %v1510
  %v2645 = vpack.c.b16 %v1529, %v1511
  %v2646 = vpack.c.b16 %v1548, %v1530
  %v2647 = vpack.c.b16 %v1549, %v1531
  %v2648 = vpack.c.b16 %v1550, %v1532
  %v2649 = vpack.c.b16 %v1551, %v1533
  %v2650 = vpack.c.b16 %v1552, %v1534
  %v2651 = vpack.c.b16 %v1553, %v1535
  %v2652 = vpack.c.b16 %v1554, %v1536
  %v2653 = vpack.c.b16 %v1555, %v1537
  %v2654 = vpack.c.b16 %v1556, %v1538
  %v2655 = vpack.c.b16 %v1557, %v1539
  %v2656 = vpack.c.b16 %v1558, %v1540
  %v2657 = vpack.c.b16 %v1559, %v1541
  %v2658 = vpack.c.b16 %v1560, %v1542
  %v2659 = vpack.c.b16 %v1561, %v1543
  %v2660 = vpack.c.b16 %v1562, %v1544
  %v2661 = vpack.c.b16 %v1563, %v1545
  %v2662 = vpack.c.b16 %v1564, %v1546
  %v2663 = vpack.c.b16 %v1565, %v1547
  %v2664 = vpack.c.b16 %v1584, %v1566
  %v2665 = vpack.c.b16 %v1585, %v1567
  %v2666 = vpack.c.b16 %v1586, %v1568
  %v2667 = vpack.c.b16 %v1587, %v1569
  %v2668 = vpack.c.b16 %v1588, %v1570
  %v2669 = vpack.c.b16 %v1589, %v1571
  %v2670 = vpack.c.b16 %v1590, %v1572
  %v2671 = vpack.c.b16 %v1591, %v1573
  %v2672 = vpack.c.b16 %v1592, %v1574
  %v2673 = vpack.c.b16 %v1593, %v1575
  %v2674 = vpack.c.b16 %v1594, %v1576
  %v2675 = vpack.c.b16 %v1595, %v1577
  %v2676 = vpack.c.b16 %v1596, %v1578
  %v2677 = vpack.c.b16 %v1597, %v1579
  %v2678 = vpack.c.b16 %v1598, %v1580
  %v2679 = vpack.c.b16 %v1599, %v1581
  %v2680 = vpack.c.b16 %v1600, %v1582
  %v2681 = vpack.c.b16 %v1601, %v1583
  %v2682 = vpack.c.b16 %v1620, %v1602
  %v2683 = vpack.c.b16 %v1621, %v1603
  %v2684 = vpack.c.b16 %v1622, %v1604
  %v2685 = vpack.c.b16 %v1623, %v1605
  %v2686 = vpack.c.b16 %v1624, %v1606
  %v2687 = vpack.c.b16 %v1625, %v1607
  %v2688 = vpack.c.b16 %v1626, %v1608
  %v2689 = vpack.c.b16 %v1627, %v1609
  %v2690 = vpack.c.b16 %v1628, %v1610
  %v2691 = vpack.c.b16 %v1629, %v1611
  %v2692 = vpack.c.b16 %v1630, %v1612
  %v2693 = vpack.c.b16 %v1631, %v1613
  %v2694 = vpack.c.b16 %v1632, %v1614
  %v2695 = vpack.c.b16 %v1633, %v1615
  %v2696 = vpack.c.b16 %v1634, %v1616
  %v2697 = vpack.c.b16 %v1635, %v1617
  %v2698 = vpack.c.b16 %v1636, %v1618
  %v2699 = vpack.c.b16 %v1637, %v1619
  %v2700 = vpack.c.b16 %v1656, %v1638
  %v2701 = vpack.c.b16 %v1657, %v1639
  %v2702 = vpack.c.b16 %v1658, %v1640
  %v2703 = vpack.c.b16 %v1659, %v1641
  %v2704 = vpack.c.b16 %v1660, %v1642
  %v2705 = vpack.c.b16 %v1661, %v1643
  %v2706 = vpack.c.b16 %v1662, %v1644
  %v2707 = vpack.c.b16 %v1663, %v1645
  %v2708 = vpack.c.b16 %v1664, %v1646
  %v2709 = vpack.c.b16 %v1665, %v1647
  %v2710 = vpack.c.b16 %v1666, %v1648
  %v2711 = vpack.c.b16 %v1667, %v1649
  %v2712 = vpack.c.b16 %v1668, %v1650
  %v2713 = vpack.c.b16 %v1669, %v1651
  %v2714 = vpack.c.b16 %v1670, %v1652
  %v2715 = vpack.c.b16 %v1671, %v1653
  %v2716 = vpack.c.b16 %v1672, %v1654
  %v2717 = vpack.c.b16 %v1673, %v1655
  %v2718 = vpack.c.b16 %v1692, %v1674
  %v2719 = vpack.c.b16 %v1693, %v1675
  %v2720 = vpack.c.b16 %v1694, %v1676
  %v2721 = vpack.c.b16 %v1695, %v1677
  %v2722 = vpack.c.b16 %v1696, %v1678
  %v2723 = vpack.c.b16 %v1697, %v1679
  %v2724 = vpack.c.b16 %v1698, %v1680
  %v2725 = vpack.c.b16 %v1699, %v1681
  %v2726 = vpack.c.b16 %v1700, %v1682
  %v2727 = vpack.c.b16 %v1701, %v1683
  %v2728 = vpack.c.b16 %v1702, %v1684
  %v2729 = vpack.c.b16 %v1703, %v1685
  %v2730 = vpack.c.b16 %v1704, %v1686
  %v2731 = vpack.c.b16 %v1705, %v1687
  %v2732 = vpack.c.b16 %v1706, %v1688
  %v2733 = vpack.c.b16 %v1707, %v1689
  %v2734 = vpack.c.b16 %v1708, %v1690
  %v2735 = vpack.c.b16 %v1709, %v1691
  %v2736 = vpack.c.b16 %v1728, %v1710
  %v2737 = vpack.c.b16 %v1729, %v1711
  %v2738 = vpack.c.b16 %v1730, %v1712
  %v2739 = vpack.c.b16 %v1731, %v1713
  %v2740 = vpack.c.b16 %v1732, %v1714
  %v2741 = vpack.c.b16 %v1733, %v1715
  %v2742 = vpack.c.b16 %v1734, %v1716
  %v2743 = vpack.c.b16 %v1735, %v1717
  %v2744 = vpack.c.b16 %v1736, %v1718
  %v2745 = vpack.c.b16 %v1737, %v1719
  %v2746 = vpack.c.b16 %v1738, %v1720
  %v2747 = vpack.c.b16 %v1739, %v1721
  %v2748 = vpack.c.b16 %v1740, %v1722
  %v2749 = vpack.c.b16 %v1741, %v1723
  %v2750 = vpack.c.b16 %v1742, %v1724
  %v2751 = vpack.c.b16 %v1743, %v1725
  %v2752 = vpack.c.b16 %v1744, %v1726
  %v2753 = vpack.c.b16 %v1745, %v1727
  %v2754 = vpack.c.b16 %v1764, %v1746
  %v2755 = vpack.c.b16 %v1765, %v1747
  %v2756 = vpack.c.b16 %v1766, %v1748
  %v2757 = vpack.c.b16 %v1767, %v1749
  %v2758 = vpack.c.b16 %v1768, %v1750
  %v2759 = vpack.c.b16 %v1769, %v1751
  %v2760 = vpack.c.b16 %v1770, %v1752
  %v2761 = vpack.c.b16 %v1771, %v1753
  %v2762 = vpack.c.b16 %v1772, %v1754
  %v2763 = vpack.c.b16 %v1773, %v1755
  %v2764 = vpack.c.b16 %v1774, %v1756
  %v2765 = vpack.c.b16 %v1775, %v1757
  %v2766 = vpack.c.b16 %v1776, %v1758
  %v2767 = vpack.c.b16 %v1777, %v1759
  %v2768 = vpack.c.b16 %v1778, %v1760
  %v2769 = vpack.c.b16 %v1779, %v1761
  %v2770 = vpack.c.b16 %v1780, %v1762
  %v2771 = vpack.c.b16 %v1781, %v1763
  %v2772 = vpack.c.b16 %v1800, %v1782
  %v2773 = vpack.c.b16 %v1801, %v1783
  %v2774 = vpack.c.b16 %v1802, %v1784
  %v2775 = vpack.c.b16 %v1803, %v1785
  %v2776 = vpack.c.b16 %v1804, %v1786
  %v2777 = vpack.c.b16 %v1805, %v1787
  %v2778 = vpack.c.b16 %v1806, %v1788
  %v2779 = vpack.c.b16 %v1807, %v1789
  %v2780 = vpack.c.b16 %v1808, %v1790
  %v2781 = vpack.c.b16 %v1809, %v1791
  %v2782 = vpack.c.b16 %v1810, %v1792
  %v2783 = vpack.c.b16 %v1811, %v1793
  %v2784 = vpack.c.b16 %v1812, %v1794
  %v2785 = vpack.c.b16 %v1813, %v1795
  %v2786 = vpack.c.b16 %v1814, %v1796
  %v2787 = vpack.c.b16 %v1815, %v1797
  %v2788 = vpack.c.b16 %v1816, %v1798
  %v2789 = vpack.c.b16 %v1817, %v1799
  %v2790 = vpack.c.b16 %v1836, %v1818
  %v2791 = vpack.c.b16 %v1837, %v1819
  %v2792 = vpack.c.b16 %v1838, %v1820
  %v2793 = vpack.c.b16 %v1839, %v1821
  %v2794 = vpack.c.b16 %v1840, %v1822
  %v2795 = vpack.c.b16 %v1841, %v1823
  %v2796 = vpack.c.b16 %v1842, %v1824
  %v2797 = vpack.c.b16 %v1843, %v1825
  %v2798 = vpack.c.b16 %v1844, %v1826
  %v2799 = vpack.c.b16 %v1845, %v1827
  %v2800 = vpack.c.b16 %v1846, %v1828
  %v2801 = vpack.c.b16 %v1847, %v1829
  %v2802 = vpack.c.b16 %v1848, %v1830
  %v2803 = vpack.c.b16 %v1849, %v1831
  %v2804 = vpack.c.b16 %v1850, %v1832
  %v2805 = vpack.c.b16 %v1851, %v1833
  %v2806 = vpack.c.b16 %v1852, %v1834
  %v2807 = vpack.c.b16 %v1853, %v1835
  %v2808 = vpack.c.b16 %v1872, %v1854
  %v2809 = vpack.c.b16 %v1873, %v1855
  %v2810 = vpack.c.b16 %v1874, %v1856
  %v2811 = vpack.c.b16 %v1875, %v1857
  %v2812 = vpack.c.b16 %v1876, %v1858
  %v2813 = vpack.c.b16 %v1877, %v1859
  %v2814 = vpack.c.b16 %v1878, %v1860
  %v2815 = vpack.c.b16 %v1879, %v1861
  %v2816 = vpack.c.b16 %v1880, %v1862
  %v2817 = vpack.c.b16 %v1881, %v1863
  %v2818 = vpack.c.b16 %v1882, %v1864
  %v2819 = vpack.c.b16 %v1883, %v1865
  %v2820 = vpack.c.b16 %v1884, %v1866
  %v2821 = vpack.c.b16 %v1885, %v1867
  %v2822 = vpack.c.b16 %v1886, %v1868
  %v2823 = vpack.c.b16 %v1887, %v1869
  %v2824 = vpack.c.b16 %v1888, %v1870
  %v2825 = vpack.c.b16 %v1889, %v1871
  %v2826 = vpack.c.b16 %v1908, %v1890
  %v2827 = vpack.c.b16 %v1909, %v1891
  %v2828 = vpack.c.b16 %v1910, %v1892
  %v2829 = vpack.c.b16 %v1911, %v1893
  %v2830 = vpack.c.b16 %v1912, %v1894
  %v2831 = vpack.c.b16 %v1913, %v1895
  %v2832 = vpack.c.b16 %v1914, %v1896
  %v2833 = vpack.c.b16 %v1915, %v1897
  %v2834 = vpack.c.b16 %v1916, %v1898
  %v2835 = vpack.c.b16 %v1917, %v1899
  %v2836 = vpack.c.b16 %v1918, %v1900
  %v2837 = vpack.c.b16 %v1919, %v1901
  %v2838 = vpack.c.b16 %v1920, %v1902
  %v2839 = vpack.c.b16 %v1921, %v1903
  %v2840 = vpack.c.b16 %v1922, %v1904
  %v2841 = vpack.c.b16 %v1923, %v1905
  %v2842 = vpack.c.b16 %v1924, %v1906
  %v2843 = vpack.c.b16 %v1925, %v1907
  %v2844 = vpack.c.b16 %v1944, %v1926
  %v2845 = vpack.c.b16 %v1945, %v1927
  %v2846 = vpack.c.b16 %v1946, %v1928
  %v2847 = vpack.c.b16 %v1947, %v1929
  %v2848 = vpack.c.b16 %v1948, %v1930
  %v2849 = vpack.c.b16 %v1949, %v1931
  %v2850 = vpack.c.b16 %v1950, %v1932
  %v2851 = vpack.c.b16 %v1951, %v1933
  %v2852 = vpack.c.b16 %v1952, %v1934
  %v2853 = vpack.c.b16 %v1953, %v1935
  %v2854 = vpack.c.b16 %v1954, %v1936
  %v2855 = vpack.c.b16 %v1955, %v1937
  %v2856 = vpack.c.b16 %v1956, %v1938
  %v2857 = vpack.c.b16 %v1957, %v1939
  %v2858 = vpack.c.b16 %v1958, %v1940
  %v2859 = vpack.c.b16 %v1959, %v1941
  %v2860 = vpack.c.b16 %v1960, %v1942
  %v2861 = vpack.c.b16 %v1961, %v1943
  %v2862 = vpack.c.b16 %v1980, %v1962
  %v2863 = vpack.c.b16 %v1981, %v1963
  %v2864 = vpack.c.b16 %v1982, %v1964
  %v2865 = vpack.c.b16 %v1983, %v1965
  %v2866 = vpack.c.b16 %v1984, %v1966
  %v2867 = vpack.c.b16 %v1985, %v1967
  %v2868 = vpack.c.b16 %v1986, %v1968
  %v2869 = vpack.c.b16 %v1987, %v1969
  %v2870 = vpack.c.b16 %v1988, %v1970
  %v2871 = vpack.c.b16 %v1989, %v1971
  %v2872 = vpack.c.b16 %v1990, %v1972
  %v2873 = vpack.c.b16 %v1991, %v1973
  %v2874 = vpack.c.b16 %v1992, %v1974
  %v2875 = vpack.c.b16 %v1993, %v1975
  %v2876 = vpack.c.b16 %v1994, %v1976
  %v2877 = vpack.c.b16 %v1995, %v1977
  %v2878 = vpack.c.b16 %v1996, %v1978
  %v2879 = vpack.c.b16 %v1997, %v1979
  %v2880 = vpack.c.b16 %v2016, %v1998
  %v2881 = vpack.c.b16 %v2017, %v1999
  %v2882 = vpack.c.b16 %v2018, %v2000
  %v2883 = vpack.c.b16 %v2019, %v2001
  %v2884 = vpack.c.b16 %v2020, %v2002
  %v2885 = vpack.c.b16 %v2021, %v2003
  %v2886 = vpack.c.b16 %v2022, %v2004
  %v2887 = vpack.c.b16 %v2023, %v2005
  %v2888 = vpack.c.b16 %v2024, %v2006
  %v2889 = vpack.c.b16 %v2025, %v2007
  %v2890 = vpack.c.b16 %v2026, %v2008
  %v2891 = vpack.c.b16 %v2027, %v2009
  %v2892 = vpack.c.b16 %v2028, %v2010
  %v2893 = vpack.c.b16 %v2029, %v2011
  %v2894 = vpack.c.b16 %v2030, %v2012
  %v2895 = vpack.c.b16 %v2031, %v2013
  %v2896 = vpack.c.b16 %v2032, %v2014
  %v2897 = vpack.c.b16 %v2033, %v2015
  %v2898 = vpack.c.b16 %v2052, %v2034
  %v2899 = vpack.c.b16 %v2053, %v2035
  %v2900 = vpack.c.b16 %v2054, %v2036
  %v2901 = vpack.c.b16 %v2055, %v2037
  %v2902 = vpack.c.b16 %v2056, %v2038
  %v2903 = vpack.c.b16 %v2057, %v2039
  %v2904 = vpack.c.b16 %v2058, %v2040
  %v2905 = vpack.c.b16 %v2059, %v2041
  %v2906 = vpack.c.b16 %v2060, %v2042
  %v2907 = vpack.c.b16 %v2061, %v2043
  %v2908 = vpack.c.b16 %v2062, %v2044
  %v2909 = vpack.c.b16 %v2063, %v2045
  %v2910 = vpack.c.b16 %v2064, %v2046
  %v2911 = vpack.c.b16 %v2065, %v2047
  %v2912 = vpack.c.b16 %v2066, %v2048
  %v2913 = vpack.c.b16 %v2067, %v2049
  %v2914 = vpack.c.b16 %v2068, %v2050
  %v2915 = vpack.c.b16 %v2069, %v2051
  %v2916 = vpack.c.b16 %v2088, %v2070
  %v2917 = vpack.c.b16 %v2089, %v2071
  %v2918 = vpack.c.b16 %v2090, %v2072
  %v2919 = vpack.c.b16 %v2091, %v2073
  %v2920 = vpack.c.b16 %v2092, %v2074
  %v2921 = vpack.c.b16 %v2093, %v2075
  %v2922 = vpack.c.b16 %v2094, %v2076
  %v2923 = vpack.c.b16 %v2095, %v2077
  %v2924 = vpack.c.b16 %v2096, %v2078
  %v2925 = vpack.c.b16 %v2097, %v2079
  %v2926 = vpack.c.b16 %v2098, %v2080
  %v2927 = vpack.c.b16 %v2099, %v2081
  %v2928 = vpack.c.b16 %v2100, %v2082
  %v2929 = vpack.c.b16 %v2101, %v2083
  %v2930 = vpack.c.b16 %v2102, %v2084
  %v2931 = vpack.c.b16 %v2103, %v2085
  %v2932 = vpack.c.b16 %v2104, %v2086
  %v2933 = vpack.c.b16 %v2105, %v2087
  %v2934 = vpack.c.b16 %v2124, %v2106
  %v2935 = vpack.c.b16 %v2125, %v2107
  %v2936 = vpack.c.b16 %v2126, %v2108
  %v2937 = vpack.c.b16 %v2127, %v2109
  %v2938 = vpack.c.b16 %v2128, %v2110
  %v2939 = vpack.c.b16 %v2129, %v2111
  %v2940 = vpack.c.b16 %v2130, %v2112
  %v2941 = vpack.c.b16 %v2131, %v2113
  %v2942 = vpack.c.b16 %v2132, %v2114
  %v2943 = vpack.c.b16 %v2133, %v2115
  %v2944 = vpack.c.b16 %v2134, %v2116
  %v2945 = vpack.c.b16 %v2135, %v2117
  %v2946 = vpack.c.b16 %v2136, %v2118
  %v2947 = vpack.c.b16 %v2137, %v2119
  %v2948 = vpack.c.b16 %v2138, %v2120
  %v2949 = vpack.c.b16 %v2139, %v2121
  %v2950 = vpack.c.b16 %v2140, %v2122
  %v2951 = vpack.c.b16 %v2141, %v2123
  %v2952 = vpack.c.b16 %v2160, %v2142
  %v2953 = vpack.c.b16 %v2161, %v2143
  %v2954 = vpack.c.b16 %v2162, %v2144
  %v2955 = vpack.c.b16 %v2163, %v2145
  %v2956 = vpack.c.b16 %v2164, %v2146
  %v2957 = vpack.c.b16 %v2165, %v2147
  %v2958 = vpack.c.b16 %v2166, %v2148
  %v2959 = vpack.c.b16 %v2167, %v2149
  %v2960 = vpack.c.b16 %v2168, %v2150
  %v2961 = vpack.c.b16 %v2169, %v2151
  %v2962 = vpack.c.b16 %v2170, %v2152
  %v2963 = vpack.c.b16 %v2171, %v2153
  %v2964 = vpack.c.b16 %v2172, %v2154
  %v2965 = vpack.c.b16 %v2173, %v2155
  %v2966 = vpack.c.b16 %v2174, %v2156
  %v2967 = vpack.c.b16 %v2175, %v2157
  %v2968 = vpack.c.b16 %v2176, %v2158
  %v2969 = vpack.c.b16 %v2177, %v2159
  %v2970 = vpack.c.b16 %v2196, %v2178
  %v2971 = vpack.c.b16 %v2197, %v2179
  %v2972 = vpack.c.b16 %v2198, %v2180
  %v2973 = vpack.c.b16 %v2199, %v2181
  %v2974 = vpack.c.b16 %v2200, %v2182
  %v2975 = vpack.c.b16 %v2201, %v2183
  %v2976 = vpack.c.b16 %v2202, %v2184
  %v2977 = vpack.c.b16 %v2203, %v2185
  %v2978 = vpack.c.b16 %v2204, %v2186
  %v2979 = vpack.c.b16 %v2205, %v2187
  %v2980 = vpack.c.b16 %v2206, %v2188
  %v2981 = vpack.c.b16 %v2207, %v2189
  %v2982 = vpack.c.b16 %v2208, %v2190
  %v2983 = vpack.c.b16 %v2209, %v2191
  %v2984 = vpack.c.b16 %v2210, %v2192
  %v2985 = vpack.c.b16 %v2211, %v2193
  %v2986 = vpack.c.b16 %v2212, %v2194
  %v2987 = vpack.c.b16 %v2213, %v2195
  %v2988 = vpack.c.b16 %v2232, %v2214
  %v2989 = vpack.c.b16 %v2233, %v2215
  %v2990 = vpack.c.b16 %v2234, %v2216
  %v2991 = vpack.c.b16 %v2235, %v2217
  %v2992 = vpack.c.b16 %v2236, %v2218
  %v2993 = vpack.c.b16 %v2237, %v2219
  %v2994 = vpack.c.b16 %v2238, %v2220
  %v2995 = vpack.c.b16 %v2239, %v2221
  %v2996 = vpack.c.b16 %v2240, %v2222
  %v2997 = vpack.c.b16 %v2241, %v2223
  %v2998 = vpack.c.b16 %v2242, %v2224
  %v2999 = vpack.c.b16 %v2243, %v2225
  %v3000 = vpack.c.b16 %v2244, %v2226
  %v3001 = vpack.c.b16 %v2245, %v2227
  %v3002 = vpack.c.b16 %v2246, %v2228
  %v3003 = vpack.c.b16 %v2247, %v2229
  %v3004 = vpack.c.b16 %v2248, %v2230
  %v3005 = vpack.c.b16 %v2249, %v2231
  %v3006 = vpack.c.b16 %v2268, %v2250
  %v3007 = vpack.c.b16 %v2269, %v2251
  %v3008 = vpack.c.b16 %v2270, %v2252
  %v3009 = vpack.c.b16 %v2271, %v2253
  %v3010 = vpack.c.b16 %v2272, %v2254
  %v3011 = vpack.c.b16 %v2273, %v2255
  %v3012 = vpack.c.b16 %v2274, %v2256
  %v3013 = vpack.c.b16 %v2275, %v2257
  %v3014 = vpack.c.b16 %v2276, %v2258
  %v3015 = vpack.c.b16 %v2277, %v2259
  %v3016 = vpack.c.b16 %v2278, %v2260
  %v3017 = vpack.c.b16 %v2279, %v2261
  %v3018 = vpack.c.b16 %v2280, %v2262
  %v3019 = vpack.c.b16 %v2281, %v2263
  %v3020 = vpack.c.b16 %v2282, %v2264
  %v3021 = vpack.c.b16 %v2283, %v2265
  %v3022 = vpack.c.b16 %v2284, %v2266
  %v3023 = vpack.c.b16 %v2285, %v2267
  %v3024 = vpack.c.b16 %v2304, %v2286
  %v3025 = vpack.c.b16 %v2305, %v2287
  %v3026 = vpack.c.b16 %v2306, %v2288
  %v3027 = vpack.c.b16 %v2307, %v2289
  %v3028 = vpack.c.b16 %v2308, %v2290
  %v3029 = vpack.c.b16 %v2309, %v2291
  %v3030 = vpack.c.b16 %v2310, %v2292
  %v3031 = vpack.c.b16 %v2311, %v2293
  %v3032 = vpack.c.b16 %v2312, %v2294
  %v3033 = vpack.c.b16 %v2313, %v2295
  %v3034 = vpack.c.b16 %v2314, %v2296
  %v3035 = vpack.c.b16 %v2315, %v2297
  %v3036 = vpack.c.b16 %v2316, %v2298
  %v3037 = vpack.c.b16 %v2317, %v2299
  %v3038 = vpack.c.b16 %v2318, %v2300
  %v3039 = vpack.c.b16 %v2319, %v2301
  %v3040 = vpack.c.b16 %v2320, %v2302
  %v3041 = vpack.c.b16 %v2321, %v2303
  %v3042 = vpack.c.b16 %v2340, %v2322
  %v3043 = vpack.c.b16 %v2341, %v2323
  %v3044 = vpack.c.b16 %v2342, %v2324
  %v3045 = vpack.c.b16 %v2343, %v2325
  %v3046 = vpack.c.b16 %v2344, %v2326
  %v3047 = vpack.c.b16 %v2345, %v2327
  %v3048 = vpack.c.b16 %v2346, %v2328
  %v3049 = vpack.c.b16 %v2347, %v2329
  %v3050 = vpack.c.b16 %v2348, %v2330
  %v3051 = vpack.c.b16 %v2349, %v2331
  %v3052 = vpack.c.b16 %v2350, %v2332
  %v3053 = vpack.c.b16 %v2351, %v2333
  %v3054 = vpack.c.b16 %v2352, %v2334
  %v3055 = vpack.c.b16 %v2353, %v2335
  %v3056 = vpack.c.b16 %v2354, %v2336
  %v3057 = vpack.c.b16 %v2355, %v2337
  %v3058 = vpack.c.b16 %v2356, %v2338
  %v3059 = vpack.c.b16 %v2357, %v2339
  %v3060 = vpack.c.b16 %v2376, %v2358
  %v3061 = vpack.c.b16 %v2377, %v2359
  %v3062 = vpack.c.b16 %v2378, %v2360
  %v3063 = vpack.c.b16 %v2379, %v2361
  %v3064 = vpack.c.b16 %v2380, %v2362
  %v3065 = vpack.c.b16 %v2381, %v2363
  %v3066 = vpack.c.b16 %v2382, %v2364
  %v3067 = vpack.c.b16 %v2383, %v2365
  %v3068 = vpack.c.b16 %v2384, %v2366
  %v3069 = vpack.c.b16 %v2385, %v2367
  %v3070 = vpack.c.b16 %v2386, %v2368
  %v3071 = vpack.c.b16 %v2387, %v2369
  %v3072 = vpack.c.b16 %v2388, %v2370
  %v3073 = vpack.c.b16 %v2389, %v2371
  %v3074 = vpack.c.b16 %v2390, %v2372
  %v3075 = vpack.c.b16 %v2391, %v2373
  %v3076 = vpack.c.b16 %v2392, %v2374
  %v3077 = vpack.c.b16 %v2393, %v2375
  %v3078 = vpack.c.b16 %v2412, %v2394
  %v3079 = vpack.c.b16 %v2413, %v2395
  %v3080 = vpack.c.b16 %v2414, %v2396
  %v3081 = vpack.c.b16 %v2415, %v2397
  %v3082 = vpack.c.b16 %v2416, %v2398
  %v3083 = vpack.c.b16 %v2417, %v2399
  %v3084 = vpack.c.b16 %v2418, %v2400
  %v3085 = vpack.c.b16 %v2419, %v2401
  %v3086 = vpack.c.b16 %v2420, %v2402
  %v3087 = vpack.c.b16 %v2421, %v2403
  %v3088 = vpack.c.b16 %v2422, %v2404
  %v3089 = vpack.c.b16 %v2423, %v2405
  %v3090 = vpack.c.b16 %v2424, %v2406
  %v3091 = vpack.c.b16 %v2425, %v2407
  %v3092 = vpack.c.b16 %v2426, %v2408
  %v3093 = vpack.c.b16 %v2427, %v2409
  %v3094 = vpack.c.b16 %v2428, %v2410
  %v3095 = vpack.c.b16 %v2429, %v2411
  %v3096 = vpack.c.b16 %v2448, %v2430
  %v3097 = vpack.c.b16 %v2449, %v2431
  %v3098 = vpack.c.b16 %v2450, %v2432
  %v3099 = vpack.c.b16 %v2451, %v2433
  %v3100 = vpack.c.b16 %v2452, %v2434
  %v3101 = vpack.c.b16 %v2453, %v2435
  %v3102 = vpack.c.b16 %v2454, %v2436
  %v3103 = vpack.c.b16 %v2455, %v2437
  %v3104 = vpack.c.b16 %v2456, %v2438
  %v3105 = vpack.c.b16 %v2457, %v2439
  %v3106 = vpack.c.b16 %v2458, %v2440
  %v3107 = vpack.c.b16 %v2459, %v2441
  %v3108 = vpack.c.b16 %v2460, %v2442
  %v3109 = vpack.c.b16 %v2461, %v2443
  %v3110 = vpack.c.b16 %v2462, %v2444
  %v3111 = vpack.c.b16 %v2463, %v2445
  %v3112 = vpack.c.b16 %v2464, %v2446
  %v3113 = vpack.c.b16 %v2465, %v2447
  %v3114 = vpack.c.b16 %v2484, %v2466
  %v3115 = vpack.c.b16 %v2485, %v2467
  %v3116 = vpack.c.b16 %v2486, %v2468
  %v3117 = vpack.c.b16 %v2487, %v2469
  %v3118 = vpack.c.b16 %v2488, %v2470
  %v3119 = vpack.c.b16 %v2489, %v2471
  %v3120 = vpack.c.b16 %v2490, %v2472
  %v3121 = vpack.c.b16 %v2491, %v2473
  %v3122 = vpack.c.b16 %v2492, %v2474
  %v3123 = vpack.c.b16 %v2493, %v2475
  %v3124 = vpack.c.b16 %v2494, %v2476
  %v3125 = vpack.c.b16 %v2495, %v2477
  %v3126 = vpack.c.b16 %v2496, %v2478
  %v3127 = vpack.c.b16 %v2497, %v2479
  %v3128 = vpack.c.b16 %v2498, %v2480
  %v3129 = vpack.c.b16 %v2499, %v2481
  %v3130 = vpack.c.b16 %v2500, %v2482
  %v3131 = vpack.c.b16 %v2501, %v2483
  %v3132 = vpack.c.b16 %v2520, %v2502
  %v3133 = vpack.c.b16 %v2521, %v2503
  %v3134 = vpack.c.b16 %v2522, %v2504
  %v3135 = vpack.c.b16 %v2523, %v2505
  %v3136 = vpack.c.b16 %v2524, %v2506
  %v3137 = vpack.c.b16 %v2525, %v2507
  %v3138 = vpack.c.b16 %v2526, %v2508
  %v3139 = vpack.c.b16 %v2527, %v2509
  %v3140 = vpack.c.b16 %v2528, %v2510
  %v3141 = vpack.c.b16 %v2529, %v2511
  %v3142 = vpack.c.b16 %v2530, %v2512
  %v3143 = vpack.c.b16 %v2531, %v2513
  %v3144 = vpack.c.b16 %v2532, %v2514
  %v3145 = vpack.c.b16 %v2533, %v2515
  %v3146 = vpack.c.b16 %v2534, %v2516
  %v3147 = vpack.c.b16 %v2535, %v2517
  %v3148 = vpack.c.b16 %v2536, %v2518
  %v3149 = vpack.c.b16 %v2537, %v2519
  %v3150 = vpack.c.b16 %v2556, %v2538
  %v3151 = vpack.c.b16 %v2557, %v2539
  %v3152 = vpack.c.b16 %v2558, %v2540
  %v3153 = vpack.c.b16 %v2559, %v2541
  %v3154 = vpack.c.b16 %v2560, %v2542
  %v3155 = vpack.c.b16 %v2561, %v2543
  %v3156 = vpack.c.b16 %v2562, %v2544
  %v3157 = vpack.c.b16 %v2563, %v2545
  %v3158 = vpack.c.b16 %v2564, %v2546
  %v3159 = vpack.c.b16 %v2565, %v2547
  %v3160 = vpack.c.b16 %v2566, %v2548
  %v3161 = vpack.c.b16 %v2567, %v2549
  %v3162 = vpack.c.b16 %v2568, %v2550
  %v3163 = vpack.c.b16 %v2569, %v2551
  %v3164 = vpack.c.b16 %v2570, %v2552
  %v3165 = vpack.c.b16 %v2571, %v2553
  %v3166 = vpack.c.b16 %v2572, %v2554
  %v3167 = vpack.c.b16 %v2573, %v2555
  %v3168 = vpack.c.b16 %v2592, %v2574
  %v3169 = vpack.c.b16 %v2593, %v2575
  %v3170 = vpack.c.b16 %v2594, %v2576
  %v3171 = vpack.c.b16 %v2595, %v2577
  %v3172 = vpack.c.b16 %v2596, %v2578
  %v3173 = vpack.c.b16 %v2597, %v2579
  %v3174 = vpack.c.b16 %v2598, %v2580
  %v3175 = vpack.c.b16 %v2599, %v2581
  %v3176 = vpack.c.b16 %v2600, %v2582
  %v3177 = vpack.c.b16 %v2601, %v2583
  %v3178 = vpack.c.b16 %v2602, %v2584
  %v3179 = vpack.c.b16 %v2603, %v2585
  %v3180 = vpack.c.b16 %v2604, %v2586
  %v3181 = vpack.c.b16 %v2605, %v2587
  %v3182 = vpack.c.b16 %v2606, %v2588
  %v3183 = vpack.c.b16 %v2607, %v2589
  %v3184 = vpack.c.b16 %v2608, %v2590
  %v3185 = vpack.c.b16 %v2609, %v2591
  %v4050 = vunpack.c.l.b16 %v594
  %v4051 = vunpack.c.l.b16 %v595
  %v4052 = vunpack.c.l.b16 %v596
  %v4053 = vunpack.c.l.b16 %v597
  %v4054 = vunpack.c.l.b16 %v598
  %v4055 = vunpack.c.l.b16 %v599
  %v4056 = vunpack.c.l.b16 %v600
  %v4057 = vunpack.c.l.b16 %v601
  %v4058 = vunpack.c.l.b16 %v602
  %v4059 = vunpack.c.l.b16 %v603
  %v4060 = vunpack.c.l.b16 %v604
  %v4061 = vunpack.c.l.b16 %v605
  %v4062 = vunpack.c.l.b16 %v606
  %v4063 = vunpack.c.l.b16 %v607
  %v4064 = vunpack.c.l.b16 %v608
  %v4065 = vunpack.c.l.b16 %v609
  %v4066 = vunpack.c.l.b16 %v610
  %v4067 = vunpack.c.l.b16 %v611
  %v4068 = vunpack.c.l.b16 %v612
  %v4069 = vunpack.c.l.b16 %v613
  %v4070 = vunpack.c.l.b16 %v614
  %v4071 = vunpack.c.l.b16 %v615
  %v4072 = vunpack.c.l.b16 %v616
  %v4073 = vunpack.c.l.b16 %v617
  %v4074 = vunpack.c.l.b16 %v618
  %v4075 = vunpack.c.l.b16 %v619
  %v4076 = vunpack.c.l.b16 %v620
  %v4077 = vunpack.c.l.b16 %v621
  %v4078 = vunpack.c.l.b16 %v622
  %v4079 = vunpack.c.l.b16 %v623
  %v4080 = vunpack.c.l.b16 %v624
  %v4081 = vunpack.c.l.b16 %v625
  %v4082 = vunpack.c.l.b16 %v626
  %v4083 = vunpack.c.l.b16 %v627
  %v4084 = vunpack.c.l.b16 %v628
  %v4085 = vunpack.c.l.b16 %v629
  %v4086 = vunpack.c.l.b16 %v630
  %v4087 = vunpack.c.l.b16 %v631
  %v4088 = vunpack.c.l.b16 %v632
  %v4089 = vunpack.c.l.b16 %v633
  %v4090 = vunpack.c.l.b16 %v634
  %v4091 = vunpack.c.l.b16 %v635
  %v4092 = vunpack.c.l.b16 %v636
  %v4093 = vunpack.c.l.b16 %v637
  %v4094 = vunpack.c.l.b16 %v638
  %v4095 = vunpack.c.l.b16 %v639
  %v4096 = vunpack.c.l.b16 %v640
  %v4097 = vunpack.c.l.b16 %v641
  %v4098 = vunpack.c.l.b16 %v642
  %v4099 = vunpack.c.l.b16 %v643
  %v4100 = vunpack.c.l.b16 %v644
  %v4101 = vunpack.c.l.b16 %v645
  %v4102 = vunpack.c.l.b16 %v646
  %v4103 = vunpack.c.l.b16 %v647
  %v4104 = vunpack.c.l.b16 %v648
  %v4105 = vunpack.c.l.b16 %v649
  %v4106 = vunpack.c.l.b16 %v650
  %v4107 = vunpack.c.l.b16 %v651
  %v4108 = vunpack.c.l.b16 %v652
  %v4109 = vunpack.c.l.b16 %v653
  %v4110 = vunpack.c.l.b16 %v654
  %v4111 = vunpack.c.l.b16 %v655
  %v4112 = vunpack.c.l.b16 %v656
  %v4113 = vunpack.c.l.b16 %v657
  %v4114 = vunpack.c.l.b16 %v658
  %v4115 = vunpack.c.l.b16 %v659
  %v4116 = vunpack.c.l.b16 %v660
  %v4117 = vunpack.c.l.b16 %v661
  %v4118 = vunpack.c.l.b16 %v662
  %v4119 = vunpack.c.l.b16 %v663
  %v4120 = vunpack.c.l.b16 %v664
  %v4121 = vunpack.c.l.b16 %v665
  %v4122 = vunpack.c.l.b16 %v666
  %v4123 = vunpack.c.l.b16 %v667
  %v4124 = vunpack.c.l.b16 %v668
  %v4125 = vunpack.c.l.b16 %v669
  %v4126 = vunpack.c.l.b16 %v670
  %v4127 = vunpack.c.l.b16 %v671
  %v4128 = vunpack.c.l.b16 %v672
  %v4129 = vunpack.c.l.b16 %v673
  %v4130 = vunpack.c.l.b16 %v674
  %v4131 = vunpack.c.l.b16 %v675
  %v4132 = vunpack.c.l.b16 %v676
  %v4133 = vunpack.c.l.b16 %v677
  %v4134 = vunpack.c.l.b16 %v678
  %v4135 = vunpack.c.l.b16 %v679
  %v4136 = vunpack.c.l.b16 %v680
  %v4137 = vunpack.c.l.b16 %v681
  %v4138 = vunpack.c.l.b16 %v682
  %v4139 = vunpack.c.l.b16 %v683
  %v4140 = vunpack.c.l.b16 %v684
  %v4141 = vunpack.c.l.b16 %v685
  %v4142 = vunpack.c.l.b16 %v686
  %v4143 = vunpack.c.l.b16 %v687
  %v4144 = vunpack.c.l.b16 %v688
  %v4145 = vunpack.c.l.b16 %v689
  %v4146 = vunpack.c.l.b16 %v690
  %v4147 = vunpack.c.l.b16 %v691
  %v4148 = vunpack.c.l.b16 %v692
  %v4149 = vunpack.c.l.b16 %v693
  %v4150 = vunpack.c.l.b16 %v694
  %v4151 = vunpack.c.l.b16 %v695
  %v4152 = vunpack.c.l.b16 %v696
  %v4153 = vunpack.c.l.b16 %v697
  %v4154 = vunpack.c.l.b16 %v698
  %v4155 = vunpack.c.l.b16 %v699
  %v4156 = vunpack.c.l.b16 %v700
  %v4157 = vunpack.c.l.b16 %v701
  %v4158 = vunpack.c.l.b16 %v702
  %v4159 = vunpack.c.l.b16 %v703
  %v4160 = vunpack.c.l.b16 %v704
  %v4161 = vunpack.c.l.b16 %v705
  %v4162 = vunpack.c.l.b16 %v706
  %v4163 = vunpack.c.l.b16 %v707
  %v4164 = vunpack.c.l.b16 %v708
  %v4165 = vunpack.c.l.b16 %v709
  %v4166 = vunpack.c.l.b16 %v710
  %v4167 = vunpack.c.l.b16 %v711
  %v4168 = vunpack.c.l.b16 %v712
  %v4169 = vunpack.c.l.b16 %v713
  %v4170 = vunpack.c.l.b16 %v714
  %v4171 = vunpack.c.l.b16 %v715
  %v4172 = vunpack.c.l.b16 %v716
  %v4173 = vunpack.c.l.b16 %v717
  %v4174 = vunpack.c.l.b16 %v718
  %v4175 = vunpack.c.l.b16 %v719
  %v4176 = vunpack.c.l.b16 %v720
  %v4177 = vunpack.c.l.b16 %v721
  %v4178 = vunpack.c.l.b16 %v722
  %v4179 = vunpack.c.l.b16 %v723
  %v4180 = vunpack.c.l.b16 %v724
  %v4181 = vunpack.c.l.b16 %v725
  %v4182 = vunpack.c.l.b16 %v726
  %v4183 = vunpack.c.l.b16 %v727
  %v4184 = vunpack.c.l.b16 %v728
  %v4185 = vunpack.c.l.b16 %v729
  %v4186 = vunpack.c.l.b16 %v730
  %v4187 = vunpack.c.l.b16 %v731
  %v4188 = vunpack.c.l.b16 %v732
  %v4189 = vunpack.c.l.b16 %v733
  %v4190 = vunpack.c.l.b16 %v734
  %v4191 = vunpack.c.l.b16 %v735
  %v4192 = vunpack.c.l.b16 %v736
  %v4193 = vunpack.c.l.b16 %v737
  %v4194 = vunpack.c.l.b16 %v738
  %v4195 = vunpack.c.l.b16 %v739
  %v4196 = vunpack.c.l.b16 %v740
  %v4197 = vunpack.c.l.b16 %v741
  %v4198 = vunpack.c.l.b16 %v742
  %v4199 = vunpack.c.l.b16 %v743
  %v4200 = vunpack.c.l.b16 %v744
  %v4201 = vunpack.c.l.b16 %v745
  %v4202 = vunpack.c.l.b16 %v746
  %v4203 = vunpack.c.l.b16 %v747
  %v4204 = vunpack.c.l.b16 %v748
  %v4205 = vunpack.c.l.b16 %v749
  %v4206 = vunpack.c.l.b16 %v750
  %v4207 = vunpack.c.l.b16 %v751
  %v4208 = vunpack.c.l.b16 %v752
  %v4209 = vunpack.c.l.b16 %v753
  %v4210 = vunpack.c.l.b16 %v754
  %v4211 = vunpack.c.l.b16 %v755
  %v4212 = vunpack.c.l.b16 %v756
  %v4213 = vunpack.c.l.b16 %v757
  %v4214 = vunpack.c.l.b16 %v758
  %v4215 = vunpack.c.l.b16 %v759
  %v4216 = vunpack.c.l.b16 %v760
  %v4217 = vunpack.c.l.b16 %v761
  %v4218 = vunpack.c.l.b16 %v762
  %v4219 = vunpack.c.l.b16 %v763
  %v4220 = vunpack.c.l.b16 %v764
  %v4221 = vunpack.c.l.b16 %v765
  %v4222 = vunpack.c.l.b16 %v766
  %v4223 = vunpack.c.l.b16 %v767
  %v4224 = vunpack.c.l.b16 %v768
  %v4225 = vunpack.c.l.b16 %v769
  %v4226 = vunpack.c.l.b16 %v770
  %v4227 = vunpack.c.l.b16 %v771
  %v4228 = vunpack.c.l.b16 %v772
  %v4229 = vunpack.c.l.b16 %v773
  %v4230 = vunpack.c.l.b16 %v774
  %v4231 = vunpack.c.l.b16 %v775
  %v4232 = vunpack.c.l.b16 %v776
  %v4233 = vunpack.c.l.b16 %v777
  %v4234 = vunpack.c.l.b16 %v778
  %v4235 = vunpack.c.l.b16 %v779
  %v4236 = vunpack.c.l.b16 %v780
  %v4237 = vunpack.c.l.b16 %v781
  %v4238 = vunpack.c.l.b16 %v782
  %v4239 = vunpack.c.l.b16 %v783
  %v4240 = vunpack.c.l.b16 %v784
  %v4241 = vunpack.c.l.b16 %v785
  %v4242 = vunpack.c.l.b16 %v786
  %v4243 = vunpack.c.l.b16 %v787
  %v4244 = vunpack.c.l.b16 %v788
  %v4245 = vunpack.c.l.b16 %v789
  %v4246 = vunpack.c.l.b16 %v790
  %v4247 = vunpack.c.l.b16 %v791
  %v4248 = vunpack.c.l.b16 %v792
  %v4249 = vunpack.c.l.b16 %v793
  %v4250 = vunpack.c.l.b16 %v794
  %v4251 = vunpack.c.l.b16 %v795
  %v4252 = vunpack.c.l.b16 %v796
  %v4253 = vunpack.c.l.b16 %v797
  %v4254 = vunpack.c.l.b16 %v798
  %v4255 = vunpack.c.l.b16 %v799
  %v4256 = vunpack.c.l.b16 %v800
  %v4257 = vunpack.c.l.b16 %v801
  %v4258 = vunpack.c.l.b16 %v802
  %v4259 = vunpack.c.l.b16 %v803
  %v4260 = vunpack.c.l.b16 %v804
  %v4261 = vunpack.c.l.b16 %v805
  %v4262 = vunpack.c.l.b16 %v806
  %v4263 = vunpack.c.l.b16 %v807
  %v4264 = vunpack.c.l.b16 %v808
  %v4265 = vunpack.c.l.b16 %v809
  %v4266 = vunpack.c.l.b16 %v810
  %v4267 = vunpack.c.l.b16 %v811
  %v4268 = vunpack.c.l.b16 %v812
  %v4269 = vunpack.c.l.b16 %v813
  %v4270 = vunpack.c.l.b16 %v814
  %v4271 = vunpack.c.l.b16 %v815
  %v4272 = vunpack.c.l.b16 %v816
  %v4273 = vunpack.c.l.b16 %v817
  %v4274 = vunpack.c.l.b16 %v818
  %v4275 = vunpack.c.l.b16 %v819
  %v4276 = vunpack.c.l.b16 %v820
  %v4277 = vunpack.c.l.b16 %v821
  %v4278 = vunpack.c.l.b16 %v822
  %v4279 = vunpack.c.l.b16 %v823
  %v4280 = vunpack.c.l.b16 %v824
  %v4281 = vunpack.c.l.b16 %v825
  %v4282 = vunpack.c.l.b16 %v826
  %v4283 = vunpack.c.l.b16 %v827
  %v4284 = vunpack.c.l.b16 %v828
  %v4285 = vunpack.c.l.b16 %v829
  %v4286 = vunpack.c.l.b16 %v830
  %v4287 = vunpack.c.l.b16 %v831
  %v4288 = vunpack.c.l.b16 %v832
  %v4289 = vunpack.c.l.b16 %v833
  %v4290 = vunpack.c.l.b16 %v834
  %v4291 = vunpack.c.l.b16 %v835
  %v4292 = vunpack.c.l.b16 %v836
  %v4293 = vunpack.c.l.b16 %v837
  %v4294 = vunpack.c.l.b16 %v838
  %v4295 = vunpack.c.l.b16 %v839
  %v4296 = vunpack.c.l.b16 %v840
  %v4297 = vunpack.c.l.b16 %v841
  %v4298 = vunpack.c.l.b16 %v842
  %v4299 = vunpack.c.l.b16 %v843
  %v4300 = vunpack.c.l.b16 %v844
  %v4301 = vunpack.c.l.b16 %v845
  %v4302 = vunpack.c.l.b16 %v846
  %v4303 = vunpack.c.l.b16 %v847
  %v4304 = vunpack.c.l.b16 %v848
  %v4305 = vunpack.c.l.b16 %v849
  %v4306 = vunpack.c.l.b16 %v850
  %v4307 = vunpack.c.l.b16 %v851
  %v4308 = vunpack.c.l.b16 %v852
  %v4309 = vunpack.c.l.b16 %v853
  %v4310 = vunpack.c.l.b16 %v854
  %v4311 = vunpack.c.l.b16 %v855
  %v4312 = vunpack.c.l.b16 %v856
  %v4313 = vunpack.c.l.b16 %v857
  %v4314 = vunpack.c.l.b16 %v858
  %v4315 = vunpack.c.l.b16 %v859
  %v4316 = vunpack.c.l.b16 %v860
  %v4317 = vunpack.c.l.b16 %v861
  %v4318 = vunpack.c.l.b16 %v862
  %v4319 = vunpack.c.l.b16 %v863
  %v4320 = vunpack.c.l.b16 %v864
  %v4321 = vunpack.c.l.b16 %v865
  %v4322 = vunpack.c.l.b16 %v866
  %v4323 = vunpack.c.l.b16 %v867
  %v4324 = vunpack.c.l.b16 %v868
  %v4325 = vunpack.c.l.b16 %v869
  %v4326 = vunpack.c.l.b16 %v870
  %v4327 = vunpack.c.l.b16 %v871
  %v4328 = vunpack.c.l.b16 %v872
  %v4329 = vunpack.c.l.b16 %v873
  %v4330 = vunpack.c.l.b16 %v874
  %v4331 = vunpack.c.l.b16 %v875
  %v4332 = vunpack.c.l.b16 %v876
  %v4333 = vunpack.c.l.b16 %v877
  %v4334 = vunpack.c.l.b16 %v878
  %v4335 = vunpack.c.l.b16 %v879
  %v4336 = vunpack.c.l.b16 %v880
  %v4337 = vunpack.c.l.b16 %v881
  %v4338 = vpack.c.b16 %v4051, %v4050
  %v4339 = vpack.c.b16 %v4053, %v4052
  %v4340 = vpack.c.b16 %v4055, %v4054
  %v4341 = vpack.c.b16 %v4057, %v4056
  %v4342 = vpack.c.b16 %v4059, %v4058
  %v4343 = vpack.c.b16 %v4061, %v4060
  %v4344 = vpack.c.b16 %v4063, %v4062
  %v4345 = vpack.c.b16 %v4065, %v4064
  %v4346 = vpack.c.b16 %v4067, %v4066
  %v4347 = vpack.c.b16 %v4069, %v4068
  %v4348 = vpack.c.b16 %v4071, %v4070
  %v4349 = vpack.c.b16 %v4073, %v4072
  %v4350 = vpack.c.b16 %v4075, %v4074
  %v4351 = vpack.c.b16 %v4077, %v4076
  %v4352 = vpack.c.b16 %v4079, %v4078
  %v4353 = vpack.c.b16 %v4081, %v4080
  %v4354 = vpack.c.b16 %v4083, %v4082
  %v4355 = vpack.c.b16 %v4085, %v4084
  %v4356 = vpack.c.b16 %v4087, %v4086
  %v4357 = vpack.c.b16 %v4089, %v4088
  %v4358 = vpack.c.b16 %v4091, %v4090
  %v4359 = vpack.c.b16 %v4093, %v4092
  %v4360 = vpack.c.b16 %v4095, %v4094
  %v4361 = vpack.c.b16 %v4097, %v4096
  %v4362 = vpack.c.b16 %v4099, %v4098
  %v4363 = vpack.c.b16 %v4101, %v4100
  %v4364 = vpack.c.b16 %v4103, %v4102
  %v4365 = vpack.c.b16 %v4105, %v4104
  %v4366 = vpack.c.b16 %v4107, %v4106
  %v4367 = vpack.c.b16 %v4109, %v4108
  %v4368 = vpack.c.b16 %v4111, %v4110
  %v4369 = vpack.c.b16 %v4113, %v4112
  %v4370 = vpack.c.b16 %v4115, %v4114
  %v4371 = vpack.c.b16 %v4117, %v4116
  %v4372 = vpack.c.b16 %v4119, %v4118
  %v4373 = vpack.c.b16 %v4121, %v4120
  %v4374 = vpack.c.b16 %v4123, %v4122
  %v4375 = vpack.c.b16 %v4125, %v4124
  %v4376 = vpack.c.b16 %v4127, %v4126
  %v4377 = vpack.c.b16 %v4129, %v4128
  %v4378 = vpack.c.b16 %v4131, %v4130
  %v4379 = vpack.c.b16 %v4133, %v4132
  %v4380 = vpack.c.b16 %v4135, %v4134
  %v4381 = vpack.c.b16 %v4137, %v4136
  %v4382 = vpack.c.b16 %v4139, %v4138
  %v4383 = vpack.c.b16 %v4141, %v4140
  %v4384 = vpack.c.b16 %v4143, %v4142
  %v4385 = vpack.c.b16 %v4145, %v4144
  %v4386 = vpack.c.b16 %v4147, %v4146
  %v4387 = vpack.c.b16 %v4149, %v4148
  %v4388 = vpack.c.b16 %v4151, %v4150
  %v4389 = vpack.c.b16 %v4153, %v4152
  %v4390 = vpack.c.b16 %v4155, %v4154
  %v4391 = vpack.c.b16 %v4157, %v4156
  %v4392 = vpack.c.b16 %v4159, %v4158
  %v4393 = vpack.c.b16 %v4161, %v4160
  %v4394 = vpack.c.b16 %v4163, %v4162
  %v4395 = vpack.c.b16 %v4165, %v4164
  %v4396 = vpack.c.b16 %v4167, %v4166
  %v4397 = vpack.c.b16 %v4169, %v4168
  %v4398 = vpack.c.b16 %v4171, %v4170
  %v4399 = vpack.c.b16 %v4173, %v4172
  %v4400 = vpack.c.b16 %v4175, %v4174
  %v4401 = vpack.c.b16 %v4177, %v4176
  %v4402 = vpack.c.b16 %v4179, %v4178
  %v4403 = vpack.c.b16 %v4181, %v4180
  %v4404 = vpack.c.b16 %v4183, %v4182
  %v4405 = vpack.c.b16 %v4185, %v4184
  %v4406 = vpack.c.b16 %v4187, %v4186
  %v4407 = vpack.c.b16 %v4189, %v4188
  %v4408 = vpack.c.b16 %v4191, %v4190
  %v4409 = vpack.c.b16 %v4193, %v4192
  %v4410 = vpack.c.b16 %v4195, %v4194
  %v4411 = vpack.c.b16 %v4197, %v4196
  %v4412 = vpack.c.b16 %v4199, %v4198
  %v4413 = vpack.c.b16 %v4201, %v4200
  %v4414 = vpack.c.b16 %v4203, %v4202
  %v4415 = vpack.c.b16 %v4205, %v4204
  %v4416 = vpack.c.b16 %v4207, %v4206
  %v4417 = vpack.c.b16 %v4209, %v4208
  %v4418 = vpack.c.b16 %v4211, %v4210
  %v4419 = vpack.c.b16 %v4213, %v4212
  %v4420 = vpack.c.b16 %v4215, %v4214
  %v4421 = vpack.c.b16 %v4217, %v4216
  %v4422 = vpack.c.b16 %v4219, %v4218
  %v4423 = vpack.c.b16 %v4221, %v4220
  %v4424 = vpack.c.b16 %v4223, %v4222
  %v4425 = vpack.c.b16 %v4225, %v4224
  %v4426 = vpack.c.b16 %v4227, %v4226
  %v4427 = vpack.c.b16 %v4229, %v4228
  %v4428 = vpack.c.b16 %v4231, %v4230
  %v4429 = vpack.c.b16 %v4233, %v4232
  %v4430 = vpack.c.b16 %v4235, %v4234
  %v4431 = vpack.c.b16 %v4237, %v4236
  %v4432 = vpack.c.b16 %v4239, %v4238
  %v4433 = vpack.c.b16 %v4241, %v4240
  %v4434 = vpack.c.b16 %v4243, %v4242
  %v4435 = vpack.c.b16 %v4245, %v4244
  %v4436 = vpack.c.b16 %v4247, %v4246
  %v4437 = vpack.c.b16 %v4249, %v4248
  %v4438 = vpack.c.b16 %v4251, %v4250
  %v4439 = vpack.c.b16 %v4253, %v4252
  %v4440 = vpack.c.b16 %v4255, %v4254
  %v4441 = vpack.c.b16 %v4257, %v4256
  %v4442 = vpack.c.b16 %v4259, %v4258
  %v4443 = vpack.c.b16 %v4261, %v4260
  %v4444 = vpack.c.b16 %v4263, %v4262
  %v4445 = vpack.c.b16 %v4265, %v4264
  %v4446 = vpack.c.b16 %v4267, %v4266
  %v4447 = vpack.c.b16 %v4269, %v4268
  %v4448 = vpack.c.b16 %v4271, %v4270
  %v4449 = vpack.c.b16 %v4273, %v4272
  %v4450 = vpack.c.b16 %v4275, %v4274
  %v4451 = vpack.c.b16 %v4277, %v4276
  %v4452 = vpack.c.b16 %v4279, %v4278
  %v4453 = vpack.c.b16 %v4281, %v4280
  %v4454 = vpack.c.b16 %v4283, %v4282
  %v4455 = vpack.c.b16 %v4285, %v4284
  %v4456 = vpack.c.b16 %v4287, %v4286
  %v4457 = vpack.c.b16 %v4289, %v4288
  %v4458 = vpack.c.b16 %v4291, %v4290
  %v4459 = vpack.c.b16 %v4293, %v4292
  %v4460 = vpack.c.b16 %v4295, %v4294
  %v4461 = vpack.c.b16 %v4297, %v4296
  %v4462 = vpack.c.b16 %v4299, %v4298
  %v4463 = vpack.c.b16 %v4301, %v4300
  %v4464 = vpack.c.b16 %v4303, %v4302
  %v4465 = vpack.c.b16 %v4305, %v4304
  %v4466 = vpack.c.b16 %v4307, %v4306
  %v4467 = vpack.c.b16 %v4309, %v4308
  %v4468 = vpack.c.b16 %v4311, %v4310
  %v4469 = vpack.c.b16 %v4313, %v4312
  %v4470 = vpack.c.b16 %v4315, %v4314
  %v4471 = vpack.c.b16 %v4317, %v4316
  %v4472 = vpack.c.b16 %v4319, %v4318
  %v4473 = vpack.c.b16 %v4321, %v4320
  %v4474 = vpack.c.b16 %v4323, %v4322
  %v4475 = vpack.c.b16 %v4325, %v4324
  %v4476 = vpack.c.b16 %v4327, %v4326
  %v4477 = vpack.c.b16 %v4329, %v4328
  %v4478 = vpack.c.b16 %v4331, %v4330
  %v4479 = vpack.c.b16 %v4333, %v4332
  %v4480 = vpack.c.b16 %v4335, %v4334
  %v4481 = vpack.c.b16 %v4337, %v4336
  %4626 = vmatprep.subr.bf16.mxu0 0
  %4627 = vmatpush1.bf16.msra.mxu0 %v4338
  %4628 = vmatprep.subr.bf16.mxu0 0
  %4629 = vmatpush1.bf16.msra.mxu0 %v4339
  %4630 = vmatprep.subr.bf16.mxu0 0
  %4631 = vmatpush1.bf16.msra.mxu0 %v4340
  %4632 = vmatprep.subr.bf16.mxu0 0
  %4633 = vmatpush1.bf16.msra.mxu0 %v4341
  %4634 = vmatprep.subr.bf16.mxu0 0
  %4635 = vmatpush1.bf16.msra.mxu0 %v4342
  %4636 = vmatprep.subr.bf16.mxu0 0
  %4637 = vmatpush1.bf16.msra.mxu0 %v4343
  %4638 = vmatprep.subr.bf16.mxu0 0
  %4639 = vmatpush1.bf16.msra.mxu0 %v4344
  %4640 = vmatprep.subr.bf16.mxu0 0
  %4641 = vmatpush1.bf16.msra.mxu0 %v4345
  %4642 = vmatprep.subr.bf16.mxu0 0
  %4643 = vmatpush1.bf16.msra.mxu0 %v4346
  %4644 = vmatprep.subr.bf16.mxu0 0
  %4645 = vmatpush1.bf16.msra.mxu0 %v4347
  %4646 = vmatprep.subr.bf16.mxu0 0
  %4647 = vmatpush1.bf16.msra.mxu0 %v4348
  %4648 = vmatprep.subr.bf16.mxu0 0
  %4649 = vmatpush1.bf16.msra.mxu0 %v4349
  %4650 = vmatprep.subr.bf16.mxu0 0
  %4651 = vmatpush1.bf16.msra.mxu0 %v4350
  %4652 = vmatprep.subr.bf16.mxu0 0
  %4653 = vmatpush1.bf16.msra.mxu0 %v4351
  %4654 = vmatprep.subr.bf16.mxu0 0
  %4655 = vmatpush1.bf16.msra.mxu0 %v4352
  %4656 = vmatprep.subr.bf16.mxu0 0
  %4657 = vmatpush1.bf16.msra.mxu0 %v4353
  %4658 = vmatprep.mubr.bf16.mxu0 %v2611
  %4659 = vmatmul.mubr.bf16.gmra.mrb[0].mxu0 %v2610
  %v4660 = vpop.f32.mrb[0].mxu0
  %v4661 = vadd.f32 0.0, %v4660
  %v4662 = vpop.f32.mrb[0].mxu0
  %v4663 = vpop.f32.mrb[0].mxu0
  %v4664 = vadd.f32 0.0, %v4663
  %v4665 = vpop.f32.mrb[0].mxu0
  %4666 = vmatprep.mubr.bf16.mxu0 %v2629
  %4667 = vmatmul.mubr.bf16.gmra.mrb[0].mxu0 %v2628
  %v4668 = vpop.f32.mrb[0].mxu0
  %v4669 = vadd.f32 0.0, %v4668
  %v4670 = vpop.f32.mrb[0].mxu0
  %v4671 = vpop.f32.mrb[0].mxu0
  %v4672 = vadd.f32 0.0, %v4671
  %v4673 = vpop.f32.mrb[0].mxu0
  %4674 = vmatprep.mubr.bf16.mxu0 %v2647
  %4675 = vmatmul.mubr.bf16.gmra.mrb[0].mxu0 %v2646
  %v4676 = vpop.f32.mrb[0].mxu0
  %v4677 = vadd.f32 0.0, %v4676
  %v4678 = vpop.f32.mrb[0].mxu0
  %v4679 = vpop.f32.mrb[0].mxu0
  %v4680 = vadd.f32 0.0, %v4679
  %v4681 = vpop.f32.mrb[0].mxu0
  %4682 = vmatprep.mubr.bf16.mxu0 %v2665
  %4683 = vmatmul.mubr.bf16.gmra.mrb[0].mxu0 %v2664
  %v4684 = vpop.f32.mrb[0].mxu0
  %v4685 = vadd.f32 0.0, %v4684
  %v4686 = vpop.f32.mrb[0].mxu0
  %v4687 = vpop.f32.mrb[0].mxu0
  %v4688 = vadd.f32 0.0, %v4687
  %v4689 = vpop.f32.mrb[0].mxu0
  %4690 = vmatprep.mubr.bf16.mxu0 %v2683
  %4691 = vmatmul.mubr.bf16.gmra.mrb[0].mxu0 %v2682
  %v4692 = vpop.f32.mrb[0].mxu0
  %v4693 = vadd.f32 0.0, %v4692
  %v4694 = vpop.f32.mrb[0].mxu0
  %v4695 = vpop.f32.mrb[0].mxu0
  %v4696 = vadd.f32 0.0, %v4695
  %v4697 = vpop.f32.mrb[0].mxu0
  %4698 = vmatprep.mubr.bf16.mxu0 %v2701
  %4699 = vmatmul.mubr.bf16.gmra.mrb[0].mxu0 %v2700
  %v4700 = vpop.f32.mrb[0].mxu0
  %v4701 = vadd.f32 0.0, %v4700
  %v4702 = vpop.f32.mrb[0].mxu0
  %v4703 = vpop.f32.mrb[0].mxu0
  %v4704 = vadd.f32 0.0, %v4703
  %v4705 = vpop.f32.mrb[0].mxu0
  %4706 = vmatprep.mubr.bf16.mxu0 %v2719
  %4707 = vmatmul.mubr.bf16.gmra.mrb[0].mxu0 %v2718
  %v4708 = vpop.f32.mrb[0].mxu0
  %v4709 = vadd.f32 0.0, %v4708
  %v4710 = vpop.f32.mrb[0].mxu0
  %v4711 = vpop.f32.mrb[0].mxu0
  %v4712 = vadd.f32 0.0, %v4711
  %v4713 = vpop.f32.mrb[0].mxu0
  %4714 = vmatprep.mubr.bf16.mxu0 %v2737
  %4715 = vmatmul.mubr.bf16.gmra.mrb[0].mxu0 %v2736
  %v4716 = vpop.f32.mrb[0].mxu0
  %v4717 = vadd.f32 0.0, %v4716
  %v4718 = vpop.f32.mrb[0].mxu0
  %v4719 = vpop.f32.mrb[0].mxu0
  %v4720 = vadd.f32 0.0, %v4719
  %v4721 = vpop.f32.mrb[0].mxu0
  %4722 = vmatprep.mubr.bf16.mxu0 %v2755
  %4723 = vmatmul.mubr.bf16.gmra.mrb[0].mxu0 %v2754
  %v4724 = vpop.f32.mrb[0].mxu0
  %v4725 = vadd.f32 0.0, %v4724
  %v4726 = vpop.f32.mrb[0].mxu0
  %v4727 = vpop.f32.mrb[0].mxu0
  %v4728 = vadd.f32 0.0, %v4727
  %v4729 = vpop.f32.mrb[0].mxu0
  %4730 = vmatprep.mubr.bf16.mxu0 %v2773
  %4731 = vmatmul.mubr.bf16.gmra.mrb[0].mxu0 %v2772
  %v4732 = vpop.f32.mrb[0].mxu0
  %v4733 = vadd.f32 0.0, %v4732
  %v4734 = vpop.f32.mrb[0].mxu0
  %v4735 = vpop.f32.mrb[0].mxu0
  %v4736 = vadd.f32 0.0, %v4735
  %v4737 = vpop.f32.mrb[0].mxu0
  %4738 = vmatprep.mubr.bf16.mxu0 %v2791
  %4739 = vmatmul.mubr.bf16.gmra.mrb[0].mxu0 %v2790
  %v4740 = vpop.f32.mrb[0].mxu0
  %v4741 = vadd.f32 0.0, %v4740
  %v4742 = vpop.f32.mrb[0].mxu0
  %v4743 = vpop.f32.mrb[0].mxu0
  %v4744 = vadd.f32 0.0, %v4743
  %v4745 = vpop.f32.mrb[0].mxu0
  %4746 = vmatprep.mubr.bf16.mxu0 %v2809
  %4747 = vmatmul.mubr.bf16.gmra.mrb[0].mxu0 %v2808
  %v4748 = vpop.f32.mrb[0].mxu0
  %v4749 = vadd.f32 0.0, %v4748
  %v4750 = vpop.f32.mrb[0].mxu0
  %v4751 = vpop.f32.mrb[0].mxu0
  %v4752 = vadd.f32 0.0, %v4751
  %v4753 = vpop.f32.mrb[0].mxu0
  %4754 = vmatprep.mubr.bf16.mxu0 %v2827
  %4755 = vmatmul.mubr.bf16.gmra.mrb[0].mxu0 %v2826
  %v4756 = vpop.f32.mrb[0].mxu0
  %v4757 = vadd.f32 0.0, %v4756
  %v4758 = vpop.f32.mrb[0].mxu0
  %v4759 = vpop.f32.mrb[0].mxu0
  %v4760 = vadd.f32 0.0, %v4759
  %v4761 = vpop.f32.mrb[0].mxu0
  %4762 = vmatprep.mubr.bf16.mxu0 %v2845
  %4763 = vmatmul.mubr.bf16.gmra.mrb[0].mxu0 %v2844
  %v4764 = vpop.f32.mrb[0].mxu0
  %v4765 = vadd.f32 0.0, %v4764
  %v4766 = vpop.f32.mrb[0].mxu0
  %v4767 = vpop.f32.mrb[0].mxu0
  %v4768 = vadd.f32 0.0, %v4767
  %v4769 = vpop.f32.mrb[0].mxu0
  %4770 = vmatprep.mubr.bf16.mxu0 %v2863
  %4771 = vmatmul.mubr.bf16.gmra.mrb[0].mxu0 %v2862
  %v4772 = vpop.f32.mrb[0].mxu0
  %v4773 = vadd.f32 0.0, %v4772
  %v4774 = vpop.f32.mrb[0].mxu0
  %v4775 = vpop.f32.mrb[0].mxu0
  %v4776 = vadd.f32 0.0, %v4775
  %v4777 = vpop.f32.mrb[0].mxu0
  %4778 = vmatprep.mubr.bf16.mxu0 %v2881
  %4779 = vmatmul.mubr.bf16.gmra.mrb[0].mxu0 %v2880
  %v4780 = vpop.f32.mrb[0].mxu0
  %v4781 = vadd.f32 0.0, %v4780
  %v4782 = vpop.f32.mrb[0].mxu0
  %v4783 = vpop.f32.mrb[0].mxu0
  %v4784 = vadd.f32 0.0, %v4783
  %v4785 = vpop.f32.mrb[0].mxu0
  %4786 = vmatprep.mubr.bf16.mxu0 %v2899
  %4787 = vmatmul.mubr.bf16.gmra.mrb[0].mxu0 %v2898
  %v4788 = vpop.f32.mrb[0].mxu0
  %v4789 = vadd.f32 0.0, %v4788
  %v4790 = vpop.f32.mrb[0].mxu0
  %v4791 = vpop.f32.mrb[0].mxu0
  %v4792 = vadd.f32 0.0, %v4791
  %v4793 = vpop.f32.mrb[0].mxu0
  %4794 = vmatprep.mubr.bf16.mxu0 %v2917
  %4795 = vmatmul.mubr.bf16.gmra.mrb[0].mxu0 %v2916
  %v4796 = vpop.f32.mrb[0].mxu0
  %v4797 = vadd.f32 0.0, %v4796
  %v4798 = vpop.f32.mrb[0].mxu0
  %v4799 = vpop.f32.mrb[0].mxu0
  %v4800 = vadd.f32 0.0, %v4799
  %v4801 = vpop.f32.mrb[0].mxu0
  %4802 = vmatprep.mubr.bf16.mxu0 %v2935
  %4803 = vmatmul.mubr.bf16.gmra.mrb[0].mxu0 %v2934
  %v4804 = vpop.f32.mrb[0].mxu0
  %v4805 = vadd.f32 0.0, %v4804
  %v4806 = vpop.f32.mrb[0].mxu0
  %v4807 = vpop.f32.mrb[0].mxu0
  %v4808 = vadd.f32 0.0, %v4807
  %v4809 = vpop.f32.mrb[0].mxu0
  %4810 = vmatprep.mubr.bf16.mxu0 %v2953
  %4811 = vmatmul.mubr.bf16.gmra.mrb[0].mxu0 %v2952
  %v4812 = vpop.f32.mrb[0].mxu0
  %v4813 = vadd.f32 0.0, %v4812
  %v4814 = vpop.f32.mrb[0].mxu0
  %v4815 = vpop.f32.mrb[0].mxu0
  %v4816 = vadd.f32 0.0, %v4815
  %v4817 = vpop.f32.mrb[0].mxu0
  %4818 = vmatprep.mubr.bf16.mxu0 %v2971
  %4819 = vmatmul.mubr.bf16.gmra.mrb[0].mxu0 %v2970
  %v4820 = vpop.f32.mrb[0].mxu0
  %v4821 = vadd.f32 0.0, %v4820
  %v4822 = vpop.f32.mrb[0].mxu0
  %v4823 = vpop.f32.mrb[0].mxu0
  %v4824 = vadd.f32 0.0, %v4823
  %v4825 = vpop.f32.mrb[0].mxu0
  %4826 = vmatprep.mubr.bf16.mxu0 %v2989
  %4827 = vmatmul.mubr.bf16.gmra.mrb[0].mxu0 %v2988
  %v4828 = vpop.f32.mrb[0].mxu0
  %v4829 = vadd.f32 0.0, %v4828
  %v4830 = vpop.f32.mrb[0].mxu0
  %v4831 = vpop.f32.mrb[0].mxu0
  %v4832 = vadd.f32 0.0, %v4831
  %v4833 = vpop.f32.mrb[0].mxu0
  %4834 = vmatprep.mubr.bf16.mxu0 %v3007
  %4835 = vmatmul.mubr.bf16.gmra.mrb[0].mxu0 %v3006
  %v4836 = vpop.f32.mrb[0].mxu0
  %v4837 = vadd.f32 0.0, %v4836
  %v4838 = vpop.f32.mrb[0].mxu0
  %v4839 = vpop.f32.mrb[0].mxu0
  %v4840 = vadd.f32 0.0, %v4839
  %v4841 = vpop.f32.mrb[0].mxu0
  %4842 = vmatprep.mubr.bf16.mxu0 %v3025
  %4843 = vmatmul.mubr.bf16.gmra.mrb[0].mxu0 %v3024
  %v4844 = vpop.f32.mrb[0].mxu0
  %v4845 = vadd.f32 0.0, %v4844
  %v4846 = vpop.f32.mrb[0].mxu0
  %v4847 = vpop.f32.mrb[0].mxu0
  %v4848 = vadd.f32 0.0, %v4847
  %v4849 = vpop.f32.mrb[0].mxu0
  %4850 = vmatprep.mubr.bf16.mxu0 %v3043
  %4851 = vmatmul.mubr.bf16.gmra.mrb[0].mxu0 %v3042
  %v4852 = vpop.f32.mrb[0].mxu0
  %v4853 = vadd.f32 0.0, %v4852
  %v4854 = vpop.f32.mrb[0].mxu0
  %v4855 = vpop.f32.mrb[0].mxu0
  %v4856 = vadd.f32 0.0, %v4855
  %v4857 = vpop.f32.mrb[0].mxu0
  %4858 = vmatprep.mubr.bf16.mxu0 %v3061
  %4859 = vmatmul.mubr.bf16.gmra.mrb[0].mxu0 %v3060
  %v4860 = vpop.f32.mrb[0].mxu0
  %v4861 = vadd.f32 0.0, %v4860
  %v4862 = vpop.f32.mrb[0].mxu0
  %v4863 = vpop.f32.mrb[0].mxu0
  %v4864 = vadd.f32 0.0, %v4863
  %v4865 = vpop.f32.mrb[0].mxu0
  %4866 = vmatprep.mubr.bf16.mxu0 %v3079
  %4867 = vmatmul.mubr.bf16.gmra.mrb[0].mxu0 %v3078
  %v4868 = vpop.f32.mrb[0].mxu0
  %v4869 = vadd.f32 0.0, %v4868
  %v4870 = vpop.f32.mrb[0].mxu0
  %v4871 = vpop.f32.mrb[0].mxu0
  %v4872 = vadd.f32 0.0, %v4871
  %v4873 = vpop.f32.mrb[0].mxu0
  %4874 = vmatprep.mubr.bf16.mxu0 %v3097
  %4875 = vmatmul.mubr.bf16.gmra.mrb[0].mxu0 %v3096
  %v4876 = vpop.f32.mrb[0].mxu0
  %v4877 = vadd.f32 0.0, %v4876
  %v4878 = vpop.f32.mrb[0].mxu0
  %v4879 = vpop.f32.mrb[0].mxu0
  %v4880 = vadd.f32 0.0, %v4879
  %v4881 = vpop.f32.mrb[0].mxu0
  %4882 = vmatprep.mubr.bf16.mxu0 %v3115
  %4883 = vmatmul.mubr.bf16.gmra.mrb[0].mxu0 %v3114
  %v4884 = vpop.f32.mrb[0].mxu0
  %v4885 = vadd.f32 0.0, %v4884
  %v4886 = vpop.f32.mrb[0].mxu0
  %v4887 = vpop.f32.mrb[0].mxu0
  %v4888 = vadd.f32 0.0, %v4887
  %v4889 = vpop.f32.mrb[0].mxu0
  %4890 = vmatprep.mubr.bf16.mxu0 %v3133
  %4891 = vmatmul.mubr.bf16.gmra.mrb[0].mxu0 %v3132
  %v4892 = vpop.f32.mrb[0].mxu0
  %v4893 = vadd.f32 0.0, %v4892
  %v4894 = vpop.f32.mrb[0].mxu0
  %v4895 = vpop.f32.mrb[0].mxu0
  %v4896 = vadd.f32 0.0, %v4895
  %v4897 = vpop.f32.mrb[0].mxu0
  %4898 = vmatprep.mubr.bf16.mxu0 %v3151
  %4899 = vmatmul.mubr.bf16.gmra.mrb[0].mxu0 %v3150
  %v4900 = vpop.f32.mrb[0].mxu0
  %v4901 = vadd.f32 0.0, %v4900
  %v4902 = vpop.f32.mrb[0].mxu0
  %v4903 = vpop.f32.mrb[0].mxu0
  %v4904 = vadd.f32 0.0, %v4903
  %v4905 = vpop.f32.mrb[0].mxu0
  %4906 = vmatprep.mubr.bf16.mxu0 %v3169
  %4907 = vmatmul.mubr.bf16.gmra.mrb[0].mxu0 %v3168
  %v4908 = vpop.f32.mrb[0].mxu0
  %v4909 = vadd.f32 0.0, %v4908
  %v4910 = vpop.f32.mrb[0].mxu0
  %v4911 = vpop.f32.mrb[0].mxu0
  %v4912 = vadd.f32 0.0, %v4911
  %v4913 = vpop.f32.mrb[0].mxu0
  %4914 = vdwg.mxu0
  %4915 = vmatprep.subr.bf16.mxu0 0
  %4916 = vmatpush1.bf16.msra.mxu0 %v4354
  %4917 = vmatprep.subr.bf16.mxu0 0
  %4918 = vmatpush1.bf16.msra.mxu0 %v4355
  %4919 = vmatprep.subr.bf16.mxu0 0
  %4920 = vmatpush1.bf16.msra.mxu0 %v4356
  %4921 = vmatprep.subr.bf16.mxu0 0
  %4922 = vmatpush1.bf16.msra.mxu0 %v4357
  %4923 = vmatprep.subr.bf16.mxu0 0
  %4924 = vmatpush1.bf16.msra.mxu0 %v4358
  %4925 = vmatprep.subr.bf16.mxu0 0
  %4926 = vmatpush1.bf16.msra.mxu0 %v4359
  %4927 = vmatprep.subr.bf16.mxu0 0
  %4928 = vmatpush1.bf16.msra.mxu0 %v4360
  %4929 = vmatprep.subr.bf16.mxu0 0
  %4930 = vmatpush1.bf16.msra.mxu0 %v4361
  %4931 = vmatprep.subr.bf16.mxu0 0
  %4932 = vmatpush1.bf16.msra.mxu0 %v4362
  %4933 = vmatprep.subr.bf16.mxu0 0
  %4934 = vmatpush1.bf16.msra.mxu0 %v4363
  %4935 = vmatprep.subr.bf16.mxu0 0
  %4936 = vmatpush1.bf16.msra.mxu0 %v4364
  %4937 = vmatprep.subr.bf16.mxu0 0
  %4938 = vmatpush1.bf16.msra.mxu0 %v4365
  %4939 = vmatprep.subr.bf16.mxu0 0
  %4940 = vmatpush1.bf16.msra.mxu0 %v4366
  %4941 = vmatprep.subr.bf16.mxu0 0
  %4942 = vmatpush1.bf16.msra.mxu0 %v4367
  %4943 = vmatprep.subr.bf16.mxu0 0
  %4944 = vmatpush1.bf16.msra.mxu0 %v4368
  %4945 = vmatprep.subr.bf16.mxu0 0
  %4946 = vmatpush1.bf16.msra.mxu0 %v4369
  %4947 = vmatprep.mubr.bf16.mxu0 %v2613
  %4948 = vmatmul.mubr.bf16.gmra.mrb[0].mxu0 %v2612
  %v4949 = vpop.f32.mrb[0].mxu0
  %v4950 = vadd.f32 %v4661, %v4949
  %v4951 = vpop.f32.mrb[0].mxu0
  %v4952 = vpop.f32.mrb[0].mxu0
  %v4953 = vadd.f32 %v4664, %v4952
  %v4954 = vpop.f32.mrb[0].mxu0
  %4955 = vmatprep.mubr.bf16.mxu0 %v2631
  %4956 = vmatmul.mubr.bf16.gmra.mrb[0].mxu0 %v2630
  %v4957 = vpop.f32.mrb[0].mxu0
  %v4958 = vadd.f32 %v4669, %v4957
  %v4959 = vpop.f32.mrb[0].mxu0
  %v4960 = vpop.f32.mrb[0].mxu0
  %v4961 = vadd.f32 %v4672, %v4960
  %v4962 = vpop.f32.mrb[0].mxu0
  %4963 = vmatprep.mubr.bf16.mxu0 %v2649
  %4964 = vmatmul.mubr.bf16.gmra.mrb[0].mxu0 %v2648
  %v4965 = vpop.f32.mrb[0].mxu0
  %v4966 = vadd.f32 %v4677, %v4965
  %v4967 = vpop.f32.mrb[0].mxu0
  %v4968 = vpop.f32.mrb[0].mxu0
  %v4969 = vadd.f32 %v4680, %v4968
  %v4970 = vpop.f32.mrb[0].mxu0
  %4971 = vmatprep.mubr.bf16.mxu0 %v2667
  %4972 = vmatmul.mubr.bf16.gmra.mrb[0].mxu0 %v2666
  %v4973 = vpop.f32.mrb[0].mxu0
  %v4974 = vadd.f32 %v4685, %v4973
  %v4975 = vpop.f32.mrb[0].mxu0
  %v4976 = vpop.f32.mrb[0].mxu0
  %v4977 = vadd.f32 %v4688, %v4976
  %v4978 = vpop.f32.mrb[0].mxu0
  %4979 = vmatprep.mubr.bf16.mxu0 %v2685
  %4980 = vmatmul.mubr.bf16.gmra.mrb[0].mxu0 %v2684
  %v4981 = vpop.f32.mrb[0].mxu0
  %v4982 = vadd.f32 %v4693, %v4981
  %v4983 = vpop.f32.mrb[0].mxu0
  %v4984 = vpop.f32.mrb[0].mxu0
  %v4985 = vadd.f32 %v4696, %v4984
  %v4986 = vpop.f32.mrb[0].mxu0
  %4987 = vmatprep.mubr.bf16.mxu0 %v2703
  %4988 = vmatmul.mubr.bf16.gmra.mrb[0].mxu0 %v2702
  %v4989 = vpop.f32.mrb[0].mxu0
  %v4990 = vadd.f32 %v4701, %v4989
  %v4991 = vpop.f32.mrb[0].mxu0
  %v4992 = vpop.f32.mrb[0].mxu0
  %v4993 = vadd.f32 %v4704, %v4992
  %v4994 = vpop.f32.mrb[0].mxu0
  %4995 = vmatprep.mubr.bf16.mxu0 %v2721
  %4996 = vmatmul.mubr.bf16.gmra.mrb[0].mxu0 %v2720
  %v4997 = vpop.f32.mrb[0].mxu0
  %v4998 = vadd.f32 %v4709, %v4997
  %v4999 = vpop.f32.mrb[0].mxu0
  %v5000 = vpop.f32.mrb[0].mxu0
  %v5001 = vadd.f32 %v4712, %v5000
  %v5002 = vpop.f32.mrb[0].mxu0
  %5003 = vmatprep.mubr.bf16.mxu0 %v2739
  %5004 = vmatmul.mubr.bf16.gmra.mrb[0].mxu0 %v2738
  %v5005 = vpop.f32.mrb[0].mxu0
  %v5006 = vadd.f32 %v4717, %v5005
  %v5007 = vpop.f32.mrb[0].mxu0
  %v5008 = vpop.f32.mrb[0].mxu0
  %v5009 = vadd.f32 %v4720, %v5008
  %v5010 = vpop.f32.mrb[0].mxu0
  %5011 = vmatprep.mubr.bf16.mxu0 %v2757
  %5012 = vmatmul.mubr.bf16.gmra.mrb[0].mxu0 %v2756
  %v5013 = vpop.f32.mrb[0].mxu0
  %v5014 = vadd.f32 %v4725, %v5013
  %v5015 = vpop.f32.mrb[0].mxu0
  %v5016 = vpop.f32.mrb[0].mxu0
  %v5017 = vadd.f32 %v4728, %v5016
  %v5018 = vpop.f32.mrb[0].mxu0
  %5019 = vmatprep.mubr.bf16.mxu0 %v2775
  %5020 = vmatmul.mubr.bf16.gmra.mrb[0].mxu0 %v2774
  %v5021 = vpop.f32.mrb[0].mxu0
  %v5022 = vadd.f32 %v4733, %v5021
  %v5023 = vpop.f32.mrb[0].mxu0
  %v5024 = vpop.f32.mrb[0].mxu0
  %v5025 = vadd.f32 %v4736, %v5024
  %v5026 = vpop.f32.mrb[0].mxu0
  %5027 = vmatprep.mubr.bf16.mxu0 %v2793
  %5028 = vmatmul.mubr.bf16.gmra.mrb[0].mxu0 %v2792
  %v5029 = vpop.f32.mrb[0].mxu0
  %v5030 = vadd.f32 %v4741, %v5029
  %v5031 = vpop.f32.mrb[0].mxu0
  %v5032 = vpop.f32.mrb[0].mxu0
  %v5033 = vadd.f32 %v4744, %v5032
  %v5034 = vpop.f32.mrb[0].mxu0
  %5035 = vmatprep.mubr.bf16.mxu0 %v2811
  %5036 = vmatmul.mubr.bf16.gmra.mrb[0].mxu0 %v2810
  %v5037 = vpop.f32.mrb[0].mxu0
  %v5038 = vadd.f32 %v4749, %v5037
  %v5039 = vpop.f32.mrb[0].mxu0
  %v5040 = vpop.f32.mrb[0].mxu0
  %v5041 = vadd.f32 %v4752, %v5040
  %v5042 = vpop.f32.mrb[0].mxu0
  %5043 = vmatprep.mubr.bf16.mxu0 %v2829
  %5044 = vmatmul.mubr.bf16.gmra.mrb[0].mxu0 %v2828
  %v5045 = vpop.f32.mrb[0].mxu0
  %v5046 = vadd.f32 %v4757, %v5045
  %v5047 = vpop.f32.mrb[0].mxu0
  %v5048 = vpop.f32.mrb[0].mxu0
  %v5049 = vadd.f32 %v4760, %v5048
  %v5050 = vpop.f32.mrb[0].mxu0
  %5051 = vmatprep.mubr.bf16.mxu0 %v2847
  %5052 = vmatmul.mubr.bf16.gmra.mrb[0].mxu0 %v2846
  %v5053 = vpop.f32.mrb[0].mxu0
  %v5054 = vadd.f32 %v4765, %v5053
  %v5055 = vpop.f32.mrb[0].mxu0
  %v5056 = vpop.f32.mrb[0].mxu0
  %v5057 = vadd.f32 %v4768, %v5056
  %v5058 = vpop.f32.mrb[0].mxu0
  %5059 = vmatprep.mubr.bf16.mxu0 %v2865
  %5060 = vmatmul.mubr.bf16.gmra.mrb[0].mxu0 %v2864
  %v5061 = vpop.f32.mrb[0].mxu0
  %v5062 = vadd.f32 %v4773, %v5061
  %v5063 = vpop.f32.mrb[0].mxu0
  %v5064 = vpop.f32.mrb[0].mxu0
  %v5065 = vadd.f32 %v4776, %v5064
  %v5066 = vpop.f32.mrb[0].mxu0
  %5067 = vmatprep.mubr.bf16.mxu0 %v2883
  %5068 = vmatmul.mubr.bf16.gmra.mrb[0].mxu0 %v2882
  %v5069 = vpop.f32.mrb[0].mxu0
  %v5070 = vadd.f32 %v4781, %v5069
  %v5071 = vpop.f32.mrb[0].mxu0
  %v5072 = vpop.f32.mrb[0].mxu0
  %v5073 = vadd.f32 %v4784, %v5072
  %v5074 = vpop.f32.mrb[0].mxu0
  %5075 = vmatprep.mubr.bf16.mxu0 %v2901
  %5076 = vmatmul.mubr.bf16.gmra.mrb[0].mxu0 %v2900
  %v5077 = vpop.f32.mrb[0].mxu0
  %v5078 = vadd.f32 %v4789, %v5077
  %v5079 = vpop.f32.mrb[0].mxu0
  %v5080 = vpop.f32.mrb[0].mxu0
  %v5081 = vadd.f32 %v4792, %v5080
  %v5082 = vpop.f32.mrb[0].mxu0
  %5083 = vmatprep.mubr.bf16.mxu0 %v2919
  %5084 = vmatmul.mubr.bf16.gmra.mrb[0].mxu0 %v2918
  %v5085 = vpop.f32.mrb[0].mxu0
  %v5086 = vadd.f32 %v4797, %v5085
  %v5087 = vpop.f32.mrb[0].mxu0
  %v5088 = vpop.f32.mrb[0].mxu0
  %v5089 = vadd.f32 %v4800, %v5088
  %v5090 = vpop.f32.mrb[0].mxu0
  %5091 = vmatprep.mubr.bf16.mxu0 %v2937
  %5092 = vmatmul.mubr.bf16.gmra.mrb[0].mxu0 %v2936
  %v5093 = vpop.f32.mrb[0].mxu0
  %v5094 = vadd.f32 %v4805, %v5093
  %v5095 = vpop.f32.mrb[0].mxu0
  %v5096 = vpop.f32.mrb[0].mxu0
  %v5097 = vadd.f32 %v4808, %v5096
  %v5098 = vpop.f32.mrb[0].mxu0
  %5099 = vmatprep.mubr.bf16.mxu0 %v2955
  %5100 = vmatmul.mubr.bf16.gmra.mrb[0].mxu0 %v2954
  %v5101 = vpop.f32.mrb[0].mxu0
  %v5102 = vadd.f32 %v4813, %v5101
  %v5103 = vpop.f32.mrb[0].mxu0
  %v5104 = vpop.f32.mrb[0].mxu0
  %v5105 = vadd.f32 %v4816, %v5104
  %v5106 = vpop.f32.mrb[0].mxu0
  %5107 = vmatprep.mubr.bf16.mxu0 %v2973
  %5108 = vmatmul.mubr.bf16.gmra.mrb[0].mxu0 %v2972
  %v5109 = vpop.f32.mrb[0].mxu0
  %v5110 = vadd.f32 %v4821, %v5109
  %v5111 = vpop.f32.mrb[0].mxu0
  %v5112 = vpop.f32.mrb[0].mxu0
  %v5113 = vadd.f32 %v4824, %v5112
  %v5114 = vpop.f32.mrb[0].mxu0
  %5115 = vmatprep.mubr.bf16.mxu0 %v2991
  %5116 = vmatmul.mubr.bf16.gmra.mrb[0].mxu0 %v2990
  %v5117 = vpop.f32.mrb[0].mxu0
  %v5118 = vadd.f32 %v4829, %v5117
  %v5119 = vpop.f32.mrb[0].mxu0
  %v5120 = vpop.f32.mrb[0].mxu0
  %v5121 = vadd.f32 %v4832, %v5120
  %v5122 = vpop.f32.mrb[0].mxu0
  %5123 = vmatprep.mubr.bf16.mxu0 %v3009
  %5124 = vmatmul.mubr.bf16.gmra.mrb[0].mxu0 %v3008
  %v5125 = vpop.f32.mrb[0].mxu0
  %v5126 = vadd.f32 %v4837, %v5125
  %v5127 = vpop.f32.mrb[0].mxu0
  %v5128 = vpop.f32.mrb[0].mxu0
  %v5129 = vadd.f32 %v4840, %v5128
  %v5130 = vpop.f32.mrb[0].mxu0
  %5131 = vmatprep.mubr.bf16.mxu0 %v3027
  %5132 = vmatmul.mubr.bf16.gmra.mrb[0].mxu0 %v3026
  %v5133 = vpop.f32.mrb[0].mxu0
  %v5134 = vadd.f32 %v4845, %v5133
  %v5135 = vpop.f32.mrb[0].mxu0
  %v5136 = vpop.f32.mrb[0].mxu0
  %v5137 = vadd.f32 %v4848, %v5136
  %v5138 = vpop.f32.mrb[0].mxu0
  %5139 = vmatprep.mubr.bf16.mxu0 %v3045
  %5140 = vmatmul.mubr.bf16.gmra.mrb[0].mxu0 %v3044
  %v5141 = vpop.f32.mrb[0].mxu0
  %v5142 = vadd.f32 %v4853, %v5141
  %v5143 = vpop.f32.mrb[0].mxu0
  %v5144 = vpop.f32.mrb[0].mxu0
  %v5145 = vadd.f32 %v4856, %v5144
  %v5146 = vpop.f32.mrb[0].mxu0
  %5147 = vmatprep.mubr.bf16.mxu0 %v3063
  %5148 = vmatmul.mubr.bf16.gmra.mrb[0].mxu0 %v3062
  %v5149 = vpop.f32.mrb[0].mxu0
  %v5150 = vadd.f32 %v4861, %v5149
  %v5151 = vpop.f32.mrb[0].mxu0
  %v5152 = vpop.f32.mrb[0].mxu0
  %v5153 = vadd.f32 %v4864, %v5152
  %v5154 = vpop.f32.mrb[0].mxu0
  %5155 = vmatprep.mubr.bf16.mxu0 %v3081
  %5156 = vmatmul.mubr.bf16.gmra.mrb[0].mxu0 %v3080
  %v5157 = vpop.f32.mrb[0].mxu0
  %v5158 = vadd.f32 %v4869, %v5157
  %v5159 = vpop.f32.mrb[0].mxu0
  %v5160 = vpop.f32.mrb[0].mxu0
  %v5161 = vadd.f32 %v4872, %v5160
  %v5162 = vpop.f32.mrb[0].mxu0
  %5163 = vmatprep.mubr.bf16.mxu0 %v3099
  %5164 = vmatmul.mubr.bf16.gmra.mrb[0].mxu0 %v3098
  %v5165 = vpop.f32.mrb[0].mxu0
  %v5166 = vadd.f32 %v4877, %v5165
  %v5167 = vpop.f32.mrb[0].mxu0
  %v5168 = vpop.f32.mrb[0].mxu0
  %v5169 = vadd.f32 %v4880, %v5168
  %v5170 = vpop.f32.mrb[0].mxu0
  %5171 = vmatprep.mubr.bf16.mxu0 %v3117
  %5172 = vmatmul.mubr.bf16.gmra.mrb[0].mxu0 %v3116
  %v5173 = vpop.f32.mrb[0].mxu0
  %v5174 = vadd.f32 %v4885, %v5173
  %v5175 = vpop.f32.mrb[0].mxu0
  %v5176 = vpop.f32.mrb[0].mxu0
  %v5177 = vadd.f32 %v4888, %v5176
  %v5178 = vpop.f32.mrb[0].mxu0
  %5179 = vmatprep.mubr.bf16.mxu0 %v3135
  %5180 = vmatmul.mubr.bf16.gmra.mrb[0].mxu0 %v3134
  %v5181 = vpop.f32.mrb[0].mxu0
  %v5182 = vadd.f32 %v4893, %v5181
  %v5183 = vpop.f32.mrb[0].mxu0
  %v5184 = vpop.f32.mrb[0].mxu0
  %v5185 = vadd.f32 %v4896, %v5184
  %v5186 = vpop.f32.mrb[0].mxu0
  %5187 = vmatprep.mubr.bf16.mxu0 %v3153
  %5188 = vmatmul.mubr.bf16.gmra.mrb[0].mxu0 %v3152
  %v5189 = vpop.f32.mrb[0].mxu0
  %v5190 = vadd.f32 %v4901, %v5189
  %v5191 = vpop.f32.mrb[0].mxu0
  %v5192 = vpop.f32.mrb[0].mxu0
  %v5193 = vadd.f32 %v4904, %v5192
  %v5194 = vpop.f32.mrb[0].mxu0
  %5195 = vmatprep.mubr.bf16.mxu0 %v3171
  %5196 = vmatmul.mubr.bf16.gmra.mrb[0].mxu0 %v3170
  %v5197 = vpop.f32.mrb[0].mxu0
  %v5198 = vadd.f32 %v4909, %v5197
  %v5199 = vpop.f32.mrb[0].mxu0
  %v5200 = vpop.f32.mrb[0].mxu0
  %v5201 = vadd.f32 %v4912, %v5200
  %v5202 = vpop.f32.mrb[0].mxu0
  %5203 = vdwg.mxu0
  %5204 = vmatprep.subr.bf16.mxu0 0
  %5205 = vmatpush1.bf16.msra.mxu0 %v4370
  %5206 = vmatprep.subr.bf16.mxu0 0
  %5207 = vmatpush1.bf16.msra.mxu0 %v4371
  %5208 = vmatprep.subr.bf16.mxu0 0
  %5209 = vmatpush1.bf16.msra.mxu0 %v4372
  %5210 = vmatprep.subr.bf16.mxu0 0
  %5211 = vmatpush1.bf16.msra.mxu0 %v4373
  %5212 = vmatprep.subr.bf16.mxu0 0
  %5213 = vmatpush1.bf16.msra.mxu0 %v4374
  %5214 = vmatprep.subr.bf16.mxu0 0
  %5215 = vmatpush1.bf16.msra.mxu0 %v4375
  %5216 = vmatprep.subr.bf16.mxu0 0
  %5217 = vmatpush1.bf16.msra.mxu0 %v4376
  %5218 = vmatprep.subr.bf16.mxu0 0
  %5219 = vmatpush1.bf16.msra.mxu0 %v4377
  %5220 = vmatprep.subr.bf16.mxu0 0
  %5221 = vmatpush1.bf16.msra.mxu0 %v4378
  %5222 = vmatprep.subr.bf16.mxu0 0
  %5223 = vmatpush1.bf16.msra.mxu0 %v4379
  %5224 = vmatprep.subr.bf16.mxu0 0
  %5225 = vmatpush1.bf16.msra.mxu0 %v4380
  %5226 = vmatprep.subr.bf16.mxu0 0
  %5227 = vmatpush1.bf16.msra.mxu0 %v4381
  %5228 = vmatprep.subr.bf16.mxu0 0
  %5229 = vmatpush1.bf16.msra.mxu0 %v4382
  %5230 = vmatprep.subr.bf16.mxu0 0
  %5231 = vmatpush1.bf16.msra.mxu0 %v4383
  %5232 = vmatprep.subr.bf16.mxu0 0
  %5233 = vmatpush1.bf16.msra.mxu0 %v4384
  %5234 = vmatprep.subr.bf16.mxu0 0
  %5235 = vmatpush1.bf16.msra.mxu0 %v4385
  %5236 = vmatprep.mubr.bf16.mxu0 %v2615
  %5237 = vmatmul.mubr.bf16.gmra.mrb[0].mxu0 %v2614
  %v5238 = vpop.f32.mrb[0].mxu0
  %v5239 = vadd.f32 %v4950, %v5238
  %v5240 = vpop.f32.mrb[0].mxu0
  %v5241 = vpop.f32.mrb[0].mxu0
  %v5242 = vadd.f32 %v4953, %v5241
  %v5243 = vpop.f32.mrb[0].mxu0
  %5244 = vmatprep.mubr.bf16.mxu0 %v2633
  %5245 = vmatmul.mubr.bf16.gmra.mrb[0].mxu0 %v2632
  %v5246 = vpop.f32.mrb[0].mxu0
  %v5247 = vadd.f32 %v4958, %v5246
  %v5248 = vpop.f32.mrb[0].mxu0
  %v5249 = vpop.f32.mrb[0].mxu0
  %v5250 = vadd.f32 %v4961, %v5249
  %v5251 = vpop.f32.mrb[0].mxu0
  %5252 = vmatprep.mubr.bf16.mxu0 %v2651
  %5253 = vmatmul.mubr.bf16.gmra.mrb[0].mxu0 %v2650
  %v5254 = vpop.f32.mrb[0].mxu0
  %v5255 = vadd.f32 %v4966, %v5254
  %v5256 = vpop.f32.mrb[0].mxu0
  %v5257 = vpop.f32.mrb[0].mxu0
  %v5258 = vadd.f32 %v4969, %v5257
  %v5259 = vpop.f32.mrb[0].mxu0
  %5260 = vmatprep.mubr.bf16.mxu0 %v2669
  %5261 = vmatmul.mubr.bf16.gmra.mrb[0].mxu0 %v2668
  %v5262 = vpop.f32.mrb[0].mxu0
  %v5263 = vadd.f32 %v4974, %v5262
  %v5264 = vpop.f32.mrb[0].mxu0
  %v5265 = vpop.f32.mrb[0].mxu0
  %v5266 = vadd.f32 %v4977, %v5265
  %v5267 = vpop.f32.mrb[0].mxu0
  %5268 = vmatprep.mubr.bf16.mxu0 %v2687
  %5269 = vmatmul.mubr.bf16.gmra.mrb[0].mxu0 %v2686
  %v5270 = vpop.f32.mrb[0].mxu0
  %v5271 = vadd.f32 %v4982, %v5270
  %v5272 = vpop.f32.mrb[0].mxu0
  %v5273 = vpop.f32.mrb[0].mxu0
  %v5274 = vadd.f32 %v4985, %v5273
  %v5275 = vpop.f32.mrb[0].mxu0
  %5276 = vmatprep.mubr.bf16.mxu0 %v2705
  %5277 = vmatmul.mubr.bf16.gmra.mrb[0].mxu0 %v2704
  %v5278 = vpop.f32.mrb[0].mxu0
  %v5279 = vadd.f32 %v4990, %v5278
  %v5280 = vpop.f32.mrb[0].mxu0
  %v5281 = vpop.f32.mrb[0].mxu0
  %v5282 = vadd.f32 %v4993, %v5281
  %v5283 = vpop.f32.mrb[0].mxu0
  %5284 = vmatprep.mubr.bf16.mxu0 %v2723
  %5285 = vmatmul.mubr.bf16.gmra.mrb[0].mxu0 %v2722
  %v5286 = vpop.f32.mrb[0].mxu0
  %v5287 = vadd.f32 %v4998, %v5286
  %v5288 = vpop.f32.mrb[0].mxu0
  %v5289 = vpop.f32.mrb[0].mxu0
  %v5290 = vadd.f32 %v5001, %v5289
  %v5291 = vpop.f32.mrb[0].mxu0
  %5292 = vmatprep.mubr.bf16.mxu0 %v2741
  %5293 = vmatmul.mubr.bf16.gmra.mrb[0].mxu0 %v2740
  %v5294 = vpop.f32.mrb[0].mxu0
  %v5295 = vadd.f32 %v5006, %v5294
  %v5296 = vpop.f32.mrb[0].mxu0
  %v5297 = vpop.f32.mrb[0].mxu0
  %v5298 = vadd.f32 %v5009, %v5297
  %v5299 = vpop.f32.mrb[0].mxu0
  %5300 = vmatprep.mubr.bf16.mxu0 %v2759
  %5301 = vmatmul.mubr.bf16.gmra.mrb[0].mxu0 %v2758
  %v5302 = vpop.f32.mrb[0].mxu0
  %v5303 = vadd.f32 %v5014, %v5302
  %v5304 = vpop.f32.mrb[0].mxu0
  %v5305 = vpop.f32.mrb[0].mxu0
  %v5306 = vadd.f32 %v5017, %v5305
  %v5307 = vpop.f32.mrb[0].mxu0
  %5308 = vmatprep.mubr.bf16.mxu0 %v2777
  %5309 = vmatmul.mubr.bf16.gmra.mrb[0].mxu0 %v2776
  %v5310 = vpop.f32.mrb[0].mxu0
  %v5311 = vadd.f32 %v5022, %v5310
  %v5312 = vpop.f32.mrb[0].mxu0
  %v5313 = vpop.f32.mrb[0].mxu0
  %v5314 = vadd.f32 %v5025, %v5313
  %v5315 = vpop.f32.mrb[0].mxu0
  %5316 = vmatprep.mubr.bf16.mxu0 %v2795
  %5317 = vmatmul.mubr.bf16.gmra.mrb[0].mxu0 %v2794
  %v5318 = vpop.f32.mrb[0].mxu0
  %v5319 = vadd.f32 %v5030, %v5318
  %v5320 = vpop.f32.mrb[0].mxu0
  %v5321 = vpop.f32.mrb[0].mxu0
  %v5322 = vadd.f32 %v5033, %v5321
  %v5323 = vpop.f32.mrb[0].mxu0
  %5324 = vmatprep.mubr.bf16.mxu0 %v2813
  %5325 = vmatmul.mubr.bf16.gmra.mrb[0].mxu0 %v2812
  %v5326 = vpop.f32.mrb[0].mxu0
  %v5327 = vadd.f32 %v5038, %v5326
  %v5328 = vpop.f32.mrb[0].mxu0
  %v5329 = vpop.f32.mrb[0].mxu0
  %v5330 = vadd.f32 %v5041, %v5329
  %v5331 = vpop.f32.mrb[0].mxu0
  %5332 = vmatprep.mubr.bf16.mxu0 %v2831
  %5333 = vmatmul.mubr.bf16.gmra.mrb[0].mxu0 %v2830
  %v5334 = vpop.f32.mrb[0].mxu0
  %v5335 = vadd.f32 %v5046, %v5334
  %v5336 = vpop.f32.mrb[0].mxu0
  %v5337 = vpop.f32.mrb[0].mxu0
  %v5338 = vadd.f32 %v5049, %v5337
  %v5339 = vpop.f32.mrb[0].mxu0
  %5340 = vmatprep.mubr.bf16.mxu0 %v2849
  %5341 = vmatmul.mubr.bf16.gmra.mrb[0].mxu0 %v2848
  %v5342 = vpop.f32.mrb[0].mxu0
  %v5343 = vadd.f32 %v5054, %v5342
  %v5344 = vpop.f32.mrb[0].mxu0
  %v5345 = vpop.f32.mrb[0].mxu0
  %v5346 = vadd.f32 %v5057, %v5345
  %v5347 = vpop.f32.mrb[0].mxu0
  %5348 = vmatprep.mubr.bf16.mxu0 %v2867
  %5349 = vmatmul.mubr.bf16.gmra.mrb[0].mxu0 %v2866
  %v5350 = vpop.f32.mrb[0].mxu0
  %v5351 = vadd.f32 %v5062, %v5350
  %v5352 = vpop.f32.mrb[0].mxu0
  %v5353 = vpop.f32.mrb[0].mxu0
  %v5354 = vadd.f32 %v5065, %v5353
  %v5355 = vpop.f32.mrb[0].mxu0
  %5356 = vmatprep.mubr.bf16.mxu0 %v2885
  %5357 = vmatmul.mubr.bf16.gmra.mrb[0].mxu0 %v2884
  %v5358 = vpop.f32.mrb[0].mxu0
  %v5359 = vadd.f32 %v5070, %v5358
  %v5360 = vpop.f32.mrb[0].mxu0
  %v5361 = vpop.f32.mrb[0].mxu0
  %v5362 = vadd.f32 %v5073, %v5361
  %v5363 = vpop.f32.mrb[0].mxu0
  %5364 = vmatprep.mubr.bf16.mxu0 %v2903
  %5365 = vmatmul.mubr.bf16.gmra.mrb[0].mxu0 %v2902
  %v5366 = vpop.f32.mrb[0].mxu0
  %v5367 = vadd.f32 %v5078, %v5366
  %v5368 = vpop.f32.mrb[0].mxu0
  %v5369 = vpop.f32.mrb[0].mxu0
  %v5370 = vadd.f32 %v5081, %v5369
  %v5371 = vpop.f32.mrb[0].mxu0
  %5372 = vmatprep.mubr.bf16.mxu0 %v2921
  %5373 = vmatmul.mubr.bf16.gmra.mrb[0].mxu0 %v2920
  %v5374 = vpop.f32.mrb[0].mxu0
  %v5375 = vadd.f32 %v5086, %v5374
  %v5376 = vpop.f32.mrb[0].mxu0
  %v5377 = vpop.f32.mrb[0].mxu0
  %v5378 = vadd.f32 %v5089, %v5377
  %v5379 = vpop.f32.mrb[0].mxu0
  %5380 = vmatprep.mubr.bf16.mxu0 %v2939
  %5381 = vmatmul.mubr.bf16.gmra.mrb[0].mxu0 %v2938
  %v5382 = vpop.f32.mrb[0].mxu0
  %v5383 = vadd.f32 %v5094, %v5382
  %v5384 = vpop.f32.mrb[0].mxu0
  %v5385 = vpop.f32.mrb[0].mxu0
  %v5386 = vadd.f32 %v5097, %v5385
  %v5387 = vpop.f32.mrb[0].mxu0
  %5388 = vmatprep.mubr.bf16.mxu0 %v2957
  %5389 = vmatmul.mubr.bf16.gmra.mrb[0].mxu0 %v2956
  %v5390 = vpop.f32.mrb[0].mxu0
  %v5391 = vadd.f32 %v5102, %v5390
  %v5392 = vpop.f32.mrb[0].mxu0
  %v5393 = vpop.f32.mrb[0].mxu0
  %v5394 = vadd.f32 %v5105, %v5393
  %v5395 = vpop.f32.mrb[0].mxu0
  %5396 = vmatprep.mubr.bf16.mxu0 %v2975
  %5397 = vmatmul.mubr.bf16.gmra.mrb[0].mxu0 %v2974
  %v5398 = vpop.f32.mrb[0].mxu0
  %v5399 = vadd.f32 %v5110, %v5398
  %v5400 = vpop.f32.mrb[0].mxu0
  %v5401 = vpop.f32.mrb[0].mxu0
  %v5402 = vadd.f32 %v5113, %v5401
  %v5403 = vpop.f32.mrb[0].mxu0
  %5404 = vmatprep.mubr.bf16.mxu0 %v2993
  %5405 = vmatmul.mubr.bf16.gmra.mrb[0].mxu0 %v2992
  %v5406 = vpop.f32.mrb[0].mxu0
  %v5407 = vadd.f32 %v5118, %v5406
  %v5408 = vpop.f32.mrb[0].mxu0
  %v5409 = vpop.f32.mrb[0].mxu0
  %v5410 = vadd.f32 %v5121, %v5409
  %v5411 = vpop.f32.mrb[0].mxu0
  %5412 = vmatprep.mubr.bf16.mxu0 %v3011
  %5413 = vmatmul.mubr.bf16.gmra.mrb[0].mxu0 %v3010
  %v5414 = vpop.f32.mrb[0].mxu0
  %v5415 = vadd.f32 %v5126, %v5414
  %v5416 = vpop.f32.mrb[0].mxu0
  %v5417 = vpop.f32.mrb[0].mxu0
  %v5418 = vadd.f32 %v5129, %v5417
  %v5419 = vpop.f32.mrb[0].mxu0
  %5420 = vmatprep.mubr.bf16.mxu0 %v3029
  %5421 = vmatmul.mubr.bf16.gmra.mrb[0].mxu0 %v3028
  %v5422 = vpop.f32.mrb[0].mxu0
  %v5423 = vadd.f32 %v5134, %v5422
  %v5424 = vpop.f32.mrb[0].mxu0
  %v5425 = vpop.f32.mrb[0].mxu0
  %v5426 = vadd.f32 %v5137, %v5425
  %v5427 = vpop.f32.mrb[0].mxu0
  %5428 = vmatprep.mubr.bf16.mxu0 %v3047
  %5429 = vmatmul.mubr.bf16.gmra.mrb[0].mxu0 %v3046
  %v5430 = vpop.f32.mrb[0].mxu0
  %v5431 = vadd.f32 %v5142, %v5430
  %v5432 = vpop.f32.mrb[0].mxu0
  %v5433 = vpop.f32.mrb[0].mxu0
  %v5434 = vadd.f32 %v5145, %v5433
  %v5435 = vpop.f32.mrb[0].mxu0
  %5436 = vmatprep.mubr.bf16.mxu0 %v3065
  %5437 = vmatmul.mubr.bf16.gmra.mrb[0].mxu0 %v3064
  %v5438 = vpop.f32.mrb[0].mxu0
  %v5439 = vadd.f32 %v5150, %v5438
  %v5440 = vpop.f32.mrb[0].mxu0
  %v5441 = vpop.f32.mrb[0].mxu0
  %v5442 = vadd.f32 %v5153, %v5441
  %v5443 = vpop.f32.mrb[0].mxu0
  %5444 = vmatprep.mubr.bf16.mxu0 %v3083
  %5445 = vmatmul.mubr.bf16.gmra.mrb[0].mxu0 %v3082
  %v5446 = vpop.f32.mrb[0].mxu0
  %v5447 = vadd.f32 %v5158, %v5446
  %v5448 = vpop.f32.mrb[0].mxu0
  %v5449 = vpop.f32.mrb[0].mxu0
  %v5450 = vadd.f32 %v5161, %v5449
  %v5451 = vpop.f32.mrb[0].mxu0
  %5452 = vmatprep.mubr.bf16.mxu0 %v3101
  %5453 = vmatmul.mubr.bf16.gmra.mrb[0].mxu0 %v3100
  %v5454 = vpop.f32.mrb[0].mxu0
  %v5455 = vadd.f32 %v5166, %v5454
  %v5456 = vpop.f32.mrb[0].mxu0
  %v5457 = vpop.f32.mrb[0].mxu0
  %v5458 = vadd.f32 %v5169, %v5457
  %v5459 = vpop.f32.mrb[0].mxu0
  %5460 = vmatprep.mubr.bf16.mxu0 %v3119
  %5461 = vmatmul.mubr.bf16.gmra.mrb[0].mxu0 %v3118
  %v5462 = vpop.f32.mrb[0].mxu0
  %v5463 = vadd.f32 %v5174, %v5462
  %v5464 = vpop.f32.mrb[0].mxu0
  %v5465 = vpop.f32.mrb[0].mxu0
  %v5466 = vadd.f32 %v5177, %v5465
  %v5467 = vpop.f32.mrb[0].mxu0
  %5468 = vmatprep.mubr.bf16.mxu0 %v3137
  %5469 = vmatmul.mubr.bf16.gmra.mrb[0].mxu0 %v3136
  %v5470 = vpop.f32.mrb[0].mxu0
  %v5471 = vadd.f32 %v5182, %v5470
  %v5472 = vpop.f32.mrb[0].mxu0
  %v5473 = vpop.f32.mrb[0].mxu0
  %v5474 = vadd.f32 %v5185, %v5473
  %v5475 = vpop.f32.mrb[0].mxu0
  %5476 = vmatprep.mubr.bf16.mxu0 %v3155
  %5477 = vmatmul.mubr.bf16.gmra.mrb[0].mxu0 %v3154
  %v5478 = vpop.f32.mrb[0].mxu0
  %v5479 = vadd.f32 %v5190, %v5478
  %v5480 = vpop.f32.mrb[0].mxu0
  %v5481 = vpop.f32.mrb[0].mxu0
  %v5482 = vadd.f32 %v5193, %v5481
  %v5483 = vpop.f32.mrb[0].mxu0
  %5484 = vmatprep.mubr.bf16.mxu0 %v3173
  %5485 = vmatmul.mubr.bf16.gmra.mrb[0].mxu0 %v3172
  %v5486 = vpop.f32.mrb[0].mxu0
  %v5487 = vadd.f32 %v5198, %v5486
  %v5488 = vpop.f32.mrb[0].mxu0
  %v5489 = vpop.f32.mrb[0].mxu0
  %v5490 = vadd.f32 %v5201, %v5489
  %v5491 = vpop.f32.mrb[0].mxu0
  %5492 = vdwg.mxu0
  %5493 = vmatprep.subr.bf16.mxu0 0
  %5494 = vmatpush1.bf16.msra.mxu0 %v4386
  %5495 = vmatprep.subr.bf16.mxu0 0
  %5496 = vmatpush1.bf16.msra.mxu0 %v4387
  %5497 = vmatprep.subr.bf16.mxu0 0
  %5498 = vmatpush1.bf16.msra.mxu0 %v4388
  %5499 = vmatprep.subr.bf16.mxu0 0
  %5500 = vmatpush1.bf16.msra.mxu0 %v4389
  %5501 = vmatprep.subr.bf16.mxu0 0
  %5502 = vmatpush1.bf16.msra.mxu0 %v4390
  %5503 = vmatprep.subr.bf16.mxu0 0
  %5504 = vmatpush1.bf16.msra.mxu0 %v4391
  %5505 = vmatprep.subr.bf16.mxu0 0
  %5506 = vmatpush1.bf16.msra.mxu0 %v4392
  %5507 = vmatprep.subr.bf16.mxu0 0
  %5508 = vmatpush1.bf16.msra.mxu0 %v4393
  %5509 = vmatprep.subr.bf16.mxu0 0
  %5510 = vmatpush1.bf16.msra.mxu0 %v4394
  %5511 = vmatprep.subr.bf16.mxu0 0
  %5512 = vmatpush1.bf16.msra.mxu0 %v4395
  %5513 = vmatprep.subr.bf16.mxu0 0
  %5514 = vmatpush1.bf16.msra.mxu0 %v4396
  %5515 = vmatprep.subr.bf16.mxu0 0
  %5516 = vmatpush1.bf16.msra.mxu0 %v4397
  %5517 = vmatprep.subr.bf16.mxu0 0
  %5518 = vmatpush1.bf16.msra.mxu0 %v4398
  %5519 = vmatprep.subr.bf16.mxu0 0
  %5520 = vmatpush1.bf16.msra.mxu0 %v4399
  %5521 = vmatprep.subr.bf16.mxu0 0
  %5522 = vmatpush1.bf16.msra.mxu0 %v4400
  %5523 = vmatprep.subr.bf16.mxu0 0
  %5524 = vmatpush1.bf16.msra.mxu0 %v4401
  %5525 = vmatprep.mubr.bf16.mxu0 %v2617
  %5526 = vmatmul.mubr.bf16.gmra.mrb[0].mxu0 %v2616
  %v5527 = vpop.f32.mrb[0].mxu0
  %v5528 = vadd.f32 %v5239, %v5527
  %v5529 = vpop.f32.mrb[0].mxu0
  %v5530 = vpop.f32.mrb[0].mxu0
  %v5531 = vadd.f32 %v5242, %v5530
  %v5532 = vpop.f32.mrb[0].mxu0
  %5533 = vmatprep.mubr.bf16.mxu0 %v2635
  %5534 = vmatmul.mubr.bf16.gmra.mrb[0].mxu0 %v2634
  %v5535 = vpop.f32.mrb[0].mxu0
  %v5536 = vadd.f32 %v5247, %v5535
  %v5537 = vpop.f32.mrb[0].mxu0
  %v5538 = vpop.f32.mrb[0].mxu0
  %v5539 = vadd.f32 %v5250, %v5538
  %v5540 = vpop.f32.mrb[0].mxu0
  %5541 = vmatprep.mubr.bf16.mxu0 %v2653
  %5542 = vmatmul.mubr.bf16.gmra.mrb[0].mxu0 %v2652
  %v5543 = vpop.f32.mrb[0].mxu0
  %v5544 = vadd.f32 %v5255, %v5543
  %v5545 = vpop.f32.mrb[0].mxu0
  %v5546 = vpop.f32.mrb[0].mxu0
  %v5547 = vadd.f32 %v5258, %v5546
  %v5548 = vpop.f32.mrb[0].mxu0
  %5549 = vmatprep.mubr.bf16.mxu0 %v2671
  %5550 = vmatmul.mubr.bf16.gmra.mrb[0].mxu0 %v2670
  %v5551 = vpop.f32.mrb[0].mxu0
  %v5552 = vadd.f32 %v5263, %v5551
  %v5553 = vpop.f32.mrb[0].mxu0
  %v5554 = vpop.f32.mrb[0].mxu0
  %v5555 = vadd.f32 %v5266, %v5554
  %v5556 = vpop.f32.mrb[0].mxu0
  %5557 = vmatprep.mubr.bf16.mxu0 %v2689
  %5558 = vmatmul.mubr.bf16.gmra.mrb[0].mxu0 %v2688
  %v5559 = vpop.f32.mrb[0].mxu0
  %v5560 = vadd.f32 %v5271, %v5559
  %v5561 = vpop.f32.mrb[0].mxu0
  %v5562 = vpop.f32.mrb[0].mxu0
  %v5563 = vadd.f32 %v5274, %v5562
  %v5564 = vpop.f32.mrb[0].mxu0
  %5565 = vmatprep.mubr.bf16.mxu0 %v2707
  %5566 = vmatmul.mubr.bf16.gmra.mrb[0].mxu0 %v2706
  %v5567 = vpop.f32.mrb[0].mxu0
  %v5568 = vadd.f32 %v5279, %v5567
  %v5569 = vpop.f32.mrb[0].mxu0
  %v5570 = vpop.f32.mrb[0].mxu0
  %v5571 = vadd.f32 %v5282, %v5570
  %v5572 = vpop.f32.mrb[0].mxu0
  %5573 = vmatprep.mubr.bf16.mxu0 %v2725
  %5574 = vmatmul.mubr.bf16.gmra.mrb[0].mxu0 %v2724
  %v5575 = vpop.f32.mrb[0].mxu0
  %v5576 = vadd.f32 %v5287, %v5575
  %v5577 = vpop.f32.mrb[0].mxu0
  %v5578 = vpop.f32.mrb[0].mxu0
  %v5579 = vadd.f32 %v5290, %v5578
  %v5580 = vpop.f32.mrb[0].mxu0
  %5581 = vmatprep.mubr.bf16.mxu0 %v2743
  %5582 = vmatmul.mubr.bf16.gmra.mrb[0].mxu0 %v2742
  %v5583 = vpop.f32.mrb[0].mxu0
  %v5584 = vadd.f32 %v5295, %v5583
  %v5585 = vpop.f32.mrb[0].mxu0
  %v5586 = vpop.f32.mrb[0].mxu0
  %v5587 = vadd.f32 %v5298, %v5586
  %v5588 = vpop.f32.mrb[0].mxu0
  %5589 = vmatprep.mubr.bf16.mxu0 %v2761
  %5590 = vmatmul.mubr.bf16.gmra.mrb[0].mxu0 %v2760
  %v5591 = vpop.f32.mrb[0].mxu0
  %v5592 = vadd.f32 %v5303, %v5591
  %v5593 = vpop.f32.mrb[0].mxu0
  %v5594 = vpop.f32.mrb[0].mxu0
  %v5595 = vadd.f32 %v5306, %v5594
  %v5596 = vpop.f32.mrb[0].mxu0
  %5597 = vmatprep.mubr.bf16.mxu0 %v2779
  %5598 = vmatmul.mubr.bf16.gmra.mrb[0].mxu0 %v2778
  %v5599 = vpop.f32.mrb[0].mxu0
  %v5600 = vadd.f32 %v5311, %v5599
  %v5601 = vpop.f32.mrb[0].mxu0
  %v5602 = vpop.f32.mrb[0].mxu0
  %v5603 = vadd.f32 %v5314, %v5602
  %v5604 = vpop.f32.mrb[0].mxu0
  %5605 = vmatprep.mubr.bf16.mxu0 %v2797
  %5606 = vmatmul.mubr.bf16.gmra.mrb[0].mxu0 %v2796
  %v5607 = vpop.f32.mrb[0].mxu0
  %v5608 = vadd.f32 %v5319, %v5607
  %v5609 = vpop.f32.mrb[0].mxu0
  %v5610 = vpop.f32.mrb[0].mxu0
  %v5611 = vadd.f32 %v5322, %v5610
  %v5612 = vpop.f32.mrb[0].mxu0
  %5613 = vmatprep.mubr.bf16.mxu0 %v2815
  %5614 = vmatmul.mubr.bf16.gmra.mrb[0].mxu0 %v2814
  %v5615 = vpop.f32.mrb[0].mxu0
  %v5616 = vadd.f32 %v5327, %v5615
  %v5617 = vpop.f32.mrb[0].mxu0
  %v5618 = vpop.f32.mrb[0].mxu0
  %v5619 = vadd.f32 %v5330, %v5618
  %v5620 = vpop.f32.mrb[0].mxu0
  %5621 = vmatprep.mubr.bf16.mxu0 %v2833
  %5622 = vmatmul.mubr.bf16.gmra.mrb[0].mxu0 %v2832
  %v5623 = vpop.f32.mrb[0].mxu0
  %v5624 = vadd.f32 %v5335, %v5623
  %v5625 = vpop.f32.mrb[0].mxu0
  %v5626 = vpop.f32.mrb[0].mxu0
  %v5627 = vadd.f32 %v5338, %v5626
  %v5628 = vpop.f32.mrb[0].mxu0
  %5629 = vmatprep.mubr.bf16.mxu0 %v2851
  %5630 = vmatmul.mubr.bf16.gmra.mrb[0].mxu0 %v2850
  %v5631 = vpop.f32.mrb[0].mxu0
  %v5632 = vadd.f32 %v5343, %v5631
  %v5633 = vpop.f32.mrb[0].mxu0
  %v5634 = vpop.f32.mrb[0].mxu0
  %v5635 = vadd.f32 %v5346, %v5634
  %v5636 = vpop.f32.mrb[0].mxu0
  %5637 = vmatprep.mubr.bf16.mxu0 %v2869
  %5638 = vmatmul.mubr.bf16.gmra.mrb[0].mxu0 %v2868
  %v5639 = vpop.f32.mrb[0].mxu0
  %v5640 = vadd.f32 %v5351, %v5639
  %v5641 = vpop.f32.mrb[0].mxu0
  %v5642 = vpop.f32.mrb[0].mxu0
  %v5643 = vadd.f32 %v5354, %v5642
  %v5644 = vpop.f32.mrb[0].mxu0
  %5645 = vmatprep.mubr.bf16.mxu0 %v2887
  %5646 = vmatmul.mubr.bf16.gmra.mrb[0].mxu0 %v2886
  %v5647 = vpop.f32.mrb[0].mxu0
  %v5648 = vadd.f32 %v5359, %v5647
  %v5649 = vpop.f32.mrb[0].mxu0
  %v5650 = vpop.f32.mrb[0].mxu0
  %v5651 = vadd.f32 %v5362, %v5650
  %v5652 = vpop.f32.mrb[0].mxu0
  %5653 = vmatprep.mubr.bf16.mxu0 %v2905
  %5654 = vmatmul.mubr.bf16.gmra.mrb[0].mxu0 %v2904
  %v5655 = vpop.f32.mrb[0].mxu0
  %v5656 = vadd.f32 %v5367, %v5655
  %v5657 = vpop.f32.mrb[0].mxu0
  %v5658 = vpop.f32.mrb[0].mxu0
  %v5659 = vadd.f32 %v5370, %v5658
  %v5660 = vpop.f32.mrb[0].mxu0
  %5661 = vmatprep.mubr.bf16.mxu0 %v2923
  %5662 = vmatmul.mubr.bf16.gmra.mrb[0].mxu0 %v2922
  %v5663 = vpop.f32.mrb[0].mxu0
  %v5664 = vadd.f32 %v5375, %v5663
  %v5665 = vpop.f32.mrb[0].mxu0
  %v5666 = vpop.f32.mrb[0].mxu0
  %v5667 = vadd.f32 %v5378, %v5666
  %v5668 = vpop.f32.mrb[0].mxu0
  %5669 = vmatprep.mubr.bf16.mxu0 %v2941
  %5670 = vmatmul.mubr.bf16.gmra.mrb[0].mxu0 %v2940
  %v5671 = vpop.f32.mrb[0].mxu0
  %v5672 = vadd.f32 %v5383, %v5671
  %v5673 = vpop.f32.mrb[0].mxu0
  %v5674 = vpop.f32.mrb[0].mxu0
  %v5675 = vadd.f32 %v5386, %v5674
  %v5676 = vpop.f32.mrb[0].mxu0
  %5677 = vmatprep.mubr.bf16.mxu0 %v2959
  %5678 = vmatmul.mubr.bf16.gmra.mrb[0].mxu0 %v2958
  %v5679 = vpop.f32.mrb[0].mxu0
  %v5680 = vadd.f32 %v5391, %v5679
  %v5681 = vpop.f32.mrb[0].mxu0
  %v5682 = vpop.f32.mrb[0].mxu0
  %v5683 = vadd.f32 %v5394, %v5682
  %v5684 = vpop.f32.mrb[0].mxu0
  %5685 = vmatprep.mubr.bf16.mxu0 %v2977
  %5686 = vmatmul.mubr.bf16.gmra.mrb[0].mxu0 %v2976
  %v5687 = vpop.f32.mrb[0].mxu0
  %v5688 = vadd.f32 %v5399, %v5687
  %v5689 = vpop.f32.mrb[0].mxu0
  %v5690 = vpop.f32.mrb[0].mxu0
  %v5691 = vadd.f32 %v5402, %v5690
  %v5692 = vpop.f32.mrb[0].mxu0
  %5693 = vmatprep.mubr.bf16.mxu0 %v2995
  %5694 = vmatmul.mubr.bf16.gmra.mrb[0].mxu0 %v2994
  %v5695 = vpop.f32.mrb[0].mxu0
  %v5696 = vadd.f32 %v5407, %v5695
  %v5697 = vpop.f32.mrb[0].mxu0
  %v5698 = vpop.f32.mrb[0].mxu0
  %v5699 = vadd.f32 %v5410, %v5698
  %v5700 = vpop.f32.mrb[0].mxu0
  %5701 = vmatprep.mubr.bf16.mxu0 %v3013
  %5702 = vmatmul.mubr.bf16.gmra.mrb[0].mxu0 %v3012
  %v5703 = vpop.f32.mrb[0].mxu0
  %v5704 = vadd.f32 %v5415, %v5703
  %v5705 = vpop.f32.mrb[0].mxu0
  %v5706 = vpop.f32.mrb[0].mxu0
  %v5707 = vadd.f32 %v5418, %v5706
  %v5708 = vpop.f32.mrb[0].mxu0
  %5709 = vmatprep.mubr.bf16.mxu0 %v3031
  %5710 = vmatmul.mubr.bf16.gmra.mrb[0].mxu0 %v3030
  %v5711 = vpop.f32.mrb[0].mxu0
  %v5712 = vadd.f32 %v5423, %v5711
  %v5713 = vpop.f32.mrb[0].mxu0
  %v5714 = vpop.f32.mrb[0].mxu0
  %v5715 = vadd.f32 %v5426, %v5714
  %v5716 = vpop.f32.mrb[0].mxu0
  %5717 = vmatprep.mubr.bf16.mxu0 %v3049
  %5718 = vmatmul.mubr.bf16.gmra.mrb[0].mxu0 %v3048
  %v5719 = vpop.f32.mrb[0].mxu0
  %v5720 = vadd.f32 %v5431, %v5719
  %v5721 = vpop.f32.mrb[0].mxu0
  %v5722 = vpop.f32.mrb[0].mxu0
  %v5723 = vadd.f32 %v5434, %v5722
  %v5724 = vpop.f32.mrb[0].mxu0
  %5725 = vmatprep.mubr.bf16.mxu0 %v3067
  %5726 = vmatmul.mubr.bf16.gmra.mrb[0].mxu0 %v3066
  %v5727 = vpop.f32.mrb[0].mxu0
  %v5728 = vadd.f32 %v5439, %v5727
  %v5729 = vpop.f32.mrb[0].mxu0
  %v5730 = vpop.f32.mrb[0].mxu0
  %v5731 = vadd.f32 %v5442, %v5730
  %v5732 = vpop.f32.mrb[0].mxu0
  %5733 = vmatprep.mubr.bf16.mxu0 %v3085
  %5734 = vmatmul.mubr.bf16.gmra.mrb[0].mxu0 %v3084
  %v5735 = vpop.f32.mrb[0].mxu0
  %v5736 = vadd.f32 %v5447, %v5735
  %v5737 = vpop.f32.mrb[0].mxu0
  %v5738 = vpop.f32.mrb[0].mxu0
  %v5739 = vadd.f32 %v5450, %v5738
  %v5740 = vpop.f32.mrb[0].mxu0
  %5741 = vmatprep.mubr.bf16.mxu0 %v3103
  %5742 = vmatmul.mubr.bf16.gmra.mrb[0].mxu0 %v3102
  %v5743 = vpop.f32.mrb[0].mxu0
  %v5744 = vadd.f32 %v5455, %v5743
  %v5745 = vpop.f32.mrb[0].mxu0
  %v5746 = vpop.f32.mrb[0].mxu0
  %v5747 = vadd.f32 %v5458, %v5746
  %v5748 = vpop.f32.mrb[0].mxu0
  %5749 = vmatprep.mubr.bf16.mxu0 %v3121
  %5750 = vmatmul.mubr.bf16.gmra.mrb[0].mxu0 %v3120
  %v5751 = vpop.f32.mrb[0].mxu0
  %v5752 = vadd.f32 %v5463, %v5751
  %v5753 = vpop.f32.mrb[0].mxu0
  %v5754 = vpop.f32.mrb[0].mxu0
  %v5755 = vadd.f32 %v5466, %v5754
  %v5756 = vpop.f32.mrb[0].mxu0
  %5757 = vmatprep.mubr.bf16.mxu0 %v3139
  %5758 = vmatmul.mubr.bf16.gmra.mrb[0].mxu0 %v3138
  %v5759 = vpop.f32.mrb[0].mxu0
  %v5760 = vadd.f32 %v5471, %v5759
  %v5761 = vpop.f32.mrb[0].mxu0
  %v5762 = vpop.f32.mrb[0].mxu0
  %v5763 = vadd.f32 %v5474, %v5762
  %v5764 = vpop.f32.mrb[0].mxu0
  %5765 = vmatprep.mubr.bf16.mxu0 %v3157
  %5766 = vmatmul.mubr.bf16.gmra.mrb[0].mxu0 %v3156
  %v5767 = vpop.f32.mrb[0].mxu0
  %v5768 = vadd.f32 %v5479, %v5767
  %v5769 = vpop.f32.mrb[0].mxu0
  %v5770 = vpop.f32.mrb[0].mxu0
  %v5771 = vadd.f32 %v5482, %v5770
  %v5772 = vpop.f32.mrb[0].mxu0
  %5773 = vmatprep.mubr.bf16.mxu0 %v3175
  %5774 = vmatmul.mubr.bf16.gmra.mrb[0].mxu0 %v3174
  %v5775 = vpop.f32.mrb[0].mxu0
  %v5776 = vadd.f32 %v5487, %v5775
  %v5777 = vpop.f32.mrb[0].mxu0
  %v5778 = vpop.f32.mrb[0].mxu0
  %v5779 = vadd.f32 %v5490, %v5778
  %v5780 = vpop.f32.mrb[0].mxu0
  %5781 = vdwg.mxu0
  %5782 = vmatprep.subr.bf16.mxu0 0
  %5783 = vmatpush1.bf16.msra.mxu0 %v4402
  %5784 = vmatprep.subr.bf16.mxu0 0
  %5785 = vmatpush1.bf16.msra.mxu0 %v4403
  %5786 = vmatprep.subr.bf16.mxu0 0
  %5787 = vmatpush1.bf16.msra.mxu0 %v4404
  %5788 = vmatprep.subr.bf16.mxu0 0
  %5789 = vmatpush1.bf16.msra.mxu0 %v4405
  %5790 = vmatprep.subr.bf16.mxu0 0
  %5791 = vmatpush1.bf16.msra.mxu0 %v4406
  %5792 = vmatprep.subr.bf16.mxu0 0
  %5793 = vmatpush1.bf16.msra.mxu0 %v4407
  %5794 = vmatprep.subr.bf16.mxu0 0
  %5795 = vmatpush1.bf16.msra.mxu0 %v4408
  %5796 = vmatprep.subr.bf16.mxu0 0
  %5797 = vmatpush1.bf16.msra.mxu0 %v4409
  %5798 = vmatprep.subr.bf16.mxu0 0
  %5799 = vmatpush1.bf16.msra.mxu0 %v4410
  %5800 = vmatprep.subr.bf16.mxu0 0
  %5801 = vmatpush1.bf16.msra.mxu0 %v4411
  %5802 = vmatprep.subr.bf16.mxu0 0
  %5803 = vmatpush1.bf16.msra.mxu0 %v4412
  %5804 = vmatprep.subr.bf16.mxu0 0
  %5805 = vmatpush1.bf16.msra.mxu0 %v4413
  %5806 = vmatprep.subr.bf16.mxu0 0
  %5807 = vmatpush1.bf16.msra.mxu0 %v4414
  %5808 = vmatprep.subr.bf16.mxu0 0
  %5809 = vmatpush1.bf16.msra.mxu0 %v4415
  %5810 = vmatprep.subr.bf16.mxu0 0
  %5811 = vmatpush1.bf16.msra.mxu0 %v4416
  %5812 = vmatprep.subr.bf16.mxu0 0
  %5813 = vmatpush1.bf16.msra.mxu0 %v4417
  %5814 = vmatprep.mubr.bf16.mxu0 %v2619
  %5815 = vmatmul.mubr.bf16.gmra.mrb[0].mxu0 %v2618
  %v5816 = vpop.f32.mrb[0].mxu0
  %v5817 = vadd.f32 %v5528, %v5816
  %v5818 = vpop.f32.mrb[0].mxu0
  %v5819 = vpop.f32.mrb[0].mxu0
  %v5820 = vadd.f32 %v5531, %v5819
  %v5821 = vpop.f32.mrb[0].mxu0
  %5822 = vmatprep.mubr.bf16.mxu0 %v2637
  %5823 = vmatmul.mubr.bf16.gmra.mrb[0].mxu0 %v2636
  %v5824 = vpop.f32.mrb[0].mxu0
  %v5825 = vadd.f32 %v5536, %v5824
  %v5826 = vpop.f32.mrb[0].mxu0
  %v5827 = vpop.f32.mrb[0].mxu0
  %v5828 = vadd.f32 %v5539, %v5827
  %v5829 = vpop.f32.mrb[0].mxu0
  %5830 = vmatprep.mubr.bf16.mxu0 %v2655
  %5831 = vmatmul.mubr.bf16.gmra.mrb[0].mxu0 %v2654
  %v5832 = vpop.f32.mrb[0].mxu0
  %v5833 = vadd.f32 %v5544, %v5832
  %v5834 = vpop.f32.mrb[0].mxu0
  %v5835 = vpop.f32.mrb[0].mxu0
  %v5836 = vadd.f32 %v5547, %v5835
  %v5837 = vpop.f32.mrb[0].mxu0
  %5838 = vmatprep.mubr.bf16.mxu0 %v2673
  %5839 = vmatmul.mubr.bf16.gmra.mrb[0].mxu0 %v2672
  %v5840 = vpop.f32.mrb[0].mxu0
  %v5841 = vadd.f32 %v5552, %v5840
  %v5842 = vpop.f32.mrb[0].mxu0
  %v5843 = vpop.f32.mrb[0].mxu0
  %v5844 = vadd.f32 %v5555, %v5843
  %v5845 = vpop.f32.mrb[0].mxu0
  %5846 = vmatprep.mubr.bf16.mxu0 %v2691
  %5847 = vmatmul.mubr.bf16.gmra.mrb[0].mxu0 %v2690
  %v5848 = vpop.f32.mrb[0].mxu0
  %v5849 = vadd.f32 %v5560, %v5848
  %v5850 = vpop.f32.mrb[0].mxu0
  %v5851 = vpop.f32.mrb[0].mxu0
  %v5852 = vadd.f32 %v5563, %v5851
  %v5853 = vpop.f32.mrb[0].mxu0
  %5854 = vmatprep.mubr.bf16.mxu0 %v2709
  %5855 = vmatmul.mubr.bf16.gmra.mrb[0].mxu0 %v2708
  %v5856 = vpop.f32.mrb[0].mxu0
  %v5857 = vadd.f32 %v5568, %v5856
  %v5858 = vpop.f32.mrb[0].mxu0
  %v5859 = vpop.f32.mrb[0].mxu0
  %v5860 = vadd.f32 %v5571, %v5859
  %v5861 = vpop.f32.mrb[0].mxu0
  %5862 = vmatprep.mubr.bf16.mxu0 %v2727
  %5863 = vmatmul.mubr.bf16.gmra.mrb[0].mxu0 %v2726
  %v5864 = vpop.f32.mrb[0].mxu0
  %v5865 = vadd.f32 %v5576, %v5864
  %v5866 = vpop.f32.mrb[0].mxu0
  %v5867 = vpop.f32.mrb[0].mxu0
  %v5868 = vadd.f32 %v5579, %v5867
  %v5869 = vpop.f32.mrb[0].mxu0
  %5870 = vmatprep.mubr.bf16.mxu0 %v2745
  %5871 = vmatmul.mubr.bf16.gmra.mrb[0].mxu0 %v2744
  %v5872 = vpop.f32.mrb[0].mxu0
  %v5873 = vadd.f32 %v5584, %v5872
  %v5874 = vpop.f32.mrb[0].mxu0
  %v5875 = vpop.f32.mrb[0].mxu0
  %v5876 = vadd.f32 %v5587, %v5875
  %v5877 = vpop.f32.mrb[0].mxu0
  %5878 = vmatprep.mubr.bf16.mxu0 %v2763
  %5879 = vmatmul.mubr.bf16.gmra.mrb[0].mxu0 %v2762
  %v5880 = vpop.f32.mrb[0].mxu0
  %v5881 = vadd.f32 %v5592, %v5880
  %v5882 = vpop.f32.mrb[0].mxu0
  %v5883 = vpop.f32.mrb[0].mxu0
  %v5884 = vadd.f32 %v5595, %v5883
  %v5885 = vpop.f32.mrb[0].mxu0
  %5886 = vmatprep.mubr.bf16.mxu0 %v2781
  %5887 = vmatmul.mubr.bf16.gmra.mrb[0].mxu0 %v2780
  %v5888 = vpop.f32.mrb[0].mxu0
  %v5889 = vadd.f32 %v5600, %v5888
  %v5890 = vpop.f32.mrb[0].mxu0
  %v5891 = vpop.f32.mrb[0].mxu0
  %v5892 = vadd.f32 %v5603, %v5891
  %v5893 = vpop.f32.mrb[0].mxu0
  %5894 = vmatprep.mubr.bf16.mxu0 %v2799
  %5895 = vmatmul.mubr.bf16.gmra.mrb[0].mxu0 %v2798
  %v5896 = vpop.f32.mrb[0].mxu0
  %v5897 = vadd.f32 %v5608, %v5896
  %v5898 = vpop.f32.mrb[0].mxu0
  %v5899 = vpop.f32.mrb[0].mxu0
  %v5900 = vadd.f32 %v5611, %v5899
  %v5901 = vpop.f32.mrb[0].mxu0
  %5902 = vmatprep.mubr.bf16.mxu0 %v2817
  %5903 = vmatmul.mubr.bf16.gmra.mrb[0].mxu0 %v2816
  %v5904 = vpop.f32.mrb[0].mxu0
  %v5905 = vadd.f32 %v5616, %v5904
  %v5906 = vpop.f32.mrb[0].mxu0
  %v5907 = vpop.f32.mrb[0].mxu0
  %v5908 = vadd.f32 %v5619, %v5907
  %v5909 = vpop.f32.mrb[0].mxu0
  %5910 = vmatprep.mubr.bf16.mxu0 %v2835
  %5911 = vmatmul.mubr.bf16.gmra.mrb[0].mxu0 %v2834
  %v5912 = vpop.f32.mrb[0].mxu0
  %v5913 = vadd.f32 %v5624, %v5912
  %v5914 = vpop.f32.mrb[0].mxu0
  %v5915 = vpop.f32.mrb[0].mxu0
  %v5916 = vadd.f32 %v5627, %v5915
  %v5917 = vpop.f32.mrb[0].mxu0
  %5918 = vmatprep.mubr.bf16.mxu0 %v2853
  %5919 = vmatmul.mubr.bf16.gmra.mrb[0].mxu0 %v2852
  %v5920 = vpop.f32.mrb[0].mxu0
  %v5921 = vadd.f32 %v5632, %v5920
  %v5922 = vpop.f32.mrb[0].mxu0
  %v5923 = vpop.f32.mrb[0].mxu0
  %v5924 = vadd.f32 %v5635, %v5923
  %v5925 = vpop.f32.mrb[0].mxu0
  %5926 = vmatprep.mubr.bf16.mxu0 %v2871
  %5927 = vmatmul.mubr.bf16.gmra.mrb[0].mxu0 %v2870
  %v5928 = vpop.f32.mrb[0].mxu0
  %v5929 = vadd.f32 %v5640, %v5928
  %v5930 = vpop.f32.mrb[0].mxu0
  %v5931 = vpop.f32.mrb[0].mxu0
  %v5932 = vadd.f32 %v5643, %v5931
  %v5933 = vpop.f32.mrb[0].mxu0
  %5934 = vmatprep.mubr.bf16.mxu0 %v2889
  %5935 = vmatmul.mubr.bf16.gmra.mrb[0].mxu0 %v2888
  %v5936 = vpop.f32.mrb[0].mxu0
  %v5937 = vadd.f32 %v5648, %v5936
  %v5938 = vpop.f32.mrb[0].mxu0
  %v5939 = vpop.f32.mrb[0].mxu0
  %v5940 = vadd.f32 %v5651, %v5939
  %v5941 = vpop.f32.mrb[0].mxu0
  %5942 = vmatprep.mubr.bf16.mxu0 %v2907
  %5943 = vmatmul.mubr.bf16.gmra.mrb[0].mxu0 %v2906
  %v5944 = vpop.f32.mrb[0].mxu0
  %v5945 = vadd.f32 %v5656, %v5944
  %v5946 = vpop.f32.mrb[0].mxu0
  %v5947 = vpop.f32.mrb[0].mxu0
  %v5948 = vadd.f32 %v5659, %v5947
  %v5949 = vpop.f32.mrb[0].mxu0
  %5950 = vmatprep.mubr.bf16.mxu0 %v2925
  %5951 = vmatmul.mubr.bf16.gmra.mrb[0].mxu0 %v2924
  %v5952 = vpop.f32.mrb[0].mxu0
  %v5953 = vadd.f32 %v5664, %v5952
  %v5954 = vpop.f32.mrb[0].mxu0
  %v5955 = vpop.f32.mrb[0].mxu0
  %v5956 = vadd.f32 %v5667, %v5955
  %v5957 = vpop.f32.mrb[0].mxu0
  %5958 = vmatprep.mubr.bf16.mxu0 %v2943
  %5959 = vmatmul.mubr.bf16.gmra.mrb[0].mxu0 %v2942
  %v5960 = vpop.f32.mrb[0].mxu0
  %v5961 = vadd.f32 %v5672, %v5960
  %v5962 = vpop.f32.mrb[0].mxu0
  %v5963 = vpop.f32.mrb[0].mxu0
  %v5964 = vadd.f32 %v5675, %v5963
  %v5965 = vpop.f32.mrb[0].mxu0
  %5966 = vmatprep.mubr.bf16.mxu0 %v2961
  %5967 = vmatmul.mubr.bf16.gmra.mrb[0].mxu0 %v2960
  %v5968 = vpop.f32.mrb[0].mxu0
  %v5969 = vadd.f32 %v5680, %v5968
  %v5970 = vpop.f32.mrb[0].mxu0
  %v5971 = vpop.f32.mrb[0].mxu0
  %v5972 = vadd.f32 %v5683, %v5971
  %v5973 = vpop.f32.mrb[0].mxu0
  %5974 = vmatprep.mubr.bf16.mxu0 %v2979
  %5975 = vmatmul.mubr.bf16.gmra.mrb[0].mxu0 %v2978
  %v5976 = vpop.f32.mrb[0].mxu0
  %v5977 = vadd.f32 %v5688, %v5976
  %v5978 = vpop.f32.mrb[0].mxu0
  %v5979 = vpop.f32.mrb[0].mxu0
  %v5980 = vadd.f32 %v5691, %v5979
  %v5981 = vpop.f32.mrb[0].mxu0
  %5982 = vmatprep.mubr.bf16.mxu0 %v2997
  %5983 = vmatmul.mubr.bf16.gmra.mrb[0].mxu0 %v2996
  %v5984 = vpop.f32.mrb[0].mxu0
  %v5985 = vadd.f32 %v5696, %v5984
  %v5986 = vpop.f32.mrb[0].mxu0
  %v5987 = vpop.f32.mrb[0].mxu0
  %v5988 = vadd.f32 %v5699, %v5987
  %v5989 = vpop.f32.mrb[0].mxu0
  %5990 = vmatprep.mubr.bf16.mxu0 %v3015
  %5991 = vmatmul.mubr.bf16.gmra.mrb[0].mxu0 %v3014
  %v5992 = vpop.f32.mrb[0].mxu0
  %v5993 = vadd.f32 %v5704, %v5992
  %v5994 = vpop.f32.mrb[0].mxu0
  %v5995 = vpop.f32.mrb[0].mxu0
  %v5996 = vadd.f32 %v5707, %v5995
  %v5997 = vpop.f32.mrb[0].mxu0
  %5998 = vmatprep.mubr.bf16.mxu0 %v3033
  %5999 = vmatmul.mubr.bf16.gmra.mrb[0].mxu0 %v3032
  %v6000 = vpop.f32.mrb[0].mxu0
  %v6001 = vadd.f32 %v5712, %v6000
  %v6002 = vpop.f32.mrb[0].mxu0
  %v6003 = vpop.f32.mrb[0].mxu0
  %v6004 = vadd.f32 %v5715, %v6003
  %v6005 = vpop.f32.mrb[0].mxu0
  %6006 = vmatprep.mubr.bf16.mxu0 %v3051
  %6007 = vmatmul.mubr.bf16.gmra.mrb[0].mxu0 %v3050
  %v6008 = vpop.f32.mrb[0].mxu0
  %v6009 = vadd.f32 %v5720, %v6008
  %v6010 = vpop.f32.mrb[0].mxu0
  %v6011 = vpop.f32.mrb[0].mxu0
  %v6012 = vadd.f32 %v5723, %v6011
  %v6013 = vpop.f32.mrb[0].mxu0
  %6014 = vmatprep.mubr.bf16.mxu0 %v3069
  %6015 = vmatmul.mubr.bf16.gmra.mrb[0].mxu0 %v3068
  %v6016 = vpop.f32.mrb[0].mxu0
  %v6017 = vadd.f32 %v5728, %v6016
  %v6018 = vpop.f32.mrb[0].mxu0
  %v6019 = vpop.f32.mrb[0].mxu0
  %v6020 = vadd.f32 %v5731, %v6019
  %v6021 = vpop.f32.mrb[0].mxu0
  %6022 = vmatprep.mubr.bf16.mxu0 %v3087
  %6023 = vmatmul.mubr.bf16.gmra.mrb[0].mxu0 %v3086
  %v6024 = vpop.f32.mrb[0].mxu0
  %v6025 = vadd.f32 %v5736, %v6024
  %v6026 = vpop.f32.mrb[0].mxu0
  %v6027 = vpop.f32.mrb[0].mxu0
  %v6028 = vadd.f32 %v5739, %v6027
  %v6029 = vpop.f32.mrb[0].mxu0
  %6030 = vmatprep.mubr.bf16.mxu0 %v3105
  %6031 = vmatmul.mubr.bf16.gmra.mrb[0].mxu0 %v3104
  %v6032 = vpop.f32.mrb[0].mxu0
  %v6033 = vadd.f32 %v5744, %v6032
  %v6034 = vpop.f32.mrb[0].mxu0
  %v6035 = vpop.f32.mrb[0].mxu0
  %v6036 = vadd.f32 %v5747, %v6035
  %v6037 = vpop.f32.mrb[0].mxu0
  %6038 = vmatprep.mubr.bf16.mxu0 %v3123
  %6039 = vmatmul.mubr.bf16.gmra.mrb[0].mxu0 %v3122
  %v6040 = vpop.f32.mrb[0].mxu0
  %v6041 = vadd.f32 %v5752, %v6040
  %v6042 = vpop.f32.mrb[0].mxu0
  %v6043 = vpop.f32.mrb[0].mxu0
  %v6044 = vadd.f32 %v5755, %v6043
  %v6045 = vpop.f32.mrb[0].mxu0
  %6046 = vmatprep.mubr.bf16.mxu0 %v3141
  %6047 = vmatmul.mubr.bf16.gmra.mrb[0].mxu0 %v3140
  %v6048 = vpop.f32.mrb[0].mxu0
  %v6049 = vadd.f32 %v5760, %v6048
  %v6050 = vpop.f32.mrb[0].mxu0
  %v6051 = vpop.f32.mrb[0].mxu0
  %v6052 = vadd.f32 %v5763, %v6051
  %v6053 = vpop.f32.mrb[0].mxu0
  %6054 = vmatprep.mubr.bf16.mxu0 %v3159
  %6055 = vmatmul.mubr.bf16.gmra.mrb[0].mxu0 %v3158
  %v6056 = vpop.f32.mrb[0].mxu0
  %v6057 = vadd.f32 %v5768, %v6056
  %v6058 = vpop.f32.mrb[0].mxu0
  %v6059 = vpop.f32.mrb[0].mxu0
  %v6060 = vadd.f32 %v5771, %v6059
  %v6061 = vpop.f32.mrb[0].mxu0
  %6062 = vmatprep.mubr.bf16.mxu0 %v3177
  %6063 = vmatmul.mubr.bf16.gmra.mrb[0].mxu0 %v3176
  %v6064 = vpop.f32.mrb[0].mxu0
  %v6065 = vadd.f32 %v5776, %v6064
  %v6066 = vpop.f32.mrb[0].mxu0
  %v6067 = vpop.f32.mrb[0].mxu0
  %v6068 = vadd.f32 %v5779, %v6067
  %v6069 = vpop.f32.mrb[0].mxu0
  %6070 = vdwg.mxu0
  %6071 = vmatprep.subr.bf16.mxu0 0
  %6072 = vmatpush1.bf16.msra.mxu0 %v4418
  %6073 = vmatprep.subr.bf16.mxu0 0
  %6074 = vmatpush1.bf16.msra.mxu0 %v4419
  %6075 = vmatprep.subr.bf16.mxu0 0
  %6076 = vmatpush1.bf16.msra.mxu0 %v4420
  %6077 = vmatprep.subr.bf16.mxu0 0
  %6078 = vmatpush1.bf16.msra.mxu0 %v4421
  %6079 = vmatprep.subr.bf16.mxu0 0
  %6080 = vmatpush1.bf16.msra.mxu0 %v4422
  %6081 = vmatprep.subr.bf16.mxu0 0
  %6082 = vmatpush1.bf16.msra.mxu0 %v4423
  %6083 = vmatprep.subr.bf16.mxu0 0
  %6084 = vmatpush1.bf16.msra.mxu0 %v4424
  %6085 = vmatprep.subr.bf16.mxu0 0
  %6086 = vmatpush1.bf16.msra.mxu0 %v4425
  %6087 = vmatprep.subr.bf16.mxu0 0
  %6088 = vmatpush1.bf16.msra.mxu0 %v4426
  %6089 = vmatprep.subr.bf16.mxu0 0
  %6090 = vmatpush1.bf16.msra.mxu0 %v4427
  %6091 = vmatprep.subr.bf16.mxu0 0
  %6092 = vmatpush1.bf16.msra.mxu0 %v4428
  %6093 = vmatprep.subr.bf16.mxu0 0
  %6094 = vmatpush1.bf16.msra.mxu0 %v4429
  %6095 = vmatprep.subr.bf16.mxu0 0
  %6096 = vmatpush1.bf16.msra.mxu0 %v4430
  %6097 = vmatprep.subr.bf16.mxu0 0
  %6098 = vmatpush1.bf16.msra.mxu0 %v4431
  %6099 = vmatprep.subr.bf16.mxu0 0
  %6100 = vmatpush1.bf16.msra.mxu0 %v4432
  %6101 = vmatprep.subr.bf16.mxu0 0
  %6102 = vmatpush1.bf16.msra.mxu0 %v4433
  %6103 = vmatprep.mubr.bf16.mxu0 %v2621
  %6104 = vmatmul.mubr.bf16.gmra.mrb[0].mxu0 %v2620
  %v6105 = vpop.f32.mrb[0].mxu0
  %v6106 = vadd.f32 %v5817, %v6105
  %v6107 = vpop.f32.mrb[0].mxu0
  %v6108 = vpop.f32.mrb[0].mxu0
  %v6109 = vadd.f32 %v5820, %v6108
  %v6110 = vpop.f32.mrb[0].mxu0
  %6111 = vmatprep.mubr.bf16.mxu0 %v2639
  %6112 = vmatmul.mubr.bf16.gmra.mrb[0].mxu0 %v2638
  %v6113 = vpop.f32.mrb[0].mxu0
  %v6114 = vadd.f32 %v5825, %v6113
  %v6115 = vpop.f32.mrb[0].mxu0
  %v6116 = vpop.f32.mrb[0].mxu0
  %v6117 = vadd.f32 %v5828, %v6116
  %v6118 = vpop.f32.mrb[0].mxu0
  %6119 = vmatprep.mubr.bf16.mxu0 %v2657
  %6120 = vmatmul.mubr.bf16.gmra.mrb[0].mxu0 %v2656
  %v6121 = vpop.f32.mrb[0].mxu0
  %v6122 = vadd.f32 %v5833, %v6121
  %v6123 = vpop.f32.mrb[0].mxu0
  %v6124 = vpop.f32.mrb[0].mxu0
  %v6125 = vadd.f32 %v5836, %v6124
  %v6126 = vpop.f32.mrb[0].mxu0
  %6127 = vmatprep.mubr.bf16.mxu0 %v2675
  %6128 = vmatmul.mubr.bf16.gmra.mrb[0].mxu0 %v2674
  %v6129 = vpop.f32.mrb[0].mxu0
  %v6130 = vadd.f32 %v5841, %v6129
  %v6131 = vpop.f32.mrb[0].mxu0
  %v6132 = vpop.f32.mrb[0].mxu0
  %v6133 = vadd.f32 %v5844, %v6132
  %v6134 = vpop.f32.mrb[0].mxu0
  %6135 = vmatprep.mubr.bf16.mxu0 %v2693
  %6136 = vmatmul.mubr.bf16.gmra.mrb[0].mxu0 %v2692
  %v6137 = vpop.f32.mrb[0].mxu0
  %v6138 = vadd.f32 %v5849, %v6137
  %v6139 = vpop.f32.mrb[0].mxu0
  %v6140 = vpop.f32.mrb[0].mxu0
  %v6141 = vadd.f32 %v5852, %v6140
  %v6142 = vpop.f32.mrb[0].mxu0
  %6143 = vmatprep.mubr.bf16.mxu0 %v2711
  %6144 = vmatmul.mubr.bf16.gmra.mrb[0].mxu0 %v2710
  %v6145 = vpop.f32.mrb[0].mxu0
  %v6146 = vadd.f32 %v5857, %v6145
  %v6147 = vpop.f32.mrb[0].mxu0
  %v6148 = vpop.f32.mrb[0].mxu0
  %v6149 = vadd.f32 %v5860, %v6148
  %v6150 = vpop.f32.mrb[0].mxu0
  %6151 = vmatprep.mubr.bf16.mxu0 %v2729
  %6152 = vmatmul.mubr.bf16.gmra.mrb[0].mxu0 %v2728
  %v6153 = vpop.f32.mrb[0].mxu0
  %v6154 = vadd.f32 %v5865, %v6153
  %v6155 = vpop.f32.mrb[0].mxu0
  %v6156 = vpop.f32.mrb[0].mxu0
  %v6157 = vadd.f32 %v5868, %v6156
  %v6158 = vpop.f32.mrb[0].mxu0
  %6159 = vmatprep.mubr.bf16.mxu0 %v2747
  %6160 = vmatmul.mubr.bf16.gmra.mrb[0].mxu0 %v2746
  %v6161 = vpop.f32.mrb[0].mxu0
  %v6162 = vadd.f32 %v5873, %v6161
  %v6163 = vpop.f32.mrb[0].mxu0
  %v6164 = vpop.f32.mrb[0].mxu0
  %v6165 = vadd.f32 %v5876, %v6164
  %v6166 = vpop.f32.mrb[0].mxu0
  %6167 = vmatprep.mubr.bf16.mxu0 %v2765
  %6168 = vmatmul.mubr.bf16.gmra.mrb[0].mxu0 %v2764
  %v6169 = vpop.f32.mrb[0].mxu0
  %v6170 = vadd.f32 %v5881, %v6169
  %v6171 = vpop.f32.mrb[0].mxu0
  %v6172 = vpop.f32.mrb[0].mxu0
  %v6173 = vadd.f32 %v5884, %v6172
  %v6174 = vpop.f32.mrb[0].mxu0
  %6175 = vmatprep.mubr.bf16.mxu0 %v2783
  %6176 = vmatmul.mubr.bf16.gmra.mrb[0].mxu0 %v2782
  %v6177 = vpop.f32.mrb[0].mxu0
  %v6178 = vadd.f32 %v5889, %v6177
  %v6179 = vpop.f32.mrb[0].mxu0
  %v6180 = vpop.f32.mrb[0].mxu0
  %v6181 = vadd.f32 %v5892, %v6180
  %v6182 = vpop.f32.mrb[0].mxu0
  %6183 = vmatprep.mubr.bf16.mxu0 %v2801
  %6184 = vmatmul.mubr.bf16.gmra.mrb[0].mxu0 %v2800
  %v6185 = vpop.f32.mrb[0].mxu0
  %v6186 = vadd.f32 %v5897, %v6185
  %v6187 = vpop.f32.mrb[0].mxu0
  %v6188 = vpop.f32.mrb[0].mxu0
  %v6189 = vadd.f32 %v5900, %v6188
  %v6190 = vpop.f32.mrb[0].mxu0
  %6191 = vmatprep.mubr.bf16.mxu0 %v2819
  %6192 = vmatmul.mubr.bf16.gmra.mrb[0].mxu0 %v2818
  %v6193 = vpop.f32.mrb[0].mxu0
  %v6194 = vadd.f32 %v5905, %v6193
  %v6195 = vpop.f32.mrb[0].mxu0
  %v6196 = vpop.f32.mrb[0].mxu0
  %v6197 = vadd.f32 %v5908, %v6196
  %v6198 = vpop.f32.mrb[0].mxu0
  %6199 = vmatprep.mubr.bf16.mxu0 %v2837
  %6200 = vmatmul.mubr.bf16.gmra.mrb[0].mxu0 %v2836
  %v6201 = vpop.f32.mrb[0].mxu0
  %v6202 = vadd.f32 %v5913, %v6201
  %v6203 = vpop.f32.mrb[0].mxu0
  %v6204 = vpop.f32.mrb[0].mxu0
  %v6205 = vadd.f32 %v5916, %v6204
  %v6206 = vpop.f32.mrb[0].mxu0
  %6207 = vmatprep.mubr.bf16.mxu0 %v2855
  %6208 = vmatmul.mubr.bf16.gmra.mrb[0].mxu0 %v2854
  %v6209 = vpop.f32.mrb[0].mxu0
  %v6210 = vadd.f32 %v5921, %v6209
  %v6211 = vpop.f32.mrb[0].mxu0
  %v6212 = vpop.f32.mrb[0].mxu0
  %v6213 = vadd.f32 %v5924, %v6212
  %v6214 = vpop.f32.mrb[0].mxu0
  %6215 = vmatprep.mubr.bf16.mxu0 %v2873
  %6216 = vmatmul.mubr.bf16.gmra.mrb[0].mxu0 %v2872
  %v6217 = vpop.f32.mrb[0].mxu0
  %v6218 = vadd.f32 %v5929, %v6217
  %v6219 = vpop.f32.mrb[0].mxu0
  %v6220 = vpop.f32.mrb[0].mxu0
  %v6221 = vadd.f32 %v5932, %v6220
  %v6222 = vpop.f32.mrb[0].mxu0
  %6223 = vmatprep.mubr.bf16.mxu0 %v2891
  %6224 = vmatmul.mubr.bf16.gmra.mrb[0].mxu0 %v2890
  %v6225 = vpop.f32.mrb[0].mxu0
  %v6226 = vadd.f32 %v5937, %v6225
  %v6227 = vpop.f32.mrb[0].mxu0
  %v6228 = vpop.f32.mrb[0].mxu0
  %v6229 = vadd.f32 %v5940, %v6228
  %v6230 = vpop.f32.mrb[0].mxu0
  %6231 = vmatprep.mubr.bf16.mxu0 %v2909
  %6232 = vmatmul.mubr.bf16.gmra.mrb[0].mxu0 %v2908
  %v6233 = vpop.f32.mrb[0].mxu0
  %v6234 = vadd.f32 %v5945, %v6233
  %v6235 = vpop.f32.mrb[0].mxu0
  %v6236 = vpop.f32.mrb[0].mxu0
  %v6237 = vadd.f32 %v5948, %v6236
  %v6238 = vpop.f32.mrb[0].mxu0
  %6239 = vmatprep.mubr.bf16.mxu0 %v2927
  %6240 = vmatmul.mubr.bf16.gmra.mrb[0].mxu0 %v2926
  %v6241 = vpop.f32.mrb[0].mxu0
  %v6242 = vadd.f32 %v5953, %v6241
  %v6243 = vpop.f32.mrb[0].mxu0
  %v6244 = vpop.f32.mrb[0].mxu0
  %v6245 = vadd.f32 %v5956, %v6244
  %v6246 = vpop.f32.mrb[0].mxu0
  %6247 = vmatprep.mubr.bf16.mxu0 %v2945
  %6248 = vmatmul.mubr.bf16.gmra.mrb[0].mxu0 %v2944
  %v6249 = vpop.f32.mrb[0].mxu0
  %v6250 = vadd.f32 %v5961, %v6249
  %v6251 = vpop.f32.mrb[0].mxu0
  %v6252 = vpop.f32.mrb[0].mxu0
  %v6253 = vadd.f32 %v5964, %v6252
  %v6254 = vpop.f32.mrb[0].mxu0
  %6255 = vmatprep.mubr.bf16.mxu0 %v2963
  %6256 = vmatmul.mubr.bf16.gmra.mrb[0].mxu0 %v2962
  %v6257 = vpop.f32.mrb[0].mxu0
  %v6258 = vadd.f32 %v5969, %v6257
  %v6259 = vpop.f32.mrb[0].mxu0
  %v6260 = vpop.f32.mrb[0].mxu0
  %v6261 = vadd.f32 %v5972, %v6260
  %v6262 = vpop.f32.mrb[0].mxu0
  %6263 = vmatprep.mubr.bf16.mxu0 %v2981
  %6264 = vmatmul.mubr.bf16.gmra.mrb[0].mxu0 %v2980
  %v6265 = vpop.f32.mrb[0].mxu0
  %v6266 = vadd.f32 %v5977, %v6265
  %v6267 = vpop.f32.mrb[0].mxu0
  %v6268 = vpop.f32.mrb[0].mxu0
  %v6269 = vadd.f32 %v5980, %v6268
  %v6270 = vpop.f32.mrb[0].mxu0
  %6271 = vmatprep.mubr.bf16.mxu0 %v2999
  %6272 = vmatmul.mubr.bf16.gmra.mrb[0].mxu0 %v2998
  %v6273 = vpop.f32.mrb[0].mxu0
  %v6274 = vadd.f32 %v5985, %v6273
  %v6275 = vpop.f32.mrb[0].mxu0
  %v6276 = vpop.f32.mrb[0].mxu0
  %v6277 = vadd.f32 %v5988, %v6276
  %v6278 = vpop.f32.mrb[0].mxu0
  %6279 = vmatprep.mubr.bf16.mxu0 %v3017
  %6280 = vmatmul.mubr.bf16.gmra.mrb[0].mxu0 %v3016
  %v6281 = vpop.f32.mrb[0].mxu0
  %v6282 = vadd.f32 %v5993, %v6281
  %v6283 = vpop.f32.mrb[0].mxu0
  %v6284 = vpop.f32.mrb[0].mxu0
  %v6285 = vadd.f32 %v5996, %v6284
  %v6286 = vpop.f32.mrb[0].mxu0
  %6287 = vmatprep.mubr.bf16.mxu0 %v3035
  %6288 = vmatmul.mubr.bf16.gmra.mrb[0].mxu0 %v3034
  %v6289 = vpop.f32.mrb[0].mxu0
  %v6290 = vadd.f32 %v6001, %v6289
  %v6291 = vpop.f32.mrb[0].mxu0
  %v6292 = vpop.f32.mrb[0].mxu0
  %v6293 = vadd.f32 %v6004, %v6292
  %v6294 = vpop.f32.mrb[0].mxu0
  %6295 = vmatprep.mubr.bf16.mxu0 %v3053
  %6296 = vmatmul.mubr.bf16.gmra.mrb[0].mxu0 %v3052
  %v6297 = vpop.f32.mrb[0].mxu0
  %v6298 = vadd.f32 %v6009, %v6297
  %v6299 = vpop.f32.mrb[0].mxu0
  %v6300 = vpop.f32.mrb[0].mxu0
  %v6301 = vadd.f32 %v6012, %v6300
  %v6302 = vpop.f32.mrb[0].mxu0
  %6303 = vmatprep.mubr.bf16.mxu0 %v3071
  %6304 = vmatmul.mubr.bf16.gmra.mrb[0].mxu0 %v3070
  %v6305 = vpop.f32.mrb[0].mxu0
  %v6306 = vadd.f32 %v6017, %v6305
  %v6307 = vpop.f32.mrb[0].mxu0
  %v6308 = vpop.f32.mrb[0].mxu0
  %v6309 = vadd.f32 %v6020, %v6308
  %v6310 = vpop.f32.mrb[0].mxu0
  %6311 = vmatprep.mubr.bf16.mxu0 %v3089
  %6312 = vmatmul.mubr.bf16.gmra.mrb[0].mxu0 %v3088
  %v6313 = vpop.f32.mrb[0].mxu0
  %v6314 = vadd.f32 %v6025, %v6313
  %v6315 = vpop.f32.mrb[0].mxu0
  %v6316 = vpop.f32.mrb[0].mxu0
  %v6317 = vadd.f32 %v6028, %v6316
  %v6318 = vpop.f32.mrb[0].mxu0
  %6319 = vmatprep.mubr.bf16.mxu0 %v3107
  %6320 = vmatmul.mubr.bf16.gmra.mrb[0].mxu0 %v3106
  %v6321 = vpop.f32.mrb[0].mxu0
  %v6322 = vadd.f32 %v6033, %v6321
  %v6323 = vpop.f32.mrb[0].mxu0
  %v6324 = vpop.f32.mrb[0].mxu0
  %v6325 = vadd.f32 %v6036, %v6324
  %v6326 = vpop.f32.mrb[0].mxu0
  %6327 = vmatprep.mubr.bf16.mxu0 %v3125
  %6328 = vmatmul.mubr.bf16.gmra.mrb[0].mxu0 %v3124
  %v6329 = vpop.f32.mrb[0].mxu0
  %v6330 = vadd.f32 %v6041, %v6329
  %v6331 = vpop.f32.mrb[0].mxu0
  %v6332 = vpop.f32.mrb[0].mxu0
  %v6333 = vadd.f32 %v6044, %v6332
  %v6334 = vpop.f32.mrb[0].mxu0
  %6335 = vmatprep.mubr.bf16.mxu0 %v3143
  %6336 = vmatmul.mubr.bf16.gmra.mrb[0].mxu0 %v3142
  %v6337 = vpop.f32.mrb[0].mxu0
  %v6338 = vadd.f32 %v6049, %v6337
  %v6339 = vpop.f32.mrb[0].mxu0
  %v6340 = vpop.f32.mrb[0].mxu0
  %v6341 = vadd.f32 %v6052, %v6340
  %v6342 = vpop.f32.mrb[0].mxu0
  %6343 = vmatprep.mubr.bf16.mxu0 %v3161
  %6344 = vmatmul.mubr.bf16.gmra.mrb[0].mxu0 %v3160
  %v6345 = vpop.f32.mrb[0].mxu0
  %v6346 = vadd.f32 %v6057, %v6345
  %v6347 = vpop.f32.mrb[0].mxu0
  %v6348 = vpop.f32.mrb[0].mxu0
  %v6349 = vadd.f32 %v6060, %v6348
  %v6350 = vpop.f32.mrb[0].mxu0
  %6351 = vmatprep.mubr.bf16.mxu0 %v3179
  %6352 = vmatmul.mubr.bf16.gmra.mrb[0].mxu0 %v3178
  %v6353 = vpop.f32.mrb[0].mxu0
  %v6354 = vadd.f32 %v6065, %v6353
  %v6355 = vpop.f32.mrb[0].mxu0
  %v6356 = vpop.f32.mrb[0].mxu0
  %v6357 = vadd.f32 %v6068, %v6356
  %v6358 = vpop.f32.mrb[0].mxu0
  %6359 = vdwg.mxu0
  %6360 = vmatprep.subr.bf16.mxu0 0
  %6361 = vmatpush1.bf16.msra.mxu0 %v4434
  %6362 = vmatprep.subr.bf16.mxu0 0
  %6363 = vmatpush1.bf16.msra.mxu0 %v4435
  %6364 = vmatprep.subr.bf16.mxu0 0
  %6365 = vmatpush1.bf16.msra.mxu0 %v4436
  %6366 = vmatprep.subr.bf16.mxu0 0
  %6367 = vmatpush1.bf16.msra.mxu0 %v4437
  %6368 = vmatprep.subr.bf16.mxu0 0
  %6369 = vmatpush1.bf16.msra.mxu0 %v4438
  %6370 = vmatprep.subr.bf16.mxu0 0
  %6371 = vmatpush1.bf16.msra.mxu0 %v4439
  %6372 = vmatprep.subr.bf16.mxu0 0
  %6373 = vmatpush1.bf16.msra.mxu0 %v4440
  %6374 = vmatprep.subr.bf16.mxu0 0
  %6375 = vmatpush1.bf16.msra.mxu0 %v4441
  %6376 = vmatprep.subr.bf16.mxu0 0
  %6377 = vmatpush1.bf16.msra.mxu0 %v4442
  %6378 = vmatprep.subr.bf16.mxu0 0
  %6379 = vmatpush1.bf16.msra.mxu0 %v4443
  %6380 = vmatprep.subr.bf16.mxu0 0
  %6381 = vmatpush1.bf16.msra.mxu0 %v4444
  %6382 = vmatprep.subr.bf16.mxu0 0
  %6383 = vmatpush1.bf16.msra.mxu0 %v4445
  %6384 = vmatprep.subr.bf16.mxu0 0
  %6385 = vmatpush1.bf16.msra.mxu0 %v4446
  %6386 = vmatprep.subr.bf16.mxu0 0
  %6387 = vmatpush1.bf16.msra.mxu0 %v4447
  %6388 = vmatprep.subr.bf16.mxu0 0
  %6389 = vmatpush1.bf16.msra.mxu0 %v4448
  %6390 = vmatprep.subr.bf16.mxu0 0
  %6391 = vmatpush1.bf16.msra.mxu0 %v4449
  %6392 = vmatprep.mubr.bf16.mxu0 %v2623
  %6393 = vmatmul.mubr.bf16.gmra.mrb[0].mxu0 %v2622
  %v6394 = vpop.f32.mrb[0].mxu0
  %v6395 = vadd.f32 %v6106, %v6394
  %v6396 = vpop.f32.mrb[0].mxu0
  %v6397 = vpop.f32.mrb[0].mxu0
  %v6398 = vadd.f32 %v6109, %v6397
  %v6399 = vpop.f32.mrb[0].mxu0
  %6400 = vmatprep.mubr.bf16.mxu0 %v2641
  %6401 = vmatmul.mubr.bf16.gmra.mrb[0].mxu0 %v2640
  %v6402 = vpop.f32.mrb[0].mxu0
  %v6403 = vadd.f32 %v6114, %v6402
  %v6404 = vpop.f32.mrb[0].mxu0
  %v6405 = vpop.f32.mrb[0].mxu0
  %v6406 = vadd.f32 %v6117, %v6405
  %v6407 = vpop.f32.mrb[0].mxu0
  %6408 = vmatprep.mubr.bf16.mxu0 %v2659
  %6409 = vmatmul.mubr.bf16.gmra.mrb[0].mxu0 %v2658
  %v6410 = vpop.f32.mrb[0].mxu0
  %v6411 = vadd.f32 %v6122, %v6410
  %v6412 = vpop.f32.mrb[0].mxu0
  %v6413 = vpop.f32.mrb[0].mxu0
  %v6414 = vadd.f32 %v6125, %v6413
  %v6415 = vpop.f32.mrb[0].mxu0
  %6416 = vmatprep.mubr.bf16.mxu0 %v2677
  %6417 = vmatmul.mubr.bf16.gmra.mrb[0].mxu0 %v2676
  %v6418 = vpop.f32.mrb[0].mxu0
  %v6419 = vadd.f32 %v6130, %v6418
  %v6420 = vpop.f32.mrb[0].mxu0
  %v6421 = vpop.f32.mrb[0].mxu0
  %v6422 = vadd.f32 %v6133, %v6421
  %v6423 = vpop.f32.mrb[0].mxu0
  %6424 = vmatprep.mubr.bf16.mxu0 %v2695
  %6425 = vmatmul.mubr.bf16.gmra.mrb[0].mxu0 %v2694
  %v6426 = vpop.f32.mrb[0].mxu0
  %v6427 = vadd.f32 %v6138, %v6426
  %v6428 = vpop.f32.mrb[0].mxu0
  %v6429 = vpop.f32.mrb[0].mxu0
  %v6430 = vadd.f32 %v6141, %v6429
  %v6431 = vpop.f32.mrb[0].mxu0
  %6432 = vmatprep.mubr.bf16.mxu0 %v2713
  %6433 = vmatmul.mubr.bf16.gmra.mrb[0].mxu0 %v2712
  %v6434 = vpop.f32.mrb[0].mxu0
  %v6435 = vadd.f32 %v6146, %v6434
  %v6436 = vpop.f32.mrb[0].mxu0
  %v6437 = vpop.f32.mrb[0].mxu0
  %v6438 = vadd.f32 %v6149, %v6437
  %v6439 = vpop.f32.mrb[0].mxu0
  %6440 = vmatprep.mubr.bf16.mxu0 %v2731
  %6441 = vmatmul.mubr.bf16.gmra.mrb[0].mxu0 %v2730
  %v6442 = vpop.f32.mrb[0].mxu0
  %v6443 = vadd.f32 %v6154, %v6442
  %v6444 = vpop.f32.mrb[0].mxu0
  %v6445 = vpop.f32.mrb[0].mxu0
  %v6446 = vadd.f32 %v6157, %v6445
  %v6447 = vpop.f32.mrb[0].mxu0
  %6448 = vmatprep.mubr.bf16.mxu0 %v2749
  %6449 = vmatmul.mubr.bf16.gmra.mrb[0].mxu0 %v2748
  %v6450 = vpop.f32.mrb[0].mxu0
  %v6451 = vadd.f32 %v6162, %v6450
  %v6452 = vpop.f32.mrb[0].mxu0
  %v6453 = vpop.f32.mrb[0].mxu0
  %v6454 = vadd.f32 %v6165, %v6453
  %v6455 = vpop.f32.mrb[0].mxu0
  %6456 = vmatprep.mubr.bf16.mxu0 %v2767
  %6457 = vmatmul.mubr.bf16.gmra.mrb[0].mxu0 %v2766
  %v6458 = vpop.f32.mrb[0].mxu0
  %v6459 = vadd.f32 %v6170, %v6458
  %v6460 = vpop.f32.mrb[0].mxu0
  %v6461 = vpop.f32.mrb[0].mxu0
  %v6462 = vadd.f32 %v6173, %v6461
  %v6463 = vpop.f32.mrb[0].mxu0
  %6464 = vmatprep.mubr.bf16.mxu0 %v2785
  %6465 = vmatmul.mubr.bf16.gmra.mrb[0].mxu0 %v2784
  %v6466 = vpop.f32.mrb[0].mxu0
  %v6467 = vadd.f32 %v6178, %v6466
  %v6468 = vpop.f32.mrb[0].mxu0
  %v6469 = vpop.f32.mrb[0].mxu0
  %v6470 = vadd.f32 %v6181, %v6469
  %v6471 = vpop.f32.mrb[0].mxu0
  %6472 = vmatprep.mubr.bf16.mxu0 %v2803
  %6473 = vmatmul.mubr.bf16.gmra.mrb[0].mxu0 %v2802
  %v6474 = vpop.f32.mrb[0].mxu0
  %v6475 = vadd.f32 %v6186, %v6474
  %v6476 = vpop.f32.mrb[0].mxu0
  %v6477 = vpop.f32.mrb[0].mxu0
  %v6478 = vadd.f32 %v6189, %v6477
  %v6479 = vpop.f32.mrb[0].mxu0
  %6480 = vmatprep.mubr.bf16.mxu0 %v2821
  %6481 = vmatmul.mubr.bf16.gmra.mrb[0].mxu0 %v2820
  %v6482 = vpop.f32.mrb[0].mxu0
  %v6483 = vadd.f32 %v6194, %v6482
  %v6484 = vpop.f32.mrb[0].mxu0
  %v6485 = vpop.f32.mrb[0].mxu0
  %v6486 = vadd.f32 %v6197, %v6485
  %v6487 = vpop.f32.mrb[0].mxu0
  %6488 = vmatprep.mubr.bf16.mxu0 %v2839
  %6489 = vmatmul.mubr.bf16.gmra.mrb[0].mxu0 %v2838
  %v6490 = vpop.f32.mrb[0].mxu0
  %v6491 = vadd.f32 %v6202, %v6490
  %v6492 = vpop.f32.mrb[0].mxu0
  %v6493 = vpop.f32.mrb[0].mxu0
  %v6494 = vadd.f32 %v6205, %v6493
  %v6495 = vpop.f32.mrb[0].mxu0
  %6496 = vmatprep.mubr.bf16.mxu0 %v2857
  %6497 = vmatmul.mubr.bf16.gmra.mrb[0].mxu0 %v2856
  %v6498 = vpop.f32.mrb[0].mxu0
  %v6499 = vadd.f32 %v6210, %v6498
  %v6500 = vpop.f32.mrb[0].mxu0
  %v6501 = vpop.f32.mrb[0].mxu0
  %v6502 = vadd.f32 %v6213, %v6501
  %v6503 = vpop.f32.mrb[0].mxu0
  %6504 = vmatprep.mubr.bf16.mxu0 %v2875
  %6505 = vmatmul.mubr.bf16.gmra.mrb[0].mxu0 %v2874
  %v6506 = vpop.f32.mrb[0].mxu0
  %v6507 = vadd.f32 %v6218, %v6506
  %v6508 = vpop.f32.mrb[0].mxu0
  %v6509 = vpop.f32.mrb[0].mxu0
  %v6510 = vadd.f32 %v6221, %v6509
  %v6511 = vpop.f32.mrb[0].mxu0
  %6512 = vmatprep.mubr.bf16.mxu0 %v2893
  %6513 = vmatmul.mubr.bf16.gmra.mrb[0].mxu0 %v2892
  %v6514 = vpop.f32.mrb[0].mxu0
  %v6515 = vadd.f32 %v6226, %v6514
  %v6516 = vpop.f32.mrb[0].mxu0
  %v6517 = vpop.f32.mrb[0].mxu0
  %v6518 = vadd.f32 %v6229, %v6517
  %v6519 = vpop.f32.mrb[0].mxu0
  %6520 = vmatprep.mubr.bf16.mxu0 %v2911
  %6521 = vmatmul.mubr.bf16.gmra.mrb[0].mxu0 %v2910
  %v6522 = vpop.f32.mrb[0].mxu0
  %v6523 = vadd.f32 %v6234, %v6522
  %v6524 = vpop.f32.mrb[0].mxu0
  %v6525 = vpop.f32.mrb[0].mxu0
  %v6526 = vadd.f32 %v6237, %v6525
  %v6527 = vpop.f32.mrb[0].mxu0
  %6528 = vmatprep.mubr.bf16.mxu0 %v2929
  %6529 = vmatmul.mubr.bf16.gmra.mrb[0].mxu0 %v2928
  %v6530 = vpop.f32.mrb[0].mxu0
  %v6531 = vadd.f32 %v6242, %v6530
  %v6532 = vpop.f32.mrb[0].mxu0
  %v6533 = vpop.f32.mrb[0].mxu0
  %v6534 = vadd.f32 %v6245, %v6533
  %v6535 = vpop.f32.mrb[0].mxu0
  %6536 = vmatprep.mubr.bf16.mxu0 %v2947
  %6537 = vmatmul.mubr.bf16.gmra.mrb[0].mxu0 %v2946
  %v6538 = vpop.f32.mrb[0].mxu0
  %v6539 = vadd.f32 %v6250, %v6538
  %v6540 = vpop.f32.mrb[0].mxu0
  %v6541 = vpop.f32.mrb[0].mxu0
  %v6542 = vadd.f32 %v6253, %v6541
  %v6543 = vpop.f32.mrb[0].mxu0
  %6544 = vmatprep.mubr.bf16.mxu0 %v2965
  %6545 = vmatmul.mubr.bf16.gmra.mrb[0].mxu0 %v2964
  %v6546 = vpop.f32.mrb[0].mxu0
  %v6547 = vadd.f32 %v6258, %v6546
  %v6548 = vpop.f32.mrb[0].mxu0
  %v6549 = vpop.f32.mrb[0].mxu0
  %v6550 = vadd.f32 %v6261, %v6549
  %v6551 = vpop.f32.mrb[0].mxu0
  %6552 = vmatprep.mubr.bf16.mxu0 %v2983
  %6553 = vmatmul.mubr.bf16.gmra.mrb[0].mxu0 %v2982
  %v6554 = vpop.f32.mrb[0].mxu0
  %v6555 = vadd.f32 %v6266, %v6554
  %v6556 = vpop.f32.mrb[0].mxu0
  %v6557 = vpop.f32.mrb[0].mxu0
  %v6558 = vadd.f32 %v6269, %v6557
  %v6559 = vpop.f32.mrb[0].mxu0
  %6560 = vmatprep.mubr.bf16.mxu0 %v3001
  %6561 = vmatmul.mubr.bf16.gmra.mrb[0].mxu0 %v3000
  %v6562 = vpop.f32.mrb[0].mxu0
  %v6563 = vadd.f32 %v6274, %v6562
  %v6564 = vpop.f32.mrb[0].mxu0
  %v6565 = vpop.f32.mrb[0].mxu0
  %v6566 = vadd.f32 %v6277, %v6565
  %v6567 = vpop.f32.mrb[0].mxu0
  %6568 = vmatprep.mubr.bf16.mxu0 %v3019
  %6569 = vmatmul.mubr.bf16.gmra.mrb[0].mxu0 %v3018
  %v6570 = vpop.f32.mrb[0].mxu0
  %v6571 = vadd.f32 %v6282, %v6570
  %v6572 = vpop.f32.mrb[0].mxu0
  %v6573 = vpop.f32.mrb[0].mxu0
  %v6574 = vadd.f32 %v6285, %v6573
  %v6575 = vpop.f32.mrb[0].mxu0
  %6576 = vmatprep.mubr.bf16.mxu0 %v3037
  %6577 = vmatmul.mubr.bf16.gmra.mrb[0].mxu0 %v3036
  %v6578 = vpop.f32.mrb[0].mxu0
  %v6579 = vadd.f32 %v6290, %v6578
  %v6580 = vpop.f32.mrb[0].mxu0
  %v6581 = vpop.f32.mrb[0].mxu0
  %v6582 = vadd.f32 %v6293, %v6581
  %v6583 = vpop.f32.mrb[0].mxu0
  %6584 = vmatprep.mubr.bf16.mxu0 %v3055
  %6585 = vmatmul.mubr.bf16.gmra.mrb[0].mxu0 %v3054
  %v6586 = vpop.f32.mrb[0].mxu0
  %v6587 = vadd.f32 %v6298, %v6586
  %v6588 = vpop.f32.mrb[0].mxu0
  %v6589 = vpop.f32.mrb[0].mxu0
  %v6590 = vadd.f32 %v6301, %v6589
  %v6591 = vpop.f32.mrb[0].mxu0
  %6592 = vmatprep.mubr.bf16.mxu0 %v3073
  %6593 = vmatmul.mubr.bf16.gmra.mrb[0].mxu0 %v3072
  %v6594 = vpop.f32.mrb[0].mxu0
  %v6595 = vadd.f32 %v6306, %v6594
  %v6596 = vpop.f32.mrb[0].mxu0
  %v6597 = vpop.f32.mrb[0].mxu0
  %v6598 = vadd.f32 %v6309, %v6597
  %v6599 = vpop.f32.mrb[0].mxu0
  %6600 = vmatprep.mubr.bf16.mxu0 %v3091
  %6601 = vmatmul.mubr.bf16.gmra.mrb[0].mxu0 %v3090
  %v6602 = vpop.f32.mrb[0].mxu0
  %v6603 = vadd.f32 %v6314, %v6602
  %v6604 = vpop.f32.mrb[0].mxu0
  %v6605 = vpop.f32.mrb[0].mxu0
  %v6606 = vadd.f32 %v6317, %v6605
  %v6607 = vpop.f32.mrb[0].mxu0
  %6608 = vmatprep.mubr.bf16.mxu0 %v3109
  %6609 = vmatmul.mubr.bf16.gmra.mrb[0].mxu0 %v3108
  %v6610 = vpop.f32.mrb[0].mxu0
  %v6611 = vadd.f32 %v6322, %v6610
  %v6612 = vpop.f32.mrb[0].mxu0
  %v6613 = vpop.f32.mrb[0].mxu0
  %v6614 = vadd.f32 %v6325, %v6613
  %v6615 = vpop.f32.mrb[0].mxu0
  %6616 = vmatprep.mubr.bf16.mxu0 %v3127
  %6617 = vmatmul.mubr.bf16.gmra.mrb[0].mxu0 %v3126
  %v6618 = vpop.f32.mrb[0].mxu0
  %v6619 = vadd.f32 %v6330, %v6618
  %v6620 = vpop.f32.mrb[0].mxu0
  %v6621 = vpop.f32.mrb[0].mxu0
  %v6622 = vadd.f32 %v6333, %v6621
  %v6623 = vpop.f32.mrb[0].mxu0
  %6624 = vmatprep.mubr.bf16.mxu0 %v3145
  %6625 = vmatmul.mubr.bf16.gmra.mrb[0].mxu0 %v3144
  %v6626 = vpop.f32.mrb[0].mxu0
  %v6627 = vadd.f32 %v6338, %v6626
  %v6628 = vpop.f32.mrb[0].mxu0
  %v6629 = vpop.f32.mrb[0].mxu0
  %v6630 = vadd.f32 %v6341, %v6629
  %v6631 = vpop.f32.mrb[0].mxu0
  %6632 = vmatprep.mubr.bf16.mxu0 %v3163
  %6633 = vmatmul.mubr.bf16.gmra.mrb[0].mxu0 %v3162
  %v6634 = vpop.f32.mrb[0].mxu0
  %v6635 = vadd.f32 %v6346, %v6634
  %v6636 = vpop.f32.mrb[0].mxu0
  %v6637 = vpop.f32.mrb[0].mxu0
  %v6638 = vadd.f32 %v6349, %v6637
  %v6639 = vpop.f32.mrb[0].mxu0
  %6640 = vmatprep.mubr.bf16.mxu0 %v3181
  %6641 = vmatmul.mubr.bf16.gmra.mrb[0].mxu0 %v3180
  %v6642 = vpop.f32.mrb[0].mxu0
  %v6643 = vadd.f32 %v6354, %v6642
  %v6644 = vpop.f32.mrb[0].mxu0
  %v6645 = vpop.f32.mrb[0].mxu0
  %v6646 = vadd.f32 %v6357, %v6645
  %v6647 = vpop.f32.mrb[0].mxu0
  %6648 = vdwg.mxu0
  %6649 = vmatprep.subr.bf16.mxu0 0
  %6650 = vmatpush1.bf16.msra.mxu0 %v4450
  %6651 = vmatprep.subr.bf16.mxu0 0
  %6652 = vmatpush1.bf16.msra.mxu0 %v4451
  %6653 = vmatprep.subr.bf16.mxu0 0
  %6654 = vmatpush1.bf16.msra.mxu0 %v4452
  %6655 = vmatprep.subr.bf16.mxu0 0
  %6656 = vmatpush1.bf16.msra.mxu0 %v4453
  %6657 = vmatprep.subr.bf16.mxu0 0
  %6658 = vmatpush1.bf16.msra.mxu0 %v4454
  %6659 = vmatprep.subr.bf16.mxu0 0
  %6660 = vmatpush1.bf16.msra.mxu0 %v4455
  %6661 = vmatprep.subr.bf16.mxu0 0
  %6662 = vmatpush1.bf16.msra.mxu0 %v4456
  %6663 = vmatprep.subr.bf16.mxu0 0
  %6664 = vmatpush1.bf16.msra.mxu0 %v4457
  %6665 = vmatprep.subr.bf16.mxu0 0
  %6666 = vmatpush1.bf16.msra.mxu0 %v4458
  %6667 = vmatprep.subr.bf16.mxu0 0
  %6668 = vmatpush1.bf16.msra.mxu0 %v4459
  %6669 = vmatprep.subr.bf16.mxu0 0
  %6670 = vmatpush1.bf16.msra.mxu0 %v4460
  %6671 = vmatprep.subr.bf16.mxu0 0
  %6672 = vmatpush1.bf16.msra.mxu0 %v4461
  %6673 = vmatprep.subr.bf16.mxu0 0
  %6674 = vmatpush1.bf16.msra.mxu0 %v4462
  %6675 = vmatprep.subr.bf16.mxu0 0
  %6676 = vmatpush1.bf16.msra.mxu0 %v4463
  %6677 = vmatprep.subr.bf16.mxu0 0
  %6678 = vmatpush1.bf16.msra.mxu0 %v4464
  %6679 = vmatprep.subr.bf16.mxu0 0
  %6680 = vmatpush1.bf16.msra.mxu0 %v4465
  %6681 = vmatprep.mubr.bf16.mxu0 %v2625
  %6682 = vmatmul.mubr.bf16.gmra.mrb[0].mxu0 %v2624
  %v6683 = vpop.f32.mrb[0].mxu0
  %v6684 = vadd.f32 %v6395, %v6683
  %v6685 = vpop.f32.mrb[0].mxu0
  %v6686 = vpop.f32.mrb[0].mxu0
  %v6687 = vadd.f32 %v6398, %v6686
  %v6688 = vpop.f32.mrb[0].mxu0
  %6689 = vmatprep.mubr.bf16.mxu0 %v2643
  %6690 = vmatmul.mubr.bf16.gmra.mrb[0].mxu0 %v2642
  %v6691 = vpop.f32.mrb[0].mxu0
  %v6692 = vadd.f32 %v6403, %v6691
  %v6693 = vpop.f32.mrb[0].mxu0
  %v6694 = vpop.f32.mrb[0].mxu0
  %v6695 = vadd.f32 %v6406, %v6694
  %v6696 = vpop.f32.mrb[0].mxu0
  %6697 = vmatprep.mubr.bf16.mxu0 %v2661
  %6698 = vmatmul.mubr.bf16.gmra.mrb[0].mxu0 %v2660
  %v6699 = vpop.f32.mrb[0].mxu0
  %v6700 = vadd.f32 %v6411, %v6699
  %v6701 = vpop.f32.mrb[0].mxu0
  %v6702 = vpop.f32.mrb[0].mxu0
  %v6703 = vadd.f32 %v6414, %v6702
  %v6704 = vpop.f32.mrb[0].mxu0
  %6705 = vmatprep.mubr.bf16.mxu0 %v2679
  %6706 = vmatmul.mubr.bf16.gmra.mrb[0].mxu0 %v2678
  %v6707 = vpop.f32.mrb[0].mxu0
  %v6708 = vadd.f32 %v6419, %v6707
  %v6709 = vpop.f32.mrb[0].mxu0
  %v6710 = vpop.f32.mrb[0].mxu0
  %v6711 = vadd.f32 %v6422, %v6710
  %v6712 = vpop.f32.mrb[0].mxu0
  %6713 = vmatprep.mubr.bf16.mxu0 %v2697
  %6714 = vmatmul.mubr.bf16.gmra.mrb[0].mxu0 %v2696
  %v6715 = vpop.f32.mrb[0].mxu0
  %v6716 = vadd.f32 %v6427, %v6715
  %v6717 = vpop.f32.mrb[0].mxu0
  %v6718 = vpop.f32.mrb[0].mxu0
  %v6719 = vadd.f32 %v6430, %v6718
  %v6720 = vpop.f32.mrb[0].mxu0
  %6721 = vmatprep.mubr.bf16.mxu0 %v2715
  %6722 = vmatmul.mubr.bf16.gmra.mrb[0].mxu0 %v2714
  %v6723 = vpop.f32.mrb[0].mxu0
  %v6724 = vadd.f32 %v6435, %v6723
  %v6725 = vpop.f32.mrb[0].mxu0
  %v6726 = vpop.f32.mrb[0].mxu0
  %v6727 = vadd.f32 %v6438, %v6726
  %v6728 = vpop.f32.mrb[0].mxu0
  %6729 = vmatprep.mubr.bf16.mxu0 %v2733
  %6730 = vmatmul.mubr.bf16.gmra.mrb[0].mxu0 %v2732
  %v6731 = vpop.f32.mrb[0].mxu0
  %v6732 = vadd.f32 %v6443, %v6731
  %v6733 = vpop.f32.mrb[0].mxu0
  %v6734 = vpop.f32.mrb[0].mxu0
  %v6735 = vadd.f32 %v6446, %v6734
  %v6736 = vpop.f32.mrb[0].mxu0
  %6737 = vmatprep.mubr.bf16.mxu0 %v2751
  %6738 = vmatmul.mubr.bf16.gmra.mrb[0].mxu0 %v2750
  %v6739 = vpop.f32.mrb[0].mxu0
  %v6740 = vadd.f32 %v6451, %v6739
  %v6741 = vpop.f32.mrb[0].mxu0
  %v6742 = vpop.f32.mrb[0].mxu0
  %v6743 = vadd.f32 %v6454, %v6742
  %v6744 = vpop.f32.mrb[0].mxu0
  %6745 = vmatprep.mubr.bf16.mxu0 %v2769
  %6746 = vmatmul.mubr.bf16.gmra.mrb[0].mxu0 %v2768
  %v6747 = vpop.f32.mrb[0].mxu0
  %v6748 = vadd.f32 %v6459, %v6747
  %v6749 = vpop.f32.mrb[0].mxu0
  %v6750 = vpop.f32.mrb[0].mxu0
  %v6751 = vadd.f32 %v6462, %v6750
  %v6752 = vpop.f32.mrb[0].mxu0
  %6753 = vmatprep.mubr.bf16.mxu0 %v2787
  %6754 = vmatmul.mubr.bf16.gmra.mrb[0].mxu0 %v2786
  %v6755 = vpop.f32.mrb[0].mxu0
  %v6756 = vadd.f32 %v6467, %v6755
  %v6757 = vpop.f32.mrb[0].mxu0
  %v6758 = vpop.f32.mrb[0].mxu0
  %v6759 = vadd.f32 %v6470, %v6758
  %v6760 = vpop.f32.mrb[0].mxu0
  %6761 = vmatprep.mubr.bf16.mxu0 %v2805
  %6762 = vmatmul.mubr.bf16.gmra.mrb[0].mxu0 %v2804
  %v6763 = vpop.f32.mrb[0].mxu0
  %v6764 = vadd.f32 %v6475, %v6763
  %v6765 = vpop.f32.mrb[0].mxu0
  %v6766 = vpop.f32.mrb[0].mxu0
  %v6767 = vadd.f32 %v6478, %v6766
  %v6768 = vpop.f32.mrb[0].mxu0
  %6769 = vmatprep.mubr.bf16.mxu0 %v2823
  %6770 = vmatmul.mubr.bf16.gmra.mrb[0].mxu0 %v2822
  %v6771 = vpop.f32.mrb[0].mxu0
  %v6772 = vadd.f32 %v6483, %v6771
  %v6773 = vpop.f32.mrb[0].mxu0
  %v6774 = vpop.f32.mrb[0].mxu0
  %v6775 = vadd.f32 %v6486, %v6774
  %v6776 = vpop.f32.mrb[0].mxu0
  %6777 = vmatprep.mubr.bf16.mxu0 %v2841
  %6778 = vmatmul.mubr.bf16.gmra.mrb[0].mxu0 %v2840
  %v6779 = vpop.f32.mrb[0].mxu0
  %v6780 = vadd.f32 %v6491, %v6779
  %v6781 = vpop.f32.mrb[0].mxu0
  %v6782 = vpop.f32.mrb[0].mxu0
  %v6783 = vadd.f32 %v6494, %v6782
  %v6784 = vpop.f32.mrb[0].mxu0
  %6785 = vmatprep.mubr.bf16.mxu0 %v2859
  %6786 = vmatmul.mubr.bf16.gmra.mrb[0].mxu0 %v2858
  %v6787 = vpop.f32.mrb[0].mxu0
  %v6788 = vadd.f32 %v6499, %v6787
  %v6789 = vpop.f32.mrb[0].mxu0
  %v6790 = vpop.f32.mrb[0].mxu0
  %v6791 = vadd.f32 %v6502, %v6790
  %v6792 = vpop.f32.mrb[0].mxu0
  %6793 = vmatprep.mubr.bf16.mxu0 %v2877
  %6794 = vmatmul.mubr.bf16.gmra.mrb[0].mxu0 %v2876
  %v6795 = vpop.f32.mrb[0].mxu0
  %v6796 = vadd.f32 %v6507, %v6795
  %v6797 = vpop.f32.mrb[0].mxu0
  %v6798 = vpop.f32.mrb[0].mxu0
  %v6799 = vadd.f32 %v6510, %v6798
  %v6800 = vpop.f32.mrb[0].mxu0
  %6801 = vmatprep.mubr.bf16.mxu0 %v2895
  %6802 = vmatmul.mubr.bf16.gmra.mrb[0].mxu0 %v2894
  %v6803 = vpop.f32.mrb[0].mxu0
  %v6804 = vadd.f32 %v6515, %v6803
  %v6805 = vpop.f32.mrb[0].mxu0
  %v6806 = vpop.f32.mrb[0].mxu0
  %v6807 = vadd.f32 %v6518, %v6806
  %v6808 = vpop.f32.mrb[0].mxu0
  %6809 = vmatprep.mubr.bf16.mxu0 %v2913
  %6810 = vmatmul.mubr.bf16.gmra.mrb[0].mxu0 %v2912
  %v6811 = vpop.f32.mrb[0].mxu0
  %v6812 = vadd.f32 %v6523, %v6811
  %v6813 = vpop.f32.mrb[0].mxu0
  %v6814 = vpop.f32.mrb[0].mxu0
  %v6815 = vadd.f32 %v6526, %v6814
  %v6816 = vpop.f32.mrb[0].mxu0
  %6817 = vmatprep.mubr.bf16.mxu0 %v2931
  %6818 = vmatmul.mubr.bf16.gmra.mrb[0].mxu0 %v2930
  %v6819 = vpop.f32.mrb[0].mxu0
  %v6820 = vadd.f32 %v6531, %v6819
  %v6821 = vpop.f32.mrb[0].mxu0
  %v6822 = vpop.f32.mrb[0].mxu0
  %v6823 = vadd.f32 %v6534, %v6822
  %v6824 = vpop.f32.mrb[0].mxu0
  %6825 = vmatprep.mubr.bf16.mxu0 %v2949
  %6826 = vmatmul.mubr.bf16.gmra.mrb[0].mxu0 %v2948
  %v6827 = vpop.f32.mrb[0].mxu0
  %v6828 = vadd.f32 %v6539, %v6827
  %v6829 = vpop.f32.mrb[0].mxu0
  %v6830 = vpop.f32.mrb[0].mxu0
  %v6831 = vadd.f32 %v6542, %v6830
  %v6832 = vpop.f32.mrb[0].mxu0
  %6833 = vmatprep.mubr.bf16.mxu0 %v2967
  %6834 = vmatmul.mubr.bf16.gmra.mrb[0].mxu0 %v2966
  %v6835 = vpop.f32.mrb[0].mxu0
  %v6836 = vadd.f32 %v6547, %v6835
  %v6837 = vpop.f32.mrb[0].mxu0
  %v6838 = vpop.f32.mrb[0].mxu0
  %v6839 = vadd.f32 %v6550, %v6838
  %v6840 = vpop.f32.mrb[0].mxu0
  %6841 = vmatprep.mubr.bf16.mxu0 %v2985
  %6842 = vmatmul.mubr.bf16.gmra.mrb[0].mxu0 %v2984
  %v6843 = vpop.f32.mrb[0].mxu0
  %v6844 = vadd.f32 %v6555, %v6843
  %v6845 = vpop.f32.mrb[0].mxu0
  %v6846 = vpop.f32.mrb[0].mxu0
  %v6847 = vadd.f32 %v6558, %v6846
  %v6848 = vpop.f32.mrb[0].mxu0
  %6849 = vmatprep.mubr.bf16.mxu0 %v3003
  %6850 = vmatmul.mubr.bf16.gmra.mrb[0].mxu0 %v3002
  %v6851 = vpop.f32.mrb[0].mxu0
  %v6852 = vadd.f32 %v6563, %v6851
  %v6853 = vpop.f32.mrb[0].mxu0
  %v6854 = vpop.f32.mrb[0].mxu0
  %v6855 = vadd.f32 %v6566, %v6854
  %v6856 = vpop.f32.mrb[0].mxu0
  %6857 = vmatprep.mubr.bf16.mxu0 %v3021
  %6858 = vmatmul.mubr.bf16.gmra.mrb[0].mxu0 %v3020
  %v6859 = vpop.f32.mrb[0].mxu0
  %v6860 = vadd.f32 %v6571, %v6859
  %v6861 = vpop.f32.mrb[0].mxu0
  %v6862 = vpop.f32.mrb[0].mxu0
  %v6863 = vadd.f32 %v6574, %v6862
  %v6864 = vpop.f32.mrb[0].mxu0
  %6865 = vmatprep.mubr.bf16.mxu0 %v3039
  %6866 = vmatmul.mubr.bf16.gmra.mrb[0].mxu0 %v3038
  %v6867 = vpop.f32.mrb[0].mxu0
  %v6868 = vadd.f32 %v6579, %v6867
  %v6869 = vpop.f32.mrb[0].mxu0
  %v6870 = vpop.f32.mrb[0].mxu0
  %v6871 = vadd.f32 %v6582, %v6870
  %v6872 = vpop.f32.mrb[0].mxu0
  %6873 = vmatprep.mubr.bf16.mxu0 %v3057
  %6874 = vmatmul.mubr.bf16.gmra.mrb[0].mxu0 %v3056
  %v6875 = vpop.f32.mrb[0].mxu0
  %v6876 = vadd.f32 %v6587, %v6875
  %v6877 = vpop.f32.mrb[0].mxu0
  %v6878 = vpop.f32.mrb[0].mxu0
  %v6879 = vadd.f32 %v6590, %v6878
  %v6880 = vpop.f32.mrb[0].mxu0
  %6881 = vmatprep.mubr.bf16.mxu0 %v3075
  %6882 = vmatmul.mubr.bf16.gmra.mrb[0].mxu0 %v3074
  %v6883 = vpop.f32.mrb[0].mxu0
  %v6884 = vadd.f32 %v6595, %v6883
  %v6885 = vpop.f32.mrb[0].mxu0
  %v6886 = vpop.f32.mrb[0].mxu0
  %v6887 = vadd.f32 %v6598, %v6886
  %v6888 = vpop.f32.mrb[0].mxu0
  %6889 = vmatprep.mubr.bf16.mxu0 %v3093
  %6890 = vmatmul.mubr.bf16.gmra.mrb[0].mxu0 %v3092
  %v6891 = vpop.f32.mrb[0].mxu0
  %v6892 = vadd.f32 %v6603, %v6891
  %v6893 = vpop.f32.mrb[0].mxu0
  %v6894 = vpop.f32.mrb[0].mxu0
  %v6895 = vadd.f32 %v6606, %v6894
  %v6896 = vpop.f32.mrb[0].mxu0
  %6897 = vmatprep.mubr.bf16.mxu0 %v3111
  %6898 = vmatmul.mubr.bf16.gmra.mrb[0].mxu0 %v3110
  %v6899 = vpop.f32.mrb[0].mxu0
  %v6900 = vadd.f32 %v6611, %v6899
  %v6901 = vpop.f32.mrb[0].mxu0
  %v6902 = vpop.f32.mrb[0].mxu0
  %v6903 = vadd.f32 %v6614, %v6902
  %v6904 = vpop.f32.mrb[0].mxu0
  %6905 = vmatprep.mubr.bf16.mxu0 %v3129
  %6906 = vmatmul.mubr.bf16.gmra.mrb[0].mxu0 %v3128
  %v6907 = vpop.f32.mrb[0].mxu0
  %v6908 = vadd.f32 %v6619, %v6907
  %v6909 = vpop.f32.mrb[0].mxu0
  %v6910 = vpop.f32.mrb[0].mxu0
  %v6911 = vadd.f32 %v6622, %v6910
  %v6912 = vpop.f32.mrb[0].mxu0
  %6913 = vmatprep.mubr.bf16.mxu0 %v3147
  %6914 = vmatmul.mubr.bf16.gmra.mrb[0].mxu0 %v3146
  %v6915 = vpop.f32.mrb[0].mxu0
  %v6916 = vadd.f32 %v6627, %v6915
  %v6917 = vpop.f32.mrb[0].mxu0
  %v6918 = vpop.f32.mrb[0].mxu0
  %v6919 = vadd.f32 %v6630, %v6918
  %v6920 = vpop.f32.mrb[0].mxu0
  %6921 = vmatprep.mubr.bf16.mxu0 %v3165
  %6922 = vmatmul.mubr.bf16.gmra.mrb[0].mxu0 %v3164
  %v6923 = vpop.f32.mrb[0].mxu0
  %v6924 = vadd.f32 %v6635, %v6923
  %v6925 = vpop.f32.mrb[0].mxu0
  %v6926 = vpop.f32.mrb[0].mxu0
  %v6927 = vadd.f32 %v6638, %v6926
  %v6928 = vpop.f32.mrb[0].mxu0
  %6929 = vmatprep.mubr.bf16.mxu0 %v3183
  %6930 = vmatmul.mubr.bf16.gmra.mrb[0].mxu0 %v3182
  %v6931 = vpop.f32.mrb[0].mxu0
  %v6932 = vadd.f32 %v6643, %v6931
  %v6933 = vpop.f32.mrb[0].mxu0
  %v6934 = vpop.f32.mrb[0].mxu0
  %v6935 = vadd.f32 %v6646, %v6934
  %v6936 = vpop.f32.mrb[0].mxu0
  %6937 = vdwg.mxu0
  %6938 = vmatprep.subr.bf16.mxu0 0
  %6939 = vmatpush1.bf16.msra.mxu0 %v4466
  %6940 = vmatprep.subr.bf16.mxu0 0
  %6941 = vmatpush1.bf16.msra.mxu0 %v4467
  %6942 = vmatprep.subr.bf16.mxu0 0
  %6943 = vmatpush1.bf16.msra.mxu0 %v4468
  %6944 = vmatprep.subr.bf16.mxu0 0
  %6945 = vmatpush1.bf16.msra.mxu0 %v4469
  %6946 = vmatprep.subr.bf16.mxu0 0
  %6947 = vmatpush1.bf16.msra.mxu0 %v4470
  %6948 = vmatprep.subr.bf16.mxu0 0
  %6949 = vmatpush1.bf16.msra.mxu0 %v4471
  %6950 = vmatprep.subr.bf16.mxu0 0
  %6951 = vmatpush1.bf16.msra.mxu0 %v4472
  %6952 = vmatprep.subr.bf16.mxu0 0
  %6953 = vmatpush1.bf16.msra.mxu0 %v4473
  %6954 = vmatprep.subr.bf16.mxu0 0
  %6955 = vmatpush1.bf16.msra.mxu0 %v4474
  %6956 = vmatprep.subr.bf16.mxu0 0
  %6957 = vmatpush1.bf16.msra.mxu0 %v4475
  %6958 = vmatprep.subr.bf16.mxu0 0
  %6959 = vmatpush1.bf16.msra.mxu0 %v4476
  %6960 = vmatprep.subr.bf16.mxu0 0
  %6961 = vmatpush1.bf16.msra.mxu0 %v4477
  %6962 = vmatprep.subr.bf16.mxu0 0
  %6963 = vmatpush1.bf16.msra.mxu0 %v4478
  %6964 = vmatprep.subr.bf16.mxu0 0
  %6965 = vmatpush1.bf16.msra.mxu0 %v4479
  %6966 = vmatprep.subr.bf16.mxu0 0
  %6967 = vmatpush1.bf16.msra.mxu0 %v4480
  %6968 = vmatprep.subr.bf16.mxu0 0
  %6969 = vmatpush1.bf16.msra.mxu0 %v4481
  %6970 = vmatprep.mubr.bf16.mxu0 %v2627
  %6971 = vmatmul.mubr.bf16.gmra.mrb[0].mxu0 %v2626
  %v6972 = vpop.f32.mrb[0].mxu0
  %v6973 = vadd.f32 %v6684, %v6972
  %v6974 = vpop.f32.mrb[0].mxu0
  %v6975 = vpop.f32.mrb[0].mxu0
  %v6976 = vadd.f32 %v6687, %v6975
  %v6977 = vpop.f32.mrb[0].mxu0
  %6978 = vmatprep.mubr.bf16.mxu0 %v2645
  %6979 = vmatmul.mubr.bf16.gmra.mrb[0].mxu0 %v2644
  %v6980 = vpop.f32.mrb[0].mxu0
  %v6981 = vadd.f32 %v6692, %v6980
  %v6982 = vpop.f32.mrb[0].mxu0
  %v6983 = vpop.f32.mrb[0].mxu0
  %v6984 = vadd.f32 %v6695, %v6983
  %v6985 = vpop.f32.mrb[0].mxu0
  %6986 = vmatprep.mubr.bf16.mxu0 %v2663
  %6987 = vmatmul.mubr.bf16.gmra.mrb[0].mxu0 %v2662
  %v6988 = vpop.f32.mrb[0].mxu0
  %v6989 = vadd.f32 %v6700, %v6988
  %v6990 = vpop.f32.mrb[0].mxu0
  %v6991 = vpop.f32.mrb[0].mxu0
  %v6992 = vadd.f32 %v6703, %v6991
  %v6993 = vpop.f32.mrb[0].mxu0
  %6994 = vmatprep.mubr.bf16.mxu0 %v2681
  %6995 = vmatmul.mubr.bf16.gmra.mrb[0].mxu0 %v2680
  %v6996 = vpop.f32.mrb[0].mxu0
  %v6997 = vadd.f32 %v6708, %v6996
  %v6998 = vpop.f32.mrb[0].mxu0
  %v6999 = vpop.f32.mrb[0].mxu0
  %v7000 = vadd.f32 %v6711, %v6999
  %v7001 = vpop.f32.mrb[0].mxu0
  %7002 = vmatprep.mubr.bf16.mxu0 %v2699
  %7003 = vmatmul.mubr.bf16.gmra.mrb[0].mxu0 %v2698
  %v7004 = vpop.f32.mrb[0].mxu0
  %v7005 = vadd.f32 %v6716, %v7004
  %v7006 = vpop.f32.mrb[0].mxu0
  %v7007 = vpop.f32.mrb[0].mxu0
  %v7008 = vadd.f32 %v6719, %v7007
  %v7009 = vpop.f32.mrb[0].mxu0
  %7010 = vmatprep.mubr.bf16.mxu0 %v2717
  %7011 = vmatmul.mubr.bf16.gmra.mrb[0].mxu0 %v2716
  %v7012 = vpop.f32.mrb[0].mxu0
  %v7013 = vadd.f32 %v6724, %v7012
  %v7014 = vpop.f32.mrb[0].mxu0
  %v7015 = vpop.f32.mrb[0].mxu0
  %v7016 = vadd.f32 %v6727, %v7015
  %v7017 = vpop.f32.mrb[0].mxu0
  %7018 = vmatprep.mubr.bf16.mxu0 %v2735
  %7019 = vmatmul.mubr.bf16.gmra.mrb[0].mxu0 %v2734
  %v7020 = vpop.f32.mrb[0].mxu0
  %v7021 = vadd.f32 %v6732, %v7020
  %v7022 = vpop.f32.mrb[0].mxu0
  %v7023 = vpop.f32.mrb[0].mxu0
  %v7024 = vadd.f32 %v6735, %v7023
  %v7025 = vpop.f32.mrb[0].mxu0
  %7026 = vmatprep.mubr.bf16.mxu0 %v2753
  %7027 = vmatmul.mubr.bf16.gmra.mrb[0].mxu0 %v2752
  %v7028 = vpop.f32.mrb[0].mxu0
  %v7029 = vadd.f32 %v6740, %v7028
  %v7030 = vpop.f32.mrb[0].mxu0
  %v7031 = vpop.f32.mrb[0].mxu0
  %v7032 = vadd.f32 %v6743, %v7031
  %v7033 = vpop.f32.mrb[0].mxu0
  %7034 = vmatprep.mubr.bf16.mxu0 %v2771
  %7035 = vmatmul.mubr.bf16.gmra.mrb[0].mxu0 %v2770
  %v7036 = vpop.f32.mrb[0].mxu0
  %v7037 = vadd.f32 %v6748, %v7036
  %v7038 = vpop.f32.mrb[0].mxu0
  %v7039 = vpop.f32.mrb[0].mxu0
  %v7040 = vadd.f32 %v6751, %v7039
  %v7041 = vpop.f32.mrb[0].mxu0
  %7042 = vmatprep.mubr.bf16.mxu0 %v2789
  %7043 = vmatmul.mubr.bf16.gmra.mrb[0].mxu0 %v2788
  %v7044 = vpop.f32.mrb[0].mxu0
  %v7045 = vadd.f32 %v6756, %v7044
  %v7046 = vpop.f32.mrb[0].mxu0
  %v7047 = vpop.f32.mrb[0].mxu0
  %v7048 = vadd.f32 %v6759, %v7047
  %v7049 = vpop.f32.mrb[0].mxu0
  %7050 = vmatprep.mubr.bf16.mxu0 %v2807
  %7051 = vmatmul.mubr.bf16.gmra.mrb[0].mxu0 %v2806
  %v7052 = vpop.f32.mrb[0].mxu0
  %v7053 = vadd.f32 %v6764, %v7052
  %v7054 = vpop.f32.mrb[0].mxu0
  %v7055 = vpop.f32.mrb[0].mxu0
  %v7056 = vadd.f32 %v6767, %v7055
  %v7057 = vpop.f32.mrb[0].mxu0
  %7058 = vmatprep.mubr.bf16.mxu0 %v2825
  %7059 = vmatmul.mubr.bf16.gmra.mrb[0].mxu0 %v2824
  %v7060 = vpop.f32.mrb[0].mxu0
  %v7061 = vadd.f32 %v6772, %v7060
  %v7062 = vpop.f32.mrb[0].mxu0
  %v7063 = vpop.f32.mrb[0].mxu0
  %v7064 = vadd.f32 %v6775, %v7063
  %v7065 = vpop.f32.mrb[0].mxu0
  %7066 = vmatprep.mubr.bf16.mxu0 %v2843
  %7067 = vmatmul.mubr.bf16.gmra.mrb[0].mxu0 %v2842
  %v7068 = vpop.f32.mrb[0].mxu0
  %v7069 = vadd.f32 %v6780, %v7068
  %v7070 = vpop.f32.mrb[0].mxu0
  %v7071 = vpop.f32.mrb[0].mxu0
  %v7072 = vadd.f32 %v6783, %v7071
  %v7073 = vpop.f32.mrb[0].mxu0
  %7074 = vmatprep.mubr.bf16.mxu0 %v2861
  %7075 = vmatmul.mubr.bf16.gmra.mrb[0].mxu0 %v2860
  %v7076 = vpop.f32.mrb[0].mxu0
  %v7077 = vadd.f32 %v6788, %v7076
  %v7078 = vpop.f32.mrb[0].mxu0
  %v7079 = vpop.f32.mrb[0].mxu0
  %v7080 = vadd.f32 %v6791, %v7079
  %v7081 = vpop.f32.mrb[0].mxu0
  %7082 = vmatprep.mubr.bf16.mxu0 %v2879
  %7083 = vmatmul.mubr.bf16.gmra.mrb[0].mxu0 %v2878
  %v7084 = vpop.f32.mrb[0].mxu0
  %v7085 = vadd.f32 %v6796, %v7084
  %v7086 = vpop.f32.mrb[0].mxu0
  %v7087 = vpop.f32.mrb[0].mxu0
  %v7088 = vadd.f32 %v6799, %v7087
  %v7089 = vpop.f32.mrb[0].mxu0
  %7090 = vmatprep.mubr.bf16.mxu0 %v2897
  %7091 = vmatmul.mubr.bf16.gmra.mrb[0].mxu0 %v2896
  %v7092 = vpop.f32.mrb[0].mxu0
  %v7093 = vadd.f32 %v6804, %v7092
  %v7094 = vpop.f32.mrb[0].mxu0
  %v7095 = vpop.f32.mrb[0].mxu0
  %v7096 = vadd.f32 %v6807, %v7095
  %v7097 = vpop.f32.mrb[0].mxu0
  %7098 = vmatprep.mubr.bf16.mxu0 %v2915
  %7099 = vmatmul.mubr.bf16.gmra.mrb[0].mxu0 %v2914
  %v7100 = vpop.f32.mrb[0].mxu0
  %v7101 = vadd.f32 %v6812, %v7100
  %v7102 = vpop.f32.mrb[0].mxu0
  %v7103 = vpop.f32.mrb[0].mxu0
  %v7104 = vadd.f32 %v6815, %v7103
  %v7105 = vpop.f32.mrb[0].mxu0
  %7106 = vmatprep.mubr.bf16.mxu0 %v2933
  %7107 = vmatmul.mubr.bf16.gmra.mrb[0].mxu0 %v2932
  %v7108 = vpop.f32.mrb[0].mxu0
  %v7109 = vadd.f32 %v6820, %v7108
  %v7110 = vpop.f32.mrb[0].mxu0
  %v7111 = vpop.f32.mrb[0].mxu0
  %v7112 = vadd.f32 %v6823, %v7111
  %v7113 = vpop.f32.mrb[0].mxu0
  %7114 = vmatprep.mubr.bf16.mxu0 %v2951
  %7115 = vmatmul.mubr.bf16.gmra.mrb[0].mxu0 %v2950
  %v7116 = vpop.f32.mrb[0].mxu0
  %v7117 = vadd.f32 %v6828, %v7116
  %v7118 = vpop.f32.mrb[0].mxu0
  %v7119 = vpop.f32.mrb[0].mxu0
  %v7120 = vadd.f32 %v6831, %v7119
  %v7121 = vpop.f32.mrb[0].mxu0
  %7122 = vmatprep.mubr.bf16.mxu0 %v2969
  %7123 = vmatmul.mubr.bf16.gmra.mrb[0].mxu0 %v2968
  %v7124 = vpop.f32.mrb[0].mxu0
  %v7125 = vadd.f32 %v6836, %v7124
  %v7126 = vpop.f32.mrb[0].mxu0
  %v7127 = vpop.f32.mrb[0].mxu0
  %v7128 = vadd.f32 %v6839, %v7127
  %v7129 = vpop.f32.mrb[0].mxu0
  %7130 = vmatprep.mubr.bf16.mxu0 %v2987
  %7131 = vmatmul.mubr.bf16.gmra.mrb[0].mxu0 %v2986
  %v7132 = vpop.f32.mrb[0].mxu0
  %v7133 = vadd.f32 %v6844, %v7132
  %v7134 = vpop.f32.mrb[0].mxu0
  %v7135 = vpop.f32.mrb[0].mxu0
  %v7136 = vadd.f32 %v6847, %v7135
  %v7137 = vpop.f32.mrb[0].mxu0
  %7138 = vmatprep.mubr.bf16.mxu0 %v3005
  %7139 = vmatmul.mubr.bf16.gmra.mrb[0].mxu0 %v3004
  %v7140 = vpop.f32.mrb[0].mxu0
  %v7141 = vadd.f32 %v6852, %v7140
  %v7142 = vpop.f32.mrb[0].mxu0
  %v7143 = vpop.f32.mrb[0].mxu0
  %v7144 = vadd.f32 %v6855, %v7143
  %v7145 = vpop.f32.mrb[0].mxu0
  %7146 = vmatprep.mubr.bf16.mxu0 %v3023
  %7147 = vmatmul.mubr.bf16.gmra.mrb[0].mxu0 %v3022
  %v7148 = vpop.f32.mrb[0].mxu0
  %v7149 = vadd.f32 %v6860, %v7148
  %v7150 = vpop.f32.mrb[0].mxu0
  %v7151 = vpop.f32.mrb[0].mxu0
  %v7152 = vadd.f32 %v6863, %v7151
  %v7153 = vpop.f32.mrb[0].mxu0
  %7154 = vmatprep.mubr.bf16.mxu0 %v3041
  %7155 = vmatmul.mubr.bf16.gmra.mrb[0].mxu0 %v3040
  %v7156 = vpop.f32.mrb[0].mxu0
  %v7157 = vadd.f32 %v6868, %v7156
  %v7158 = vpop.f32.mrb[0].mxu0
  %v7159 = vpop.f32.mrb[0].mxu0
  %v7160 = vadd.f32 %v6871, %v7159
  %v7161 = vpop.f32.mrb[0].mxu0
  %7162 = vmatprep.mubr.bf16.mxu0 %v3059
  %7163 = vmatmul.mubr.bf16.gmra.mrb[0].mxu0 %v3058
  %v7164 = vpop.f32.mrb[0].mxu0
  %v7165 = vadd.f32 %v6876, %v7164
  %v7166 = vpop.f32.mrb[0].mxu0
  %v7167 = vpop.f32.mrb[0].mxu0
  %v7168 = vadd.f32 %v6879, %v7167
  %v7169 = vpop.f32.mrb[0].mxu0
  %7170 = vmatprep.mubr.bf16.mxu0 %v3077
  %7171 = vmatmul.mubr.bf16.gmra.mrb[0].mxu0 %v3076
  %v7172 = vpop.f32.mrb[0].mxu0
  %v7173 = vadd.f32 %v6884, %v7172
  %v7174 = vpop.f32.mrb[0].mxu0
  %v7175 = vpop.f32.mrb[0].mxu0
  %v7176 = vadd.f32 %v6887, %v7175
  %v7177 = vpop.f32.mrb[0].mxu0
  %7178 = vmatprep.mubr.bf16.mxu0 %v3095
  %7179 = vmatmul.mubr.bf16.gmra.mrb[0].mxu0 %v3094
  %v7180 = vpop.f32.mrb[0].mxu0
  %v7181 = vadd.f32 %v6892, %v7180
  %v7182 = vpop.f32.mrb[0].mxu0
  %v7183 = vpop.f32.mrb[0].mxu0
  %v7184 = vadd.f32 %v6895, %v7183
  %v7185 = vpop.f32.mrb[0].mxu0
  %7186 = vmatprep.mubr.bf16.mxu0 %v3113
  %7187 = vmatmul.mubr.bf16.gmra.mrb[0].mxu0 %v3112
  %v7188 = vpop.f32.mrb[0].mxu0
  %v7189 = vadd.f32 %v6900, %v7188
  %v7190 = vpop.f32.mrb[0].mxu0
  %v7191 = vpop.f32.mrb[0].mxu0
  %v7192 = vadd.f32 %v6903, %v7191
  %v7193 = vpop.f32.mrb[0].mxu0
  %7194 = vmatprep.mubr.bf16.mxu0 %v3131
  %7195 = vmatmul.mubr.bf16.gmra.mrb[0].mxu0 %v3130
  %v7196 = vpop.f32.mrb[0].mxu0
  %v7197 = vadd.f32 %v6908, %v7196
  %v7198 = vpop.f32.mrb[0].mxu0
  %v7199 = vpop.f32.mrb[0].mxu0
  %v7200 = vadd.f32 %v6911, %v7199
  %v7201 = vpop.f32.mrb[0].mxu0
  %7202 = vmatprep.mubr.bf16.mxu0 %v3149
  %7203 = vmatmul.mubr.bf16.gmra.mrb[0].mxu0 %v3148
  %v7204 = vpop.f32.mrb[0].mxu0
  %v7205 = vadd.f32 %v6916, %v7204
  %v7206 = vpop.f32.mrb[0].mxu0
  %v7207 = vpop.f32.mrb[0].mxu0
  %v7208 = vadd.f32 %v6919, %v7207
  %v7209 = vpop.f32.mrb[0].mxu0
  %7210 = vmatprep.mubr.bf16.mxu0 %v3167
  %7211 = vmatmul.mubr.bf16.gmra.mrb[0].mxu0 %v3166
  %v7212 = vpop.f32.mrb[0].mxu0
  %v7213 = vadd.f32 %v6924, %v7212
  %v7214 = vpop.f32.mrb[0].mxu0
  %v7215 = vpop.f32.mrb[0].mxu0
  %v7216 = vadd.f32 %v6927, %v7215
  %v7217 = vpop.f32.mrb[0].mxu0
  %7218 = vmatprep.mubr.bf16.mxu0 %v3185
  %7219 = vmatmul.mubr.bf16.gmra.mrb[0].mxu0 %v3184
  %v7220 = vpop.f32.mrb[0].mxu0
  %v7221 = vadd.f32 %v6932, %v7220
  %v7222 = vpop.f32.mrb[0].mxu0
  %v7223 = vpop.f32.mrb[0].mxu0
  %v7224 = vadd.f32 %v6935, %v7223
  %v7225 = vpop.f32.mrb[0].mxu0
  %7226 = vdwg.mxu0
  %v7227 = vld [vmem:[%s1] sm:$0xff]
  %v7228 = vld [vmem:[%s1 + $0x8] sm:$0xff]
  %v7229 = vld [vmem:[%s1 + $0x10] sm:$0xff]
  %v7230 = vld [vmem:[%s1 + $0x18] sm:$0xff]
  %v7231 = vld [vmem:[%s1 + $0x20] sm:$0xff]
  %v7232 = vld [vmem:[%s1 + $0x28] sm:$0xff]
  %v7233 = vld [vmem:[%s1 + $0x30] sm:$0xff]
  %v7234 = vld [vmem:[%s1 + $0x38] sm:$0xff]
  %v7235 = vld [vmem:[%s1 + $0x40] sm:$0xff]
  %v7236 = vld [vmem:[%s1 + $0x48] sm:$0xff]
  %v7237 = vld [vmem:[%s1 + $0x50] sm:$0xff]
  %v7238 = vld [vmem:[%s1 + $0x58] sm:$0xff]
  %v7239 = vld [vmem:[%s1 + $0x60] sm:$0xff]
  %v7240 = vld [vmem:[%s1 + $0x68] sm:$0xff]
  %v7241 = vld [vmem:[%s1 + $0x70] sm:$0xff]
  %v7242 = vld [vmem:[%s1 + $0x78] sm:$0xff]
  %v7243 = vld [vmem:[%s1 + $0x80] sm:$0xff]
  %v7244 = vld [vmem:[%s1 + $0x88] sm:$0xff]
  %v7245 = vld [vmem:[%s1 + $0x90] sm:$0xff]
  %v7246 = vld [vmem:[%s1 + $0x98] sm:$0xff]
  %v7247 = vld [vmem:[%s1 + $0xa0] sm:$0xff]
  %v7248 = vld [vmem:[%s1 + $0xa8] sm:$0xff]
  %v7249 = vld [vmem:[%s1 + $0xb0] sm:$0xff]
  %v7250 = vld [vmem:[%s1 + $0xb8] sm:$0xff]
  %v7251 = vld [vmem:[%s1 + $0xc0] sm:$0xff]
  %v7252 = vld [vmem:[%s1 + $0xc8] sm:$0xff]
  %v7253 = vld [vmem:[%s1 + $0xd0] sm:$0xff]
  %v7254 = vld [vmem:[%s1 + $0xd8] sm:$0xff]
  %v7255 = vld [vmem:[%s1 + $0xe0] sm:$0xff]
  %v7256 = vld [vmem:[%s1 + $0xe8] sm:$0xff]
  %v7257 = vld [vmem:[%s1 + $0xf0] sm:$0xff]
  %v7258 = vld [vmem:[%s1 + $0xf8] sm:$0xff]
  %v7259 = vld [vmem:[%s1 + $0x100] sm:$0xff]
  %v7260 = vld [vmem:[%s1 + $0x108] sm:$0xff]
  %v7261 = vld [vmem:[%s1 + $0x110] sm:$0xff]
  %v7262 = vld [vmem:[%s1 + $0x118] sm:$0xff]
  %v7263 = vld [vmem:[%s1 + $0x120] sm:$0xff]
  %v7264 = vld [vmem:[%s1 + $0x128] sm:$0xff]
  %v7265 = vld [vmem:[%s1 + $0x130] sm:$0xff]
  %v7266 = vld [vmem:[%s1 + $0x138] sm:$0xff]
  %v7267 = vld [vmem:[%s1 + $0x140] sm:$0xff]
  %v7268 = vld [vmem:[%s1 + $0x148] sm:$0xff]
  %v7269 = vld [vmem:[%s1 + $0x150] sm:$0xff]
  %v7270 = vld [vmem:[%s1 + $0x158] sm:$0xff]
  %v7271 = vld [vmem:[%s1 + $0x160] sm:$0xff]
  %v7272 = vld [vmem:[%s1 + $0x168] sm:$0xff]
  %v7273 = vld [vmem:[%s1 + $0x170] sm:$0xff]
  %v7274 = vld [vmem:[%s1 + $0x178] sm:$0xff]
  %v7275 = vld [vmem:[%s1 + $0x180] sm:$0xff]
  %v7276 = vld [vmem:[%s1 + $0x188] sm:$0xff]
  %v7277 = vld [vmem:[%s1 + $0x190] sm:$0xff]
  %v7278 = vld [vmem:[%s1 + $0x198] sm:$0xff]
  %v7279 = vld [vmem:[%s1 + $0x1a0] sm:$0xff]
  %v7280 = vld [vmem:[%s1 + $0x1a8] sm:$0xff]
  %v7281 = vld [vmem:[%s1 + $0x1b0] sm:$0xff]
  %v7282 = vld [vmem:[%s1 + $0x1b8] sm:$0xff]
  %v7283 = vld [vmem:[%s1 + $0x1c0] sm:$0xff]
  %v7284 = vld [vmem:[%s1 + $0x1c8] sm:$0xff]
  %v7285 = vld [vmem:[%s1 + $0x1d0] sm:$0xff]
  %v7286 = vld [vmem:[%s1 + $0x1d8] sm:$0xff]
  %v7287 = vld [vmem:[%s1 + $0x1e0] sm:$0xff]
  %v7288 = vld [vmem:[%s1 + $0x1e8] sm:$0xff]
  %v7289 = vld [vmem:[%s1 + $0x1f0] sm:$0xff]
  %v7290 = vld [vmem:[%s1 + $0x1f8] sm:$0xff]
  %v7291 = vmax.f32 %v7227, 0.0
  %v7292 = vmax.f32 %v7228, 0.0
  %v7293 = vmax.f32 %v7229, 0.0
  %v7294 = vmax.f32 %v7230, 0.0
  %v7295 = vmax.f32 %v7231, 0.0
  %v7296 = vmax.f32 %v7232, 0.0
  %v7297 = vmax.f32 %v7233, 0.0
  %v7298 = vmax.f32 %v7234, 0.0
  %v7299 = vmax.f32 %v7235, 0.0
  %v7300 = vmax.f32 %v7236, 0.0
  %v7301 = vmax.f32 %v7237, 0.0
  %v7302 = vmax.f32 %v7238, 0.0
  %v7303 = vmax.f32 %v7239, 0.0
  %v7304 = vmax.f32 %v7240, 0.0
  %v7305 = vmax.f32 %v7241, 0.0
  %v7306 = vmax.f32 %v7242, 0.0
  %v7307 = vmax.f32 %v7243, 0.0
  %v7308 = vmax.f32 %v7244, 0.0
  %v7309 = vmax.f32 %v7245, 0.0
  %v7310 = vmax.f32 %v7246, 0.0
  %v7311 = vmax.f32 %v7247, 0.0
  %v7312 = vmax.f32 %v7248, 0.0
  %v7313 = vmax.f32 %v7249, 0.0
  %v7314 = vmax.f32 %v7250, 0.0
  %v7315 = vmax.f32 %v7251, 0.0
  %v7316 = vmax.f32 %v7252, 0.0
  %v7317 = vmax.f32 %v7253, 0.0
  %v7318 = vmax.f32 %v7254, 0.0
  %v7319 = vmax.f32 %v7255, 0.0
  %v7320 = vmax.f32 %v7256, 0.0
  %v7321 = vmax.f32 %v7257, 0.0
  %v7322 = vmax.f32 %v7258, 0.0
  %v7323 = vmax.f32 %v7259, 0.0
  %v7324 = vmax.f32 %v7260, 0.0
  %v7325 = vmax.f32 %v7261, 0.0
  %v7326 = vmax.f32 %v7262, 0.0
  %v7327 = vmax.f32 %v7263, 0.0
  %v7328 = vmax.f32 %v7264, 0.0
  %v7329 = vmax.f32 %v7265, 0.0
  %v7330 = vmax.f32 %v7266, 0.0
  %v7331 = vmax.f32 %v7267, 0.0
  %v7332 = vmax.f32 %v7268, 0.0
  %v7333 = vmax.f32 %v7269, 0.0
  %v7334 = vmax.f32 %v7270, 0.0
  %v7335 = vmax.f32 %v7271, 0.0
  %v7336 = vmax.f32 %v7272, 0.0
  %v7337 = vmax.f32 %v7273, 0.0
  %v7338 = vmax.f32 %v7274, 0.0
  %v7339 = vmax.f32 %v7275, 0.0
  %v7340 = vmax.f32 %v7276, 0.0
  %v7341 = vmax.f32 %v7277, 0.0
  %v7342 = vmax.f32 %v7278, 0.0
  %v7343 = vmax.f32 %v7279, 0.0
  %v7344 = vmax.f32 %v7280, 0.0
  %v7345 = vmax.f32 %v7281, 0.0
  %v7346 = vmax.f32 %v7282, 0.0
  %v7347 = vmax.f32 %v7283, 0.0
  %v7348 = vmax.f32 %v7284, 0.0
  %v7349 = vmax.f32 %v7285, 0.0
  %v7350 = vmax.f32 %v7286, 0.0
  %v7351 = vmax.f32 %v7287, 0.0
  %v7352 = vmax.f32 %v7288, 0.0
  %v7353 = vmax.f32 %v7289, 0.0
  %v7354 = vmax.f32 %v7290, 0.0
  %v7355 = vmin.f32 %v7291, 1.0
  %v7356 = vmin.f32 %v7292, 1.0
  %v7357 = vmin.f32 %v7293, 1.0
  %v7358 = vmin.f32 %v7294, 1.0
  %v7359 = vmin.f32 %v7295, 1.0
  %v7360 = vmin.f32 %v7296, 1.0
  %v7361 = vmin.f32 %v7297, 1.0
  %v7362 = vmin.f32 %v7298, 1.0
  %v7363 = vmin.f32 %v7299, 1.0
  %v7364 = vmin.f32 %v7300, 1.0
  %v7365 = vmin.f32 %v7301, 1.0
  %v7366 = vmin.f32 %v7302, 1.0
  %v7367 = vmin.f32 %v7303, 1.0
  %v7368 = vmin.f32 %v7304, 1.0
  %v7369 = vmin.f32 %v7305, 1.0
  %v7370 = vmin.f32 %v7306, 1.0
  %v7371 = vmin.f32 %v7307, 1.0
  %v7372 = vmin.f32 %v7308, 1.0
  %v7373 = vmin.f32 %v7309, 1.0
  %v7374 = vmin.f32 %v7310, 1.0
  %v7375 = vmin.f32 %v7311, 1.0
  %v7376 = vmin.f32 %v7312, 1.0
  %v7377 = vmin.f32 %v7313, 1.0
  %v7378 = vmin.f32 %v7314, 1.0
  %v7379 = vmin.f32 %v7315, 1.0
  %v7380 = vmin.f32 %v7316, 1.0
  %v7381 = vmin.f32 %v7317, 1.0
  %v7382 = vmin.f32 %v7318, 1.0
  %v7383 = vmin.f32 %v7319, 1.0
  %v7384 = vmin.f32 %v7320, 1.0
  %v7385 = vmin.f32 %v7321, 1.0
  %v7386 = vmin.f32 %v7322, 1.0
  %v7387 = vmin.f32 %v7323, 1.0
  %v7388 = vmin.f32 %v7324, 1.0
  %v7389 = vmin.f32 %v7325, 1.0
  %v7390 = vmin.f32 %v7326, 1.0
  %v7391 = vmin.f32 %v7327, 1.0
  %v7392 = vmin.f32 %v7328, 1.0
  %v7393 = vmin.f32 %v7329, 1.0
  %v7394 = vmin.f32 %v7330, 1.0
  %v7395 = vmin.f32 %v7331, 1.0
  %v7396 = vmin.f32 %v7332, 1.0
  %v7397 = vmin.f32 %v7333, 1.0
  %v7398 = vmin.f32 %v7334, 1.0
  %v7399 = vmin.f32 %v7335, 1.0
  %v7400 = vmin.f32 %v7336, 1.0
  %v7401 = vmin.f32 %v7337, 1.0
  %v7402 = vmin.f32 %v7338, 1.0
  %v7403 = vmin.f32 %v7339, 1.0
  %v7404 = vmin.f32 %v7340, 1.0
  %v7405 = vmin.f32 %v7341, 1.0
  %v7406 = vmin.f32 %v7342, 1.0
  %v7407 = vmin.f32 %v7343, 1.0
  %v7408 = vmin.f32 %v7344, 1.0
  %v7409 = vmin.f32 %v7345, 1.0
  %v7410 = vmin.f32 %v7346, 1.0
  %v7411 = vmin.f32 %v7347, 1.0
  %v7412 = vmin.f32 %v7348, 1.0
  %v7413 = vmin.f32 %v7349, 1.0
  %v7414 = vmin.f32 %v7350, 1.0
  %v7415 = vmin.f32 %v7351, 1.0
  %v7416 = vmin.f32 %v7352, 1.0
  %v7417 = vmin.f32 %v7353, 1.0
  %v7418 = vmin.f32 %v7354, 1.0
  %v7419 = vadd.f32 %v7227, 1e-08
  %v7420 = vadd.f32 %v7228, 1e-08
  %v7421 = vadd.f32 %v7229, 1e-08
  %v7422 = vadd.f32 %v7230, 1e-08
  %v7423 = vadd.f32 %v7231, 1e-08
  %v7424 = vadd.f32 %v7232, 1e-08
  %v7425 = vadd.f32 %v7233, 1e-08
  %v7426 = vadd.f32 %v7234, 1e-08
  %v7427 = vadd.f32 %v7235, 1e-08
  %v7428 = vadd.f32 %v7236, 1e-08
  %v7429 = vadd.f32 %v7237, 1e-08
  %v7430 = vadd.f32 %v7238, 1e-08
  %v7431 = vadd.f32 %v7239, 1e-08
  %v7432 = vadd.f32 %v7240, 1e-08
  %v7433 = vadd.f32 %v7241, 1e-08
  %v7434 = vadd.f32 %v7242, 1e-08
  %v7435 = vadd.f32 %v7243, 1e-08
  %v7436 = vadd.f32 %v7244, 1e-08
  %v7437 = vadd.f32 %v7245, 1e-08
  %v7438 = vadd.f32 %v7246, 1e-08
  %v7439 = vadd.f32 %v7247, 1e-08
  %v7440 = vadd.f32 %v7248, 1e-08
  %v7441 = vadd.f32 %v7249, 1e-08
  %v7442 = vadd.f32 %v7250, 1e-08
  %v7443 = vadd.f32 %v7251, 1e-08
  %v7444 = vadd.f32 %v7252, 1e-08
  %v7445 = vadd.f32 %v7253, 1e-08
  %v7446 = vadd.f32 %v7254, 1e-08
  %v7447 = vadd.f32 %v7255, 1e-08
  %v7448 = vadd.f32 %v7256, 1e-08
  %v7449 = vadd.f32 %v7257, 1e-08
  %v7450 = vadd.f32 %v7258, 1e-08
  %v7451 = vadd.f32 %v7259, 1e-08
  %v7452 = vadd.f32 %v7260, 1e-08
  %v7453 = vadd.f32 %v7261, 1e-08
  %v7454 = vadd.f32 %v7262, 1e-08
  %v7455 = vadd.f32 %v7263, 1e-08
  %v7456 = vadd.f32 %v7264, 1e-08
  %v7457 = vadd.f32 %v7265, 1e-08
  %v7458 = vadd.f32 %v7266, 1e-08
  %v7459 = vadd.f32 %v7267, 1e-08
  %v7460 = vadd.f32 %v7268, 1e-08
  %v7461 = vadd.f32 %v7269, 1e-08
  %v7462 = vadd.f32 %v7270, 1e-08
  %v7463 = vadd.f32 %v7271, 1e-08
  %v7464 = vadd.f32 %v7272, 1e-08
  %v7465 = vadd.f32 %v7273, 1e-08
  %v7466 = vadd.f32 %v7274, 1e-08
  %v7467 = vadd.f32 %v7275, 1e-08
  %v7468 = vadd.f32 %v7276, 1e-08
  %v7469 = vadd.f32 %v7277, 1e-08
  %v7470 = vadd.f32 %v7278, 1e-08
  %v7471 = vadd.f32 %v7279, 1e-08
  %v7472 = vadd.f32 %v7280, 1e-08
  %v7473 = vadd.f32 %v7281, 1e-08
  %v7474 = vadd.f32 %v7282, 1e-08
  %v7475 = vadd.f32 %v7283, 1e-08
  %v7476 = vadd.f32 %v7284, 1e-08
  %v7477 = vadd.f32 %v7285, 1e-08
  %v7478 = vadd.f32 %v7286, 1e-08
  %v7479 = vadd.f32 %v7287, 1e-08
  %v7480 = vadd.f32 %v7288, 1e-08
  %v7481 = vadd.f32 %v7289, 1e-08
  %v7482 = vadd.f32 %v7290, 1e-08
  %v7483 = vrcp.pop %v7419
  %v7484 = vrcp.pop %v7420
  %v7485 = vrcp.pop %v7421
  %v7486 = vrcp.pop %v7422
  %v7487 = vrcp.pop %v7423
  %v7488 = vrcp.pop %v7424
  %v7489 = vrcp.pop %v7425
  %v7490 = vrcp.pop %v7426
  %v7491 = vrcp.pop %v7427
  %v7492 = vrcp.pop %v7428
  %v7493 = vrcp.pop %v7429
  %v7494 = vrcp.pop %v7430
  %v7495 = vrcp.pop %v7431
  %v7496 = vrcp.pop %v7432
  %v7497 = vrcp.pop %v7433
  %v7498 = vrcp.pop %v7434
  %v7499 = vrcp.pop %v7435
  %v7500 = vrcp.pop %v7436
  %v7501 = vrcp.pop %v7437
  %v7502 = vrcp.pop %v7438
  %v7503 = vrcp.pop %v7439
  %v7504 = vrcp.pop %v7440
  %v7505 = vrcp.pop %v7441
  %v7506 = vrcp.pop %v7442
  %v7507 = vrcp.pop %v7443
  %v7508 = vrcp.pop %v7444
  %v7509 = vrcp.pop %v7445
  %v7510 = vrcp.pop %v7446
  %v7511 = vrcp.pop %v7447
  %v7512 = vrcp.pop %v7448
  %v7513 = vrcp.pop %v7449
  %v7514 = vrcp.pop %v7450
  %v7515 = vrcp.pop %v7451
  %v7516 = vrcp.pop %v7452
  %v7517 = vrcp.pop %v7453
  %v7518 = vrcp.pop %v7454
  %v7519 = vrcp.pop %v7455
  %v7520 = vrcp.pop %v7456
  %v7521 = vrcp.pop %v7457
  %v7522 = vrcp.pop %v7458
  %v7523 = vrcp.pop %v7459
  %v7524 = vrcp.pop %v7460
  %v7525 = vrcp.pop %v7461
  %v7526 = vrcp.pop %v7462
  %v7527 = vrcp.pop %v7463
  %v7528 = vrcp.pop %v7464
  %v7529 = vrcp.pop %v7465
  %v7530 = vrcp.pop %v7466
  %v7531 = vrcp.pop %v7467
  %v7532 = vrcp.pop %v7468
  %v7533 = vrcp.pop %v7469
  %v7534 = vrcp.pop %v7470
  %v7535 = vrcp.pop %v7471
  %v7536 = vrcp.pop %v7472
  %v7537 = vrcp.pop %v7473
  %v7538 = vrcp.pop %v7474
  %v7539 = vrcp.pop %v7475
  %v7540 = vrcp.pop %v7476
  %v7541 = vrcp.pop %v7477
  %v7542 = vrcp.pop %v7478
  %v7543 = vrcp.pop %v7479
  %v7544 = vrcp.pop %v7480
  %v7545 = vrcp.pop %v7481
  %v7546 = vrcp.pop %v7482
  %v7547 = vmul.f32 %v7483, 9.0
  %v7548 = vmul.f32 %v7484, 9.0
  %v7549 = vmul.f32 %v7485, 9.0
  %v7550 = vmul.f32 %v7486, 9.0
  %v7551 = vmul.f32 %v7487, 9.0
  %v7552 = vmul.f32 %v7488, 9.0
  %v7553 = vmul.f32 %v7489, 9.0
  %v7554 = vmul.f32 %v7490, 9.0
  %v7555 = vmul.f32 %v7491, 9.0
  %v7556 = vmul.f32 %v7492, 9.0
  %v7557 = vmul.f32 %v7493, 9.0
  %v7558 = vmul.f32 %v7494, 9.0
  %v7559 = vmul.f32 %v7495, 9.0
  %v7560 = vmul.f32 %v7496, 9.0
  %v7561 = vmul.f32 %v7497, 9.0
  %v7562 = vmul.f32 %v7498, 9.0
  %v7563 = vmul.f32 %v7499, 9.0
  %v7564 = vmul.f32 %v7500, 9.0
  %v7565 = vmul.f32 %v7501, 9.0
  %v7566 = vmul.f32 %v7502, 9.0
  %v7567 = vmul.f32 %v7503, 9.0
  %v7568 = vmul.f32 %v7504, 9.0
  %v7569 = vmul.f32 %v7505, 9.0
  %v7570 = vmul.f32 %v7506, 9.0
  %v7571 = vmul.f32 %v7507, 9.0
  %v7572 = vmul.f32 %v7508, 9.0
  %v7573 = vmul.f32 %v7509, 9.0
  %v7574 = vmul.f32 %v7510, 9.0
  %v7575 = vmul.f32 %v7511, 9.0
  %v7576 = vmul.f32 %v7512, 9.0
  %v7577 = vmul.f32 %v7513, 9.0
  %v7578 = vmul.f32 %v7514, 9.0
  %v7579 = vmul.f32 %v7515, 9.0
  %v7580 = vmul.f32 %v7516, 9.0
  %v7581 = vmul.f32 %v7517, 9.0
  %v7582 = vmul.f32 %v7518, 9.0
  %v7583 = vmul.f32 %v7519, 9.0
  %v7584 = vmul.f32 %v7520, 9.0
  %v7585 = vmul.f32 %v7521, 9.0
  %v7586 = vmul.f32 %v7522, 9.0
  %v7587 = vmul.f32 %v7523, 9.0
  %v7588 = vmul.f32 %v7524, 9.0
  %v7589 = vmul.f32 %v7525, 9.0
  %v7590 = vmul.f32 %v7526, 9.0
  %v7591 = vmul.f32 %v7527, 9.0
  %v7592 = vmul.f32 %v7528, 9.0
  %v7593 = vmul.f32 %v7529, 9.0
  %v7594 = vmul.f32 %v7530, 9.0
  %v7595 = vmul.f32 %v7531, 9.0
  %v7596 = vmul.f32 %v7532, 9.0
  %v7597 = vmul.f32 %v7533, 9.0
  %v7598 = vmul.f32 %v7534, 9.0
  %v7599 = vmul.f32 %v7535, 9.0
  %v7600 = vmul.f32 %v7536, 9.0
  %v7601 = vmul.f32 %v7537, 9.0
  %v7602 = vmul.f32 %v7538, 9.0
  %v7603 = vmul.f32 %v7539, 9.0
  %v7604 = vmul.f32 %v7540, 9.0
  %v7605 = vmul.f32 %v7541, 9.0
  %v7606 = vmul.f32 %v7542, 9.0
  %v7607 = vmul.f32 %v7543, 9.0
  %v7608 = vmul.f32 %v7544, 9.0
  %v7609 = vmul.f32 %v7545, 9.0
  %v7610 = vmul.f32 %v7546, 9.0
  %v7611 = vmul.f32 %v7547, %v7355
  %v7612 = vmul.f32 %v7548, %v7356
  %v7613 = vmul.f32 %v7549, %v7357
  %v7614 = vmul.f32 %v7550, %v7358
  %v7615 = vmul.f32 %v7551, %v7359
  %v7616 = vmul.f32 %v7552, %v7360
  %v7617 = vmul.f32 %v7553, %v7361
  %v7618 = vmul.f32 %v7554, %v7362
  %v7619 = vmul.f32 %v7555, %v7363
  %v7620 = vmul.f32 %v7556, %v7364
  %v7621 = vmul.f32 %v7557, %v7365
  %v7622 = vmul.f32 %v7558, %v7366
  %v7623 = vmul.f32 %v7559, %v7367
  %v7624 = vmul.f32 %v7560, %v7368
  %v7625 = vmul.f32 %v7561, %v7369
  %v7626 = vmul.f32 %v7562, %v7370
  %v7627 = vmul.f32 %v7563, %v7371
  %v7628 = vmul.f32 %v7564, %v7372
  %v7629 = vmul.f32 %v7565, %v7373
  %v7630 = vmul.f32 %v7566, %v7374
  %v7631 = vmul.f32 %v7567, %v7375
  %v7632 = vmul.f32 %v7568, %v7376
  %v7633 = vmul.f32 %v7569, %v7377
  %v7634 = vmul.f32 %v7570, %v7378
  %v7635 = vmul.f32 %v7571, %v7379
  %v7636 = vmul.f32 %v7572, %v7380
  %v7637 = vmul.f32 %v7573, %v7381
  %v7638 = vmul.f32 %v7574, %v7382
  %v7639 = vmul.f32 %v7575, %v7383
  %v7640 = vmul.f32 %v7576, %v7384
  %v7641 = vmul.f32 %v7577, %v7385
  %v7642 = vmul.f32 %v7578, %v7386
  %v7643 = vmul.f32 %v7579, %v7387
  %v7644 = vmul.f32 %v7580, %v7388
  %v7645 = vmul.f32 %v7581, %v7389
  %v7646 = vmul.f32 %v7582, %v7390
  %v7647 = vmul.f32 %v7583, %v7391
  %v7648 = vmul.f32 %v7584, %v7392
  %v7649 = vmul.f32 %v7585, %v7393
  %v7650 = vmul.f32 %v7586, %v7394
  %v7651 = vmul.f32 %v7587, %v7395
  %v7652 = vmul.f32 %v7588, %v7396
  %v7653 = vmul.f32 %v7589, %v7397
  %v7654 = vmul.f32 %v7590, %v7398
  %v7655 = vmul.f32 %v7591, %v7399
  %v7656 = vmul.f32 %v7592, %v7400
  %v7657 = vmul.f32 %v7593, %v7401
  %v7658 = vmul.f32 %v7594, %v7402
  %v7659 = vmul.f32 %v7595, %v7403
  %v7660 = vmul.f32 %v7596, %v7404
  %v7661 = vmul.f32 %v7597, %v7405
  %v7662 = vmul.f32 %v7598, %v7406
  %v7663 = vmul.f32 %v7599, %v7407
  %v7664 = vmul.f32 %v7600, %v7408
  %v7665 = vmul.f32 %v7601, %v7409
  %v7666 = vmul.f32 %v7602, %v7410
  %v7667 = vmul.f32 %v7603, %v7411
  %v7668 = vmul.f32 %v7604, %v7412
  %v7669 = vmul.f32 %v7605, %v7413
  %v7670 = vmul.f32 %v7606, %v7414
  %v7671 = vmul.f32 %v7607, %v7415
  %v7672 = vmul.f32 %v7608, %v7416
  %v7673 = vmul.f32 %v7609, %v7417
  %v7674 = vmul.f32 %v7610, %v7418
  %7676 = vset.pattern.permute.xlu0 0
  %7677 = vperm.xlu0 %7676, %v7611
  %v7678 = vpop.permute.xlu0 %7677
  %7681 = vset.pattern.permute.xlu0 0
  %7682 = vperm.xlu0 %7681, %v7612
  %v7683 = vpop.permute.xlu0 %7682
  %7686 = vset.pattern.permute.xlu0 0
  %7687 = vperm.xlu0 %7686, %v7613
  %v7688 = vpop.permute.xlu0 %7687
  %7691 = vset.pattern.permute.xlu0 0
  %7692 = vperm.xlu0 %7691, %v7614
  %v7693 = vpop.permute.xlu0 %7692
  %7696 = vset.pattern.permute.xlu0 0
  %7697 = vperm.xlu0 %7696, %v7615
  %v7698 = vpop.permute.xlu0 %7697
  %7701 = vset.pattern.permute.xlu0 0
  %7702 = vperm.xlu0 %7701, %v7616
  %v7703 = vpop.permute.xlu0 %7702
  %7706 = vset.pattern.permute.xlu0 0
  %7707 = vperm.xlu0 %7706, %v7617
  %v7708 = vpop.permute.xlu0 %7707
  %7711 = vset.pattern.permute.xlu0 0
  %7712 = vperm.xlu0 %7711, %v7618
  %v7713 = vpop.permute.xlu0 %7712
  %7716 = vset.pattern.permute.xlu0 0
  %7717 = vperm.xlu0 %7716, %v7619
  %v7718 = vpop.permute.xlu0 %7717
  %7721 = vset.pattern.permute.xlu0 0
  %7722 = vperm.xlu0 %7721, %v7620
  %v7723 = vpop.permute.xlu0 %7722
  %7726 = vset.pattern.permute.xlu0 0
  %7727 = vperm.xlu0 %7726, %v7621
  %v7728 = vpop.permute.xlu0 %7727
  %7731 = vset.pattern.permute.xlu0 0
  %7732 = vperm.xlu0 %7731, %v7622
  %v7733 = vpop.permute.xlu0 %7732
  %7736 = vset.pattern.permute.xlu0 0
  %7737 = vperm.xlu0 %7736, %v7623
  %v7738 = vpop.permute.xlu0 %7737
  %7741 = vset.pattern.permute.xlu0 0
  %7742 = vperm.xlu0 %7741, %v7624
  %v7743 = vpop.permute.xlu0 %7742
  %7746 = vset.pattern.permute.xlu0 0
  %7747 = vperm.xlu0 %7746, %v7625
  %v7748 = vpop.permute.xlu0 %7747
  %7751 = vset.pattern.permute.xlu0 0
  %7752 = vperm.xlu0 %7751, %v7626
  %v7753 = vpop.permute.xlu0 %7752
  %7756 = vset.pattern.permute.xlu0 0
  %7757 = vperm.xlu0 %7756, %v7627
  %v7758 = vpop.permute.xlu0 %7757
  %7761 = vset.pattern.permute.xlu0 0
  %7762 = vperm.xlu0 %7761, %v7628
  %v7763 = vpop.permute.xlu0 %7762
  %7766 = vset.pattern.permute.xlu0 0
  %7767 = vperm.xlu0 %7766, %v7629
  %v7768 = vpop.permute.xlu0 %7767
  %7771 = vset.pattern.permute.xlu0 0
  %7772 = vperm.xlu0 %7771, %v7630
  %v7773 = vpop.permute.xlu0 %7772
  %7776 = vset.pattern.permute.xlu0 0
  %7777 = vperm.xlu0 %7776, %v7631
  %v7778 = vpop.permute.xlu0 %7777
  %7781 = vset.pattern.permute.xlu0 0
  %7782 = vperm.xlu0 %7781, %v7632
  %v7783 = vpop.permute.xlu0 %7782
  %7786 = vset.pattern.permute.xlu0 0
  %7787 = vperm.xlu0 %7786, %v7633
  %v7788 = vpop.permute.xlu0 %7787
  %7791 = vset.pattern.permute.xlu0 0
  %7792 = vperm.xlu0 %7791, %v7634
  %v7793 = vpop.permute.xlu0 %7792
  %7796 = vset.pattern.permute.xlu0 0
  %7797 = vperm.xlu0 %7796, %v7635
  %v7798 = vpop.permute.xlu0 %7797
  %7801 = vset.pattern.permute.xlu0 0
  %7802 = vperm.xlu0 %7801, %v7636
  %v7803 = vpop.permute.xlu0 %7802
  %7806 = vset.pattern.permute.xlu0 0
  %7807 = vperm.xlu0 %7806, %v7637
  %v7808 = vpop.permute.xlu0 %7807
  %7811 = vset.pattern.permute.xlu0 0
  %7812 = vperm.xlu0 %7811, %v7638
  %v7813 = vpop.permute.xlu0 %7812
  %7816 = vset.pattern.permute.xlu0 0
  %7817 = vperm.xlu0 %7816, %v7639
  %v7818 = vpop.permute.xlu0 %7817
  %7821 = vset.pattern.permute.xlu0 0
  %7822 = vperm.xlu0 %7821, %v7640
  %v7823 = vpop.permute.xlu0 %7822
  %7826 = vset.pattern.permute.xlu0 0
  %7827 = vperm.xlu0 %7826, %v7641
  %v7828 = vpop.permute.xlu0 %7827
  %7831 = vset.pattern.permute.xlu0 0
  %7832 = vperm.xlu0 %7831, %v7642
  %v7833 = vpop.permute.xlu0 %7832
  %7836 = vset.pattern.permute.xlu0 0
  %7837 = vperm.xlu0 %7836, %v7643
  %v7838 = vpop.permute.xlu0 %7837
  %7841 = vset.pattern.permute.xlu0 0
  %7842 = vperm.xlu0 %7841, %v7644
  %v7843 = vpop.permute.xlu0 %7842
  %7846 = vset.pattern.permute.xlu0 0
  %7847 = vperm.xlu0 %7846, %v7645
  %v7848 = vpop.permute.xlu0 %7847
  %7851 = vset.pattern.permute.xlu0 0
  %7852 = vperm.xlu0 %7851, %v7646
  %v7853 = vpop.permute.xlu0 %7852
  %7856 = vset.pattern.permute.xlu0 0
  %7857 = vperm.xlu0 %7856, %v7647
  %v7858 = vpop.permute.xlu0 %7857
  %7861 = vset.pattern.permute.xlu0 0
  %7862 = vperm.xlu0 %7861, %v7648
  %v7863 = vpop.permute.xlu0 %7862
  %7866 = vset.pattern.permute.xlu0 0
  %7867 = vperm.xlu0 %7866, %v7649
  %v7868 = vpop.permute.xlu0 %7867
  %7871 = vset.pattern.permute.xlu0 0
  %7872 = vperm.xlu0 %7871, %v7650
  %v7873 = vpop.permute.xlu0 %7872
  %7876 = vset.pattern.permute.xlu0 0
  %7877 = vperm.xlu0 %7876, %v7651
  %v7878 = vpop.permute.xlu0 %7877
  %7881 = vset.pattern.permute.xlu0 0
  %7882 = vperm.xlu0 %7881, %v7652
  %v7883 = vpop.permute.xlu0 %7882
  %7886 = vset.pattern.permute.xlu0 0
  %7887 = vperm.xlu0 %7886, %v7653
  %v7888 = vpop.permute.xlu0 %7887
  %7891 = vset.pattern.permute.xlu0 0
  %7892 = vperm.xlu0 %7891, %v7654
  %v7893 = vpop.permute.xlu0 %7892
  %7896 = vset.pattern.permute.xlu0 0
  %7897 = vperm.xlu0 %7896, %v7655
  %v7898 = vpop.permute.xlu0 %7897
  %7901 = vset.pattern.permute.xlu0 0
  %7902 = vperm.xlu0 %7901, %v7656
  %v7903 = vpop.permute.xlu0 %7902
  %7906 = vset.pattern.permute.xlu0 0
  %7907 = vperm.xlu0 %7906, %v7657
  %v7908 = vpop.permute.xlu0 %7907
  %7911 = vset.pattern.permute.xlu0 0
  %7912 = vperm.xlu0 %7911, %v7658
  %v7913 = vpop.permute.xlu0 %7912
  %7916 = vset.pattern.permute.xlu0 0
  %7917 = vperm.xlu0 %7916, %v7659
  %v7918 = vpop.permute.xlu0 %7917
  %7921 = vset.pattern.permute.xlu0 0
  %7922 = vperm.xlu0 %7921, %v7660
  %v7923 = vpop.permute.xlu0 %7922
  %7926 = vset.pattern.permute.xlu0 0
  %7927 = vperm.xlu0 %7926, %v7661
  %v7928 = vpop.permute.xlu0 %7927
  %7931 = vset.pattern.permute.xlu0 0
  %7932 = vperm.xlu0 %7931, %v7662
  %v7933 = vpop.permute.xlu0 %7932
  %7936 = vset.pattern.permute.xlu0 0
  %7937 = vperm.xlu0 %7936, %v7663
  %v7938 = vpop.permute.xlu0 %7937
  %7941 = vset.pattern.permute.xlu0 0
  %7942 = vperm.xlu0 %7941, %v7664
  %v7943 = vpop.permute.xlu0 %7942
  %7946 = vset.pattern.permute.xlu0 0
  %7947 = vperm.xlu0 %7946, %v7665
  %v7948 = vpop.permute.xlu0 %7947
  %7951 = vset.pattern.permute.xlu0 0
  %7952 = vperm.xlu0 %7951, %v7666
  %v7953 = vpop.permute.xlu0 %7952
  %7956 = vset.pattern.permute.xlu0 0
  %7957 = vperm.xlu0 %7956, %v7667
  %v7958 = vpop.permute.xlu0 %7957
  %7961 = vset.pattern.permute.xlu0 0
  %7962 = vperm.xlu0 %7961, %v7668
  %v7963 = vpop.permute.xlu0 %7962
  %7966 = vset.pattern.permute.xlu0 0
  %7967 = vperm.xlu0 %7966, %v7669
  %v7968 = vpop.permute.xlu0 %7967
  %7971 = vset.pattern.permute.xlu0 0
  %7972 = vperm.xlu0 %7971, %v7670
  %v7973 = vpop.permute.xlu0 %7972
  %7976 = vset.pattern.permute.xlu0 0
  %7977 = vperm.xlu0 %7976, %v7671
  %v7978 = vpop.permute.xlu0 %7977
  %7981 = vset.pattern.permute.xlu0 0
  %7982 = vperm.xlu0 %7981, %v7672
  %v7983 = vpop.permute.xlu0 %7982
  %7986 = vset.pattern.permute.xlu0 0
  %7987 = vperm.xlu0 %7986, %v7673
  %v7988 = vpop.permute.xlu0 %7987
  %7991 = vset.pattern.permute.xlu0 0
  %7992 = vperm.xlu0 %7991, %v7674
  %v7993 = vpop.permute.xlu0 %7992
  %v7995 = vmul.f32 %v6973, %v7678
  %v7996 = vmul.f32 %v6976, %v7683
  %v7997 = vmul.f32 %v6981, %v7688
  %v7998 = vmul.f32 %v6984, %v7693
  %v7999 = vmul.f32 %v6989, %v7698
  %v8000 = vmul.f32 %v6992, %v7703
  %v8001 = vmul.f32 %v6997, %v7708
  %v8002 = vmul.f32 %v7000, %v7713
  %v8003 = vmul.f32 %v7005, %v7718
  %v8004 = vmul.f32 %v7008, %v7723
  %v8005 = vmul.f32 %v7013, %v7728
  %v8006 = vmul.f32 %v7016, %v7733
  %v8007 = vmul.f32 %v7021, %v7738
  %v8008 = vmul.f32 %v7024, %v7743
  %v8009 = vmul.f32 %v7029, %v7748
  %v8010 = vmul.f32 %v7032, %v7753
  %v8011 = vmul.f32 %v7037, %v7758
  %v8012 = vmul.f32 %v7040, %v7763
  %v8013 = vmul.f32 %v7045, %v7768
  %v8014 = vmul.f32 %v7048, %v7773
  %v8015 = vmul.f32 %v7053, %v7778
  %v8016 = vmul.f32 %v7056, %v7783
  %v8017 = vmul.f32 %v7061, %v7788
  %v8018 = vmul.f32 %v7064, %v7793
  %v8019 = vmul.f32 %v7069, %v7798
  %v8020 = vmul.f32 %v7072, %v7803
  %v8021 = vmul.f32 %v7077, %v7808
  %v8022 = vmul.f32 %v7080, %v7813
  %v8023 = vmul.f32 %v7085, %v7818
  %v8024 = vmul.f32 %v7088, %v7823
  %v8025 = vmul.f32 %v7093, %v7828
  %v8026 = vmul.f32 %v7096, %v7833
  %v8027 = vmul.f32 %v7101, %v7838
  %v8028 = vmul.f32 %v7104, %v7843
  %v8029 = vmul.f32 %v7109, %v7848
  %v8030 = vmul.f32 %v7112, %v7853
  %v8031 = vmul.f32 %v7117, %v7858
  %v8032 = vmul.f32 %v7120, %v7863
  %v8033 = vmul.f32 %v7125, %v7868
  %v8034 = vmul.f32 %v7128, %v7873
  %v8035 = vmul.f32 %v7133, %v7878
  %v8036 = vmul.f32 %v7136, %v7883
  %v8037 = vmul.f32 %v7141, %v7888
  %v8038 = vmul.f32 %v7144, %v7893
  %v8039 = vmul.f32 %v7149, %v7898
  %v8040 = vmul.f32 %v7152, %v7903
  %v8041 = vmul.f32 %v7157, %v7908
  %v8042 = vmul.f32 %v7160, %v7913
  %v8043 = vmul.f32 %v7165, %v7918
  %v8044 = vmul.f32 %v7168, %v7923
  %v8045 = vmul.f32 %v7173, %v7928
  %v8046 = vmul.f32 %v7176, %v7933
  %v8047 = vmul.f32 %v7181, %v7938
  %v8048 = vmul.f32 %v7184, %v7943
  %v8049 = vmul.f32 %v7189, %v7948
  %v8050 = vmul.f32 %v7192, %v7953
  %v8051 = vmul.f32 %v7197, %v7958
  %v8052 = vmul.f32 %v7200, %v7963
  %v8053 = vmul.f32 %v7205, %v7968
  %v8054 = vmul.f32 %v7208, %v7973
  %v8055 = vmul.f32 %v7213, %v7978
  %v8056 = vmul.f32 %v7216, %v7983
  %v8057 = vmul.f32 %v7221, %v7988
  %v8058 = vmul.f32 %v7224, %v7993
  %v8059 = vld [vmem:[%s3] sm:$0x1]
  %v8061 = vlaneseq
  %v8062 = vshrl.u32 %v8061, 7
  %v8063 = vsub.s32 0, %v8062
  %v8064 = vrot.slane %v8059, %v8063
  %v8066 = vadd.f32 %v7995, %v8064
  %v8067 = vadd.f32 %v7996, %v8064
  %v8068 = vadd.f32 %v7997, %v8064
  %v8069 = vadd.f32 %v7998, %v8064
  %v8070 = vadd.f32 %v7999, %v8064
  %v8071 = vadd.f32 %v8000, %v8064
  %v8072 = vadd.f32 %v8001, %v8064
  %v8073 = vadd.f32 %v8002, %v8064
  %v8074 = vadd.f32 %v8003, %v8064
  %v8075 = vadd.f32 %v8004, %v8064
  %v8076 = vadd.f32 %v8005, %v8064
  %v8077 = vadd.f32 %v8006, %v8064
  %v8078 = vadd.f32 %v8007, %v8064
  %v8079 = vadd.f32 %v8008, %v8064
  %v8080 = vadd.f32 %v8009, %v8064
  %v8081 = vadd.f32 %v8010, %v8064
  %v8082 = vadd.f32 %v8011, %v8064
  %v8083 = vadd.f32 %v8012, %v8064
  %v8084 = vadd.f32 %v8013, %v8064
  %v8085 = vadd.f32 %v8014, %v8064
  %v8086 = vadd.f32 %v8015, %v8064
  %v8087 = vadd.f32 %v8016, %v8064
  %v8088 = vadd.f32 %v8017, %v8064
  %v8089 = vadd.f32 %v8018, %v8064
  %v8090 = vadd.f32 %v8019, %v8064
  %v8091 = vadd.f32 %v8020, %v8064
  %v8092 = vadd.f32 %v8021, %v8064
  %v8093 = vadd.f32 %v8022, %v8064
  %v8094 = vadd.f32 %v8023, %v8064
  %v8095 = vadd.f32 %v8024, %v8064
  %v8096 = vadd.f32 %v8025, %v8064
  %v8097 = vadd.f32 %v8026, %v8064
  %v8098 = vadd.f32 %v8027, %v8064
  %v8099 = vadd.f32 %v8028, %v8064
  %v8100 = vadd.f32 %v8029, %v8064
  %v8101 = vadd.f32 %v8030, %v8064
  %v8102 = vadd.f32 %v8031, %v8064
  %v8103 = vadd.f32 %v8032, %v8064
  %v8104 = vadd.f32 %v8033, %v8064
  %v8105 = vadd.f32 %v8034, %v8064
  %v8106 = vadd.f32 %v8035, %v8064
  %v8107 = vadd.f32 %v8036, %v8064
  %v8108 = vadd.f32 %v8037, %v8064
  %v8109 = vadd.f32 %v8038, %v8064
  %v8110 = vadd.f32 %v8039, %v8064
  %v8111 = vadd.f32 %v8040, %v8064
  %v8112 = vadd.f32 %v8041, %v8064
  %v8113 = vadd.f32 %v8042, %v8064
  %v8114 = vadd.f32 %v8043, %v8064
  %v8115 = vadd.f32 %v8044, %v8064
  %v8116 = vadd.f32 %v8045, %v8064
  %v8117 = vadd.f32 %v8046, %v8064
  %v8118 = vadd.f32 %v8047, %v8064
  %v8119 = vadd.f32 %v8048, %v8064
  %v8120 = vadd.f32 %v8049, %v8064
  %v8121 = vadd.f32 %v8050, %v8064
  %v8122 = vadd.f32 %v8051, %v8064
  %v8123 = vadd.f32 %v8052, %v8064
  %v8124 = vadd.f32 %v8053, %v8064
  %v8125 = vadd.f32 %v8054, %v8064
  %v8126 = vadd.f32 %v8055, %v8064
  %v8127 = vadd.f32 %v8056, %v8064
  %v8128 = vadd.f32 %v8057, %v8064
  %v8129 = vadd.f32 %v8058, %v8064
  %8131 = vset.pattern.permute.xlu0 0
  %8132 = vperm.xlu0 %8131, %v7355
  %v8133 = vpop.permute.xlu0 %8132
  %8136 = vset.pattern.permute.xlu0 0
  %8137 = vperm.xlu0 %8136, %v7356
  %v8138 = vpop.permute.xlu0 %8137
  %8141 = vset.pattern.permute.xlu0 0
  %8142 = vperm.xlu0 %8141, %v7357
  %v8143 = vpop.permute.xlu0 %8142
  %8146 = vset.pattern.permute.xlu0 0
  %8147 = vperm.xlu0 %8146, %v7358
  %v8148 = vpop.permute.xlu0 %8147
  %8151 = vset.pattern.permute.xlu0 0
  %8152 = vperm.xlu0 %8151, %v7359
  %v8153 = vpop.permute.xlu0 %8152
  %8156 = vset.pattern.permute.xlu0 0
  %8157 = vperm.xlu0 %8156, %v7360
  %v8158 = vpop.permute.xlu0 %8157
  %8161 = vset.pattern.permute.xlu0 0
  %8162 = vperm.xlu0 %8161, %v7361
  %v8163 = vpop.permute.xlu0 %8162
  %8166 = vset.pattern.permute.xlu0 0
  %8167 = vperm.xlu0 %8166, %v7362
  %v8168 = vpop.permute.xlu0 %8167
  %8171 = vset.pattern.permute.xlu0 0
  %8172 = vperm.xlu0 %8171, %v7363
  %v8173 = vpop.permute.xlu0 %8172
  %8176 = vset.pattern.permute.xlu0 0
  %8177 = vperm.xlu0 %8176, %v7364
  %v8178 = vpop.permute.xlu0 %8177
  %8181 = vset.pattern.permute.xlu0 0
  %8182 = vperm.xlu0 %8181, %v7365
  %v8183 = vpop.permute.xlu0 %8182
  %8186 = vset.pattern.permute.xlu0 0
  %8187 = vperm.xlu0 %8186, %v7366
  %v8188 = vpop.permute.xlu0 %8187
  %8191 = vset.pattern.permute.xlu0 0
  %8192 = vperm.xlu0 %8191, %v7367
  %v8193 = vpop.permute.xlu0 %8192
  %8196 = vset.pattern.permute.xlu0 0
  %8197 = vperm.xlu0 %8196, %v7368
  %v8198 = vpop.permute.xlu0 %8197
  %8201 = vset.pattern.permute.xlu0 0
  %8202 = vperm.xlu0 %8201, %v7369
  %v8203 = vpop.permute.xlu0 %8202
  %8206 = vset.pattern.permute.xlu0 0
  %8207 = vperm.xlu0 %8206, %v7370
  %v8208 = vpop.permute.xlu0 %8207
  %8211 = vset.pattern.permute.xlu0 0
  %8212 = vperm.xlu0 %8211, %v7371
  %v8213 = vpop.permute.xlu0 %8212
  %8216 = vset.pattern.permute.xlu0 0
  %8217 = vperm.xlu0 %8216, %v7372
  %v8218 = vpop.permute.xlu0 %8217
  %8221 = vset.pattern.permute.xlu0 0
  %8222 = vperm.xlu0 %8221, %v7373
  %v8223 = vpop.permute.xlu0 %8222
  %8226 = vset.pattern.permute.xlu0 0
  %8227 = vperm.xlu0 %8226, %v7374
  %v8228 = vpop.permute.xlu0 %8227
  %8231 = vset.pattern.permute.xlu0 0
  %8232 = vperm.xlu0 %8231, %v7375
  %v8233 = vpop.permute.xlu0 %8232
  %8236 = vset.pattern.permute.xlu0 0
  %8237 = vperm.xlu0 %8236, %v7376
  %v8238 = vpop.permute.xlu0 %8237
  %8241 = vset.pattern.permute.xlu0 0
  %8242 = vperm.xlu0 %8241, %v7377
  %v8243 = vpop.permute.xlu0 %8242
  %8246 = vset.pattern.permute.xlu0 0
  %8247 = vperm.xlu0 %8246, %v7378
  %v8248 = vpop.permute.xlu0 %8247
  %8251 = vset.pattern.permute.xlu0 0
  %8252 = vperm.xlu0 %8251, %v7379
  %v8253 = vpop.permute.xlu0 %8252
  %8256 = vset.pattern.permute.xlu0 0
  %8257 = vperm.xlu0 %8256, %v7380
  %v8258 = vpop.permute.xlu0 %8257
  %8261 = vset.pattern.permute.xlu0 0
  %8262 = vperm.xlu0 %8261, %v7381
  %v8263 = vpop.permute.xlu0 %8262
  %8266 = vset.pattern.permute.xlu0 0
  %8267 = vperm.xlu0 %8266, %v7382
  %v8268 = vpop.permute.xlu0 %8267
  %8271 = vset.pattern.permute.xlu0 0
  %8272 = vperm.xlu0 %8271, %v7383
  %v8273 = vpop.permute.xlu0 %8272
  %8276 = vset.pattern.permute.xlu0 0
  %8277 = vperm.xlu0 %8276, %v7384
  %v8278 = vpop.permute.xlu0 %8277
  %8281 = vset.pattern.permute.xlu0 0
  %8282 = vperm.xlu0 %8281, %v7385
  %v8283 = vpop.permute.xlu0 %8282
  %8286 = vset.pattern.permute.xlu0 0
  %8287 = vperm.xlu0 %8286, %v7386
  %v8288 = vpop.permute.xlu0 %8287
  %8291 = vset.pattern.permute.xlu0 0
  %8292 = vperm.xlu0 %8291, %v7387
  %v8293 = vpop.permute.xlu0 %8292
  %8296 = vset.pattern.permute.xlu0 0
  %8297 = vperm.xlu0 %8296, %v7388
  %v8298 = vpop.permute.xlu0 %8297
  %8301 = vset.pattern.permute.xlu0 0
  %8302 = vperm.xlu0 %8301, %v7389
  %v8303 = vpop.permute.xlu0 %8302
  %8306 = vset.pattern.permute.xlu0 0
  %8307 = vperm.xlu0 %8306, %v7390
  %v8308 = vpop.permute.xlu0 %8307
  %8311 = vset.pattern.permute.xlu0 0
  %8312 = vperm.xlu0 %8311, %v7391
  %v8313 = vpop.permute.xlu0 %8312
  %8316 = vset.pattern.permute.xlu0 0
  %8317 = vperm.xlu0 %8316, %v7392
  %v8318 = vpop.permute.xlu0 %8317
  %8321 = vset.pattern.permute.xlu0 0
  %8322 = vperm.xlu0 %8321, %v7393
  %v8323 = vpop.permute.xlu0 %8322
  %8326 = vset.pattern.permute.xlu0 0
  %8327 = vperm.xlu0 %8326, %v7394
  %v8328 = vpop.permute.xlu0 %8327
  %8331 = vset.pattern.permute.xlu0 0
  %8332 = vperm.xlu0 %8331, %v7395
  %v8333 = vpop.permute.xlu0 %8332
  %8336 = vset.pattern.permute.xlu0 0
  %8337 = vperm.xlu0 %8336, %v7396
  %v8338 = vpop.permute.xlu0 %8337
  %8341 = vset.pattern.permute.xlu0 0
  %8342 = vperm.xlu0 %8341, %v7397
  %v8343 = vpop.permute.xlu0 %8342
  %8346 = vset.pattern.permute.xlu0 0
  %8347 = vperm.xlu0 %8346, %v7398
  %v8348 = vpop.permute.xlu0 %8347
  %8351 = vset.pattern.permute.xlu0 0
  %8352 = vperm.xlu0 %8351, %v7399
  %v8353 = vpop.permute.xlu0 %8352
  %8356 = vset.pattern.permute.xlu0 0
  %8357 = vperm.xlu0 %8356, %v7400
  %v8358 = vpop.permute.xlu0 %8357
  %8361 = vset.pattern.permute.xlu0 0
  %8362 = vperm.xlu0 %8361, %v7401
  %v8363 = vpop.permute.xlu0 %8362
  %8366 = vset.pattern.permute.xlu0 0
  %8367 = vperm.xlu0 %8366, %v7402
  %v8368 = vpop.permute.xlu0 %8367
  %8371 = vset.pattern.permute.xlu0 0
  %8372 = vperm.xlu0 %8371, %v7403
  %v8373 = vpop.permute.xlu0 %8372
  %8376 = vset.pattern.permute.xlu0 0
  %8377 = vperm.xlu0 %8376, %v7404
  %v8378 = vpop.permute.xlu0 %8377
  %8381 = vset.pattern.permute.xlu0 0
  %8382 = vperm.xlu0 %8381, %v7405
  %v8383 = vpop.permute.xlu0 %8382
  %8386 = vset.pattern.permute.xlu0 0
  %8387 = vperm.xlu0 %8386, %v7406
  %v8388 = vpop.permute.xlu0 %8387
  %8391 = vset.pattern.permute.xlu0 0
  %8392 = vperm.xlu0 %8391, %v7407
  %v8393 = vpop.permute.xlu0 %8392
  %8396 = vset.pattern.permute.xlu0 0
  %8397 = vperm.xlu0 %8396, %v7408
  %v8398 = vpop.permute.xlu0 %8397
  %8401 = vset.pattern.permute.xlu0 0
  %8402 = vperm.xlu0 %8401, %v7409
  %v8403 = vpop.permute.xlu0 %8402
  %8406 = vset.pattern.permute.xlu0 0
  %8407 = vperm.xlu0 %8406, %v7410
  %v8408 = vpop.permute.xlu0 %8407
  %8411 = vset.pattern.permute.xlu0 0
  %8412 = vperm.xlu0 %8411, %v7411
  %v8413 = vpop.permute.xlu0 %8412
  %8416 = vset.pattern.permute.xlu0 0
  %8417 = vperm.xlu0 %8416, %v7412
  %v8418 = vpop.permute.xlu0 %8417
  %8421 = vset.pattern.permute.xlu0 0
  %8422 = vperm.xlu0 %8421, %v7413
  %v8423 = vpop.permute.xlu0 %8422
  %8426 = vset.pattern.permute.xlu0 0
  %8427 = vperm.xlu0 %8426, %v7414
  %v8428 = vpop.permute.xlu0 %8427
  %8431 = vset.pattern.permute.xlu0 0
  %8432 = vperm.xlu0 %8431, %v7415
  %v8433 = vpop.permute.xlu0 %8432
  %8436 = vset.pattern.permute.xlu0 0
  %8437 = vperm.xlu0 %8436, %v7416
  %v8438 = vpop.permute.xlu0 %8437
  %8441 = vset.pattern.permute.xlu0 0
  %8442 = vperm.xlu0 %8441, %v7417
  %v8443 = vpop.permute.xlu0 %8442
  %8446 = vset.pattern.permute.xlu0 0
  %8447 = vperm.xlu0 %8446, %v7418
  %v8448 = vpop.permute.xlu0 %8447
  %v8450 = vmul.f32 %v8066, %v8133
  %v8451 = vmul.f32 %v8067, %v8138
  %v8452 = vmul.f32 %v8068, %v8143
  %v8453 = vmul.f32 %v8069, %v8148
  %v8454 = vmul.f32 %v8070, %v8153
  %v8455 = vmul.f32 %v8071, %v8158
  %v8456 = vmul.f32 %v8072, %v8163
  %v8457 = vmul.f32 %v8073, %v8168
  %v8458 = vmul.f32 %v8074, %v8173
  %v8459 = vmul.f32 %v8075, %v8178
  %v8460 = vmul.f32 %v8076, %v8183
  %v8461 = vmul.f32 %v8077, %v8188
  %v8462 = vmul.f32 %v8078, %v8193
  %v8463 = vmul.f32 %v8079, %v8198
  %v8464 = vmul.f32 %v8080, %v8203
  %v8465 = vmul.f32 %v8081, %v8208
  %v8466 = vmul.f32 %v8082, %v8213
  %v8467 = vmul.f32 %v8083, %v8218
  %v8468 = vmul.f32 %v8084, %v8223
  %v8469 = vmul.f32 %v8085, %v8228
  %v8470 = vmul.f32 %v8086, %v8233
  %v8471 = vmul.f32 %v8087, %v8238
  %v8472 = vmul.f32 %v8088, %v8243
  %v8473 = vmul.f32 %v8089, %v8248
  %v8474 = vmul.f32 %v8090, %v8253
  %v8475 = vmul.f32 %v8091, %v8258
  %v8476 = vmul.f32 %v8092, %v8263
  %v8477 = vmul.f32 %v8093, %v8268
  %v8478 = vmul.f32 %v8094, %v8273
  %v8479 = vmul.f32 %v8095, %v8278
  %v8480 = vmul.f32 %v8096, %v8283
  %v8481 = vmul.f32 %v8097, %v8288
  %v8482 = vmul.f32 %v8098, %v8293
  %v8483 = vmul.f32 %v8099, %v8298
  %v8484 = vmul.f32 %v8100, %v8303
  %v8485 = vmul.f32 %v8101, %v8308
  %v8486 = vmul.f32 %v8102, %v8313
  %v8487 = vmul.f32 %v8103, %v8318
  %v8488 = vmul.f32 %v8104, %v8323
  %v8489 = vmul.f32 %v8105, %v8328
  %v8490 = vmul.f32 %v8106, %v8333
  %v8491 = vmul.f32 %v8107, %v8338
  %v8492 = vmul.f32 %v8108, %v8343
  %v8493 = vmul.f32 %v8109, %v8348
  %v8494 = vmul.f32 %v8110, %v8353
  %v8495 = vmul.f32 %v8111, %v8358
  %v8496 = vmul.f32 %v8112, %v8363
  %v8497 = vmul.f32 %v8113, %v8368
  %v8498 = vmul.f32 %v8114, %v8373
  %v8499 = vmul.f32 %v8115, %v8378
  %v8500 = vmul.f32 %v8116, %v8383
  %v8501 = vmul.f32 %v8117, %v8388
  %v8502 = vmul.f32 %v8118, %v8393
  %v8503 = vmul.f32 %v8119, %v8398
  %v8504 = vmul.f32 %v8120, %v8403
  %v8505 = vmul.f32 %v8121, %v8408
  %v8506 = vmul.f32 %v8122, %v8413
  %v8507 = vmul.f32 %v8123, %v8418
  %v8508 = vmul.f32 %v8124, %v8423
  %v8509 = vmul.f32 %v8125, %v8428
  %v8510 = vmul.f32 %v8126, %v8433
  %v8511 = vmul.f32 %v8127, %v8438
  %v8512 = vmul.f32 %v8128, %v8443
  %v8513 = vmul.f32 %v8129, %v8448
  %v8514 = vmax.f32 %v8450, 0.0
  %v8515 = vmax.f32 %v8451, 0.0
  %v8516 = vmax.f32 %v8452, 0.0
  %v8517 = vmax.f32 %v8453, 0.0
  %v8518 = vmax.f32 %v8454, 0.0
  %v8519 = vmax.f32 %v8455, 0.0
  %v8520 = vmax.f32 %v8456, 0.0
  %v8521 = vmax.f32 %v8457, 0.0
  %v8522 = vmax.f32 %v8458, 0.0
  %v8523 = vmax.f32 %v8459, 0.0
  %v8524 = vmax.f32 %v8460, 0.0
  %v8525 = vmax.f32 %v8461, 0.0
  %v8526 = vmax.f32 %v8462, 0.0
  %v8527 = vmax.f32 %v8463, 0.0
  %v8528 = vmax.f32 %v8464, 0.0
  %v8529 = vmax.f32 %v8465, 0.0
  %v8530 = vmax.f32 %v8466, 0.0
  %v8531 = vmax.f32 %v8467, 0.0
  %v8532 = vmax.f32 %v8468, 0.0
  %v8533 = vmax.f32 %v8469, 0.0
  %v8534 = vmax.f32 %v8470, 0.0
  %v8535 = vmax.f32 %v8471, 0.0
  %v8536 = vmax.f32 %v8472, 0.0
  %v8537 = vmax.f32 %v8473, 0.0
  %v8538 = vmax.f32 %v8474, 0.0
  %v8539 = vmax.f32 %v8475, 0.0
  %v8540 = vmax.f32 %v8476, 0.0
  %v8541 = vmax.f32 %v8477, 0.0
  %v8542 = vmax.f32 %v8478, 0.0
  %v8543 = vmax.f32 %v8479, 0.0
  %v8544 = vmax.f32 %v8480, 0.0
  %v8545 = vmax.f32 %v8481, 0.0
  %v8546 = vmax.f32 %v8482, 0.0
  %v8547 = vmax.f32 %v8483, 0.0
  %v8548 = vmax.f32 %v8484, 0.0
  %v8549 = vmax.f32 %v8485, 0.0
  %v8550 = vmax.f32 %v8486, 0.0
  %v8551 = vmax.f32 %v8487, 0.0
  %v8552 = vmax.f32 %v8488, 0.0
  %v8553 = vmax.f32 %v8489, 0.0
  %v8554 = vmax.f32 %v8490, 0.0
  %v8555 = vmax.f32 %v8491, 0.0
  %v8556 = vmax.f32 %v8492, 0.0
  %v8557 = vmax.f32 %v8493, 0.0
  %v8558 = vmax.f32 %v8494, 0.0
  %v8559 = vmax.f32 %v8495, 0.0
  %v8560 = vmax.f32 %v8496, 0.0
  %v8561 = vmax.f32 %v8497, 0.0
  %v8562 = vmax.f32 %v8498, 0.0
  %v8563 = vmax.f32 %v8499, 0.0
  %v8564 = vmax.f32 %v8500, 0.0
  %v8565 = vmax.f32 %v8501, 0.0
  %v8566 = vmax.f32 %v8502, 0.0
  %v8567 = vmax.f32 %v8503, 0.0
  %v8568 = vmax.f32 %v8504, 0.0
  %v8569 = vmax.f32 %v8505, 0.0
  %v8570 = vmax.f32 %v8506, 0.0
  %v8571 = vmax.f32 %v8507, 0.0
  %v8572 = vmax.f32 %v8508, 0.0
  %v8573 = vmax.f32 %v8509, 0.0
  %v8574 = vmax.f32 %v8510, 0.0
  %v8575 = vmax.f32 %v8511, 0.0
  %v8576 = vmax.f32 %v8512, 0.0
  %v8577 = vmax.f32 %v8513, 0.0
  %8578 = vst [vmem:[%s4] sm:$0xff] %v8514
  %8579 = vst [vmem:[%s4 + $0x8] sm:$0xff] %v8515
  %8580 = vst [vmem:[%s4 + $0x10] sm:$0xff] %v8516
  %8581 = vst [vmem:[%s4 + $0x18] sm:$0xff] %v8517
  %8582 = vst [vmem:[%s4 + $0x20] sm:$0xff] %v8518
  %8583 = vst [vmem:[%s4 + $0x28] sm:$0xff] %v8519
  %8584 = vst [vmem:[%s4 + $0x30] sm:$0xff] %v8520
  %8585 = vst [vmem:[%s4 + $0x38] sm:$0xff] %v8521
  %8586 = vst [vmem:[%s4 + $0x40] sm:$0xff] %v8522
  %8587 = vst [vmem:[%s4 + $0x48] sm:$0xff] %v8523
  %8588 = vst [vmem:[%s4 + $0x50] sm:$0xff] %v8524
  %8589 = vst [vmem:[%s4 + $0x58] sm:$0xff] %v8525
  %8590 = vst [vmem:[%s4 + $0x60] sm:$0xff] %v8526
  %8591 = vst [vmem:[%s4 + $0x68] sm:$0xff] %v8527
  %8592 = vst [vmem:[%s4 + $0x70] sm:$0xff] %v8528
  %8593 = vst [vmem:[%s4 + $0x78] sm:$0xff] %v8529
  %8594 = vst [vmem:[%s4 + $0x80] sm:$0xff] %v8530
  %8595 = vst [vmem:[%s4 + $0x88] sm:$0xff] %v8531
  %8596 = vst [vmem:[%s4 + $0x90] sm:$0xff] %v8532
  %8597 = vst [vmem:[%s4 + $0x98] sm:$0xff] %v8533
  %8598 = vst [vmem:[%s4 + $0xa0] sm:$0xff] %v8534
  %8599 = vst [vmem:[%s4 + $0xa8] sm:$0xff] %v8535
  %8600 = vst [vmem:[%s4 + $0xb0] sm:$0xff] %v8536
  %8601 = vst [vmem:[%s4 + $0xb8] sm:$0xff] %v8537
  %8602 = vst [vmem:[%s4 + $0xc0] sm:$0xff] %v8538
  %8603 = vst [vmem:[%s4 + $0xc8] sm:$0xff] %v8539
  %8604 = vst [vmem:[%s4 + $0xd0] sm:$0xff] %v8540
  %8605 = vst [vmem:[%s4 + $0xd8] sm:$0xff] %v8541
  %8606 = vst [vmem:[%s4 + $0xe0] sm:$0xff] %v8542
  %8607 = vst [vmem:[%s4 + $0xe8] sm:$0xff] %v8543
  %8608 = vst [vmem:[%s4 + $0xf0] sm:$0xff] %v8544
  %8609 = vst [vmem:[%s4 + $0xf8] sm:$0xff] %v8545
  %8610 = vst [vmem:[%s4 + $0x100] sm:$0xff] %v8546
  %8611 = vst [vmem:[%s4 + $0x108] sm:$0xff] %v8547
  %8612 = vst [vmem:[%s4 + $0x110] sm:$0xff] %v8548
  %8613 = vst [vmem:[%s4 + $0x118] sm:$0xff] %v8549
  %8614 = vst [vmem:[%s4 + $0x120] sm:$0xff] %v8550
  %8615 = vst [vmem:[%s4 + $0x128] sm:$0xff] %v8551
  %8616 = vst [vmem:[%s4 + $0x130] sm:$0xff] %v8552
  %8617 = vst [vmem:[%s4 + $0x138] sm:$0xff] %v8553
  %8618 = vst [vmem:[%s4 + $0x140] sm:$0xff] %v8554
  %8619 = vst [vmem:[%s4 + $0x148] sm:$0xff] %v8555
  %8620 = vst [vmem:[%s4 + $0x150] sm:$0xff] %v8556
  %8621 = vst [vmem:[%s4 + $0x158] sm:$0xff] %v8557
  %8622 = vst [vmem:[%s4 + $0x160] sm:$0xff] %v8558
  %8623 = vst [vmem:[%s4 + $0x168] sm:$0xff] %v8559
  %8624 = vst [vmem:[%s4 + $0x170] sm:$0xff] %v8560
  %8625 = vst [vmem:[%s4 + $0x178] sm:$0xff] %v8561
  %8626 = vst [vmem:[%s4 + $0x180] sm:$0xff] %v8562
  %8627 = vst [vmem:[%s4 + $0x188] sm:$0xff] %v8563
  %8628 = vst [vmem:[%s4 + $0x190] sm:$0xff] %v8564
  %8629 = vst [vmem:[%s4 + $0x198] sm:$0xff] %v8565
  %8630 = vst [vmem:[%s4 + $0x1a0] sm:$0xff] %v8566
  %8631 = vst [vmem:[%s4 + $0x1a8] sm:$0xff] %v8567
  %8632 = vst [vmem:[%s4 + $0x1b0] sm:$0xff] %v8568
  %8633 = vst [vmem:[%s4 + $0x1b8] sm:$0xff] %v8569
  %8634 = vst [vmem:[%s4 + $0x1c0] sm:$0xff] %v8570
  %8635 = vst [vmem:[%s4 + $0x1c8] sm:$0xff] %v8571
  %8636 = vst [vmem:[%s4 + $0x1d0] sm:$0xff] %v8572
  %8637 = vst [vmem:[%s4 + $0x1d8] sm:$0xff] %v8573
  %8638 = vst [vmem:[%s4 + $0x1e0] sm:$0xff] %v8574
  %8639 = vst [vmem:[%s4 + $0x1e8] sm:$0xff] %v8575
  %8640 = vst [vmem:[%s4 + $0x1f0] sm:$0xff] %v8576
  %8641 = vst [vmem:[%s4 + $0x1f8] sm:$0xff] %v8577
  // Predicated region
  $region18: #{upsample_partial_block.2} parent=0 // pred_check
    _
  $region19: #{upsample_partial_block.2} parent=0 // pred_check_branch
    %8643 = sbr.rel (0) target = $region21
  $region20: #{upsample_partial_block.2} parent=0 // pred_region
    _
  $region21: #{upsample_partial_block.2} parent=0 // pred_fallthru
    _
  // Predicated region
  $region22: #{upsample_partial_block.2} parent=0 // pred_check
    _
  $region23: #{upsample_partial_block.2} parent=0 // pred_check_branch
    %8645 = sbr.rel (0) target = $region25
  $region24: #{upsample_partial_block.2} parent=0 // pred_region
    _
  $region25: #{upsample_partial_block.2} parent=0 // pred_fallthru
    _

// kernel: upsample_partial_block.3
$region0: #{upsample_partial_block.3}
  #allocation0 [shape = 'u32[]', space=smem, size = 0x4, offset = 0x4, fixed_abs, tag = 'smem constant byte address 0x4 - core index']
  #allocation1 [shape = 'u32[144,128]{1,0:T(1,128)}', space=vmem, size = 0x12000, scoped, tag = 'internal scratch']
  %s0 = inlined_call_operand.vmem [shape: bf16[512,1152], index: 0, kind: input, shape index: {}]
  %s1 = inlined_call_operand.vmem [shape: f32[512,1], index: 1, kind: input, shape index: {}]
  %s2 = inlined_call_operand.vmem [shape: bf16[1152,128], index: 2, kind: input, shape index: {}]
  %s3 = inlined_call_operand.vmem [shape: f32[1,128], index: 3, kind: input, shape index: {}]
  %s4 = inlined_call_operand.hbm [shape: f32[512,128], index: 4, kind: output, shape index: {}]
  %s5 = sld [smem:[#allocation0]]
  $region26: #{upsample_partial_block.3} parent=0
    _
  %s7 = ssub.s32 1, %s5
  %s8 = scalar_select 0, %s7, %s5
  $region1: #{upsample_partial_block.3} parent=0
    #allocation2 [shape = 'u8[262144]{0}', space=vmem, size = 0x40000, scoped, tag = 'output window, operand 0, single buffered']
    #allocation3 [shape = 's32[1]{0}', space=sflag, size = 0x4, scoped, tag = 'scoped memory for upsample_partial_block.3']
    %9 = vsyncpa [#allocation3], 0
    // Predicated region
    $region2: #{upsample_partial_block.3} parent=1 // pred_check
      _
    $region3: #{upsample_partial_block.3} parent=1 // pred_check_branch
      %11 = sbr.rel (0) target = $region5
    $region4: #{upsample_partial_block.3} parent=1 // pred_region
      _
    $region5: #{upsample_partial_block.3} parent=1 // pred_fallthru
      _
    // Predicated region
    $region6: #{upsample_partial_block.3} parent=1 // pred_check
      _
    $region7: #{upsample_partial_block.3} parent=1 // pred_check_branch
      %13 = sbr.rel (0) target = $region9
    $region8: #{upsample_partial_block.3} parent=1 // pred_region
      _
    $region9: #{upsample_partial_block.3} parent=1 // pred_fallthru
      _
    // Predicated region
    $region10: #{upsample_partial_block.3} parent=1 // pred_check
      _
    $region11: #{upsample_partial_block.3} parent=1 // pred_check_branch
      %15 = sbr.rel (0) target = $region13
    $region12: #{upsample_partial_block.3} parent=1 // pred_region
      _
    $region13: #{upsample_partial_block.3} parent=1 // pred_fallthru
      _
    // Predicated region
    $region14: #{upsample_partial_block.3} parent=1 // pred_check
      _
    $region15: #{upsample_partial_block.3} parent=1 // pred_check_branch
      %17 = sbr.rel (0) target = $region17
    $region16: #{upsample_partial_block.3} parent=1 // pred_region
      _
    $region17: #{upsample_partial_block.3} parent=1 // pred_fallthru
      _
    %v19 = vld [vmem:[%s0] sm:$0xff]
    %v20 = vld [vmem:[%s0 + $0x8] sm:$0xff]
    %v21 = vld [vmem:[%s0 + $0x10] sm:$0xff]
    %v22 = vld [vmem:[%s0 + $0x18] sm:$0xff]
    %v23 = vld [vmem:[%s0 + $0x20] sm:$0xf]
    %v24 = vld [vmem:[%s0 + $0x24] sm:$0xff]
    %v25 = vld [vmem:[%s0 + $0x2c] sm:$0xff]
    %v26 = vld [vmem:[%s0 + $0x34] sm:$0xff]
    %v27 = vld [vmem:[%s0 + $0x3c] sm:$0xff]
    %v28 = vld [vmem:[%s0 + $0x44] sm:$0xf]
    %v29 = vld [vmem:[%s0 + $0x48] sm:$0xff]
    %v30 = vld [vmem:[%s0 + $0x50] sm:$0xff]
    %v31 = vld [vmem:[%s0 + $0x58] sm:$0xff]
    %v32 = vld [vmem:[%s0 + $0x60] sm:$0xff]
    %v33 = vld [vmem:[%s0 + $0x68] sm:$0xf]
    %v34 = vld [vmem:[%s0 + $0x6c] sm:$0xff]
    %v35 = vld [vmem:[%s0 + $0x74] sm:$0xff]
    %v36 = vld [vmem:[%s0 + $0x7c] sm:$0xff]
    %v37 = vld [vmem:[%s0 + $0x84] sm:$0xff]
    %v38 = vld [vmem:[%s0 + $0x8c] sm:$0xf]
    %v39 = vld [vmem:[%s0 + $0x90] sm:$0xff]
    %v40 = vld [vmem:[%s0 + $0x98] sm:$0xff]
    %v41 = vld [vmem:[%s0 + $0xa0] sm:$0xff]
    %v42 = vld [vmem:[%s0 + $0xa8] sm:$0xff]
    %v43 = vld [vmem:[%s0 + $0xb0] sm:$0xf]
    %v44 = vld [vmem:[%s0 + $0xb4] sm:$0xff]
    %v45 = vld [vmem:[%s0 + $0xbc] sm:$0xff]
    %v46 = vld [vmem:[%s0 + $0xc4] sm:$0xff]
    %v47 = vld [vmem:[%s0 + $0xcc] sm:$0xff]
    %v48 = vld [vmem:[%s0 + $0xd4] sm:$0xf]
    %v49 = vld [vmem:[%s0 + $0xd8] sm:$0xff]
    %v50 = vld [vmem:[%s0 + $0xe0] sm:$0xff]
    %v51 = vld [vmem:[%s0 + $0xe8] sm:$0xff]
    %v52 = vld [vmem:[%s0 + $0xf0] sm:$0xff]
    %v53 = vld [vmem:[%s0 + $0xf8] sm:$0xf]
    %v54 = vld [vmem:[%s0 + $0xfc] sm:$0xff]
    %v55 = vld [vmem:[%s0 + $0x104] sm:$0xff]
    %v56 = vld [vmem:[%s0 + $0x10c] sm:$0xff]
    %v57 = vld [vmem:[%s0 + $0x114] sm:$0xff]
    %v58 = vld [vmem:[%s0 + $0x11c] sm:$0xf]
    %v59 = vld [vmem:[%s0 + $0x120] sm:$0xff]
    %v60 = vld [vmem:[%s0 + $0x128] sm:$0xff]
    %v61 = vld [vmem:[%s0 + $0x130] sm:$0xff]
    %v62 = vld [vmem:[%s0 + $0x138] sm:$0xff]
    %v63 = vld [vmem:[%s0 + $0x140] sm:$0xf]
    %v64 = vld [vmem:[%s0 + $0x144] sm:$0xff]
    %v65 = vld [vmem:[%s0 + $0x14c] sm:$0xff]
    %v66 = vld [vmem:[%s0 + $0x154] sm:$0xff]
    %v67 = vld [vmem:[%s0 + $0x15c] sm:$0xff]
    %v68 = vld [vmem:[%s0 + $0x164] sm:$0xf]
    %v69 = vld [vmem:[%s0 + $0x168] sm:$0xff]
    %v70 = vld [vmem:[%s0 + $0x170] sm:$0xff]
    %v71 = vld [vmem:[%s0 + $0x178] sm:$0xff]
    %v72 = vld [vmem:[%s0 + $0x180] sm:$0xff]
    %v73 = vld [vmem:[%s0 + $0x188] sm:$0xf]
    %v74 = vld [vmem:[%s0 + $0x18c] sm:$0xff]
    %v75 = vld [vmem:[%s0 + $0x194] sm:$0xff]
    %v76 = vld [vmem:[%s0 + $0x19c] sm:$0xff]
    %v77 = vld [vmem:[%s0 + $0x1a4] sm:$0xff]
    %v78 = vld [vmem:[%s0 + $0x1ac] sm:$0xf]
    %v79 = vld [vmem:[%s0 + $0x1b0] sm:$0xff]
    %v80 = vld [vmem:[%s0 + $0x1b8] sm:$0xff]
    %v81 = vld [vmem:[%s0 + $0x1c0] sm:$0xff]
    %v82 = vld [vmem:[%s0 + $0x1c8] sm:$0xff]
    %v83 = vld [vmem:[%s0 + $0x1d0] sm:$0xf]
    %v84 = vld [vmem:[%s0 + $0x1d4] sm:$0xff]
    %v85 = vld [vmem:[%s0 + $0x1dc] sm:$0xff]
    %v86 = vld [vmem:[%s0 + $0x1e4] sm:$0xff]
    %v87 = vld [vmem:[%s0 + $0x1ec] sm:$0xff]
    %v88 = vld [vmem:[%s0 + $0x1f4] sm:$0xf]
    %v89 = vld [vmem:[%s0 + $0x1f8] sm:$0xff]
    %v90 = vld [vmem:[%s0 + $0x200] sm:$0xff]
    %v91 = vld [vmem:[%s0 + $0x208] sm:$0xff]
    %v92 = vld [vmem:[%s0 + $0x210] sm:$0xff]
    %v93 = vld [vmem:[%s0 + $0x218] sm:$0xf]
    %v94 = vld [vmem:[%s0 + $0x21c] sm:$0xff]
    %v95 = vld [vmem:[%s0 + $0x224] sm:$0xff]
    %v96 = vld [vmem:[%s0 + $0x22c] sm:$0xff]
    %v97 = vld [vmem:[%s0 + $0x234] sm:$0xff]
    %v98 = vld [vmem:[%s0 + $0x23c] sm:$0xf]
    %v99 = vld [vmem:[%s0 + $0x240] sm:$0xff]
    %v100 = vld [vmem:[%s0 + $0x248] sm:$0xff]
    %v101 = vld [vmem:[%s0 + $0x250] sm:$0xff]
    %v102 = vld [vmem:[%s0 + $0x258] sm:$0xff]
    %v103 = vld [vmem:[%s0 + $0x260] sm:$0xf]
    %v104 = vld [vmem:[%s0 + $0x264] sm:$0xff]
    %v105 = vld [vmem:[%s0 + $0x26c] sm:$0xff]
    %v106 = vld [vmem:[%s0 + $0x274] sm:$0xff]
    %v107 = vld [vmem:[%s0 + $0x27c] sm:$0xff]
    %v108 = vld [vmem:[%s0 + $0x284] sm:$0xf]
    %v109 = vld [vmem:[%s0 + $0x288] sm:$0xff]
    %v110 = vld [vmem:[%s0 + $0x290] sm:$0xff]
    %v111 = vld [vmem:[%s0 + $0x298] sm:$0xff]
    %v112 = vld [vmem:[%s0 + $0x2a0] sm:$0xff]
    %v113 = vld [vmem:[%s0 + $0x2a8] sm:$0xf]
    %v114 = vld [vmem:[%s0 + $0x2ac] sm:$0xff]
    %v115 = vld [vmem:[%s0 + $0x2b4] sm:$0xff]
    %v116 = vld [vmem:[%s0 + $0x2bc] sm:$0xff]
    %v117 = vld [vmem:[%s0 + $0x2c4] sm:$0xff]
    %v118 = vld [vmem:[%s0 + $0x2cc] sm:$0xf]
    %v119 = vld [vmem:[%s0 + $0x2d0] sm:$0xff]
    %v120 = vld [vmem:[%s0 + $0x2d8] sm:$0xff]
    %v121 = vld [vmem:[%s0 + $0x2e0] sm:$0xff]
    %v122 = vld [vmem:[%s0 + $0x2e8] sm:$0xff]
    %v123 = vld [vmem:[%s0 + $0x2f0] sm:$0xf]
    %v124 = vld [vmem:[%s0 + $0x2f4] sm:$0xff]
    %v125 = vld [vmem:[%s0 + $0x2fc] sm:$0xff]
    %v126 = vld [vmem:[%s0 + $0x304] sm:$0xff]
    %v127 = vld [vmem:[%s0 + $0x30c] sm:$0xff]
    %v128 = vld [vmem:[%s0 + $0x314] sm:$0xf]
    %v129 = vld [vmem:[%s0 + $0x318] sm:$0xff]
    %v130 = vld [vmem:[%s0 + $0x320] sm:$0xff]
    %v131 = vld [vmem:[%s0 + $0x328] sm:$0xff]
    %v132 = vld [vmem:[%s0 + $0x330] sm:$0xff]
    %v133 = vld [vmem:[%s0 + $0x338] sm:$0xf]
    %v134 = vld [vmem:[%s0 + $0x33c] sm:$0xff]
    %v135 = vld [vmem:[%s0 + $0x344] sm:$0xff]
    %v136 = vld [vmem:[%s0 + $0x34c] sm:$0xff]
    %v137 = vld [vmem:[%s0 + $0x354] sm:$0xff]
    %v138 = vld [vmem:[%s0 + $0x35c] sm:$0xf]
    %v139 = vld [vmem:[%s0 + $0x360] sm:$0xff]
    %v140 = vld [vmem:[%s0 + $0x368] sm:$0xff]
    %v141 = vld [vmem:[%s0 + $0x370] sm:$0xff]
    %v142 = vld [vmem:[%s0 + $0x378] sm:$0xff]
    %v143 = vld [vmem:[%s0 + $0x380] sm:$0xf]
    %v144 = vld [vmem:[%s0 + $0x384] sm:$0xff]
    %v145 = vld [vmem:[%s0 + $0x38c] sm:$0xff]
    %v146 = vld [vmem:[%s0 + $0x394] sm:$0xff]
    %v147 = vld [vmem:[%s0 + $0x39c] sm:$0xff]
    %v148 = vld [vmem:[%s0 + $0x3a4] sm:$0xf]
    %v149 = vld [vmem:[%s0 + $0x3a8] sm:$0xff]
    %v150 = vld [vmem:[%s0 + $0x3b0] sm:$0xff]
    %v151 = vld [vmem:[%s0 + $0x3b8] sm:$0xff]
    %v152 = vld [vmem:[%s0 + $0x3c0] sm:$0xff]
    %v153 = vld [vmem:[%s0 + $0x3c8] sm:$0xf]
    %v154 = vld [vmem:[%s0 + $0x3cc] sm:$0xff]
    %v155 = vld [vmem:[%s0 + $0x3d4] sm:$0xff]
    %v156 = vld [vmem:[%s0 + $0x3dc] sm:$0xff]
    %v157 = vld [vmem:[%s0 + $0x3e4] sm:$0xff]
    %v158 = vld [vmem:[%s0 + $0x3ec] sm:$0xf]
    %v159 = vld [vmem:[%s0 + $0x3f0] sm:$0xff]
    %v160 = vld [vmem:[%s0 + $0x3f8] sm:$0xff]
    %v161 = vld [vmem:[%s0 + $0x400] sm:$0xff]
    %v162 = vld [vmem:[%s0 + $0x408] sm:$0xff]
    %v163 = vld [vmem:[%s0 + $0x410] sm:$0xf]
    %v164 = vld [vmem:[%s0 + $0x414] sm:$0xff]
    %v165 = vld [vmem:[%s0 + $0x41c] sm:$0xff]
    %v166 = vld [vmem:[%s0 + $0x424] sm:$0xff]
    %v167 = vld [vmem:[%s0 + $0x42c] sm:$0xff]
    %v168 = vld [vmem:[%s0 + $0x434] sm:$0xf]
    %v169 = vld [vmem:[%s0 + $0x438] sm:$0xff]
    %v170 = vld [vmem:[%s0 + $0x440] sm:$0xff]
    %v171 = vld [vmem:[%s0 + $0x448] sm:$0xff]
    %v172 = vld [vmem:[%s0 + $0x450] sm:$0xff]
    %v173 = vld [vmem:[%s0 + $0x458] sm:$0xf]
    %v174 = vld [vmem:[%s0 + $0x45c] sm:$0xff]
    %v175 = vld [vmem:[%s0 + $0x464] sm:$0xff]
    %v176 = vld [vmem:[%s0 + $0x46c] sm:$0xff]
    %v177 = vld [vmem:[%s0 + $0x474] sm:$0xff]
    %v178 = vld [vmem:[%s0 + $0x47c] sm:$0xf]
    %v179 = vld [vmem:[%s0 + $0x480] sm:$0xff]
    %v180 = vld [vmem:[%s0 + $0x488] sm:$0xff]
    %v181 = vld [vmem:[%s0 + $0x490] sm:$0xff]
    %v182 = vld [vmem:[%s0 + $0x498] sm:$0xff]
    %v183 = vld [vmem:[%s0 + $0x4a0] sm:$0xf]
    %v184 = vld [vmem:[%s0 + $0x4a4] sm:$0xff]
    %v185 = vld [vmem:[%s0 + $0x4ac] sm:$0xff]
    %v186 = vld [vmem:[%s0 + $0x4b4] sm:$0xff]
    %v187 = vld [vmem:[%s0 + $0x4bc] sm:$0xff]
    %v188 = vld [vmem:[%s0 + $0x4c4] sm:$0xf]
    %v189 = vld [vmem:[%s0 + $0x4c8] sm:$0xff]
    %v190 = vld [vmem:[%s0 + $0x4d0] sm:$0xff]
    %v191 = vld [vmem:[%s0 + $0x4d8] sm:$0xff]
    %v192 = vld [vmem:[%s0 + $0x4e0] sm:$0xff]
    %v193 = vld [vmem:[%s0 + $0x4e8] sm:$0xf]
    %v194 = vld [vmem:[%s0 + $0x4ec] sm:$0xff]
    %v195 = vld [vmem:[%s0 + $0x4f4] sm:$0xff]
    %v196 = vld [vmem:[%s0 + $0x4fc] sm:$0xff]
    %v197 = vld [vmem:[%s0 + $0x504] sm:$0xff]
    %v198 = vld [vmem:[%s0 + $0x50c] sm:$0xf]
    %v199 = vld [vmem:[%s0 + $0x510] sm:$0xff]
    %v200 = vld [vmem:[%s0 + $0x518] sm:$0xff]
    %v201 = vld [vmem:[%s0 + $0x520] sm:$0xff]
    %v202 = vld [vmem:[%s0 + $0x528] sm:$0xff]
    %v203 = vld [vmem:[%s0 + $0x530] sm:$0xf]
    %v204 = vld [vmem:[%s0 + $0x534] sm:$0xff]
    %v205 = vld [vmem:[%s0 + $0x53c] sm:$0xff]
    %v206 = vld [vmem:[%s0 + $0x544] sm:$0xff]
    %v207 = vld [vmem:[%s0 + $0x54c] sm:$0xff]
    %v208 = vld [vmem:[%s0 + $0x554] sm:$0xf]
    %v209 = vld [vmem:[%s0 + $0x558] sm:$0xff]
    %v210 = vld [vmem:[%s0 + $0x560] sm:$0xff]
    %v211 = vld [vmem:[%s0 + $0x568] sm:$0xff]
    %v212 = vld [vmem:[%s0 + $0x570] sm:$0xff]
    %v213 = vld [vmem:[%s0 + $0x578] sm:$0xf]
    %v214 = vld [vmem:[%s0 + $0x57c] sm:$0xff]
    %v215 = vld [vmem:[%s0 + $0x584] sm:$0xff]
    %v216 = vld [vmem:[%s0 + $0x58c] sm:$0xff]
    %v217 = vld [vmem:[%s0 + $0x594] sm:$0xff]
    %v218 = vld [vmem:[%s0 + $0x59c] sm:$0xf]
    %v219 = vld [vmem:[%s0 + $0x5a0] sm:$0xff]
    %v220 = vld [vmem:[%s0 + $0x5a8] sm:$0xff]
    %v221 = vld [vmem:[%s0 + $0x5b0] sm:$0xff]
    %v222 = vld [vmem:[%s0 + $0x5b8] sm:$0xff]
    %v223 = vld [vmem:[%s0 + $0x5c0] sm:$0xf]
    %v224 = vld [vmem:[%s0 + $0x5c4] sm:$0xff]
    %v225 = vld [vmem:[%s0 + $0x5cc] sm:$0xff]
    %v226 = vld [vmem:[%s0 + $0x5d4] sm:$0xff]
    %v227 = vld [vmem:[%s0 + $0x5dc] sm:$0xff]
    %v228 = vld [vmem:[%s0 + $0x5e4] sm:$0xf]
    %v229 = vld [vmem:[%s0 + $0x5e8] sm:$0xff]
    %v230 = vld [vmem:[%s0 + $0x5f0] sm:$0xff]
    %v231 = vld [vmem:[%s0 + $0x5f8] sm:$0xff]
    %v232 = vld [vmem:[%s0 + $0x600] sm:$0xff]
    %v233 = vld [vmem:[%s0 + $0x608] sm:$0xf]
    %v234 = vld [vmem:[%s0 + $0x60c] sm:$0xff]
    %v235 = vld [vmem:[%s0 + $0x614] sm:$0xff]
    %v236 = vld [vmem:[%s0 + $0x61c] sm:$0xff]
    %v237 = vld [vmem:[%s0 + $0x624] sm:$0xff]
    %v238 = vld [vmem:[%s0 + $0x62c] sm:$0xf]
    %v239 = vld [vmem:[%s0 + $0x630] sm:$0xff]
    %v240 = vld [vmem:[%s0 + $0x638] sm:$0xff]
    %v241 = vld [vmem:[%s0 + $0x640] sm:$0xff]
    %v242 = vld [vmem:[%s0 + $0x648] sm:$0xff]
    %v243 = vld [vmem:[%s0 + $0x650] sm:$0xf]
    %v244 = vld [vmem:[%s0 + $0x654] sm:$0xff]
    %v245 = vld [vmem:[%s0 + $0x65c] sm:$0xff]
    %v246 = vld [vmem:[%s0 + $0x664] sm:$0xff]
    %v247 = vld [vmem:[%s0 + $0x66c] sm:$0xff]
    %v248 = vld [vmem:[%s0 + $0x674] sm:$0xf]
    %v249 = vld [vmem:[%s0 + $0x678] sm:$0xff]
    %v250 = vld [vmem:[%s0 + $0x680] sm:$0xff]
    %v251 = vld [vmem:[%s0 + $0x688] sm:$0xff]
    %v252 = vld [vmem:[%s0 + $0x690] sm:$0xff]
    %v253 = vld [vmem:[%s0 + $0x698] sm:$0xf]
    %v254 = vld [vmem:[%s0 + $0x69c] sm:$0xff]
    %v255 = vld [vmem:[%s0 + $0x6a4] sm:$0xff]
    %v256 = vld [vmem:[%s0 + $0x6ac] sm:$0xff]
    %v257 = vld [vmem:[%s0 + $0x6b4] sm:$0xff]
    %v258 = vld [vmem:[%s0 + $0x6bc] sm:$0xf]
    %v259 = vld [vmem:[%s0 + $0x6c0] sm:$0xff]
    %v260 = vld [vmem:[%s0 + $0x6c8] sm:$0xff]
    %v261 = vld [vmem:[%s0 + $0x6d0] sm:$0xff]
    %v262 = vld [vmem:[%s0 + $0x6d8] sm:$0xff]
    %v263 = vld [vmem:[%s0 + $0x6e0] sm:$0xf]
    %v264 = vld [vmem:[%s0 + $0x6e4] sm:$0xff]
    %v265 = vld [vmem:[%s0 + $0x6ec] sm:$0xff]
    %v266 = vld [vmem:[%s0 + $0x6f4] sm:$0xff]
    %v267 = vld [vmem:[%s0 + $0x6fc] sm:$0xff]
    %v268 = vld [vmem:[%s0 + $0x704] sm:$0xf]
    %v269 = vld [vmem:[%s0 + $0x708] sm:$0xff]
    %v270 = vld [vmem:[%s0 + $0x710] sm:$0xff]
    %v271 = vld [vmem:[%s0 + $0x718] sm:$0xff]
    %v272 = vld [vmem:[%s0 + $0x720] sm:$0xff]
    %v273 = vld [vmem:[%s0 + $0x728] sm:$0xf]
    %v274 = vld [vmem:[%s0 + $0x72c] sm:$0xff]
    %v275 = vld [vmem:[%s0 + $0x734] sm:$0xff]
    %v276 = vld [vmem:[%s0 + $0x73c] sm:$0xff]
    %v277 = vld [vmem:[%s0 + $0x744] sm:$0xff]
    %v278 = vld [vmem:[%s0 + $0x74c] sm:$0xf]
    %v279 = vld [vmem:[%s0 + $0x750] sm:$0xff]
    %v280 = vld [vmem:[%s0 + $0x758] sm:$0xff]
    %v281 = vld [vmem:[%s0 + $0x760] sm:$0xff]
    %v282 = vld [vmem:[%s0 + $0x768] sm:$0xff]
    %v283 = vld [vmem:[%s0 + $0x770] sm:$0xf]
    %v284 = vld [vmem:[%s0 + $0x774] sm:$0xff]
    %v285 = vld [vmem:[%s0 + $0x77c] sm:$0xff]
    %v286 = vld [vmem:[%s0 + $0x784] sm:$0xff]
    %v287 = vld [vmem:[%s0 + $0x78c] sm:$0xff]
    %v288 = vld [vmem:[%s0 + $0x794] sm:$0xf]
    %v289 = vld [vmem:[%s0 + $0x798] sm:$0xff]
    %v290 = vld [vmem:[%s0 + $0x7a0] sm:$0xff]
    %v291 = vld [vmem:[%s0 + $0x7a8] sm:$0xff]
    %v292 = vld [vmem:[%s0 + $0x7b0] sm:$0xff]
    %v293 = vld [vmem:[%s0 + $0x7b8] sm:$0xf]
    %v294 = vld [vmem:[%s0 + $0x7bc] sm:$0xff]
    %v295 = vld [vmem:[%s0 + $0x7c4] sm:$0xff]
    %v296 = vld [vmem:[%s0 + $0x7cc] sm:$0xff]
    %v297 = vld [vmem:[%s0 + $0x7d4] sm:$0xff]
    %v298 = vld [vmem:[%s0 + $0x7dc] sm:$0xf]
    %v299 = vld [vmem:[%s0 + $0x7e0] sm:$0xff]
    %v300 = vld [vmem:[%s0 + $0x7e8] sm:$0xff]
    %v301 = vld [vmem:[%s0 + $0x7f0] sm:$0xff]
    %v302 = vld [vmem:[%s0 + $0x7f8] sm:$0xff]
    %v303 = vld [vmem:[%s0 + $0x800] sm:$0xf]
    %v304 = vld [vmem:[%s0 + $0x804] sm:$0xff]
    %v305 = vld [vmem:[%s0 + $0x80c] sm:$0xff]
    %v306 = vld [vmem:[%s0 + $0x814] sm:$0xff]
    %v307 = vld [vmem:[%s0 + $0x81c] sm:$0xff]
    %v308 = vld [vmem:[%s0 + $0x824] sm:$0xf]
    %v309 = vld [vmem:[%s0 + $0x828] sm:$0xff]
    %v310 = vld [vmem:[%s0 + $0x830] sm:$0xff]
    %v311 = vld [vmem:[%s0 + $0x838] sm:$0xff]
    %v312 = vld [vmem:[%s0 + $0x840] sm:$0xff]
    %v313 = vld [vmem:[%s0 + $0x848] sm:$0xf]
    %v314 = vld [vmem:[%s0 + $0x84c] sm:$0xff]
    %v315 = vld [vmem:[%s0 + $0x854] sm:$0xff]
    %v316 = vld [vmem:[%s0 + $0x85c] sm:$0xff]
    %v317 = vld [vmem:[%s0 + $0x864] sm:$0xff]
    %v318 = vld [vmem:[%s0 + $0x86c] sm:$0xf]
    %v319 = vld [vmem:[%s0 + $0x870] sm:$0xff]
    %v320 = vld [vmem:[%s0 + $0x878] sm:$0xff]
    %v321 = vld [vmem:[%s0 + $0x880] sm:$0xff]
    %v322 = vld [vmem:[%s0 + $0x888] sm:$0xff]
    %v323 = vld [vmem:[%s0 + $0x890] sm:$0xf]
    %v324 = vld [vmem:[%s0 + $0x894] sm:$0xff]
    %v325 = vld [vmem:[%s0 + $0x89c] sm:$0xff]
    %v326 = vld [vmem:[%s0 + $0x8a4] sm:$0xff]
    %v327 = vld [vmem:[%s0 + $0x8ac] sm:$0xff]
    %v328 = vld [vmem:[%s0 + $0x8b4] sm:$0xf]
    %v329 = vld [vmem:[%s0 + $0x8b8] sm:$0xff]
    %v330 = vld [vmem:[%s0 + $0x8c0] sm:$0xff]
    %v331 = vld [vmem:[%s0 + $0x8c8] sm:$0xff]
    %v332 = vld [vmem:[%s0 + $0x8d0] sm:$0xff]
    %v333 = vld [vmem:[%s0 + $0x8d8] sm:$0xf]
    %v334 = vld [vmem:[%s0 + $0x8dc] sm:$0xff]
    %v335 = vld [vmem:[%s0 + $0x8e4] sm:$0xff]
    %v336 = vld [vmem:[%s0 + $0x8ec] sm:$0xff]
    %v337 = vld [vmem:[%s0 + $0x8f4] sm:$0xff]
    %v338 = vld [vmem:[%s0 + $0x8fc] sm:$0xf]
    %v339 = vld [vmem:[%s2] sm:$0xf]
    %v340 = vld [vmem:[%s2 + $0x4] sm:$0xf]
    %v341 = vld [vmem:[%s2 + $0x8] sm:$0xf]
    %v342 = vld [vmem:[%s2 + $0xc] sm:$0xf]
    %v343 = vld [vmem:[%s2 + $0x10] sm:$0xf]
    %v344 = vld [vmem:[%s2 + $0x14] sm:$0xf]
    %v345 = vld [vmem:[%s2 + $0x18] sm:$0xf]
    %v346 = vld [vmem:[%s2 + $0x1c] sm:$0xf]
    %v347 = vld [vmem:[%s2 + $0x20] sm:$0xf]
    %v348 = vld [vmem:[%s2 + $0x24] sm:$0xf]
    %v349 = vld [vmem:[%s2 + $0x28] sm:$0xf]
    %v350 = vld [vmem:[%s2 + $0x2c] sm:$0xf]
    %v351 = vld [vmem:[%s2 + $0x30] sm:$0xf]
    %v352 = vld [vmem:[%s2 + $0x34] sm:$0xf]
    %v353 = vld [vmem:[%s2 + $0x38] sm:$0xf]
    %v354 = vld [vmem:[%s2 + $0x3c] sm:$0xf]
    %v355 = vld [vmem:[%s2 + $0x40] sm:$0xf]
    %v356 = vld [vmem:[%s2 + $0x44] sm:$0xf]
    %v357 = vld [vmem:[%s2 + $0x48] sm:$0xf]
    %v358 = vld [vmem:[%s2 + $0x4c] sm:$0xf]
    %v359 = vld [vmem:[%s2 + $0x50] sm:$0xf]
    %v360 = vld [vmem:[%s2 + $0x54] sm:$0xf]
    %v361 = vld [vmem:[%s2 + $0x58] sm:$0xf]
    %v362 = vld [vmem:[%s2 + $0x5c] sm:$0xf]
    %v363 = vld [vmem:[%s2 + $0x60] sm:$0xf]
    %v364 = vld [vmem:[%s2 + $0x64] sm:$0xf]
    %v365 = vld [vmem:[%s2 + $0x68] sm:$0xf]
    %v366 = vld [vmem:[%s2 + $0x6c] sm:$0xf]
    %v367 = vld [vmem:[%s2 + $0x70] sm:$0xf]
    %v368 = vld [vmem:[%s2 + $0x74] sm:$0xf]
    %v369 = vld [vmem:[%s2 + $0x78] sm:$0xf]
    %v370 = vld [vmem:[%s2 + $0x7c] sm:$0xf]
    %v371 = vld [vmem:[%s2 + $0x80] sm:$0xf]
    %v372 = vld [vmem:[%s2 + $0x84] sm:$0xf]
    %v373 = vld [vmem:[%s2 + $0x88] sm:$0xf]
    %v374 = vld [vmem:[%s2 + $0x8c] sm:$0xf]
    %v375 = vld [vmem:[%s2 + $0x90] sm:$0xf]
    %v376 = vld [vmem:[%s2 + $0x94] sm:$0xf]
    %v377 = vld [vmem:[%s2 + $0x98] sm:$0xf]
    %v378 = vld [vmem:[%s2 + $0x9c] sm:$0xf]
    %v379 = vld [vmem:[%s2 + $0xa0] sm:$0xf]
    %v380 = vld [vmem:[%s2 + $0xa4] sm:$0xf]
    %v381 = vld [vmem:[%s2 + $0xa8] sm:$0xf]
    %v382 = vld [vmem:[%s2 + $0xac] sm:$0xf]
    %v383 = vld [vmem:[%s2 + $0xb0] sm:$0xf]
    %v384 = vld [vmem:[%s2 + $0xb4] sm:$0xf]
    %v385 = vld [vmem:[%s2 + $0xb8] sm:$0xf]
    %v386 = vld [vmem:[%s2 + $0xbc] sm:$0xf]
    %v387 = vld [vmem:[%s2 + $0xc0] sm:$0xf]
    %v388 = vld [vmem:[%s2 + $0xc4] sm:$0xf]
    %v389 = vld [vmem:[%s2 + $0xc8] sm:$0xf]
    %v390 = vld [vmem:[%s2 + $0xcc] sm:$0xf]
    %v391 = vld [vmem:[%s2 + $0xd0] sm:$0xf]
    %v392 = vld [vmem:[%s2 + $0xd4] sm:$0xf]
    %v393 = vld [vmem:[%s2 + $0xd8] sm:$0xf]
    %v394 = vld [vmem:[%s2 + $0xdc] sm:$0xf]
    %v395 = vld [vmem:[%s2 + $0xe0] sm:$0xf]
    %v396 = vld [vmem:[%s2 + $0xe4] sm:$0xf]
    %v397 = vld [vmem:[%s2 + $0xe8] sm:$0xf]
    %v398 = vld [vmem:[%s2 + $0xec] sm:$0xf]
    %v399 = vld [vmem:[%s2 + $0xf0] sm:$0xf]
    %v400 = vld [vmem:[%s2 + $0xf4] sm:$0xf]
    %v401 = vld [vmem:[%s2 + $0xf8] sm:$0xf]
    %v402 = vld [vmem:[%s2 + $0xfc] sm:$0xf]
    %v403 = vld [vmem:[%s2 + $0x100] sm:$0xf]
    %v404 = vld [vmem:[%s2 + $0x104] sm:$0xf]
    %v405 = vld [vmem:[%s2 + $0x108] sm:$0xf]
    %v406 = vld [vmem:[%s2 + $0x10c] sm:$0xf]
    %v407 = vld [vmem:[%s2 + $0x110] sm:$0xf]
    %v408 = vld [vmem:[%s2 + $0x114] sm:$0xf]
    %v409 = vld [vmem:[%s2 + $0x118] sm:$0xf]
    %v410 = vld [vmem:[%s2 + $0x11c] sm:$0xf]
    %v411 = vld [vmem:[%s2 + $0x120] sm:$0xf]
    %v412 = vld [vmem:[%s2 + $0x124] sm:$0xf]
    %v413 = vld [vmem:[%s2 + $0x128] sm:$0xf]
    %v414 = vld [vmem:[%s2 + $0x12c] sm:$0xf]
    %v415 = vld [vmem:[%s2 + $0x130] sm:$0xf]
    %v416 = vld [vmem:[%s2 + $0x134] sm:$0xf]
    %v417 = vld [vmem:[%s2 + $0x138] sm:$0xf]
    %v418 = vld [vmem:[%s2 + $0x13c] sm:$0xf]
    %v419 = vld [vmem:[%s2 + $0x140] sm:$0xf]
    %v420 = vld [vmem:[%s2 + $0x144] sm:$0xf]
    %v421 = vld [vmem:[%s2 + $0x148] sm:$0xf]
    %v422 = vld [vmem:[%s2 + $0x14c] sm:$0xf]
    %v423 = vld [vmem:[%s2 + $0x150] sm:$0xf]
    %v424 = vld [vmem:[%s2 + $0x154] sm:$0xf]
    %v425 = vld [vmem:[%s2 + $0x158] sm:$0xf]
    %v426 = vld [vmem:[%s2 + $0x15c] sm:$0xf]
    %v427 = vld [vmem:[%s2 + $0x160] sm:$0xf]
    %v428 = vld [vmem:[%s2 + $0x164] sm:$0xf]
    %v429 = vld [vmem:[%s2 + $0x168] sm:$0xf]
    %v430 = vld [vmem:[%s2 + $0x16c] sm:$0xf]
    %v431 = vld [vmem:[%s2 + $0x170] sm:$0xf]
    %v432 = vld [vmem:[%s2 + $0x174] sm:$0xf]
    %v433 = vld [vmem:[%s2 + $0x178] sm:$0xf]
    %v434 = vld [vmem:[%s2 + $0x17c] sm:$0xf]
    %v435 = vld [vmem:[%s2 + $0x180] sm:$0xf]
    %v436 = vld [vmem:[%s2 + $0x184] sm:$0xf]
    %v437 = vld [vmem:[%s2 + $0x188] sm:$0xf]
    %v438 = vld [vmem:[%s2 + $0x18c] sm:$0xf]
    %v439 = vld [vmem:[%s2 + $0x190] sm:$0xf]
    %v440 = vld [vmem:[%s2 + $0x194] sm:$0xf]
    %v441 = vld [vmem:[%s2 + $0x198] sm:$0xf]
    %v442 = vld [vmem:[%s2 + $0x19c] sm:$0xf]
    %v443 = vld [vmem:[%s2 + $0x1a0] sm:$0xf]
    %v444 = vld [vmem:[%s2 + $0x1a4] sm:$0xf]
    %v445 = vld [vmem:[%s2 + $0x1a8] sm:$0xf]
    %v446 = vld [vmem:[%s2 + $0x1ac] sm:$0xf]
    %v447 = vld [vmem:[%s2 + $0x1b0] sm:$0xf]
    %v448 = vld [vmem:[%s2 + $0x1b4] sm:$0xf]
    %v449 = vld [vmem:[%s2 + $0x1b8] sm:$0xf]
    %v450 = vld [vmem:[%s2 + $0x1bc] sm:$0xf]
    %v451 = vld [vmem:[%s2 + $0x1c0] sm:$0xf]
    %v452 = vld [vmem:[%s2 + $0x1c4] sm:$0xf]
    %v453 = vld [vmem:[%s2 + $0x1c8] sm:$0xf]
    %v454 = vld [vmem:[%s2 + $0x1cc] sm:$0xf]
    %v455 = vld [vmem:[%s2 + $0x1d0] sm:$0xf]
    %v456 = vld [vmem:[%s2 + $0x1d4] sm:$0xf]
    %v457 = vld [vmem:[%s2 + $0x1d8] sm:$0xf]
    %v458 = vld [vmem:[%s2 + $0x1dc] sm:$0xf]
    %v459 = vld [vmem:[%s2 + $0x1e0] sm:$0xf]
    %v460 = vld [vmem:[%s2 + $0x1e4] sm:$0xf]
    %v461 = vld [vmem:[%s2 + $0x1e8] sm:$0xf]
    %v462 = vld [vmem:[%s2 + $0x1ec] sm:$0xf]
    %v463 = vld [vmem:[%s2 + $0x1f0] sm:$0xf]
    %v464 = vld [vmem:[%s2 + $0x1f4] sm:$0xf]
    %v465 = vld [vmem:[%s2 + $0x1f8] sm:$0xf]
    %v466 = vld [vmem:[%s2 + $0x1fc] sm:$0xf]
    %v467 = vld [vmem:[%s2 + $0x200] sm:$0xf]
    %v468 = vld [vmem:[%s2 + $0x204] sm:$0xf]
    %v469 = vld [vmem:[%s2 + $0x208] sm:$0xf]
    %v470 = vld [vmem:[%s2 + $0x20c] sm:$0xf]
    %v471 = vld [vmem:[%s2 + $0x210] sm:$0xf]
    %v472 = vld [vmem:[%s2 + $0x214] sm:$0xf]
    %v473 = vld [vmem:[%s2 + $0x218] sm:$0xf]
    %v474 = vld [vmem:[%s2 + $0x21c] sm:$0xf]
    %v475 = vld [vmem:[%s2 + $0x220] sm:$0xf]
    %v476 = vld [vmem:[%s2 + $0x224] sm:$0xf]
    %v477 = vld [vmem:[%s2 + $0x228] sm:$0xf]
    %v478 = vld [vmem:[%s2 + $0x22c] sm:$0xf]
    %v479 = vld [vmem:[%s2 + $0x230] sm:$0xf]
    %v480 = vld [vmem:[%s2 + $0x234] sm:$0xf]
    %v481 = vld [vmem:[%s2 + $0x238] sm:$0xf]
    %v482 = vld [vmem:[%s2 + $0x23c] sm:$0xf]
    %v803 = vunpack.c.l.b16 %v19
    %v804 = vunpack.c.h.b16 %v19
    %v805 = vunpack.c.l.b16 %v20
    %v806 = vunpack.c.h.b16 %v20
    %v807 = vunpack.c.l.b16 %v21
    %v808 = vunpack.c.h.b16 %v21
    %v809 = vunpack.c.l.b16 %v22
    %v810 = vunpack.c.h.b16 %v22
    %v811 = vunpack.c.l.b16 %v23
    %v812 = vunpack.c.l.b16 %v24
    %v813 = vunpack.c.h.b16 %v24
    %v814 = vunpack.c.l.b16 %v25
    %v815 = vunpack.c.h.b16 %v25
    %v816 = vunpack.c.l.b16 %v26
    %v817 = vunpack.c.h.b16 %v26
    %v818 = vunpack.c.l.b16 %v27
    %v819 = vunpack.c.h.b16 %v27
    %v820 = vunpack.c.l.b16 %v28
    %v821 = vunpack.c.l.b16 %v29
    %v822 = vunpack.c.h.b16 %v29
    %v823 = vunpack.c.l.b16 %v30
    %v824 = vunpack.c.h.b16 %v30
    %v825 = vunpack.c.l.b16 %v31
    %v826 = vunpack.c.h.b16 %v31
    %v827 = vunpack.c.l.b16 %v32
    %v828 = vunpack.c.h.b16 %v32
    %v829 = vunpack.c.l.b16 %v33
    %v830 = vunpack.c.l.b16 %v34
    %v831 = vunpack.c.h.b16 %v34
    %v832 = vunpack.c.l.b16 %v35
    %v833 = vunpack.c.h.b16 %v35
    %v834 = vunpack.c.l.b16 %v36
    %v835 = vunpack.c.h.b16 %v36
    %v836 = vunpack.c.l.b16 %v37
    %v837 = vunpack.c.h.b16 %v37
    %v838 = vunpack.c.l.b16 %v38
    %v839 = vunpack.c.l.b16 %v39
    %v840 = vunpack.c.h.b16 %v39
    %v841 = vunpack.c.l.b16 %v40
    %v842 = vunpack.c.h.b16 %v40
    %v843 = vunpack.c.l.b16 %v41
    %v844 = vunpack.c.h.b16 %v41
    %v845 = vunpack.c.l.b16 %v42
    %v846 = vunpack.c.h.b16 %v42
    %v847 = vunpack.c.l.b16 %v43
    %v848 = vunpack.c.l.b16 %v44
    %v849 = vunpack.c.h.b16 %v44
    %v850 = vunpack.c.l.b16 %v45
    %v851 = vunpack.c.h.b16 %v45
    %v852 = vunpack.c.l.b16 %v46
    %v853 = vunpack.c.h.b16 %v46
    %v854 = vunpack.c.l.b16 %v47
    %v855 = vunpack.c.h.b16 %v47
    %v856 = vunpack.c.l.b16 %v48
    %v857 = vunpack.c.l.b16 %v49
    %v858 = vunpack.c.h.b16 %v49
    %v859 = vunpack.c.l.b16 %v50
    %v860 = vunpack.c.h.b16 %v50
    %v861 = vunpack.c.l.b16 %v51
    %v862 = vunpack.c.h.b16 %v51
    %v863 = vunpack.c.l.b16 %v52
    %v864 = vunpack.c.h.b16 %v52
    %v865 = vunpack.c.l.b16 %v53
    %v866 = vunpack.c.l.b16 %v54
    %v867 = vunpack.c.h.b16 %v54
    %v868 = vunpack.c.l.b16 %v55
    %v869 = vunpack.c.h.b16 %v55
    %v870 = vunpack.c.l.b16 %v56
    %v871 = vunpack.c.h.b16 %v56
    %v872 = vunpack.c.l.b16 %v57
    %v873 = vunpack.c.h.b16 %v57
    %v874 = vunpack.c.l.b16 %v58
    %v875 = vunpack.c.l.b16 %v59
    %v876 = vunpack.c.h.b16 %v59
    %v877 = vunpack.c.l.b16 %v60
    %v878 = vunpack.c.h.b16 %v60
    %v879 = vunpack.c.l.b16 %v61
    %v880 = vunpack.c.h.b16 %v61
    %v881 = vunpack.c.l.b16 %v62
    %v882 = vunpack.c.h.b16 %v62
    %v883 = vunpack.c.l.b16 %v63
    %v884 = vunpack.c.l.b16 %v64
    %v885 = vunpack.c.h.b16 %v64
    %v886 = vunpack.c.l.b16 %v65
    %v887 = vunpack.c.h.b16 %v65
    %v888 = vunpack.c.l.b16 %v66
    %v889 = vunpack.c.h.b16 %v66
    %v890 = vunpack.c.l.b16 %v67
    %v891 = vunpack.c.h.b16 %v67
    %v892 = vunpack.c.l.b16 %v68
    %v893 = vunpack.c.l.b16 %v69
    %v894 = vunpack.c.h.b16 %v69
    %v895 = vunpack.c.l.b16 %v70
    %v896 = vunpack.c.h.b16 %v70
    %v897 = vunpack.c.l.b16 %v71
    %v898 = vunpack.c.h.b16 %v71
    %v899 = vunpack.c.l.b16 %v72
    %v900 = vunpack.c.h.b16 %v72
    %v901 = vunpack.c.l.b16 %v73
    %v902 = vunpack.c.l.b16 %v74
    %v903 = vunpack.c.h.b16 %v74
    %v904 = vunpack.c.l.b16 %v75
    %v905 = vunpack.c.h.b16 %v75
    %v906 = vunpack.c.l.b16 %v76
    %v907 = vunpack.c.h.b16 %v76
    %v908 = vunpack.c.l.b16 %v77
    %v909 = vunpack.c.h.b16 %v77
    %v910 = vunpack.c.l.b16 %v78
    %v911 = vunpack.c.l.b16 %v79
    %v912 = vunpack.c.h.b16 %v79
    %v913 = vunpack.c.l.b16 %v80
    %v914 = vunpack.c.h.b16 %v80
    %v915 = vunpack.c.l.b16 %v81
    %v916 = vunpack.c.h.b16 %v81
    %v917 = vunpack.c.l.b16 %v82
    %v918 = vunpack.c.h.b16 %v82
    %v919 = vunpack.c.l.b16 %v83
    %v920 = vunpack.c.l.b16 %v84
    %v921 = vunpack.c.h.b16 %v84
    %v922 = vunpack.c.l.b16 %v85
    %v923 = vunpack.c.h.b16 %v85
    %v924 = vunpack.c.l.b16 %v86
    %v925 = vunpack.c.h.b16 %v86
    %v926 = vunpack.c.l.b16 %v87
    %v927 = vunpack.c.h.b16 %v87
    %v928 = vunpack.c.l.b16 %v88
    %v929 = vunpack.c.l.b16 %v89
    %v930 = vunpack.c.h.b16 %v89
    %v931 = vunpack.c.l.b16 %v90
    %v932 = vunpack.c.h.b16 %v90
    %v933 = vunpack.c.l.b16 %v91
    %v934 = vunpack.c.h.b16 %v91
    %v935 = vunpack.c.l.b16 %v92
    %v936 = vunpack.c.h.b16 %v92
    %v937 = vunpack.c.l.b16 %v93
    %v938 = vunpack.c.l.b16 %v94
    %v939 = vunpack.c.h.b16 %v94
    %v940 = vunpack.c.l.b16 %v95
    %v941 = vunpack.c.h.b16 %v95
    %v942 = vunpack.c.l.b16 %v96
    %v943 = vunpack.c.h.b16 %v96
    %v944 = vunpack.c.l.b16 %v97
    %v945 = vunpack.c.h.b16 %v97
    %v946 = vunpack.c.l.b16 %v98
    %v947 = vunpack.c.l.b16 %v99
    %v948 = vunpack.c.h.b16 %v99
    %v949 = vunpack.c.l.b16 %v100
    %v950 = vunpack.c.h.b16 %v100
    %v951 = vunpack.c.l.b16 %v101
    %v952 = vunpack.c.h.b16 %v101
    %v953 = vunpack.c.l.b16 %v102
    %v954 = vunpack.c.h.b16 %v102
    %v955 = vunpack.c.l.b16 %v103
    %v956 = vunpack.c.l.b16 %v104
    %v957 = vunpack.c.h.b16 %v104
    %v958 = vunpack.c.l.b16 %v105
    %v959 = vunpack.c.h.b16 %v105
    %v960 = vunpack.c.l.b16 %v106
    %v961 = vunpack.c.h.b16 %v106
    %v962 = vunpack.c.l.b16 %v107
    %v963 = vunpack.c.h.b16 %v107
    %v964 = vunpack.c.l.b16 %v108
    %v965 = vunpack.c.l.b16 %v109
    %v966 = vunpack.c.h.b16 %v109
    %v967 = vunpack.c.l.b16 %v110
    %v968 = vunpack.c.h.b16 %v110
    %v969 = vunpack.c.l.b16 %v111
    %v970 = vunpack.c.h.b16 %v111
    %v971 = vunpack.c.l.b16 %v112
    %v972 = vunpack.c.h.b16 %v112
    %v973 = vunpack.c.l.b16 %v113
    %v974 = vunpack.c.l.b16 %v114
    %v975 = vunpack.c.h.b16 %v114
    %v976 = vunpack.c.l.b16 %v115
    %v977 = vunpack.c.h.b16 %v115
    %v978 = vunpack.c.l.b16 %v116
    %v979 = vunpack.c.h.b16 %v116
    %v980 = vunpack.c.l.b16 %v117
    %v981 = vunpack.c.h.b16 %v117
    %v982 = vunpack.c.l.b16 %v118
    %v983 = vunpack.c.l.b16 %v119
    %v984 = vunpack.c.h.b16 %v119
    %v985 = vunpack.c.l.b16 %v120
    %v986 = vunpack.c.h.b16 %v120
    %v987 = vunpack.c.l.b16 %v121
    %v988 = vunpack.c.h.b16 %v121
    %v989 = vunpack.c.l.b16 %v122
    %v990 = vunpack.c.h.b16 %v122
    %v991 = vunpack.c.l.b16 %v123
    %v992 = vunpack.c.l.b16 %v124
    %v993 = vunpack.c.h.b16 %v124
    %v994 = vunpack.c.l.b16 %v125
    %v995 = vunpack.c.h.b16 %v125
    %v996 = vunpack.c.l.b16 %v126
    %v997 = vunpack.c.h.b16 %v126
    %v998 = vunpack.c.l.b16 %v127
    %v999 = vunpack.c.h.b16 %v127
    %v1000 = vunpack.c.l.b16 %v128
    %v1001 = vunpack.c.l.b16 %v129
    %v1002 = vunpack.c.h.b16 %v129
    %v1003 = vunpack.c.l.b16 %v130
    %v1004 = vunpack.c.h.b16 %v130
    %v1005 = vunpack.c.l.b16 %v131
    %v1006 = vunpack.c.h.b16 %v131
    %v1007 = vunpack.c.l.b16 %v132
    %v1008 = vunpack.c.h.b16 %v132
    %v1009 = vunpack.c.l.b16 %v133
    %v1010 = vunpack.c.l.b16 %v134
    %v1011 = vunpack.c.h.b16 %v134
    %v1012 = vunpack.c.l.b16 %v135
    %v1013 = vunpack.c.h.b16 %v135
    %v1014 = vunpack.c.l.b16 %v136
    %v1015 = vunpack.c.h.b16 %v136
    %v1016 = vunpack.c.l.b16 %v137
    %v1017 = vunpack.c.h.b16 %v137
    %v1018 = vunpack.c.l.b16 %v138
    %v1019 = vunpack.c.l.b16 %v139
    %v1020 = vunpack.c.h.b16 %v139
    %v1021 = vunpack.c.l.b16 %v140
    %v1022 = vunpack.c.h.b16 %v140
    %v1023 = vunpack.c.l.b16 %v141
    %v1024 = vunpack.c.h.b16 %v141
    %v1025 = vunpack.c.l.b16 %v142
    %v1026 = vunpack.c.h.b16 %v142
    %v1027 = vunpack.c.l.b16 %v143
    %v1028 = vunpack.c.l.b16 %v144
    %v1029 = vunpack.c.h.b16 %v144
    %v1030 = vunpack.c.l.b16 %v145
    %v1031 = vunpack.c.h.b16 %v145
    %v1032 = vunpack.c.l.b16 %v146
    %v1033 = vunpack.c.h.b16 %v146
    %v1034 = vunpack.c.l.b16 %v147
    %v1035 = vunpack.c.h.b16 %v147
    %v1036 = vunpack.c.l.b16 %v148
    %v1037 = vunpack.c.l.b16 %v149
    %v1038 = vunpack.c.h.b16 %v149
    %v1039 = vunpack.c.l.b16 %v150
    %v1040 = vunpack.c.h.b16 %v150
    %v1041 = vunpack.c.l.b16 %v151
    %v1042 = vunpack.c.h.b16 %v151
    %v1043 = vunpack.c.l.b16 %v152
    %v1044 = vunpack.c.h.b16 %v152
    %v1045 = vunpack.c.l.b16 %v153
    %v1046 = vunpack.c.l.b16 %v154
    %v1047 = vunpack.c.h.b16 %v154
    %v1048 = vunpack.c.l.b16 %v155
    %v1049 = vunpack.c.h.b16 %v155
    %v1050 = vunpack.c.l.b16 %v156
    %v1051 = vunpack.c.h.b16 %v156
    %v1052 = vunpack.c.l.b16 %v157
    %v1053 = vunpack.c.h.b16 %v157
    %v1054 = vunpack.c.l.b16 %v158
    %v1055 = vunpack.c.l.b16 %v159
    %v1056 = vunpack.c.h.b16 %v159
    %v1057 = vunpack.c.l.b16 %v160
    %v1058 = vunpack.c.h.b16 %v160
    %v1059 = vunpack.c.l.b16 %v161
    %v1060 = vunpack.c.h.b16 %v161
    %v1061 = vunpack.c.l.b16 %v162
    %v1062 = vunpack.c.h.b16 %v162
    %v1063 = vunpack.c.l.b16 %v163
    %v1064 = vunpack.c.l.b16 %v164
    %v1065 = vunpack.c.h.b16 %v164
    %v1066 = vunpack.c.l.b16 %v165
    %v1067 = vunpack.c.h.b16 %v165
    %v1068 = vunpack.c.l.b16 %v166
    %v1069 = vunpack.c.h.b16 %v166
    %v1070 = vunpack.c.l.b16 %v167
    %v1071 = vunpack.c.h.b16 %v167
    %v1072 = vunpack.c.l.b16 %v168
    %v1073 = vunpack.c.l.b16 %v169
    %v1074 = vunpack.c.h.b16 %v169
    %v1075 = vunpack.c.l.b16 %v170
    %v1076 = vunpack.c.h.b16 %v170
    %v1077 = vunpack.c.l.b16 %v171
    %v1078 = vunpack.c.h.b16 %v171
    %v1079 = vunpack.c.l.b16 %v172
    %v1080 = vunpack.c.h.b16 %v172
    %v1081 = vunpack.c.l.b16 %v173
    %v1082 = vunpack.c.l.b16 %v174
    %v1083 = vunpack.c.h.b16 %v174
    %v1084 = vunpack.c.l.b16 %v175
    %v1085 = vunpack.c.h.b16 %v175
    %v1086 = vunpack.c.l.b16 %v176
    %v1087 = vunpack.c.h.b16 %v176
    %v1088 = vunpack.c.l.b16 %v177
    %v1089 = vunpack.c.h.b16 %v177
    %v1090 = vunpack.c.l.b16 %v178
    %v1091 = vunpack.c.l.b16 %v179
    %v1092 = vunpack.c.h.b16 %v179
    %v1093 = vunpack.c.l.b16 %v180
    %v1094 = vunpack.c.h.b16 %v180
    %v1095 = vunpack.c.l.b16 %v181
    %v1096 = vunpack.c.h.b16 %v181
    %v1097 = vunpack.c.l.b16 %v182
    %v1098 = vunpack.c.h.b16 %v182
    %v1099 = vunpack.c.l.b16 %v183
    %v1100 = vunpack.c.l.b16 %v184
    %v1101 = vunpack.c.h.b16 %v184
    %v1102 = vunpack.c.l.b16 %v185
    %v1103 = vunpack.c.h.b16 %v185
    %v1104 = vunpack.c.l.b16 %v186
    %v1105 = vunpack.c.h.b16 %v186
    %v1106 = vunpack.c.l.b16 %v187
    %v1107 = vunpack.c.h.b16 %v187
    %v1108 = vunpack.c.l.b16 %v188
    %v1109 = vunpack.c.l.b16 %v189
    %v1110 = vunpack.c.h.b16 %v189
    %v1111 = vunpack.c.l.b16 %v190
    %v1112 = vunpack.c.h.b16 %v190
    %v1113 = vunpack.c.l.b16 %v191
    %v1114 = vunpack.c.h.b16 %v191
    %v1115 = vunpack.c.l.b16 %v192
    %v1116 = vunpack.c.h.b16 %v192
    %v1117 = vunpack.c.l.b16 %v193
    %v1118 = vunpack.c.l.b16 %v194
    %v1119 = vunpack.c.h.b16 %v194
    %v1120 = vunpack.c.l.b16 %v195
    %v1121 = vunpack.c.h.b16 %v195
    %v1122 = vunpack.c.l.b16 %v196
    %v1123 = vunpack.c.h.b16 %v196
    %v1124 = vunpack.c.l.b16 %v197
    %v1125 = vunpack.c.h.b16 %v197
    %v1126 = vunpack.c.l.b16 %v198
    %v1127 = vunpack.c.l.b16 %v199
    %v1128 = vunpack.c.h.b16 %v199
    %v1129 = vunpack.c.l.b16 %v200
    %v1130 = vunpack.c.h.b16 %v200
    %v1131 = vunpack.c.l.b16 %v201
    %v1132 = vunpack.c.h.b16 %v201
    %v1133 = vunpack.c.l.b16 %v202
    %v1134 = vunpack.c.h.b16 %v202
    %v1135 = vunpack.c.l.b16 %v203
    %v1136 = vunpack.c.l.b16 %v204
    %v1137 = vunpack.c.h.b16 %v204
    %v1138 = vunpack.c.l.b16 %v205
    %v1139 = vunpack.c.h.b16 %v205
    %v1140 = vunpack.c.l.b16 %v206
    %v1141 = vunpack.c.h.b16 %v206
    %v1142 = vunpack.c.l.b16 %v207
    %v1143 = vunpack.c.h.b16 %v207
    %v1144 = vunpack.c.l.b16 %v208
    %v1145 = vunpack.c.l.b16 %v209
    %v1146 = vunpack.c.h.b16 %v209
    %v1147 = vunpack.c.l.b16 %v210
    %v1148 = vunpack.c.h.b16 %v210
    %v1149 = vunpack.c.l.b16 %v211
    %v1150 = vunpack.c.h.b16 %v211
    %v1151 = vunpack.c.l.b16 %v212
    %v1152 = vunpack.c.h.b16 %v212
    %v1153 = vunpack.c.l.b16 %v213
    %v1154 = vunpack.c.l.b16 %v214
    %v1155 = vunpack.c.h.b16 %v214
    %v1156 = vunpack.c.l.b16 %v215
    %v1157 = vunpack.c.h.b16 %v215
    %v1158 = vunpack.c.l.b16 %v216
    %v1159 = vunpack.c.h.b16 %v216
    %v1160 = vunpack.c.l.b16 %v217
    %v1161 = vunpack.c.h.b16 %v217
    %v1162 = vunpack.c.l.b16 %v218
    %v1163 = vunpack.c.l.b16 %v219
    %v1164 = vunpack.c.h.b16 %v219
    %v1165 = vunpack.c.l.b16 %v220
    %v1166 = vunpack.c.h.b16 %v220
    %v1167 = vunpack.c.l.b16 %v221
    %v1168 = vunpack.c.h.b16 %v221
    %v1169 = vunpack.c.l.b16 %v222
    %v1170 = vunpack.c.h.b16 %v222
    %v1171 = vunpack.c.l.b16 %v223
    %v1172 = vunpack.c.l.b16 %v224
    %v1173 = vunpack.c.h.b16 %v224
    %v1174 = vunpack.c.l.b16 %v225
    %v1175 = vunpack.c.h.b16 %v225
    %v1176 = vunpack.c.l.b16 %v226
    %v1177 = vunpack.c.h.b16 %v226
    %v1178 = vunpack.c.l.b16 %v227
    %v1179 = vunpack.c.h.b16 %v227
    %v1180 = vunpack.c.l.b16 %v228
    %v1181 = vunpack.c.l.b16 %v229
    %v1182 = vunpack.c.h.b16 %v229
    %v1183 = vunpack.c.l.b16 %v230
    %v1184 = vunpack.c.h.b16 %v230
    %v1185 = vunpack.c.l.b16 %v231
    %v1186 = vunpack.c.h.b16 %v231
    %v1187 = vunpack.c.l.b16 %v232
    %v1188 = vunpack.c.h.b16 %v232
    %v1189 = vunpack.c.l.b16 %v233
    %v1190 = vunpack.c.l.b16 %v234
    %v1191 = vunpack.c.h.b16 %v234
    %v1192 = vunpack.c.l.b16 %v235
    %v1193 = vunpack.c.h.b16 %v235
    %v1194 = vunpack.c.l.b16 %v236
    %v1195 = vunpack.c.h.b16 %v236
    %v1196 = vunpack.c.l.b16 %v237
    %v1197 = vunpack.c.h.b16 %v237
    %v1198 = vunpack.c.l.b16 %v238
    %v1199 = vunpack.c.l.b16 %v239
    %v1200 = vunpack.c.h.b16 %v239
    %v1201 = vunpack.c.l.b16 %v240
    %v1202 = vunpack.c.h.b16 %v240
    %v1203 = vunpack.c.l.b16 %v241
    %v1204 = vunpack.c.h.b16 %v241
    %v1205 = vunpack.c.l.b16 %v242
    %v1206 = vunpack.c.h.b16 %v242
    %v1207 = vunpack.c.l.b16 %v243
    %v1208 = vunpack.c.l.b16 %v244
    %v1209 = vunpack.c.h.b16 %v244
    %v1210 = vunpack.c.l.b16 %v245
    %v1211 = vunpack.c.h.b16 %v245
    %v1212 = vunpack.c.l.b16 %v246
    %v1213 = vunpack.c.h.b16 %v246
    %v1214 = vunpack.c.l.b16 %v247
    %v1215 = vunpack.c.h.b16 %v247
    %v1216 = vunpack.c.l.b16 %v248
    %v1217 = vunpack.c.l.b16 %v249
    %v1218 = vunpack.c.h.b16 %v249
    %v1219 = vunpack.c.l.b16 %v250
    %v1220 = vunpack.c.h.b16 %v250
    %v1221 = vunpack.c.l.b16 %v251
    %v1222 = vunpack.c.h.b16 %v251
    %v1223 = vunpack.c.l.b16 %v252
    %v1224 = vunpack.c.h.b16 %v252
    %v1225 = vunpack.c.l.b16 %v253
    %v1226 = vunpack.c.l.b16 %v254
    %v1227 = vunpack.c.h.b16 %v254
    %v1228 = vunpack.c.l.b16 %v255
    %v1229 = vunpack.c.h.b16 %v255
    %v1230 = vunpack.c.l.b16 %v256
    %v1231 = vunpack.c.h.b16 %v256
    %v1232 = vunpack.c.l.b16 %v257
    %v1233 = vunpack.c.h.b16 %v257
    %v1234 = vunpack.c.l.b16 %v258
    %v1235 = vunpack.c.l.b16 %v259
    %v1236 = vunpack.c.h.b16 %v259
    %v1237 = vunpack.c.l.b16 %v260
    %v1238 = vunpack.c.h.b16 %v260
    %v1239 = vunpack.c.l.b16 %v261
    %v1240 = vunpack.c.h.b16 %v261
    %v1241 = vunpack.c.l.b16 %v262
    %v1242 = vunpack.c.h.b16 %v262
    %v1243 = vunpack.c.l.b16 %v263
    %v1244 = vunpack.c.l.b16 %v264
    %v1245 = vunpack.c.h.b16 %v264
    %v1246 = vunpack.c.l.b16 %v265
    %v1247 = vunpack.c.h.b16 %v265
    %v1248 = vunpack.c.l.b16 %v266
    %v1249 = vunpack.c.h.b16 %v266
    %v1250 = vunpack.c.l.b16 %v267
    %v1251 = vunpack.c.h.b16 %v267
    %v1252 = vunpack.c.l.b16 %v268
    %v1253 = vunpack.c.l.b16 %v269
    %v1254 = vunpack.c.h.b16 %v269
    %v1255 = vunpack.c.l.b16 %v270
    %v1256 = vunpack.c.h.b16 %v270
    %v1257 = vunpack.c.l.b16 %v271
    %v1258 = vunpack.c.h.b16 %v271
    %v1259 = vunpack.c.l.b16 %v272
    %v1260 = vunpack.c.h.b16 %v272
    %v1261 = vunpack.c.l.b16 %v273
    %v1262 = vunpack.c.l.b16 %v274
    %v1263 = vunpack.c.h.b16 %v274
    %v1264 = vunpack.c.l.b16 %v275
    %v1265 = vunpack.c.h.b16 %v275
    %v1266 = vunpack.c.l.b16 %v276
    %v1267 = vunpack.c.h.b16 %v276
    %v1268 = vunpack.c.l.b16 %v277
    %v1269 = vunpack.c.h.b16 %v277
    %v1270 = vunpack.c.l.b16 %v278
    %v1271 = vunpack.c.l.b16 %v279
    %v1272 = vunpack.c.h.b16 %v279
    %v1273 = vunpack.c.l.b16 %v280
    %v1274 = vunpack.c.h.b16 %v280
    %v1275 = vunpack.c.l.b16 %v281
    %v1276 = vunpack.c.h.b16 %v281
    %v1277 = vunpack.c.l.b16 %v282
    %v1278 = vunpack.c.h.b16 %v282
    %v1279 = vunpack.c.l.b16 %v283
    %v1280 = vunpack.c.l.b16 %v284
    %v1281 = vunpack.c.h.b16 %v284
    %v1282 = vunpack.c.l.b16 %v285
    %v1283 = vunpack.c.h.b16 %v285
    %v1284 = vunpack.c.l.b16 %v286
    %v1285 = vunpack.c.h.b16 %v286
    %v1286 = vunpack.c.l.b16 %v287
    %v1287 = vunpack.c.h.b16 %v287
    %v1288 = vunpack.c.l.b16 %v288
    %v1289 = vunpack.c.l.b16 %v289
    %v1290 = vunpack.c.h.b16 %v289
    %v1291 = vunpack.c.l.b16 %v290
    %v1292 = vunpack.c.h.b16 %v290
    %v1293 = vunpack.c.l.b16 %v291
    %v1294 = vunpack.c.h.b16 %v291
    %v1295 = vunpack.c.l.b16 %v292
    %v1296 = vunpack.c.h.b16 %v292
    %v1297 = vunpack.c.l.b16 %v293
    %v1298 = vunpack.c.l.b16 %v294
    %v1299 = vunpack.c.h.b16 %v294
    %v1300 = vunpack.c.l.b16 %v295
    %v1301 = vunpack.c.h.b16 %v295
    %v1302 = vunpack.c.l.b16 %v296
    %v1303 = vunpack.c.h.b16 %v296
    %v1304 = vunpack.c.l.b16 %v297
    %v1305 = vunpack.c.h.b16 %v297
    %v1306 = vunpack.c.l.b16 %v298
    %v1307 = vunpack.c.l.b16 %v299
    %v1308 = vunpack.c.h.b16 %v299
    %v1309 = vunpack.c.l.b16 %v300
    %v1310 = vunpack.c.h.b16 %v300
    %v1311 = vunpack.c.l.b16 %v301
    %v1312 = vunpack.c.h.b16 %v301
    %v1313 = vunpack.c.l.b16 %v302
    %v1314 = vunpack.c.h.b16 %v302
    %v1315 = vunpack.c.l.b16 %v303
    %v1316 = vunpack.c.l.b16 %v304
    %v1317 = vunpack.c.h.b16 %v304
    %v1318 = vunpack.c.l.b16 %v305
    %v1319 = vunpack.c.h.b16 %v305
    %v1320 = vunpack.c.l.b16 %v306
    %v1321 = vunpack.c.h.b16 %v306
    %v1322 = vunpack.c.l.b16 %v307
    %v1323 = vunpack.c.h.b16 %v307
    %v1324 = vunpack.c.l.b16 %v308
    %v1325 = vunpack.c.l.b16 %v309
    %v1326 = vunpack.c.h.b16 %v309
    %v1327 = vunpack.c.l.b16 %v310
    %v1328 = vunpack.c.h.b16 %v310
    %v1329 = vunpack.c.l.b16 %v311
    %v1330 = vunpack.c.h.b16 %v311
    %v1331 = vunpack.c.l.b16 %v312
    %v1332 = vunpack.c.h.b16 %v312
    %v1333 = vunpack.c.l.b16 %v313
    %v1334 = vunpack.c.l.b16 %v314
    %v1335 = vunpack.c.h.b16 %v314
    %v1336 = vunpack.c.l.b16 %v315
    %v1337 = vunpack.c.h.b16 %v315
    %v1338 = vunpack.c.l.b16 %v316
    %v1339 = vunpack.c.h.b16 %v316
    %v1340 = vunpack.c.l.b16 %v317
    %v1341 = vunpack.c.h.b16 %v317
    %v1342 = vunpack.c.l.b16 %v318
    %v1343 = vunpack.c.l.b16 %v319
    %v1344 = vunpack.c.h.b16 %v319
    %v1345 = vunpack.c.l.b16 %v320
    %v1346 = vunpack.c.h.b16 %v320
    %v1347 = vunpack.c.l.b16 %v321
    %v1348 = vunpack.c.h.b16 %v321
    %v1349 = vunpack.c.l.b16 %v322
    %v1350 = vunpack.c.h.b16 %v322
    %v1351 = vunpack.c.l.b16 %v323
    %v1352 = vunpack.c.l.b16 %v324
    %v1353 = vunpack.c.h.b16 %v324
    %v1354 = vunpack.c.l.b16 %v325
    %v1355 = vunpack.c.h.b16 %v325
    %v1356 = vunpack.c.l.b16 %v326
    %v1357 = vunpack.c.h.b16 %v326
    %v1358 = vunpack.c.l.b16 %v327
    %v1359 = vunpack.c.h.b16 %v327
    %v1360 = vunpack.c.l.b16 %v328
    %v1361 = vunpack.c.l.b16 %v329
    %v1362 = vunpack.c.h.b16 %v329
    %v1363 = vunpack.c.l.b16 %v330
    %v1364 = vunpack.c.h.b16 %v330
    %v1365 = vunpack.c.l.b16 %v331
    %v1366 = vunpack.c.h.b16 %v331
    %v1367 = vunpack.c.l.b16 %v332
    %v1368 = vunpack.c.h.b16 %v332
    %v1369 = vunpack.c.l.b16 %v333
    %v1370 = vunpack.c.l.b16 %v334
    %v1371 = vunpack.c.h.b16 %v334
    %v1372 = vunpack.c.l.b16 %v335
    %v1373 = vunpack.c.h.b16 %v335
    %v1374 = vunpack.c.l.b16 %v336
    %v1375 = vunpack.c.h.b16 %v336
    %v1376 = vunpack.c.l.b16 %v337
    %v1377 = vunpack.c.h.b16 %v337
    %v1378 = vunpack.c.l.b16 %v338
    %v1379 = vpack.c.b16 %v812, %v803
    %v1380 = vpack.c.b16 %v813, %v804
    %v1381 = vpack.c.b16 %v814, %v805
    %v1382 = vpack.c.b16 %v815, %v806
    %v1383 = vpack.c.b16 %v816, %v807
    %v1384 = vpack.c.b16 %v817, %v808
    %v1385 = vpack.c.b16 %v818, %v809
    %v1386 = vpack.c.b16 %v819, %v810
    %v1387 = vpack.c.b16 %v820, %v811
    %v1388 = vpack.c.b16 %v830, %v821
    %v1389 = vpack.c.b16 %v831, %v822
    %v1390 = vpack.c.b16 %v832, %v823
    %v1391 = vpack.c.b16 %v833, %v824
    %v1392 = vpack.c.b16 %v834, %v825
    %v1393 = vpack.c.b16 %v835, %v826
    %v1394 = vpack.c.b16 %v836, %v827
    %v1395 = vpack.c.b16 %v837, %v828
    %v1396 = vpack.c.b16 %v838, %v829
    %v1397 = vpack.c.b16 %v848, %v839
    %v1398 = vpack.c.b16 %v849, %v840
    %v1399 = vpack.c.b16 %v850, %v841
    %v1400 = vpack.c.b16 %v851, %v842
    %v1401 = vpack.c.b16 %v852, %v843
    %v1402 = vpack.c.b16 %v853, %v844
    %v1403 = vpack.c.b16 %v854, %v845
    %v1404 = vpack.c.b16 %v855, %v846
    %v1405 = vpack.c.b16 %v856, %v847
    %v1406 = vpack.c.b16 %v866, %v857
    %v1407 = vpack.c.b16 %v867, %v858
    %v1408 = vpack.c.b16 %v868, %v859
    %v1409 = vpack.c.b16 %v869, %v860
    %v1410 = vpack.c.b16 %v870, %v861
    %v1411 = vpack.c.b16 %v871, %v862
    %v1412 = vpack.c.b16 %v872, %v863
    %v1413 = vpack.c.b16 %v873, %v864
    %v1414 = vpack.c.b16 %v874, %v865
    %v1415 = vpack.c.b16 %v884, %v875
    %v1416 = vpack.c.b16 %v885, %v876
    %v1417 = vpack.c.b16 %v886, %v877
    %v1418 = vpack.c.b16 %v887, %v878
    %v1419 = vpack.c.b16 %v888, %v879
    %v1420 = vpack.c.b16 %v889, %v880
    %v1421 = vpack.c.b16 %v890, %v881
    %v1422 = vpack.c.b16 %v891, %v882
    %v1423 = vpack.c.b16 %v892, %v883
    %v1424 = vpack.c.b16 %v902, %v893
    %v1425 = vpack.c.b16 %v903, %v894
    %v1426 = vpack.c.b16 %v904, %v895
    %v1427 = vpack.c.b16 %v905, %v896
    %v1428 = vpack.c.b16 %v906, %v897
    %v1429 = vpack.c.b16 %v907, %v898
    %v1430 = vpack.c.b16 %v908, %v899
    %v1431 = vpack.c.b16 %v909, %v900
    %v1432 = vpack.c.b16 %v910, %v901
    %v1433 = vpack.c.b16 %v920, %v911
    %v1434 = vpack.c.b16 %v921, %v912
    %v1435 = vpack.c.b16 %v922, %v913
    %v1436 = vpack.c.b16 %v923, %v914
    %v1437 = vpack.c.b16 %v924, %v915
    %v1438 = vpack.c.b16 %v925, %v916
    %v1439 = vpack.c.b16 %v926, %v917
    %v1440 = vpack.c.b16 %v927, %v918
    %v1441 = vpack.c.b16 %v928, %v919
    %v1442 = vpack.c.b16 %v938, %v929
    %v1443 = vpack.c.b16 %v939, %v930
    %v1444 = vpack.c.b16 %v940, %v931
    %v1445 = vpack.c.b16 %v941, %v932
    %v1446 = vpack.c.b16 %v942, %v933
    %v1447 = vpack.c.b16 %v943, %v934
    %v1448 = vpack.c.b16 %v944, %v935
    %v1449 = vpack.c.b16 %v945, %v936
    %v1450 = vpack.c.b16 %v946, %v937
    %v1451 = vpack.c.b16 %v956, %v947
    %v1452 = vpack.c.b16 %v957, %v948
    %v1453 = vpack.c.b16 %v958, %v949
    %v1454 = vpack.c.b16 %v959, %v950
    %v1455 = vpack.c.b16 %v960, %v951
    %v1456 = vpack.c.b16 %v961, %v952
    %v1457 = vpack.c.b16 %v962, %v953
    %v1458 = vpack.c.b16 %v963, %v954
    %v1459 = vpack.c.b16 %v964, %v955
    %v1460 = vpack.c.b16 %v974, %v965
    %v1461 = vpack.c.b16 %v975, %v966
    %v1462 = vpack.c.b16 %v976, %v967
    %v1463 = vpack.c.b16 %v977, %v968
    %v1464 = vpack.c.b16 %v978, %v969
    %v1465 = vpack.c.b16 %v979, %v970
    %v1466 = vpack.c.b16 %v980, %v971
    %v1467 = vpack.c.b16 %v981, %v972
    %v1468 = vpack.c.b16 %v982, %v973
    %v1469 = vpack.c.b16 %v992, %v983
    %v1470 = vpack.c.b16 %v993, %v984
    %v1471 = vpack.c.b16 %v994, %v985
    %v1472 = vpack.c.b16 %v995, %v986
    %v1473 = vpack.c.b16 %v996, %v987
    %v1474 = vpack.c.b16 %v997, %v988
    %v1475 = vpack.c.b16 %v998, %v989
    %v1476 = vpack.c.b16 %v999, %v990
    %v1477 = vpack.c.b16 %v1000, %v991
    %v1478 = vpack.c.b16 %v1010, %v1001
    %v1479 = vpack.c.b16 %v1011, %v1002
    %v1480 = vpack.c.b16 %v1012, %v1003
    %v1481 = vpack.c.b16 %v1013, %v1004
    %v1482 = vpack.c.b16 %v1014, %v1005
    %v1483 = vpack.c.b16 %v1015, %v1006
    %v1484 = vpack.c.b16 %v1016, %v1007
    %v1485 = vpack.c.b16 %v1017, %v1008
    %v1486 = vpack.c.b16 %v1018, %v1009
    %v1487 = vpack.c.b16 %v1028, %v1019
    %v1488 = vpack.c.b16 %v1029, %v1020
    %v1489 = vpack.c.b16 %v1030, %v1021
    %v1490 = vpack.c.b16 %v1031, %v1022
    %v1491 = vpack.c.b16 %v1032, %v1023
    %v1492 = vpack.c.b16 %v1033, %v1024
    %v1493 = vpack.c.b16 %v1034, %v1025
    %v1494 = vpack.c.b16 %v1035, %v1026
    %v1495 = vpack.c.b16 %v1036, %v1027
    %v1496 = vpack.c.b16 %v1046, %v1037
    %v1497 = vpack.c.b16 %v1047, %v1038
    %v1498 = vpack.c.b16 %v1048, %v1039
    %v1499 = vpack.c.b16 %v1049, %v1040
    %v1500 = vpack.c.b16 %v1050, %v1041
    %v1501 = vpack.c.b16 %v1051, %v1042
    %v1502 = vpack.c.b16 %v1052, %v1043
    %v1503 = vpack.c.b16 %v1053, %v1044
    %v1504 = vpack.c.b16 %v1054, %v1045
    %v1505 = vpack.c.b16 %v1064, %v1055
    %v1506 = vpack.c.b16 %v1065, %v1056
    %v1507 = vpack.c.b16 %v1066, %v1057
    %v1508 = vpack.c.b16 %v1067, %v1058
    %v1509 = vpack.c.b16 %v1068, %v1059
    %v1510 = vpack.c.b16 %v1069, %v1060
    %v1511 = vpack.c.b16 %v1070, %v1061
    %v1512 = vpack.c.b16 %v1071, %v1062
    %v1513 = vpack.c.b16 %v1072, %v1063
    %v1514 = vpack.c.b16 %v1082, %v1073
    %v1515 = vpack.c.b16 %v1083, %v1074
    %v1516 = vpack.c.b16 %v1084, %v1075
    %v1517 = vpack.c.b16 %v1085, %v1076
    %v1518 = vpack.c.b16 %v1086, %v1077
    %v1519 = vpack.c.b16 %v1087, %v1078
    %v1520 = vpack.c.b16 %v1088, %v1079
    %v1521 = vpack.c.b16 %v1089, %v1080
    %v1522 = vpack.c.b16 %v1090, %v1081
    %v1523 = vpack.c.b16 %v1100, %v1091
    %v1524 = vpack.c.b16 %v1101, %v1092
    %v1525 = vpack.c.b16 %v1102, %v1093
    %v1526 = vpack.c.b16 %v1103, %v1094
    %v1527 = vpack.c.b16 %v1104, %v1095
    %v1528 = vpack.c.b16 %v1105, %v1096
    %v1529 = vpack.c.b16 %v1106, %v1097
    %v1530 = vpack.c.b16 %v1107, %v1098
    %v1531 = vpack.c.b16 %v1108, %v1099
    %v1532 = vpack.c.b16 %v1118, %v1109
    %v1533 = vpack.c.b16 %v1119, %v1110
    %v1534 = vpack.c.b16 %v1120, %v1111
    %v1535 = vpack.c.b16 %v1121, %v1112
    %v1536 = vpack.c.b16 %v1122, %v1113
    %v1537 = vpack.c.b16 %v1123, %v1114
    %v1538 = vpack.c.b16 %v1124, %v1115
    %v1539 = vpack.c.b16 %v1125, %v1116
    %v1540 = vpack.c.b16 %v1126, %v1117
    %v1541 = vpack.c.b16 %v1136, %v1127
    %v1542 = vpack.c.b16 %v1137, %v1128
    %v1543 = vpack.c.b16 %v1138, %v1129
    %v1544 = vpack.c.b16 %v1139, %v1130
    %v1545 = vpack.c.b16 %v1140, %v1131
    %v1546 = vpack.c.b16 %v1141, %v1132
    %v1547 = vpack.c.b16 %v1142, %v1133
    %v1548 = vpack.c.b16 %v1143, %v1134
    %v1549 = vpack.c.b16 %v1144, %v1135
    %v1550 = vpack.c.b16 %v1154, %v1145
    %v1551 = vpack.c.b16 %v1155, %v1146
    %v1552 = vpack.c.b16 %v1156, %v1147
    %v1553 = vpack.c.b16 %v1157, %v1148
    %v1554 = vpack.c.b16 %v1158, %v1149
    %v1555 = vpack.c.b16 %v1159, %v1150
    %v1556 = vpack.c.b16 %v1160, %v1151
    %v1557 = vpack.c.b16 %v1161, %v1152
    %v1558 = vpack.c.b16 %v1162, %v1153
    %v1559 = vpack.c.b16 %v1172, %v1163
    %v1560 = vpack.c.b16 %v1173, %v1164
    %v1561 = vpack.c.b16 %v1174, %v1165
    %v1562 = vpack.c.b16 %v1175, %v1166
    %v1563 = vpack.c.b16 %v1176, %v1167
    %v1564 = vpack.c.b16 %v1177, %v1168
    %v1565 = vpack.c.b16 %v1178, %v1169
    %v1566 = vpack.c.b16 %v1179, %v1170
    %v1567 = vpack.c.b16 %v1180, %v1171
    %v1568 = vpack.c.b16 %v1190, %v1181
    %v1569 = vpack.c.b16 %v1191, %v1182
    %v1570 = vpack.c.b16 %v1192, %v1183
    %v1571 = vpack.c.b16 %v1193, %v1184
    %v1572 = vpack.c.b16 %v1194, %v1185
    %v1573 = vpack.c.b16 %v1195, %v1186
    %v1574 = vpack.c.b16 %v1196, %v1187
    %v1575 = vpack.c.b16 %v1197, %v1188
    %v1576 = vpack.c.b16 %v1198, %v1189
    %v1577 = vpack.c.b16 %v1208, %v1199
    %v1578 = vpack.c.b16 %v1209, %v1200
    %v1579 = vpack.c.b16 %v1210, %v1201
    %v1580 = vpack.c.b16 %v1211, %v1202
    %v1581 = vpack.c.b16 %v1212, %v1203
    %v1582 = vpack.c.b16 %v1213, %v1204
    %v1583 = vpack.c.b16 %v1214, %v1205
    %v1584 = vpack.c.b16 %v1215, %v1206
    %v1585 = vpack.c.b16 %v1216, %v1207
    %v1586 = vpack.c.b16 %v1226, %v1217
    %v1587 = vpack.c.b16 %v1227, %v1218
    %v1588 = vpack.c.b16 %v1228, %v1219
    %v1589 = vpack.c.b16 %v1229, %v1220
    %v1590 = vpack.c.b16 %v1230, %v1221
    %v1591 = vpack.c.b16 %v1231, %v1222
    %v1592 = vpack.c.b16 %v1232, %v1223
    %v1593 = vpack.c.b16 %v1233, %v1224
    %v1594 = vpack.c.b16 %v1234, %v1225
    %v1595 = vpack.c.b16 %v1244, %v1235
    %v1596 = vpack.c.b16 %v1245, %v1236
    %v1597 = vpack.c.b16 %v1246, %v1237
    %v1598 = vpack.c.b16 %v1247, %v1238
    %v1599 = vpack.c.b16 %v1248, %v1239
    %v1600 = vpack.c.b16 %v1249, %v1240
    %v1601 = vpack.c.b16 %v1250, %v1241
    %v1602 = vpack.c.b16 %v1251, %v1242
    %v1603 = vpack.c.b16 %v1252, %v1243
    %v1604 = vpack.c.b16 %v1262, %v1253
    %v1605 = vpack.c.b16 %v1263, %v1254
    %v1606 = vpack.c.b16 %v1264, %v1255
    %v1607 = vpack.c.b16 %v1265, %v1256
    %v1608 = vpack.c.b16 %v1266, %v1257
    %v1609 = vpack.c.b16 %v1267, %v1258
    %v1610 = vpack.c.b16 %v1268, %v1259
    %v1611 = vpack.c.b16 %v1269, %v1260
    %v1612 = vpack.c.b16 %v1270, %v1261
    %v1613 = vpack.c.b16 %v1280, %v1271
    %v1614 = vpack.c.b16 %v1281, %v1272
    %v1615 = vpack.c.b16 %v1282, %v1273
    %v1616 = vpack.c.b16 %v1283, %v1274
    %v1617 = vpack.c.b16 %v1284, %v1275
    %v1618 = vpack.c.b16 %v1285, %v1276
    %v1619 = vpack.c.b16 %v1286, %v1277
    %v1620 = vpack.c.b16 %v1287, %v1278
    %v1621 = vpack.c.b16 %v1288, %v1279
    %v1622 = vpack.c.b16 %v1298, %v1289
    %v1623 = vpack.c.b16 %v1299, %v1290
    %v1624 = vpack.c.b16 %v1300, %v1291
    %v1625 = vpack.c.b16 %v1301, %v1292
    %v1626 = vpack.c.b16 %v1302, %v1293
    %v1627 = vpack.c.b16 %v1303, %v1294
    %v1628 = vpack.c.b16 %v1304, %v1295
    %v1629 = vpack.c.b16 %v1305, %v1296
    %v1630 = vpack.c.b16 %v1306, %v1297
    %v1631 = vpack.c.b16 %v1316, %v1307
    %v1632 = vpack.c.b16 %v1317, %v1308
    %v1633 = vpack.c.b16 %v1318, %v1309
    %v1634 = vpack.c.b16 %v1319, %v1310
    %v1635 = vpack.c.b16 %v1320, %v1311
    %v1636 = vpack.c.b16 %v1321, %v1312
    %v1637 = vpack.c.b16 %v1322, %v1313
    %v1638 = vpack.c.b16 %v1323, %v1314
    %v1639 = vpack.c.b16 %v1324, %v1315
    %v1640 = vpack.c.b16 %v1334, %v1325
    %v1641 = vpack.c.b16 %v1335, %v1326
    %v1642 = vpack.c.b16 %v1336, %v1327
    %v1643 = vpack.c.b16 %v1337, %v1328
    %v1644 = vpack.c.b16 %v1338, %v1329
    %v1645 = vpack.c.b16 %v1339, %v1330
    %v1646 = vpack.c.b16 %v1340, %v1331
    %v1647 = vpack.c.b16 %v1341, %v1332
    %v1648 = vpack.c.b16 %v1342, %v1333
    %v1649 = vpack.c.b16 %v1352, %v1343
    %v1650 = vpack.c.b16 %v1353, %v1344
    %v1651 = vpack.c.b16 %v1354, %v1345
    %v1652 = vpack.c.b16 %v1355, %v1346
    %v1653 = vpack.c.b16 %v1356, %v1347
    %v1654 = vpack.c.b16 %v1357, %v1348
    %v1655 = vpack.c.b16 %v1358, %v1349
    %v1656 = vpack.c.b16 %v1359, %v1350
    %v1657 = vpack.c.b16 %v1360, %v1351
    %v1658 = vpack.c.b16 %v1370, %v1361
    %v1659 = vpack.c.b16 %v1371, %v1362
    %v1660 = vpack.c.b16 %v1372, %v1363
    %v1661 = vpack.c.b16 %v1373, %v1364
    %v1662 = vpack.c.b16 %v1374, %v1365
    %v1663 = vpack.c.b16 %v1375, %v1366
    %v1664 = vpack.c.b16 %v1376, %v1367
    %v1665 = vpack.c.b16 %v1377, %v1368
    %v1666 = vpack.c.b16 %v1378, %v1369
    %v2099 = vunpack.c.l.b16 %v339
    %v2100 = vunpack.c.l.b16 %v340
    %v2101 = vunpack.c.l.b16 %v341
    %v2102 = vunpack.c.l.b16 %v342
    %v2103 = vunpack.c.l.b16 %v343
    %v2104 = vunpack.c.l.b16 %v344
    %v2105 = vunpack.c.l.b16 %v345
    %v2106 = vunpack.c.l.b16 %v346
    %v2107 = vunpack.c.l.b16 %v347
    %v2108 = vunpack.c.l.b16 %v348
    %v2109 = vunpack.c.l.b16 %v349
    %v2110 = vunpack.c.l.b16 %v350
    %v2111 = vunpack.c.l.b16 %v351
    %v2112 = vunpack.c.l.b16 %v352
    %v2113 = vunpack.c.l.b16 %v353
    %v2114 = vunpack.c.l.b16 %v354
    %v2115 = vunpack.c.l.b16 %v355
    %v2116 = vunpack.c.l.b16 %v356
    %v2117 = vunpack.c.l.b16 %v357
    %v2118 = vunpack.c.l.b16 %v358
    %v2119 = vunpack.c.l.b16 %v359
    %v2120 = vunpack.c.l.b16 %v360
    %v2121 = vunpack.c.l.b16 %v361
    %v2122 = vunpack.c.l.b16 %v362
    %v2123 = vunpack.c.l.b16 %v363
    %v2124 = vunpack.c.l.b16 %v364
    %v2125 = vunpack.c.l.b16 %v365
    %v2126 = vunpack.c.l.b16 %v366
    %v2127 = vunpack.c.l.b16 %v367
    %v2128 = vunpack.c.l.b16 %v368
    %v2129 = vunpack.c.l.b16 %v369
    %v2130 = vunpack.c.l.b16 %v370
    %v2131 = vunpack.c.l.b16 %v371
    %v2132 = vunpack.c.l.b16 %v372
    %v2133 = vunpack.c.l.b16 %v373
    %v2134 = vunpack.c.l.b16 %v374
    %v2135 = vunpack.c.l.b16 %v375
    %v2136 = vunpack.c.l.b16 %v376
    %v2137 = vunpack.c.l.b16 %v377
    %v2138 = vunpack.c.l.b16 %v378
    %v2139 = vunpack.c.l.b16 %v379
    %v2140 = vunpack.c.l.b16 %v380
    %v2141 = vunpack.c.l.b16 %v381
    %v2142 = vunpack.c.l.b16 %v382
    %v2143 = vunpack.c.l.b16 %v383
    %v2144 = vunpack.c.l.b16 %v384
    %v2145 = vunpack.c.l.b16 %v385
    %v2146 = vunpack.c.l.b16 %v386
    %v2147 = vunpack.c.l.b16 %v387
    %v2148 = vunpack.c.l.b16 %v388
    %v2149 = vunpack.c.l.b16 %v389
    %v2150 = vunpack.c.l.b16 %v390
    %v2151 = vunpack.c.l.b16 %v391
    %v2152 = vunpack.c.l.b16 %v392
    %v2153 = vunpack.c.l.b16 %v393
    %v2154 = vunpack.c.l.b16 %v394
    %v2155 = vunpack.c.l.b16 %v395
    %v2156 = vunpack.c.l.b16 %v396
    %v2157 = vunpack.c.l.b16 %v397
    %v2158 = vunpack.c.l.b16 %v398
    %v2159 = vunpack.c.l.b16 %v399
    %v2160 = vunpack.c.l.b16 %v400
    %v2161 = vunpack.c.l.b16 %v401
    %v2162 = vunpack.c.l.b16 %v402
    %v2163 = vunpack.c.l.b16 %v403
    %v2164 = vunpack.c.l.b16 %v404
    %v2165 = vunpack.c.l.b16 %v405
    %v2166 = vunpack.c.l.b16 %v406
    %v2167 = vunpack.c.l.b16 %v407
    %v2168 = vunpack.c.l.b16 %v408
    %v2169 = vunpack.c.l.b16 %v409
    %v2170 = vunpack.c.l.b16 %v410
    %v2171 = vunpack.c.l.b16 %v411
    %v2172 = vunpack.c.l.b16 %v412
    %v2173 = vunpack.c.l.b16 %v413
    %v2174 = vunpack.c.l.b16 %v414
    %v2175 = vunpack.c.l.b16 %v415
    %v2176 = vunpack.c.l.b16 %v416
    %v2177 = vunpack.c.l.b16 %v417
    %v2178 = vunpack.c.l.b16 %v418
    %v2179 = vunpack.c.l.b16 %v419
    %v2180 = vunpack.c.l.b16 %v420
    %v2181 = vunpack.c.l.b16 %v421
    %v2182 = vunpack.c.l.b16 %v422
    %v2183 = vunpack.c.l.b16 %v423
    %v2184 = vunpack.c.l.b16 %v424
    %v2185 = vunpack.c.l.b16 %v425
    %v2186 = vunpack.c.l.b16 %v426
    %v2187 = vunpack.c.l.b16 %v427
    %v2188 = vunpack.c.l.b16 %v428
    %v2189 = vunpack.c.l.b16 %v429
    %v2190 = vunpack.c.l.b16 %v430
    %v2191 = vunpack.c.l.b16 %v431
    %v2192 = vunpack.c.l.b16 %v432
    %v2193 = vunpack.c.l.b16 %v433
    %v2194 = vunpack.c.l.b16 %v434
    %v2195 = vunpack.c.l.b16 %v435
    %v2196 = vunpack.c.l.b16 %v436
    %v2197 = vunpack.c.l.b16 %v437
    %v2198 = vunpack.c.l.b16 %v438
    %v2199 = vunpack.c.l.b16 %v439
    %v2200 = vunpack.c.l.b16 %v440
    %v2201 = vunpack.c.l.b16 %v441
    %v2202 = vunpack.c.l.b16 %v442
    %v2203 = vunpack.c.l.b16 %v443
    %v2204 = vunpack.c.l.b16 %v444
    %v2205 = vunpack.c.l.b16 %v445
    %v2206 = vunpack.c.l.b16 %v446
    %v2207 = vunpack.c.l.b16 %v447
    %v2208 = vunpack.c.l.b16 %v448
    %v2209 = vunpack.c.l.b16 %v449
    %v2210 = vunpack.c.l.b16 %v450
    %v2211 = vunpack.c.l.b16 %v451
    %v2212 = vunpack.c.l.b16 %v452
    %v2213 = vunpack.c.l.b16 %v453
    %v2214 = vunpack.c.l.b16 %v454
    %v2215 = vunpack.c.l.b16 %v455
    %v2216 = vunpack.c.l.b16 %v456
    %v2217 = vunpack.c.l.b16 %v457
    %v2218 = vunpack.c.l.b16 %v458
    %v2219 = vunpack.c.l.b16 %v459
    %v2220 = vunpack.c.l.b16 %v460
    %v2221 = vunpack.c.l.b16 %v461
    %v2222 = vunpack.c.l.b16 %v462
    %v2223 = vunpack.c.l.b16 %v463
    %v2224 = vunpack.c.l.b16 %v464
    %v2225 = vunpack.c.l.b16 %v465
    %v2226 = vunpack.c.l.b16 %v466
    %v2227 = vunpack.c.l.b16 %v467
    %v2228 = vunpack.c.l.b16 %v468
    %v2229 = vunpack.c.l.b16 %v469
    %v2230 = vunpack.c.l.b16 %v470
    %v2231 = vunpack.c.l.b16 %v471
    %v2232 = vunpack.c.l.b16 %v472
    %v2233 = vunpack.c.l.b16 %v473
    %v2234 = vunpack.c.l.b16 %v474
    %v2235 = vunpack.c.l.b16 %v475
    %v2236 = vunpack.c.l.b16 %v476
    %v2237 = vunpack.c.l.b16 %v477
    %v2238 = vunpack.c.l.b16 %v478
    %v2239 = vunpack.c.l.b16 %v479
    %v2240 = vunpack.c.l.b16 %v480
    %v2241 = vunpack.c.l.b16 %v481
    %v2242 = vunpack.c.l.b16 %v482
    %v2243 = vpack.c.b16 %v2100, %v2099
    %v2244 = vpack.c.b16 %v2102, %v2101
    %v2245 = vpack.c.b16 %v2104, %v2103
    %v2246 = vpack.c.b16 %v2106, %v2105
    %v2247 = vpack.c.b16 %v2108, %v2107
    %v2248 = vpack.c.b16 %v2110, %v2109
    %v2249 = vpack.c.b16 %v2112, %v2111
    %v2250 = vpack.c.b16 %v2114, %v2113
    %v2251 = vpack.c.b16 %v2116, %v2115
    %v2252 = vpack.c.b16 %v2118, %v2117
    %v2253 = vpack.c.b16 %v2120, %v2119
    %v2254 = vpack.c.b16 %v2122, %v2121
    %v2255 = vpack.c.b16 %v2124, %v2123
    %v2256 = vpack.c.b16 %v2126, %v2125
    %v2257 = vpack.c.b16 %v2128, %v2127
    %v2258 = vpack.c.b16 %v2130, %v2129
    %v2259 = vpack.c.b16 %v2132, %v2131
    %v2260 = vpack.c.b16 %v2134, %v2133
    %v2261 = vpack.c.b16 %v2136, %v2135
    %v2262 = vpack.c.b16 %v2138, %v2137
    %v2263 = vpack.c.b16 %v2140, %v2139
    %v2264 = vpack.c.b16 %v2142, %v2141
    %v2265 = vpack.c.b16 %v2144, %v2143
    %v2266 = vpack.c.b16 %v2146, %v2145
    %v2267 = vpack.c.b16 %v2148, %v2147
    %v2268 = vpack.c.b16 %v2150, %v2149
    %v2269 = vpack.c.b16 %v2152, %v2151
    %v2270 = vpack.c.b16 %v2154, %v2153
    %v2271 = vpack.c.b16 %v2156, %v2155
    %v2272 = vpack.c.b16 %v2158, %v2157
    %v2273 = vpack.c.b16 %v2160, %v2159
    %v2274 = vpack.c.b16 %v2162, %v2161
    %v2275 = vpack.c.b16 %v2164, %v2163
    %v2276 = vpack.c.b16 %v2166, %v2165
    %v2277 = vpack.c.b16 %v2168, %v2167
    %v2278 = vpack.c.b16 %v2170, %v2169
    %v2279 = vpack.c.b16 %v2172, %v2171
    %v2280 = vpack.c.b16 %v2174, %v2173
    %v2281 = vpack.c.b16 %v2176, %v2175
    %v2282 = vpack.c.b16 %v2178, %v2177
    %v2283 = vpack.c.b16 %v2180, %v2179
    %v2284 = vpack.c.b16 %v2182, %v2181
    %v2285 = vpack.c.b16 %v2184, %v2183
    %v2286 = vpack.c.b16 %v2186, %v2185
    %v2287 = vpack.c.b16 %v2188, %v2187
    %v2288 = vpack.c.b16 %v2190, %v2189
    %v2289 = vpack.c.b16 %v2192, %v2191
    %v2290 = vpack.c.b16 %v2194, %v2193
    %v2291 = vpack.c.b16 %v2196, %v2195
    %v2292 = vpack.c.b16 %v2198, %v2197
    %v2293 = vpack.c.b16 %v2200, %v2199
    %v2294 = vpack.c.b16 %v2202, %v2201
    %v2295 = vpack.c.b16 %v2204, %v2203
    %v2296 = vpack.c.b16 %v2206, %v2205
    %v2297 = vpack.c.b16 %v2208, %v2207
    %v2298 = vpack.c.b16 %v2210, %v2209
    %v2299 = vpack.c.b16 %v2212, %v2211
    %v2300 = vpack.c.b16 %v2214, %v2213
    %v2301 = vpack.c.b16 %v2216, %v2215
    %v2302 = vpack.c.b16 %v2218, %v2217
    %v2303 = vpack.c.b16 %v2220, %v2219
    %v2304 = vpack.c.b16 %v2222, %v2221
    %v2305 = vpack.c.b16 %v2224, %v2223
    %v2306 = vpack.c.b16 %v2226, %v2225
    %v2307 = vpack.c.b16 %v2228, %v2227
    %v2308 = vpack.c.b16 %v2230, %v2229
    %v2309 = vpack.c.b16 %v2232, %v2231
    %v2310 = vpack.c.b16 %v2234, %v2233
    %v2311 = vpack.c.b16 %v2236, %v2235
    %v2312 = vpack.c.b16 %v2238, %v2237
    %v2313 = vpack.c.b16 %v2240, %v2239
    %v2314 = vpack.c.b16 %v2242, %v2241
    %2387 = vmatprep.subr.bf16.mxu0 0
    %2388 = vmatpush1.bf16.msra.mxu0 %v2243
    %2389 = vmatprep.subr.bf16.mxu0 0
    %2390 = vmatpush1.bf16.msra.mxu0 %v2244
    %2391 = vmatprep.subr.bf16.mxu0 0
    %2392 = vmatpush1.bf16.msra.mxu0 %v2245
    %2393 = vmatprep.subr.bf16.mxu0 0
    %2394 = vmatpush1.bf16.msra.mxu0 %v2246
    %2395 = vmatprep.subr.bf16.mxu0 0
    %2396 = vmatpush1.bf16.msra.mxu0 %v2247
    %2397 = vmatprep.subr.bf16.mxu0 0
    %2398 = vmatpush1.bf16.msra.mxu0 %v2248
    %2399 = vmatprep.subr.bf16.mxu0 0
    %2400 = vmatpush1.bf16.msra.mxu0 %v2249
    %2401 = vmatprep.subr.bf16.mxu0 0
    %2402 = vmatpush1.bf16.msra.mxu0 %v2250
    %2403 = vmatprep.subr.bf16.mxu0 0
    %2404 = vmatpush1.bf16.msra.mxu0 %v2251
    %2405 = vmatprep.subr.bf16.mxu0 0
    %2406 = vmatpush1.bf16.msra.mxu0 %v2252
    %2407 = vmatprep.subr.bf16.mxu0 0
    %2408 = vmatpush1.bf16.msra.mxu0 %v2253
    %2409 = vmatprep.subr.bf16.mxu0 0
    %2410 = vmatpush1.bf16.msra.mxu0 %v2254
    %2411 = vmatprep.subr.bf16.mxu0 0
    %2412 = vmatpush1.bf16.msra.mxu0 %v2255
    %2413 = vmatprep.subr.bf16.mxu0 0
    %2414 = vmatpush1.bf16.msra.mxu0 %v2256
    %2415 = vmatprep.subr.bf16.mxu0 0
    %2416 = vmatpush1.bf16.msra.mxu0 %v2257
    %2417 = vmatprep.subr.bf16.mxu0 0
    %2418 = vmatpush1.bf16.msra.mxu0 %v2258
    %2419 = vmatprep.mubr.bf16.mxu0 %v1380
    %2420 = vmatmul.mubr.bf16.gmra.mrb[0].mxu0 %v1379
    %v2421 = vpop.f32.mrb[0].mxu0
    %v2422 = vadd.f32 0.0, %v2421
    %v2423 = vpop.f32.mrb[0].mxu0
    %v2424 = vpop.f32.mrb[0].mxu0
    %v2425 = vadd.f32 0.0, %v2424
    %v2426 = vpop.f32.mrb[0].mxu0
    %2427 = vmatprep.mubr.bf16.mxu0 %v1389
    %2428 = vmatmul.mubr.bf16.gmra.mrb[0].mxu0 %v1388
    %v2429 = vpop.f32.mrb[0].mxu0
    %v2430 = vadd.f32 0.0, %v2429
    %v2431 = vpop.f32.mrb[0].mxu0
    %v2432 = vpop.f32.mrb[0].mxu0
    %v2433 = vadd.f32 0.0, %v2432
    %v2434 = vpop.f32.mrb[0].mxu0
    %2435 = vmatprep.mubr.bf16.mxu0 %v1398
    %2436 = vmatmul.mubr.bf16.gmra.mrb[0].mxu0 %v1397
    %v2437 = vpop.f32.mrb[0].mxu0
    %v2438 = vadd.f32 0.0, %v2437
    %v2439 = vpop.f32.mrb[0].mxu0
    %v2440 = vpop.f32.mrb[0].mxu0
    %v2441 = vadd.f32 0.0, %v2440
    %v2442 = vpop.f32.mrb[0].mxu0
    %2443 = vmatprep.mubr.bf16.mxu0 %v1407
    %2444 = vmatmul.mubr.bf16.gmra.mrb[0].mxu0 %v1406
    %v2445 = vpop.f32.mrb[0].mxu0
    %v2446 = vadd.f32 0.0, %v2445
    %v2447 = vpop.f32.mrb[0].mxu0
    %v2448 = vpop.f32.mrb[0].mxu0
    %v2449 = vadd.f32 0.0, %v2448
    %v2450 = vpop.f32.mrb[0].mxu0
    %2451 = vmatprep.mubr.bf16.mxu0 %v1416
    %2452 = vmatmul.mubr.bf16.gmra.mrb[0].mxu0 %v1415
    %v2453 = vpop.f32.mrb[0].mxu0
    %v2454 = vadd.f32 0.0, %v2453
    %v2455 = vpop.f32.mrb[0].mxu0
    %v2456 = vpop.f32.mrb[0].mxu0
    %v2457 = vadd.f32 0.0, %v2456
    %v2458 = vpop.f32.mrb[0].mxu0
    %2459 = vmatprep.mubr.bf16.mxu0 %v1425
    %2460 = vmatmul.mubr.bf16.gmra.mrb[0].mxu0 %v1424
    %v2461 = vpop.f32.mrb[0].mxu0
    %v2462 = vadd.f32 0.0, %v2461
    %v2463 = vpop.f32.mrb[0].mxu0
    %v2464 = vpop.f32.mrb[0].mxu0
    %v2465 = vadd.f32 0.0, %v2464
    %v2466 = vpop.f32.mrb[0].mxu0
    %2467 = vmatprep.mubr.bf16.mxu0 %v1434
    %2468 = vmatmul.mubr.bf16.gmra.mrb[0].mxu0 %v1433
    %v2469 = vpop.f32.mrb[0].mxu0
    %v2470 = vadd.f32 0.0, %v2469
    %v2471 = vpop.f32.mrb[0].mxu0
    %v2472 = vpop.f32.mrb[0].mxu0
    %v2473 = vadd.f32 0.0, %v2472
    %v2474 = vpop.f32.mrb[0].mxu0
    %2475 = vmatprep.mubr.bf16.mxu0 %v1443
    %2476 = vmatmul.mubr.bf16.gmra.mrb[0].mxu0 %v1442
    %v2477 = vpop.f32.mrb[0].mxu0
    %v2478 = vadd.f32 0.0, %v2477
    %v2479 = vpop.f32.mrb[0].mxu0
    %v2480 = vpop.f32.mrb[0].mxu0
    %v2481 = vadd.f32 0.0, %v2480
    %v2482 = vpop.f32.mrb[0].mxu0
    %2483 = vmatprep.mubr.bf16.mxu0 %v1452
    %2484 = vmatmul.mubr.bf16.gmra.mrb[0].mxu0 %v1451
    %v2485 = vpop.f32.mrb[0].mxu0
    %v2486 = vadd.f32 0.0, %v2485
    %v2487 = vpop.f32.mrb[0].mxu0
    %v2488 = vpop.f32.mrb[0].mxu0
    %v2489 = vadd.f32 0.0, %v2488
    %v2490 = vpop.f32.mrb[0].mxu0
    %2491 = vmatprep.mubr.bf16.mxu0 %v1461
    %2492 = vmatmul.mubr.bf16.gmra.mrb[0].mxu0 %v1460
    %v2493 = vpop.f32.mrb[0].mxu0
    %v2494 = vadd.f32 0.0, %v2493
    %v2495 = vpop.f32.mrb[0].mxu0
    %v2496 = vpop.f32.mrb[0].mxu0
    %v2497 = vadd.f32 0.0, %v2496
    %v2498 = vpop.f32.mrb[0].mxu0
    %2499 = vmatprep.mubr.bf16.mxu0 %v1470
    %2500 = vmatmul.mubr.bf16.gmra.mrb[0].mxu0 %v1469
    %v2501 = vpop.f32.mrb[0].mxu0
    %v2502 = vadd.f32 0.0, %v2501
    %v2503 = vpop.f32.mrb[0].mxu0
    %v2504 = vpop.f32.mrb[0].mxu0
    %v2505 = vadd.f32 0.0, %v2504
    %v2506 = vpop.f32.mrb[0].mxu0
    %2507 = vmatprep.mubr.bf16.mxu0 %v1479
    %2508 = vmatmul.mubr.bf16.gmra.mrb[0].mxu0 %v1478
    %v2509 = vpop.f32.mrb[0].mxu0
    %v2510 = vadd.f32 0.0, %v2509
    %v2511 = vpop.f32.mrb[0].mxu0
    %v2512 = vpop.f32.mrb[0].mxu0
    %v2513 = vadd.f32 0.0, %v2512
    %v2514 = vpop.f32.mrb[0].mxu0
    %2515 = vmatprep.mubr.bf16.mxu0 %v1488
    %2516 = vmatmul.mubr.bf16.gmra.mrb[0].mxu0 %v1487
    %v2517 = vpop.f32.mrb[0].mxu0
    %v2518 = vadd.f32 0.0, %v2517
    %v2519 = vpop.f32.mrb[0].mxu0
    %v2520 = vpop.f32.mrb[0].mxu0
    %v2521 = vadd.f32 0.0, %v2520
    %v2522 = vpop.f32.mrb[0].mxu0
    %2523 = vmatprep.mubr.bf16.mxu0 %v1497
    %2524 = vmatmul.mubr.bf16.gmra.mrb[0].mxu0 %v1496
    %v2525 = vpop.f32.mrb[0].mxu0
    %v2526 = vadd.f32 0.0, %v2525
    %v2527 = vpop.f32.mrb[0].mxu0
    %v2528 = vpop.f32.mrb[0].mxu0
    %v2529 = vadd.f32 0.0, %v2528
    %v2530 = vpop.f32.mrb[0].mxu0
    %2531 = vmatprep.mubr.bf16.mxu0 %v1506
    %2532 = vmatmul.mubr.bf16.gmra.mrb[0].mxu0 %v1505
    %v2533 = vpop.f32.mrb[0].mxu0
    %v2534 = vadd.f32 0.0, %v2533
    %v2535 = vpop.f32.mrb[0].mxu0
    %v2536 = vpop.f32.mrb[0].mxu0
    %v2537 = vadd.f32 0.0, %v2536
    %v2538 = vpop.f32.mrb[0].mxu0
    %2539 = vmatprep.mubr.bf16.mxu0 %v1515
    %2540 = vmatmul.mubr.bf16.gmra.mrb[0].mxu0 %v1514
    %v2541 = vpop.f32.mrb[0].mxu0
    %v2542 = vadd.f32 0.0, %v2541
    %v2543 = vpop.f32.mrb[0].mxu0
    %v2544 = vpop.f32.mrb[0].mxu0
    %v2545 = vadd.f32 0.0, %v2544
    %v2546 = vpop.f32.mrb[0].mxu0
    %2547 = vmatprep.mubr.bf16.mxu0 %v1524
    %2548 = vmatmul.mubr.bf16.gmra.mrb[0].mxu0 %v1523
    %v2549 = vpop.f32.mrb[0].mxu0
    %v2550 = vadd.f32 0.0, %v2549
    %v2551 = vpop.f32.mrb[0].mxu0
    %v2552 = vpop.f32.mrb[0].mxu0
    %v2553 = vadd.f32 0.0, %v2552
    %v2554 = vpop.f32.mrb[0].mxu0
    %2555 = vmatprep.mubr.bf16.mxu0 %v1533
    %2556 = vmatmul.mubr.bf16.gmra.mrb[0].mxu0 %v1532
    %v2557 = vpop.f32.mrb[0].mxu0
    %v2558 = vadd.f32 0.0, %v2557
    %v2559 = vpop.f32.mrb[0].mxu0
    %v2560 = vpop.f32.mrb[0].mxu0
    %v2561 = vadd.f32 0.0, %v2560
    %v2562 = vpop.f32.mrb[0].mxu0
    %2563 = vmatprep.mubr.bf16.mxu0 %v1542
    %2564 = vmatmul.mubr.bf16.gmra.mrb[0].mxu0 %v1541
    %v2565 = vpop.f32.mrb[0].mxu0
    %v2566 = vadd.f32 0.0, %v2565
    %v2567 = vpop.f32.mrb[0].mxu0
    %v2568 = vpop.f32.mrb[0].mxu0
    %v2569 = vadd.f32 0.0, %v2568
    %v2570 = vpop.f32.mrb[0].mxu0
    %2571 = vmatprep.mubr.bf16.mxu0 %v1551
    %2572 = vmatmul.mubr.bf16.gmra.mrb[0].mxu0 %v1550
    %v2573 = vpop.f32.mrb[0].mxu0
    %v2574 = vadd.f32 0.0, %v2573
    %v2575 = vpop.f32.mrb[0].mxu0
    %v2576 = vpop.f32.mrb[0].mxu0
    %v2577 = vadd.f32 0.0, %v2576
    %v2578 = vpop.f32.mrb[0].mxu0
    %2579 = vmatprep.mubr.bf16.mxu0 %v1560
    %2580 = vmatmul.mubr.bf16.gmra.mrb[0].mxu0 %v1559
    %v2581 = vpop.f32.mrb[0].mxu0
    %v2582 = vadd.f32 0.0, %v2581
    %v2583 = vpop.f32.mrb[0].mxu0
    %v2584 = vpop.f32.mrb[0].mxu0
    %v2585 = vadd.f32 0.0, %v2584
    %v2586 = vpop.f32.mrb[0].mxu0
    %2587 = vmatprep.mubr.bf16.mxu0 %v1569
    %2588 = vmatmul.mubr.bf16.gmra.mrb[0].mxu0 %v1568
    %v2589 = vpop.f32.mrb[0].mxu0
    %v2590 = vadd.f32 0.0, %v2589
    %v2591 = vpop.f32.mrb[0].mxu0
    %v2592 = vpop.f32.mrb[0].mxu0
    %v2593 = vadd.f32 0.0, %v2592
    %v2594 = vpop.f32.mrb[0].mxu0
    %2595 = vmatprep.mubr.bf16.mxu0 %v1578
    %2596 = vmatmul.mubr.bf16.gmra.mrb[0].mxu0 %v1577
    %v2597 = vpop.f32.mrb[0].mxu0
    %v2598 = vadd.f32 0.0, %v2597
    %v2599 = vpop.f32.mrb[0].mxu0
    %v2600 = vpop.f32.mrb[0].mxu0
    %v2601 = vadd.f32 0.0, %v2600
    %v2602 = vpop.f32.mrb[0].mxu0
    %2603 = vmatprep.mubr.bf16.mxu0 %v1587
    %2604 = vmatmul.mubr.bf16.gmra.mrb[0].mxu0 %v1586
    %v2605 = vpop.f32.mrb[0].mxu0
    %v2606 = vadd.f32 0.0, %v2605
    %v2607 = vpop.f32.mrb[0].mxu0
    %v2608 = vpop.f32.mrb[0].mxu0
    %v2609 = vadd.f32 0.0, %v2608
    %v2610 = vpop.f32.mrb[0].mxu0
    %2611 = vmatprep.mubr.bf16.mxu0 %v1596
    %2612 = vmatmul.mubr.bf16.gmra.mrb[0].mxu0 %v1595
    %v2613 = vpop.f32.mrb[0].mxu0
    %v2614 = vadd.f32 0.0, %v2613
    %v2615 = vpop.f32.mrb[0].mxu0
    %v2616 = vpop.f32.mrb[0].mxu0
    %v2617 = vadd.f32 0.0, %v2616
    %v2618 = vpop.f32.mrb[0].mxu0
    %2619 = vmatprep.mubr.bf16.mxu0 %v1605
    %2620 = vmatmul.mubr.bf16.gmra.mrb[0].mxu0 %v1604
    %v2621 = vpop.f32.mrb[0].mxu0
    %v2622 = vadd.f32 0.0, %v2621
    %v2623 = vpop.f32.mrb[0].mxu0
    %v2624 = vpop.f32.mrb[0].mxu0
    %v2625 = vadd.f32 0.0, %v2624
    %v2626 = vpop.f32.mrb[0].mxu0
    %2627 = vmatprep.mubr.bf16.mxu0 %v1614
    %2628 = vmatmul.mubr.bf16.gmra.mrb[0].mxu0 %v1613
    %v2629 = vpop.f32.mrb[0].mxu0
    %v2630 = vadd.f32 0.0, %v2629
    %v2631 = vpop.f32.mrb[0].mxu0
    %v2632 = vpop.f32.mrb[0].mxu0
    %v2633 = vadd.f32 0.0, %v2632
    %v2634 = vpop.f32.mrb[0].mxu0
    %2635 = vmatprep.mubr.bf16.mxu0 %v1623
    %2636 = vmatmul.mubr.bf16.gmra.mrb[0].mxu0 %v1622
    %v2637 = vpop.f32.mrb[0].mxu0
    %v2638 = vadd.f32 0.0, %v2637
    %v2639 = vpop.f32.mrb[0].mxu0
    %v2640 = vpop.f32.mrb[0].mxu0
    %v2641 = vadd.f32 0.0, %v2640
    %v2642 = vpop.f32.mrb[0].mxu0
    %2643 = vmatprep.mubr.bf16.mxu0 %v1632
    %2644 = vmatmul.mubr.bf16.gmra.mrb[0].mxu0 %v1631
    %v2645 = vpop.f32.mrb[0].mxu0
    %v2646 = vadd.f32 0.0, %v2645
    %v2647 = vpop.f32.mrb[0].mxu0
    %v2648 = vpop.f32.mrb[0].mxu0
    %v2649 = vadd.f32 0.0, %v2648
    %v2650 = vpop.f32.mrb[0].mxu0
    %2651 = vmatprep.mubr.bf16.mxu0 %v1641
    %2652 = vmatmul.mubr.bf16.gmra.mrb[0].mxu0 %v1640
    %v2653 = vpop.f32.mrb[0].mxu0
    %v2654 = vadd.f32 0.0, %v2653
    %v2655 = vpop.f32.mrb[0].mxu0
    %v2656 = vpop.f32.mrb[0].mxu0
    %v2657 = vadd.f32 0.0, %v2656
    %v2658 = vpop.f32.mrb[0].mxu0
    %2659 = vmatprep.mubr.bf16.mxu0 %v1650
    %2660 = vmatmul.mubr.bf16.gmra.mrb[0].mxu0 %v1649
    %v2661 = vpop.f32.mrb[0].mxu0
    %v2662 = vadd.f32 0.0, %v2661
    %v2663 = vpop.f32.mrb[0].mxu0
    %v2664 = vpop.f32.mrb[0].mxu0
    %v2665 = vadd.f32 0.0, %v2664
    %v2666 = vpop.f32.mrb[0].mxu0
    %2667 = vmatprep.mubr.bf16.mxu0 %v1659
    %2668 = vmatmul.mubr.bf16.gmra.mrb[0].mxu0 %v1658
    %v2669 = vpop.f32.mrb[0].mxu0
    %v2670 = vadd.f32 0.0, %v2669
    %v2671 = vpop.f32.mrb[0].mxu0
    %v2672 = vpop.f32.mrb[0].mxu0
    %v2673 = vadd.f32 0.0, %v2672
    %v2674 = vpop.f32.mrb[0].mxu0
    %2675 = vdwg.mxu0
    %2676 = vmatprep.subr.bf16.mxu0 0
    %2677 = vmatpush1.bf16.msra.mxu0 %v2259
    %2678 = vmatprep.subr.bf16.mxu0 0
    %2679 = vmatpush1.bf16.msra.mxu0 %v2260
    %2680 = vmatprep.subr.bf16.mxu0 0
    %2681 = vmatpush1.bf16.msra.mxu0 %v2261
    %2682 = vmatprep.subr.bf16.mxu0 0
    %2683 = vmatpush1.bf16.msra.mxu0 %v2262
    %2684 = vmatprep.subr.bf16.mxu0 0
    %2685 = vmatpush1.bf16.msra.mxu0 %v2263
    %2686 = vmatprep.subr.bf16.mxu0 0
    %2687 = vmatpush1.bf16.msra.mxu0 %v2264
    %2688 = vmatprep.subr.bf16.mxu0 0
    %2689 = vmatpush1.bf16.msra.mxu0 %v2265
    %2690 = vmatprep.subr.bf16.mxu0 0
    %2691 = vmatpush1.bf16.msra.mxu0 %v2266
    %2692 = vmatprep.subr.bf16.mxu0 0
    %2693 = vmatpush1.bf16.msra.mxu0 %v2267
    %2694 = vmatprep.subr.bf16.mxu0 0
    %2695 = vmatpush1.bf16.msra.mxu0 %v2268
    %2696 = vmatprep.subr.bf16.mxu0 0
    %2697 = vmatpush1.bf16.msra.mxu0 %v2269
    %2698 = vmatprep.subr.bf16.mxu0 0
    %2699 = vmatpush1.bf16.msra.mxu0 %v2270
    %2700 = vmatprep.subr.bf16.mxu0 0
    %2701 = vmatpush1.bf16.msra.mxu0 %v2271
    %2702 = vmatprep.subr.bf16.mxu0 0
    %2703 = vmatpush1.bf16.msra.mxu0 %v2272
    %2704 = vmatprep.subr.bf16.mxu0 0
    %2705 = vmatpush1.bf16.msra.mxu0 %v2273
    %2706 = vmatprep.subr.bf16.mxu0 0
    %2707 = vmatpush1.bf16.msra.mxu0 %v2274
    %2708 = vmatprep.mubr.bf16.mxu0 %v1382
    %2709 = vmatmul.mubr.bf16.gmra.mrb[0].mxu0 %v1381
    %v2710 = vpop.f32.mrb[0].mxu0
    %v2711 = vadd.f32 %v2422, %v2710
    %v2712 = vpop.f32.mrb[0].mxu0
    %v2713 = vpop.f32.mrb[0].mxu0
    %v2714 = vadd.f32 %v2425, %v2713
    %v2715 = vpop.f32.mrb[0].mxu0
    %2716 = vmatprep.mubr.bf16.mxu0 %v1391
    %2717 = vmatmul.mubr.bf16.gmra.mrb[0].mxu0 %v1390
    %v2718 = vpop.f32.mrb[0].mxu0
    %v2719 = vadd.f32 %v2430, %v2718
    %v2720 = vpop.f32.mrb[0].mxu0
    %v2721 = vpop.f32.mrb[0].mxu0
    %v2722 = vadd.f32 %v2433, %v2721
    %v2723 = vpop.f32.mrb[0].mxu0
    %2724 = vmatprep.mubr.bf16.mxu0 %v1400
    %2725 = vmatmul.mubr.bf16.gmra.mrb[0].mxu0 %v1399
    %v2726 = vpop.f32.mrb[0].mxu0
    %v2727 = vadd.f32 %v2438, %v2726
    %v2728 = vpop.f32.mrb[0].mxu0
    %v2729 = vpop.f32.mrb[0].mxu0
    %v2730 = vadd.f32 %v2441, %v2729
    %v2731 = vpop.f32.mrb[0].mxu0
    %2732 = vmatprep.mubr.bf16.mxu0 %v1409
    %2733 = vmatmul.mubr.bf16.gmra.mrb[0].mxu0 %v1408
    %v2734 = vpop.f32.mrb[0].mxu0
    %v2735 = vadd.f32 %v2446, %v2734
    %v2736 = vpop.f32.mrb[0].mxu0
    %v2737 = vpop.f32.mrb[0].mxu0
    %v2738 = vadd.f32 %v2449, %v2737
    %v2739 = vpop.f32.mrb[0].mxu0
    %2740 = vmatprep.mubr.bf16.mxu0 %v1418
    %2741 = vmatmul.mubr.bf16.gmra.mrb[0].mxu0 %v1417
    %v2742 = vpop.f32.mrb[0].mxu0
    %v2743 = vadd.f32 %v2454, %v2742
    %v2744 = vpop.f32.mrb[0].mxu0
    %v2745 = vpop.f32.mrb[0].mxu0
    %v2746 = vadd.f32 %v2457, %v2745
    %v2747 = vpop.f32.mrb[0].mxu0
    %2748 = vmatprep.mubr.bf16.mxu0 %v1427
    %2749 = vmatmul.mubr.bf16.gmra.mrb[0].mxu0 %v1426
    %v2750 = vpop.f32.mrb[0].mxu0
    %v2751 = vadd.f32 %v2462, %v2750
    %v2752 = vpop.f32.mrb[0].mxu0
    %v2753 = vpop.f32.mrb[0].mxu0
    %v2754 = vadd.f32 %v2465, %v2753
    %v2755 = vpop.f32.mrb[0].mxu0
    %2756 = vmatprep.mubr.bf16.mxu0 %v1436
    %2757 = vmatmul.mubr.bf16.gmra.mrb[0].mxu0 %v1435
    %v2758 = vpop.f32.mrb[0].mxu0
    %v2759 = vadd.f32 %v2470, %v2758
    %v2760 = vpop.f32.mrb[0].mxu0
    %v2761 = vpop.f32.mrb[0].mxu0
    %v2762 = vadd.f32 %v2473, %v2761
    %v2763 = vpop.f32.mrb[0].mxu0
    %2764 = vmatprep.mubr.bf16.mxu0 %v1445
    %2765 = vmatmul.mubr.bf16.gmra.mrb[0].mxu0 %v1444
    %v2766 = vpop.f32.mrb[0].mxu0
    %v2767 = vadd.f32 %v2478, %v2766
    %v2768 = vpop.f32.mrb[0].mxu0
    %v2769 = vpop.f32.mrb[0].mxu0
    %v2770 = vadd.f32 %v2481, %v2769
    %v2771 = vpop.f32.mrb[0].mxu0
    %2772 = vmatprep.mubr.bf16.mxu0 %v1454
    %2773 = vmatmul.mubr.bf16.gmra.mrb[0].mxu0 %v1453
    %v2774 = vpop.f32.mrb[0].mxu0
    %v2775 = vadd.f32 %v2486, %v2774
    %v2776 = vpop.f32.mrb[0].mxu0
    %v2777 = vpop.f32.mrb[0].mxu0
    %v2778 = vadd.f32 %v2489, %v2777
    %v2779 = vpop.f32.mrb[0].mxu0
    %2780 = vmatprep.mubr.bf16.mxu0 %v1463
    %2781 = vmatmul.mubr.bf16.gmra.mrb[0].mxu0 %v1462
    %v2782 = vpop.f32.mrb[0].mxu0
    %v2783 = vadd.f32 %v2494, %v2782
    %v2784 = vpop.f32.mrb[0].mxu0
    %v2785 = vpop.f32.mrb[0].mxu0
    %v2786 = vadd.f32 %v2497, %v2785
    %v2787 = vpop.f32.mrb[0].mxu0
    %2788 = vmatprep.mubr.bf16.mxu0 %v1472
    %2789 = vmatmul.mubr.bf16.gmra.mrb[0].mxu0 %v1471
    %v2790 = vpop.f32.mrb[0].mxu0
    %v2791 = vadd.f32 %v2502, %v2790
    %v2792 = vpop.f32.mrb[0].mxu0
    %v2793 = vpop.f32.mrb[0].mxu0
    %v2794 = vadd.f32 %v2505, %v2793
    %v2795 = vpop.f32.mrb[0].mxu0
    %2796 = vmatprep.mubr.bf16.mxu0 %v1481
    %2797 = vmatmul.mubr.bf16.gmra.mrb[0].mxu0 %v1480
    %v2798 = vpop.f32.mrb[0].mxu0
    %v2799 = vadd.f32 %v2510, %v2798
    %v2800 = vpop.f32.mrb[0].mxu0
    %v2801 = vpop.f32.mrb[0].mxu0
    %v2802 = vadd.f32 %v2513, %v2801
    %v2803 = vpop.f32.mrb[0].mxu0
    %2804 = vmatprep.mubr.bf16.mxu0 %v1490
    %2805 = vmatmul.mubr.bf16.gmra.mrb[0].mxu0 %v1489
    %v2806 = vpop.f32.mrb[0].mxu0
    %v2807 = vadd.f32 %v2518, %v2806
    %v2808 = vpop.f32.mrb[0].mxu0
    %v2809 = vpop.f32.mrb[0].mxu0
    %v2810 = vadd.f32 %v2521, %v2809
    %v2811 = vpop.f32.mrb[0].mxu0
    %2812 = vmatprep.mubr.bf16.mxu0 %v1499
    %2813 = vmatmul.mubr.bf16.gmra.mrb[0].mxu0 %v1498
    %v2814 = vpop.f32.mrb[0].mxu0
    %v2815 = vadd.f32 %v2526, %v2814
    %v2816 = vpop.f32.mrb[0].mxu0
    %v2817 = vpop.f32.mrb[0].mxu0
    %v2818 = vadd.f32 %v2529, %v2817
    %v2819 = vpop.f32.mrb[0].mxu0
    %2820 = vmatprep.mubr.bf16.mxu0 %v1508
    %2821 = vmatmul.mubr.bf16.gmra.mrb[0].mxu0 %v1507
    %v2822 = vpop.f32.mrb[0].mxu0
    %v2823 = vadd.f32 %v2534, %v2822
    %v2824 = vpop.f32.mrb[0].mxu0
    %v2825 = vpop.f32.mrb[0].mxu0
    %v2826 = vadd.f32 %v2537, %v2825
    %v2827 = vpop.f32.mrb[0].mxu0
    %2828 = vmatprep.mubr.bf16.mxu0 %v1517
    %2829 = vmatmul.mubr.bf16.gmra.mrb[0].mxu0 %v1516
    %v2830 = vpop.f32.mrb[0].mxu0
    %v2831 = vadd.f32 %v2542, %v2830
    %v2832 = vpop.f32.mrb[0].mxu0
    %v2833 = vpop.f32.mrb[0].mxu0
    %v2834 = vadd.f32 %v2545, %v2833
    %v2835 = vpop.f32.mrb[0].mxu0
    %2836 = vmatprep.mubr.bf16.mxu0 %v1526
    %2837 = vmatmul.mubr.bf16.gmra.mrb[0].mxu0 %v1525
    %v2838 = vpop.f32.mrb[0].mxu0
    %v2839 = vadd.f32 %v2550, %v2838
    %v2840 = vpop.f32.mrb[0].mxu0
    %v2841 = vpop.f32.mrb[0].mxu0
    %v2842 = vadd.f32 %v2553, %v2841
    %v2843 = vpop.f32.mrb[0].mxu0
    %2844 = vmatprep.mubr.bf16.mxu0 %v1535
    %2845 = vmatmul.mubr.bf16.gmra.mrb[0].mxu0 %v1534
    %v2846 = vpop.f32.mrb[0].mxu0
    %v2847 = vadd.f32 %v2558, %v2846
    %v2848 = vpop.f32.mrb[0].mxu0
    %v2849 = vpop.f32.mrb[0].mxu0
    %v2850 = vadd.f32 %v2561, %v2849
    %v2851 = vpop.f32.mrb[0].mxu0
    %2852 = vmatprep.mubr.bf16.mxu0 %v1544
    %2853 = vmatmul.mubr.bf16.gmra.mrb[0].mxu0 %v1543
    %v2854 = vpop.f32.mrb[0].mxu0
    %v2855 = vadd.f32 %v2566, %v2854
    %v2856 = vpop.f32.mrb[0].mxu0
    %v2857 = vpop.f32.mrb[0].mxu0
    %v2858 = vadd.f32 %v2569, %v2857
    %v2859 = vpop.f32.mrb[0].mxu0
    %2860 = vmatprep.mubr.bf16.mxu0 %v1553
    %2861 = vmatmul.mubr.bf16.gmra.mrb[0].mxu0 %v1552
    %v2862 = vpop.f32.mrb[0].mxu0
    %v2863 = vadd.f32 %v2574, %v2862
    %v2864 = vpop.f32.mrb[0].mxu0
    %v2865 = vpop.f32.mrb[0].mxu0
    %v2866 = vadd.f32 %v2577, %v2865
    %v2867 = vpop.f32.mrb[0].mxu0
    %2868 = vmatprep.mubr.bf16.mxu0 %v1562
    %2869 = vmatmul.mubr.bf16.gmra.mrb[0].mxu0 %v1561
    %v2870 = vpop.f32.mrb[0].mxu0
    %v2871 = vadd.f32 %v2582, %v2870
    %v2872 = vpop.f32.mrb[0].mxu0
    %v2873 = vpop.f32.mrb[0].mxu0
    %v2874 = vadd.f32 %v2585, %v2873
    %v2875 = vpop.f32.mrb[0].mxu0
    %2876 = vmatprep.mubr.bf16.mxu0 %v1571
    %2877 = vmatmul.mubr.bf16.gmra.mrb[0].mxu0 %v1570
    %v2878 = vpop.f32.mrb[0].mxu0
    %v2879 = vadd.f32 %v2590, %v2878
    %v2880 = vpop.f32.mrb[0].mxu0
    %v2881 = vpop.f32.mrb[0].mxu0
    %v2882 = vadd.f32 %v2593, %v2881
    %v2883 = vpop.f32.mrb[0].mxu0
    %2884 = vmatprep.mubr.bf16.mxu0 %v1580
    %2885 = vmatmul.mubr.bf16.gmra.mrb[0].mxu0 %v1579
    %v2886 = vpop.f32.mrb[0].mxu0
    %v2887 = vadd.f32 %v2598, %v2886
    %v2888 = vpop.f32.mrb[0].mxu0
    %v2889 = vpop.f32.mrb[0].mxu0
    %v2890 = vadd.f32 %v2601, %v2889
    %v2891 = vpop.f32.mrb[0].mxu0
    %2892 = vmatprep.mubr.bf16.mxu0 %v1589
    %2893 = vmatmul.mubr.bf16.gmra.mrb[0].mxu0 %v1588
    %v2894 = vpop.f32.mrb[0].mxu0
    %v2895 = vadd.f32 %v2606, %v2894
    %v2896 = vpop.f32.mrb[0].mxu0
    %v2897 = vpop.f32.mrb[0].mxu0
    %v2898 = vadd.f32 %v2609, %v2897
    %v2899 = vpop.f32.mrb[0].mxu0
    %2900 = vmatprep.mubr.bf16.mxu0 %v1598
    %2901 = vmatmul.mubr.bf16.gmra.mrb[0].mxu0 %v1597
    %v2902 = vpop.f32.mrb[0].mxu0
    %v2903 = vadd.f32 %v2614, %v2902
    %v2904 = vpop.f32.mrb[0].mxu0
    %v2905 = vpop.f32.mrb[0].mxu0
    %v2906 = vadd.f32 %v2617, %v2905
    %v2907 = vpop.f32.mrb[0].mxu0
    %2908 = vmatprep.mubr.bf16.mxu0 %v1607
    %2909 = vmatmul.mubr.bf16.gmra.mrb[0].mxu0 %v1606
    %v2910 = vpop.f32.mrb[0].mxu0
    %v2911 = vadd.f32 %v2622, %v2910
    %v2912 = vpop.f32.mrb[0].mxu0
    %v2913 = vpop.f32.mrb[0].mxu0
    %v2914 = vadd.f32 %v2625, %v2913
    %v2915 = vpop.f32.mrb[0].mxu0
    %2916 = vmatprep.mubr.bf16.mxu0 %v1616
    %2917 = vmatmul.mubr.bf16.gmra.mrb[0].mxu0 %v1615
    %v2918 = vpop.f32.mrb[0].mxu0
    %v2919 = vadd.f32 %v2630, %v2918
    %v2920 = vpop.f32.mrb[0].mxu0
    %v2921 = vpop.f32.mrb[0].mxu0
    %v2922 = vadd.f32 %v2633, %v2921
    %v2923 = vpop.f32.mrb[0].mxu0
    %2924 = vmatprep.mubr.bf16.mxu0 %v1625
    %2925 = vmatmul.mubr.bf16.gmra.mrb[0].mxu0 %v1624
    %v2926 = vpop.f32.mrb[0].mxu0
    %v2927 = vadd.f32 %v2638, %v2926
    %v2928 = vpop.f32.mrb[0].mxu0
    %v2929 = vpop.f32.mrb[0].mxu0
    %v2930 = vadd.f32 %v2641, %v2929
    %v2931 = vpop.f32.mrb[0].mxu0
    %2932 = vmatprep.mubr.bf16.mxu0 %v1634
    %2933 = vmatmul.mubr.bf16.gmra.mrb[0].mxu0 %v1633
    %v2934 = vpop.f32.mrb[0].mxu0
    %v2935 = vadd.f32 %v2646, %v2934
    %v2936 = vpop.f32.mrb[0].mxu0
    %v2937 = vpop.f32.mrb[0].mxu0
    %v2938 = vadd.f32 %v2649, %v2937
    %v2939 = vpop.f32.mrb[0].mxu0
    %2940 = vmatprep.mubr.bf16.mxu0 %v1643
    %2941 = vmatmul.mubr.bf16.gmra.mrb[0].mxu0 %v1642
    %v2942 = vpop.f32.mrb[0].mxu0
    %v2943 = vadd.f32 %v2654, %v2942
    %v2944 = vpop.f32.mrb[0].mxu0
    %v2945 = vpop.f32.mrb[0].mxu0
    %v2946 = vadd.f32 %v2657, %v2945
    %v2947 = vpop.f32.mrb[0].mxu0
    %2948 = vmatprep.mubr.bf16.mxu0 %v1652
    %2949 = vmatmul.mubr.bf16.gmra.mrb[0].mxu0 %v1651
    %v2950 = vpop.f32.mrb[0].mxu0
    %v2951 = vadd.f32 %v2662, %v2950
    %v2952 = vpop.f32.mrb[0].mxu0
    %v2953 = vpop.f32.mrb[0].mxu0
    %v2954 = vadd.f32 %v2665, %v2953
    %v2955 = vpop.f32.mrb[0].mxu0
    %2956 = vmatprep.mubr.bf16.mxu0 %v1661
    %2957 = vmatmul.mubr.bf16.gmra.mrb[0].mxu0 %v1660
    %v2958 = vpop.f32.mrb[0].mxu0
    %v2959 = vadd.f32 %v2670, %v2958
    %v2960 = vpop.f32.mrb[0].mxu0
    %v2961 = vpop.f32.mrb[0].mxu0
    %v2962 = vadd.f32 %v2673, %v2961
    %v2963 = vpop.f32.mrb[0].mxu0
    %2964 = vdwg.mxu0
    %2965 = vmatprep.subr.bf16.mxu0 0
    %2966 = vmatpush1.bf16.msra.mxu0 %v2275
    %2967 = vmatprep.subr.bf16.mxu0 0
    %2968 = vmatpush1.bf16.msra.mxu0 %v2276
    %2969 = vmatprep.subr.bf16.mxu0 0
    %2970 = vmatpush1.bf16.msra.mxu0 %v2277
    %2971 = vmatprep.subr.bf16.mxu0 0
    %2972 = vmatpush1.bf16.msra.mxu0 %v2278
    %2973 = vmatprep.subr.bf16.mxu0 0
    %2974 = vmatpush1.bf16.msra.mxu0 %v2279
    %2975 = vmatprep.subr.bf16.mxu0 0
    %2976 = vmatpush1.bf16.msra.mxu0 %v2280
    %2977 = vmatprep.subr.bf16.mxu0 0
    %2978 = vmatpush1.bf16.msra.mxu0 %v2281
    %2979 = vmatprep.subr.bf16.mxu0 0
    %2980 = vmatpush1.bf16.msra.mxu0 %v2282
    %2981 = vmatprep.subr.bf16.mxu0 0
    %2982 = vmatpush1.bf16.msra.mxu0 %v2283
    %2983 = vmatprep.subr.bf16.mxu0 0
    %2984 = vmatpush1.bf16.msra.mxu0 %v2284
    %2985 = vmatprep.subr.bf16.mxu0 0
    %2986 = vmatpush1.bf16.msra.mxu0 %v2285
    %2987 = vmatprep.subr.bf16.mxu0 0
    %2988 = vmatpush1.bf16.msra.mxu0 %v2286
    %2989 = vmatprep.subr.bf16.mxu0 0
    %2990 = vmatpush1.bf16.msra.mxu0 %v2287
    %2991 = vmatprep.subr.bf16.mxu0 0
    %2992 = vmatpush1.bf16.msra.mxu0 %v2288
    %2993 = vmatprep.subr.bf16.mxu0 0
    %2994 = vmatpush1.bf16.msra.mxu0 %v2289
    %2995 = vmatprep.subr.bf16.mxu0 0
    %2996 = vmatpush1.bf16.msra.mxu0 %v2290
    %2997 = vmatprep.mubr.bf16.mxu0 %v1384
    %2998 = vmatmul.mubr.bf16.gmra.mrb[0].mxu0 %v1383
    %v2999 = vpop.f32.mrb[0].mxu0
    %v3000 = vadd.f32 %v2711, %v2999
    %v3001 = vpop.f32.mrb[0].mxu0
    %v3002 = vpop.f32.mrb[0].mxu0
    %v3003 = vadd.f32 %v2714, %v3002
    %v3004 = vpop.f32.mrb[0].mxu0
    %3005 = vmatprep.mubr.bf16.mxu0 %v1393
    %3006 = vmatmul.mubr.bf16.gmra.mrb[0].mxu0 %v1392
    %v3007 = vpop.f32.mrb[0].mxu0
    %v3008 = vadd.f32 %v2719, %v3007
    %v3009 = vpop.f32.mrb[0].mxu0
    %v3010 = vpop.f32.mrb[0].mxu0
    %v3011 = vadd.f32 %v2722, %v3010
    %v3012 = vpop.f32.mrb[0].mxu0
    %3013 = vmatprep.mubr.bf16.mxu0 %v1402
    %3014 = vmatmul.mubr.bf16.gmra.mrb[0].mxu0 %v1401
    %v3015 = vpop.f32.mrb[0].mxu0
    %v3016 = vadd.f32 %v2727, %v3015
    %v3017 = vpop.f32.mrb[0].mxu0
    %v3018 = vpop.f32.mrb[0].mxu0
    %v3019 = vadd.f32 %v2730, %v3018
    %v3020 = vpop.f32.mrb[0].mxu0
    %3021 = vmatprep.mubr.bf16.mxu0 %v1411
    %3022 = vmatmul.mubr.bf16.gmra.mrb[0].mxu0 %v1410
    %v3023 = vpop.f32.mrb[0].mxu0
    %v3024 = vadd.f32 %v2735, %v3023
    %v3025 = vpop.f32.mrb[0].mxu0
    %v3026 = vpop.f32.mrb[0].mxu0
    %v3027 = vadd.f32 %v2738, %v3026
    %v3028 = vpop.f32.mrb[0].mxu0
    %3029 = vmatprep.mubr.bf16.mxu0 %v1420
    %3030 = vmatmul.mubr.bf16.gmra.mrb[0].mxu0 %v1419
    %v3031 = vpop.f32.mrb[0].mxu0
    %v3032 = vadd.f32 %v2743, %v3031
    %v3033 = vpop.f32.mrb[0].mxu0
    %v3034 = vpop.f32.mrb[0].mxu0
    %v3035 = vadd.f32 %v2746, %v3034
    %v3036 = vpop.f32.mrb[0].mxu0
    %3037 = vmatprep.mubr.bf16.mxu0 %v1429
    %3038 = vmatmul.mubr.bf16.gmra.mrb[0].mxu0 %v1428
    %v3039 = vpop.f32.mrb[0].mxu0
    %v3040 = vadd.f32 %v2751, %v3039
    %v3041 = vpop.f32.mrb[0].mxu0
    %v3042 = vpop.f32.mrb[0].mxu0
    %v3043 = vadd.f32 %v2754, %v3042
    %v3044 = vpop.f32.mrb[0].mxu0
    %3045 = vmatprep.mubr.bf16.mxu0 %v1438
    %3046 = vmatmul.mubr.bf16.gmra.mrb[0].mxu0 %v1437
    %v3047 = vpop.f32.mrb[0].mxu0
    %v3048 = vadd.f32 %v2759, %v3047
    %v3049 = vpop.f32.mrb[0].mxu0
    %v3050 = vpop.f32.mrb[0].mxu0
    %v3051 = vadd.f32 %v2762, %v3050
    %v3052 = vpop.f32.mrb[0].mxu0
    %3053 = vmatprep.mubr.bf16.mxu0 %v1447
    %3054 = vmatmul.mubr.bf16.gmra.mrb[0].mxu0 %v1446
    %v3055 = vpop.f32.mrb[0].mxu0
    %v3056 = vadd.f32 %v2767, %v3055
    %v3057 = vpop.f32.mrb[0].mxu0
    %v3058 = vpop.f32.mrb[0].mxu0
    %v3059 = vadd.f32 %v2770, %v3058
    %v3060 = vpop.f32.mrb[0].mxu0
    %3061 = vmatprep.mubr.bf16.mxu0 %v1456
    %3062 = vmatmul.mubr.bf16.gmra.mrb[0].mxu0 %v1455
    %v3063 = vpop.f32.mrb[0].mxu0
    %v3064 = vadd.f32 %v2775, %v3063
    %v3065 = vpop.f32.mrb[0].mxu0
    %v3066 = vpop.f32.mrb[0].mxu0
    %v3067 = vadd.f32 %v2778, %v3066
    %v3068 = vpop.f32.mrb[0].mxu0
    %3069 = vmatprep.mubr.bf16.mxu0 %v1465
    %3070 = vmatmul.mubr.bf16.gmra.mrb[0].mxu0 %v1464
    %v3071 = vpop.f32.mrb[0].mxu0
    %v3072 = vadd.f32 %v2783, %v3071
    %v3073 = vpop.f32.mrb[0].mxu0
    %v3074 = vpop.f32.mrb[0].mxu0
    %v3075 = vadd.f32 %v2786, %v3074
    %v3076 = vpop.f32.mrb[0].mxu0
    %3077 = vmatprep.mubr.bf16.mxu0 %v1474
    %3078 = vmatmul.mubr.bf16.gmra.mrb[0].mxu0 %v1473
    %v3079 = vpop.f32.mrb[0].mxu0
    %v3080 = vadd.f32 %v2791, %v3079
    %v3081 = vpop.f32.mrb[0].mxu0
    %v3082 = vpop.f32.mrb[0].mxu0
    %v3083 = vadd.f32 %v2794, %v3082
    %v3084 = vpop.f32.mrb[0].mxu0
    %3085 = vmatprep.mubr.bf16.mxu0 %v1483
    %3086 = vmatmul.mubr.bf16.gmra.mrb[0].mxu0 %v1482
    %v3087 = vpop.f32.mrb[0].mxu0
    %v3088 = vadd.f32 %v2799, %v3087
    %v3089 = vpop.f32.mrb[0].mxu0
    %v3090 = vpop.f32.mrb[0].mxu0
    %v3091 = vadd.f32 %v2802, %v3090
    %v3092 = vpop.f32.mrb[0].mxu0
    %3093 = vmatprep.mubr.bf16.mxu0 %v1492
    %3094 = vmatmul.mubr.bf16.gmra.mrb[0].mxu0 %v1491
    %v3095 = vpop.f32.mrb[0].mxu0
    %v3096 = vadd.f32 %v2807, %v3095
    %v3097 = vpop.f32.mrb[0].mxu0
    %v3098 = vpop.f32.mrb[0].mxu0
    %v3099 = vadd.f32 %v2810, %v3098
    %v3100 = vpop.f32.mrb[0].mxu0
    %3101 = vmatprep.mubr.bf16.mxu0 %v1501
    %3102 = vmatmul.mubr.bf16.gmra.mrb[0].mxu0 %v1500
    %v3103 = vpop.f32.mrb[0].mxu0
    %v3104 = vadd.f32 %v2815, %v3103
    %v3105 = vpop.f32.mrb[0].mxu0
    %v3106 = vpop.f32.mrb[0].mxu0
    %v3107 = vadd.f32 %v2818, %v3106
    %v3108 = vpop.f32.mrb[0].mxu0
    %3109 = vmatprep.mubr.bf16.mxu0 %v1510
    %3110 = vmatmul.mubr.bf16.gmra.mrb[0].mxu0 %v1509
    %v3111 = vpop.f32.mrb[0].mxu0
    %v3112 = vadd.f32 %v2823, %v3111
    %v3113 = vpop.f32.mrb[0].mxu0
    %v3114 = vpop.f32.mrb[0].mxu0
    %v3115 = vadd.f32 %v2826, %v3114
    %v3116 = vpop.f32.mrb[0].mxu0
    %3117 = vmatprep.mubr.bf16.mxu0 %v1519
    %3118 = vmatmul.mubr.bf16.gmra.mrb[0].mxu0 %v1518
    %v3119 = vpop.f32.mrb[0].mxu0
    %v3120 = vadd.f32 %v2831, %v3119
    %v3121 = vpop.f32.mrb[0].mxu0
    %v3122 = vpop.f32.mrb[0].mxu0
    %v3123 = vadd.f32 %v2834, %v3122
    %v3124 = vpop.f32.mrb[0].mxu0
    %3125 = vmatprep.mubr.bf16.mxu0 %v1528
    %3126 = vmatmul.mubr.bf16.gmra.mrb[0].mxu0 %v1527
    %v3127 = vpop.f32.mrb[0].mxu0
    %v3128 = vadd.f32 %v2839, %v3127
    %v3129 = vpop.f32.mrb[0].mxu0
    %v3130 = vpop.f32.mrb[0].mxu0
    %v3131 = vadd.f32 %v2842, %v3130
    %v3132 = vpop.f32.mrb[0].mxu0
    %3133 = vmatprep.mubr.bf16.mxu0 %v1537
    %3134 = vmatmul.mubr.bf16.gmra.mrb[0].mxu0 %v1536
    %v3135 = vpop.f32.mrb[0].mxu0
    %v3136 = vadd.f32 %v2847, %v3135
    %v3137 = vpop.f32.mrb[0].mxu0
    %v3138 = vpop.f32.mrb[0].mxu0
    %v3139 = vadd.f32 %v2850, %v3138
    %v3140 = vpop.f32.mrb[0].mxu0
    %3141 = vmatprep.mubr.bf16.mxu0 %v1546
    %3142 = vmatmul.mubr.bf16.gmra.mrb[0].mxu0 %v1545
    %v3143 = vpop.f32.mrb[0].mxu0
    %v3144 = vadd.f32 %v2855, %v3143
    %v3145 = vpop.f32.mrb[0].mxu0
    %v3146 = vpop.f32.mrb[0].mxu0
    %v3147 = vadd.f32 %v2858, %v3146
    %v3148 = vpop.f32.mrb[0].mxu0
    %3149 = vmatprep.mubr.bf16.mxu0 %v1555
    %3150 = vmatmul.mubr.bf16.gmra.mrb[0].mxu0 %v1554
    %v3151 = vpop.f32.mrb[0].mxu0
    %v3152 = vadd.f32 %v2863, %v3151
    %v3153 = vpop.f32.mrb[0].mxu0
    %v3154 = vpop.f32.mrb[0].mxu0
    %v3155 = vadd.f32 %v2866, %v3154
    %v3156 = vpop.f32.mrb[0].mxu0
    %3157 = vmatprep.mubr.bf16.mxu0 %v1564
    %3158 = vmatmul.mubr.bf16.gmra.mrb[0].mxu0 %v1563
    %v3159 = vpop.f32.mrb[0].mxu0
    %v3160 = vadd.f32 %v2871, %v3159
    %v3161 = vpop.f32.mrb[0].mxu0
    %v3162 = vpop.f32.mrb[0].mxu0
    %v3163 = vadd.f32 %v2874, %v3162
    %v3164 = vpop.f32.mrb[0].mxu0
    %3165 = vmatprep.mubr.bf16.mxu0 %v1573
    %3166 = vmatmul.mubr.bf16.gmra.mrb[0].mxu0 %v1572
    %v3167 = vpop.f32.mrb[0].mxu0
    %v3168 = vadd.f32 %v2879, %v3167
    %v3169 = vpop.f32.mrb[0].mxu0
    %v3170 = vpop.f32.mrb[0].mxu0
    %v3171 = vadd.f32 %v2882, %v3170
    %v3172 = vpop.f32.mrb[0].mxu0
    %3173 = vmatprep.mubr.bf16.mxu0 %v1582
    %3174 = vmatmul.mubr.bf16.gmra.mrb[0].mxu0 %v1581
    %v3175 = vpop.f32.mrb[0].mxu0
    %v3176 = vadd.f32 %v2887, %v3175
    %v3177 = vpop.f32.mrb[0].mxu0
    %v3178 = vpop.f32.mrb[0].mxu0
    %v3179 = vadd.f32 %v2890, %v3178
    %v3180 = vpop.f32.mrb[0].mxu0
    %3181 = vmatprep.mubr.bf16.mxu0 %v1591
    %3182 = vmatmul.mubr.bf16.gmra.mrb[0].mxu0 %v1590
    %v3183 = vpop.f32.mrb[0].mxu0
    %v3184 = vadd.f32 %v2895, %v3183
    %v3185 = vpop.f32.mrb[0].mxu0
    %v3186 = vpop.f32.mrb[0].mxu0
    %v3187 = vadd.f32 %v2898, %v3186
    %v3188 = vpop.f32.mrb[0].mxu0
    %3189 = vmatprep.mubr.bf16.mxu0 %v1600
    %3190 = vmatmul.mubr.bf16.gmra.mrb[0].mxu0 %v1599
    %v3191 = vpop.f32.mrb[0].mxu0
    %v3192 = vadd.f32 %v2903, %v3191
    %v3193 = vpop.f32.mrb[0].mxu0
    %v3194 = vpop.f32.mrb[0].mxu0
    %v3195 = vadd.f32 %v2906, %v3194
    %v3196 = vpop.f32.mrb[0].mxu0
    %3197 = vmatprep.mubr.bf16.mxu0 %v1609
    %3198 = vmatmul.mubr.bf16.gmra.mrb[0].mxu0 %v1608
    %v3199 = vpop.f32.mrb[0].mxu0
    %v3200 = vadd.f32 %v2911, %v3199
    %v3201 = vpop.f32.mrb[0].mxu0
    %v3202 = vpop.f32.mrb[0].mxu0
    %v3203 = vadd.f32 %v2914, %v3202
    %v3204 = vpop.f32.mrb[0].mxu0
    %3205 = vmatprep.mubr.bf16.mxu0 %v1618
    %3206 = vmatmul.mubr.bf16.gmra.mrb[0].mxu0 %v1617
    %v3207 = vpop.f32.mrb[0].mxu0
    %v3208 = vadd.f32 %v2919, %v3207
    %v3209 = vpop.f32.mrb[0].mxu0
    %v3210 = vpop.f32.mrb[0].mxu0
    %v3211 = vadd.f32 %v2922, %v3210
    %v3212 = vpop.f32.mrb[0].mxu0
    %3213 = vmatprep.mubr.bf16.mxu0 %v1627
    %3214 = vmatmul.mubr.bf16.gmra.mrb[0].mxu0 %v1626
    %v3215 = vpop.f32.mrb[0].mxu0
    %v3216 = vadd.f32 %v2927, %v3215
    %v3217 = vpop.f32.mrb[0].mxu0
    %v3218 = vpop.f32.mrb[0].mxu0
    %v3219 = vadd.f32 %v2930, %v3218
    %v3220 = vpop.f32.mrb[0].mxu0
    %3221 = vmatprep.mubr.bf16.mxu0 %v1636
    %3222 = vmatmul.mubr.bf16.gmra.mrb[0].mxu0 %v1635
    %v3223 = vpop.f32.mrb[0].mxu0
    %v3224 = vadd.f32 %v2935, %v3223
    %v3225 = vpop.f32.mrb[0].mxu0
    %v3226 = vpop.f32.mrb[0].mxu0
    %v3227 = vadd.f32 %v2938, %v3226
    %v3228 = vpop.f32.mrb[0].mxu0
    %3229 = vmatprep.mubr.bf16.mxu0 %v1645
    %3230 = vmatmul.mubr.bf16.gmra.mrb[0].mxu0 %v1644
    %v3231 = vpop.f32.mrb[0].mxu0
    %v3232 = vadd.f32 %v2943, %v3231
    %v3233 = vpop.f32.mrb[0].mxu0
    %v3234 = vpop.f32.mrb[0].mxu0
    %v3235 = vadd.f32 %v2946, %v3234
    %v3236 = vpop.f32.mrb[0].mxu0
    %3237 = vmatprep.mubr.bf16.mxu0 %v1654
    %3238 = vmatmul.mubr.bf16.gmra.mrb[0].mxu0 %v1653
    %v3239 = vpop.f32.mrb[0].mxu0
    %v3240 = vadd.f32 %v2951, %v3239
    %v3241 = vpop.f32.mrb[0].mxu0
    %v3242 = vpop.f32.mrb[0].mxu0
    %v3243 = vadd.f32 %v2954, %v3242
    %v3244 = vpop.f32.mrb[0].mxu0
    %3245 = vmatprep.mubr.bf16.mxu0 %v1663
    %3246 = vmatmul.mubr.bf16.gmra.mrb[0].mxu0 %v1662
    %v3247 = vpop.f32.mrb[0].mxu0
    %v3248 = vadd.f32 %v2959, %v3247
    %v3249 = vpop.f32.mrb[0].mxu0
    %v3250 = vpop.f32.mrb[0].mxu0
    %v3251 = vadd.f32 %v2962, %v3250
    %v3252 = vpop.f32.mrb[0].mxu0
    %3253 = vdwg.mxu0
    %3254 = vmatprep.subr.bf16.mxu0 0
    %3255 = vmatpush1.bf16.msra.mxu0 %v2291
    %3256 = vmatprep.subr.bf16.mxu0 0
    %3257 = vmatpush1.bf16.msra.mxu0 %v2292
    %3258 = vmatprep.subr.bf16.mxu0 0
    %3259 = vmatpush1.bf16.msra.mxu0 %v2293
    %3260 = vmatprep.subr.bf16.mxu0 0
    %3261 = vmatpush1.bf16.msra.mxu0 %v2294
    %3262 = vmatprep.subr.bf16.mxu0 0
    %3263 = vmatpush1.bf16.msra.mxu0 %v2295
    %3264 = vmatprep.subr.bf16.mxu0 0
    %3265 = vmatpush1.bf16.msra.mxu0 %v2296
    %3266 = vmatprep.subr.bf16.mxu0 0
    %3267 = vmatpush1.bf16.msra.mxu0 %v2297
    %3268 = vmatprep.subr.bf16.mxu0 0
    %3269 = vmatpush1.bf16.msra.mxu0 %v2298
    %3270 = vmatprep.subr.bf16.mxu0 0
    %3271 = vmatpush1.bf16.msra.mxu0 %v2299
    %3272 = vmatprep.subr.bf16.mxu0 0
    %3273 = vmatpush1.bf16.msra.mxu0 %v2300
    %3274 = vmatprep.subr.bf16.mxu0 0
    %3275 = vmatpush1.bf16.msra.mxu0 %v2301
    %3276 = vmatprep.subr.bf16.mxu0 0
    %3277 = vmatpush1.bf16.msra.mxu0 %v2302
    %3278 = vmatprep.subr.bf16.mxu0 0
    %3279 = vmatpush1.bf16.msra.mxu0 %v2303
    %3280 = vmatprep.subr.bf16.mxu0 0
    %3281 = vmatpush1.bf16.msra.mxu0 %v2304
    %3282 = vmatprep.subr.bf16.mxu0 0
    %3283 = vmatpush1.bf16.msra.mxu0 %v2305
    %3284 = vmatprep.subr.bf16.mxu0 0
    %3285 = vmatpush1.bf16.msra.mxu0 %v2306
    %3286 = vmatprep.mubr.bf16.mxu0 %v1386
    %3287 = vmatmul.mubr.bf16.gmra.mrb[0].mxu0 %v1385
    %v3288 = vpop.f32.mrb[0].mxu0
    %v3289 = vadd.f32 %v3000, %v3288
    %v3290 = vpop.f32.mrb[0].mxu0
    %v3291 = vpop.f32.mrb[0].mxu0
    %v3292 = vadd.f32 %v3003, %v3291
    %v3293 = vpop.f32.mrb[0].mxu0
    %3294 = vmatprep.mubr.bf16.mxu0 %v1395
    %3295 = vmatmul.mubr.bf16.gmra.mrb[0].mxu0 %v1394
    %v3296 = vpop.f32.mrb[0].mxu0
    %v3297 = vadd.f32 %v3008, %v3296
    %v3298 = vpop.f32.mrb[0].mxu0
    %v3299 = vpop.f32.mrb[0].mxu0
    %v3300 = vadd.f32 %v3011, %v3299
    %v3301 = vpop.f32.mrb[0].mxu0
    %3302 = vmatprep.mubr.bf16.mxu0 %v1404
    %3303 = vmatmul.mubr.bf16.gmra.mrb[0].mxu0 %v1403
    %v3304 = vpop.f32.mrb[0].mxu0
    %v3305 = vadd.f32 %v3016, %v3304
    %v3306 = vpop.f32.mrb[0].mxu0
    %v3307 = vpop.f32.mrb[0].mxu0
    %v3308 = vadd.f32 %v3019, %v3307
    %v3309 = vpop.f32.mrb[0].mxu0
    %3310 = vmatprep.mubr.bf16.mxu0 %v1413
    %3311 = vmatmul.mubr.bf16.gmra.mrb[0].mxu0 %v1412
    %v3312 = vpop.f32.mrb[0].mxu0
    %v3313 = vadd.f32 %v3024, %v3312
    %v3314 = vpop.f32.mrb[0].mxu0
    %v3315 = vpop.f32.mrb[0].mxu0
    %v3316 = vadd.f32 %v3027, %v3315
    %v3317 = vpop.f32.mrb[0].mxu0
    %3318 = vmatprep.mubr.bf16.mxu0 %v1422
    %3319 = vmatmul.mubr.bf16.gmra.mrb[0].mxu0 %v1421
    %v3320 = vpop.f32.mrb[0].mxu0
    %v3321 = vadd.f32 %v3032, %v3320
    %v3322 = vpop.f32.mrb[0].mxu0
    %v3323 = vpop.f32.mrb[0].mxu0
    %v3324 = vadd.f32 %v3035, %v3323
    %v3325 = vpop.f32.mrb[0].mxu0
    %3326 = vmatprep.mubr.bf16.mxu0 %v1431
    %3327 = vmatmul.mubr.bf16.gmra.mrb[0].mxu0 %v1430
    %v3328 = vpop.f32.mrb[0].mxu0
    %v3329 = vadd.f32 %v3040, %v3328
    %v3330 = vpop.f32.mrb[0].mxu0
    %v3331 = vpop.f32.mrb[0].mxu0
    %v3332 = vadd.f32 %v3043, %v3331
    %v3333 = vpop.f32.mrb[0].mxu0
    %3334 = vmatprep.mubr.bf16.mxu0 %v1440
    %3335 = vmatmul.mubr.bf16.gmra.mrb[0].mxu0 %v1439
    %v3336 = vpop.f32.mrb[0].mxu0
    %v3337 = vadd.f32 %v3048, %v3336
    %v3338 = vpop.f32.mrb[0].mxu0
    %v3339 = vpop.f32.mrb[0].mxu0
    %v3340 = vadd.f32 %v3051, %v3339
    %v3341 = vpop.f32.mrb[0].mxu0
    %3342 = vmatprep.mubr.bf16.mxu0 %v1449
    %3343 = vmatmul.mubr.bf16.gmra.mrb[0].mxu0 %v1448
    %v3344 = vpop.f32.mrb[0].mxu0
    %v3345 = vadd.f32 %v3056, %v3344
    %v3346 = vpop.f32.mrb[0].mxu0
    %v3347 = vpop.f32.mrb[0].mxu0
    %v3348 = vadd.f32 %v3059, %v3347
    %v3349 = vpop.f32.mrb[0].mxu0
    %3350 = vmatprep.mubr.bf16.mxu0 %v1458
    %3351 = vmatmul.mubr.bf16.gmra.mrb[0].mxu0 %v1457
    %v3352 = vpop.f32.mrb[0].mxu0
    %v3353 = vadd.f32 %v3064, %v3352
    %v3354 = vpop.f32.mrb[0].mxu0
    %v3355 = vpop.f32.mrb[0].mxu0
    %v3356 = vadd.f32 %v3067, %v3355
    %v3357 = vpop.f32.mrb[0].mxu0
    %3358 = vmatprep.mubr.bf16.mxu0 %v1467
    %3359 = vmatmul.mubr.bf16.gmra.mrb[0].mxu0 %v1466
    %v3360 = vpop.f32.mrb[0].mxu0
    %v3361 = vadd.f32 %v3072, %v3360
    %v3362 = vpop.f32.mrb[0].mxu0
    %v3363 = vpop.f32.mrb[0].mxu0
    %v3364 = vadd.f32 %v3075, %v3363
    %v3365 = vpop.f32.mrb[0].mxu0
    %3366 = vmatprep.mubr.bf16.mxu0 %v1476
    %3367 = vmatmul.mubr.bf16.gmra.mrb[0].mxu0 %v1475
    %v3368 = vpop.f32.mrb[0].mxu0
    %v3369 = vadd.f32 %v3080, %v3368
    %v3370 = vpop.f32.mrb[0].mxu0
    %v3371 = vpop.f32.mrb[0].mxu0
    %v3372 = vadd.f32 %v3083, %v3371
    %v3373 = vpop.f32.mrb[0].mxu0
    %3374 = vmatprep.mubr.bf16.mxu0 %v1485
    %3375 = vmatmul.mubr.bf16.gmra.mrb[0].mxu0 %v1484
    %v3376 = vpop.f32.mrb[0].mxu0
    %v3377 = vadd.f32 %v3088, %v3376
    %v3378 = vpop.f32.mrb[0].mxu0
    %v3379 = vpop.f32.mrb[0].mxu0
    %v3380 = vadd.f32 %v3091, %v3379
    %v3381 = vpop.f32.mrb[0].mxu0
    %3382 = vmatprep.mubr.bf16.mxu0 %v1494
    %3383 = vmatmul.mubr.bf16.gmra.mrb[0].mxu0 %v1493
    %v3384 = vpop.f32.mrb[0].mxu0
    %v3385 = vadd.f32 %v3096, %v3384
    %v3386 = vpop.f32.mrb[0].mxu0
    %v3387 = vpop.f32.mrb[0].mxu0
    %v3388 = vadd.f32 %v3099, %v3387
    %v3389 = vpop.f32.mrb[0].mxu0
    %3390 = vmatprep.mubr.bf16.mxu0 %v1503
    %3391 = vmatmul.mubr.bf16.gmra.mrb[0].mxu0 %v1502
    %v3392 = vpop.f32.mrb[0].mxu0
    %v3393 = vadd.f32 %v3104, %v3392
    %v3394 = vpop.f32.mrb[0].mxu0
    %v3395 = vpop.f32.mrb[0].mxu0
    %v3396 = vadd.f32 %v3107, %v3395
    %v3397 = vpop.f32.mrb[0].mxu0
    %3398 = vmatprep.mubr.bf16.mxu0 %v1512
    %3399 = vmatmul.mubr.bf16.gmra.mrb[0].mxu0 %v1511
    %v3400 = vpop.f32.mrb[0].mxu0
    %v3401 = vadd.f32 %v3112, %v3400
    %v3402 = vpop.f32.mrb[0].mxu0
    %v3403 = vpop.f32.mrb[0].mxu0
    %v3404 = vadd.f32 %v3115, %v3403
    %v3405 = vpop.f32.mrb[0].mxu0
    %3406 = vmatprep.mubr.bf16.mxu0 %v1521
    %3407 = vmatmul.mubr.bf16.gmra.mrb[0].mxu0 %v1520
    %v3408 = vpop.f32.mrb[0].mxu0
    %v3409 = vadd.f32 %v3120, %v3408
    %v3410 = vpop.f32.mrb[0].mxu0
    %v3411 = vpop.f32.mrb[0].mxu0
    %v3412 = vadd.f32 %v3123, %v3411
    %v3413 = vpop.f32.mrb[0].mxu0
    %3414 = vmatprep.mubr.bf16.mxu0 %v1530
    %3415 = vmatmul.mubr.bf16.gmra.mrb[0].mxu0 %v1529
    %v3416 = vpop.f32.mrb[0].mxu0
    %v3417 = vadd.f32 %v3128, %v3416
    %v3418 = vpop.f32.mrb[0].mxu0
    %v3419 = vpop.f32.mrb[0].mxu0
    %v3420 = vadd.f32 %v3131, %v3419
    %v3421 = vpop.f32.mrb[0].mxu0
    %3422 = vmatprep.mubr.bf16.mxu0 %v1539
    %3423 = vmatmul.mubr.bf16.gmra.mrb[0].mxu0 %v1538
    %v3424 = vpop.f32.mrb[0].mxu0
    %v3425 = vadd.f32 %v3136, %v3424
    %v3426 = vpop.f32.mrb[0].mxu0
    %v3427 = vpop.f32.mrb[0].mxu0
    %v3428 = vadd.f32 %v3139, %v3427
    %v3429 = vpop.f32.mrb[0].mxu0
    %3430 = vmatprep.mubr.bf16.mxu0 %v1548
    %3431 = vmatmul.mubr.bf16.gmra.mrb[0].mxu0 %v1547
    %v3432 = vpop.f32.mrb[0].mxu0
    %v3433 = vadd.f32 %v3144, %v3432
    %v3434 = vpop.f32.mrb[0].mxu0
    %v3435 = vpop.f32.mrb[0].mxu0
    %v3436 = vadd.f32 %v3147, %v3435
    %v3437 = vpop.f32.mrb[0].mxu0
    %3438 = vmatprep.mubr.bf16.mxu0 %v1557
    %3439 = vmatmul.mubr.bf16.gmra.mrb[0].mxu0 %v1556
    %v3440 = vpop.f32.mrb[0].mxu0
    %v3441 = vadd.f32 %v3152, %v3440
    %v3442 = vpop.f32.mrb[0].mxu0
    %v3443 = vpop.f32.mrb[0].mxu0
    %v3444 = vadd.f32 %v3155, %v3443
    %v3445 = vpop.f32.mrb[0].mxu0
    %3446 = vmatprep.mubr.bf16.mxu0 %v1566
    %3447 = vmatmul.mubr.bf16.gmra.mrb[0].mxu0 %v1565
    %v3448 = vpop.f32.mrb[0].mxu0
    %v3449 = vadd.f32 %v3160, %v3448
    %v3450 = vpop.f32.mrb[0].mxu0
    %v3451 = vpop.f32.mrb[0].mxu0
    %v3452 = vadd.f32 %v3163, %v3451
    %v3453 = vpop.f32.mrb[0].mxu0
    %3454 = vmatprep.mubr.bf16.mxu0 %v1575
    %3455 = vmatmul.mubr.bf16.gmra.mrb[0].mxu0 %v1574
    %v3456 = vpop.f32.mrb[0].mxu0
    %v3457 = vadd.f32 %v3168, %v3456
    %v3458 = vpop.f32.mrb[0].mxu0
    %v3459 = vpop.f32.mrb[0].mxu0
    %v3460 = vadd.f32 %v3171, %v3459
    %v3461 = vpop.f32.mrb[0].mxu0
    %3462 = vmatprep.mubr.bf16.mxu0 %v1584
    %3463 = vmatmul.mubr.bf16.gmra.mrb[0].mxu0 %v1583
    %v3464 = vpop.f32.mrb[0].mxu0
    %v3465 = vadd.f32 %v3176, %v3464
    %v3466 = vpop.f32.mrb[0].mxu0
    %v3467 = vpop.f32.mrb[0].mxu0
    %v3468 = vadd.f32 %v3179, %v3467
    %v3469 = vpop.f32.mrb[0].mxu0
    %3470 = vmatprep.mubr.bf16.mxu0 %v1593
    %3471 = vmatmul.mubr.bf16.gmra.mrb[0].mxu0 %v1592
    %v3472 = vpop.f32.mrb[0].mxu0
    %v3473 = vadd.f32 %v3184, %v3472
    %v3474 = vpop.f32.mrb[0].mxu0
    %v3475 = vpop.f32.mrb[0].mxu0
    %v3476 = vadd.f32 %v3187, %v3475
    %v3477 = vpop.f32.mrb[0].mxu0
    %3478 = vmatprep.mubr.bf16.mxu0 %v1602
    %3479 = vmatmul.mubr.bf16.gmra.mrb[0].mxu0 %v1601
    %v3480 = vpop.f32.mrb[0].mxu0
    %v3481 = vadd.f32 %v3192, %v3480
    %v3482 = vpop.f32.mrb[0].mxu0
    %v3483 = vpop.f32.mrb[0].mxu0
    %v3484 = vadd.f32 %v3195, %v3483
    %v3485 = vpop.f32.mrb[0].mxu0
    %3486 = vmatprep.mubr.bf16.mxu0 %v1611
    %3487 = vmatmul.mubr.bf16.gmra.mrb[0].mxu0 %v1610
    %v3488 = vpop.f32.mrb[0].mxu0
    %v3489 = vadd.f32 %v3200, %v3488
    %v3490 = vpop.f32.mrb[0].mxu0
    %v3491 = vpop.f32.mrb[0].mxu0
    %v3492 = vadd.f32 %v3203, %v3491
    %v3493 = vpop.f32.mrb[0].mxu0
    %3494 = vmatprep.mubr.bf16.mxu0 %v1620
    %3495 = vmatmul.mubr.bf16.gmra.mrb[0].mxu0 %v1619
    %v3496 = vpop.f32.mrb[0].mxu0
    %v3497 = vadd.f32 %v3208, %v3496
    %v3498 = vpop.f32.mrb[0].mxu0
    %v3499 = vpop.f32.mrb[0].mxu0
    %v3500 = vadd.f32 %v3211, %v3499
    %v3501 = vpop.f32.mrb[0].mxu0
    %3502 = vmatprep.mubr.bf16.mxu0 %v1629
    %3503 = vmatmul.mubr.bf16.gmra.mrb[0].mxu0 %v1628
    %v3504 = vpop.f32.mrb[0].mxu0
    %v3505 = vadd.f32 %v3216, %v3504
    %v3506 = vpop.f32.mrb[0].mxu0
    %v3507 = vpop.f32.mrb[0].mxu0
    %v3508 = vadd.f32 %v3219, %v3507
    %v3509 = vpop.f32.mrb[0].mxu0
    %3510 = vmatprep.mubr.bf16.mxu0 %v1638
    %3511 = vmatmul.mubr.bf16.gmra.mrb[0].mxu0 %v1637
    %v3512 = vpop.f32.mrb[0].mxu0
    %v3513 = vadd.f32 %v3224, %v3512
    %v3514 = vpop.f32.mrb[0].mxu0
    %v3515 = vpop.f32.mrb[0].mxu0
    %v3516 = vadd.f32 %v3227, %v3515
    %v3517 = vpop.f32.mrb[0].mxu0
    %3518 = vmatprep.mubr.bf16.mxu0 %v1647
    %3519 = vmatmul.mubr.bf16.gmra.mrb[0].mxu0 %v1646
    %v3520 = vpop.f32.mrb[0].mxu0
    %v3521 = vadd.f32 %v3232, %v3520
    %v3522 = vpop.f32.mrb[0].mxu0
    %v3523 = vpop.f32.mrb[0].mxu0
    %v3524 = vadd.f32 %v3235, %v3523
    %v3525 = vpop.f32.mrb[0].mxu0
    %3526 = vmatprep.mubr.bf16.mxu0 %v1656
    %3527 = vmatmul.mubr.bf16.gmra.mrb[0].mxu0 %v1655
    %v3528 = vpop.f32.mrb[0].mxu0
    %v3529 = vadd.f32 %v3240, %v3528
    %v3530 = vpop.f32.mrb[0].mxu0
    %v3531 = vpop.f32.mrb[0].mxu0
    %v3532 = vadd.f32 %v3243, %v3531
    %v3533 = vpop.f32.mrb[0].mxu0
    %3534 = vmatprep.mubr.bf16.mxu0 %v1665
    %3535 = vmatmul.mubr.bf16.gmra.mrb[0].mxu0 %v1664
    %v3536 = vpop.f32.mrb[0].mxu0
    %v3537 = vadd.f32 %v3248, %v3536
    %v3538 = vpop.f32.mrb[0].mxu0
    %v3539 = vpop.f32.mrb[0].mxu0
    %v3540 = vadd.f32 %v3251, %v3539
    %v3541 = vpop.f32.mrb[0].mxu0
    %3542 = vdwg.mxu0
    %3543 = vmatprep.subr.bf16.mxu0 0
    %3544 = vmatpush1.bf16.msra.mxu0 %v2307
    %3545 = vmatprep.subr.bf16.mxu0 0
    %3546 = vmatpush1.bf16.msra.mxu0 %v2308
    %3547 = vmatprep.subr.bf16.mxu0 0
    %3548 = vmatpush1.bf16.msra.mxu0 %v2309
    %3549 = vmatprep.subr.bf16.mxu0 0
    %3550 = vmatpush1.bf16.msra.mxu0 %v2310
    %3551 = vmatprep.subr.bf16.mxu0 0
    %3552 = vmatpush1.bf16.msra.mxu0 %v2311
    %3553 = vmatprep.subr.bf16.mxu0 0
    %3554 = vmatpush1.bf16.msra.mxu0 %v2312
    %3555 = vmatprep.subr.bf16.mxu0 0
    %3556 = vmatpush1.bf16.msra.mxu0 %v2313
    %3557 = vmatprep.subr.bf16.mxu0 0
    %3558 = vmatpush1.bf16.msra.mxu0 %v2314
    %3559 = vmatprep.subr.bf16.mxu0 0
    %3560 = vmatpush1.bf16.msra.mxu0 0
    %3561 = vmatprep.subr.bf16.mxu0 0
    %3562 = vmatpush1.bf16.msra.mxu0 0
    %3563 = vmatprep.subr.bf16.mxu0 0
    %3564 = vmatpush1.bf16.msra.mxu0 0
    %3565 = vmatprep.subr.bf16.mxu0 0
    %3566 = vmatpush1.bf16.msra.mxu0 0
    %3567 = vmatprep.subr.bf16.mxu0 0
    %3568 = vmatpush1.bf16.msra.mxu0 0
    %3569 = vmatprep.subr.bf16.mxu0 0
    %3570 = vmatpush1.bf16.msra.mxu0 0
    %3571 = vmatprep.subr.bf16.mxu0 0
    %3572 = vmatpush1.bf16.msra.mxu0 0
    %3573 = vmatprep.subr.bf16.mxu0 0
    %3574 = vmatpush1.bf16.msra.mxu0 0
    %3575 = vmatprep.mubr.bf16.mxu0 0
    %3576 = vmatmul.mubr.bf16.gmra.mrb[0].mxu0 %v1387
    %v3577 = vpop.f32.mrb[0].mxu0
    %v3578 = vadd.f32 %v3289, %v3577
    %v3579 = vpop.f32.mrb[0].mxu0
    %v3580 = vpop.f32.mrb[0].mxu0
    %v3581 = vadd.f32 %v3292, %v3580
    %v3582 = vpop.f32.mrb[0].mxu0
    %3583 = vmatprep.mubr.bf16.mxu0 0
    %3584 = vmatmul.mubr.bf16.gmra.mrb[0].mxu0 %v1396
    %v3585 = vpop.f32.mrb[0].mxu0
    %v3586 = vadd.f32 %v3297, %v3585
    %v3587 = vpop.f32.mrb[0].mxu0
    %v3588 = vpop.f32.mrb[0].mxu0
    %v3589 = vadd.f32 %v3300, %v3588
    %v3590 = vpop.f32.mrb[0].mxu0
    %3591 = vmatprep.mubr.bf16.mxu0 0
    %3592 = vmatmul.mubr.bf16.gmra.mrb[0].mxu0 %v1405
    %v3593 = vpop.f32.mrb[0].mxu0
    %v3594 = vadd.f32 %v3305, %v3593
    %v3595 = vpop.f32.mrb[0].mxu0
    %v3596 = vpop.f32.mrb[0].mxu0
    %v3597 = vadd.f32 %v3308, %v3596
    %v3598 = vpop.f32.mrb[0].mxu0
    %3599 = vmatprep.mubr.bf16.mxu0 0
    %3600 = vmatmul.mubr.bf16.gmra.mrb[0].mxu0 %v1414
    %v3601 = vpop.f32.mrb[0].mxu0
    %v3602 = vadd.f32 %v3313, %v3601
    %v3603 = vpop.f32.mrb[0].mxu0
    %v3604 = vpop.f32.mrb[0].mxu0
    %v3605 = vadd.f32 %v3316, %v3604
    %v3606 = vpop.f32.mrb[0].mxu0
    %3607 = vmatprep.mubr.bf16.mxu0 0
    %3608 = vmatmul.mubr.bf16.gmra.mrb[0].mxu0 %v1423
    %v3609 = vpop.f32.mrb[0].mxu0
    %v3610 = vadd.f32 %v3321, %v3609
    %v3611 = vpop.f32.mrb[0].mxu0
    %v3612 = vpop.f32.mrb[0].mxu0
    %v3613 = vadd.f32 %v3324, %v3612
    %v3614 = vpop.f32.mrb[0].mxu0
    %3615 = vmatprep.mubr.bf16.mxu0 0
    %3616 = vmatmul.mubr.bf16.gmra.mrb[0].mxu0 %v1432
    %v3617 = vpop.f32.mrb[0].mxu0
    %v3618 = vadd.f32 %v3329, %v3617
    %v3619 = vpop.f32.mrb[0].mxu0
    %v3620 = vpop.f32.mrb[0].mxu0
    %v3621 = vadd.f32 %v3332, %v3620
    %v3622 = vpop.f32.mrb[0].mxu0
    %3623 = vmatprep.mubr.bf16.mxu0 0
    %3624 = vmatmul.mubr.bf16.gmra.mrb[0].mxu0 %v1441
    %v3625 = vpop.f32.mrb[0].mxu0
    %v3626 = vadd.f32 %v3337, %v3625
    %v3627 = vpop.f32.mrb[0].mxu0
    %v3628 = vpop.f32.mrb[0].mxu0
    %v3629 = vadd.f32 %v3340, %v3628
    %v3630 = vpop.f32.mrb[0].mxu0
    %3631 = vmatprep.mubr.bf16.mxu0 0
    %3632 = vmatmul.mubr.bf16.gmra.mrb[0].mxu0 %v1450
    %v3633 = vpop.f32.mrb[0].mxu0
    %v3634 = vadd.f32 %v3345, %v3633
    %v3635 = vpop.f32.mrb[0].mxu0
    %v3636 = vpop.f32.mrb[0].mxu0
    %v3637 = vadd.f32 %v3348, %v3636
    %v3638 = vpop.f32.mrb[0].mxu0
    %3639 = vmatprep.mubr.bf16.mxu0 0
    %3640 = vmatmul.mubr.bf16.gmra.mrb[0].mxu0 %v1459
    %v3641 = vpop.f32.mrb[0].mxu0
    %v3642 = vadd.f32 %v3353, %v3641
    %v3643 = vpop.f32.mrb[0].mxu0
    %v3644 = vpop.f32.mrb[0].mxu0
    %v3645 = vadd.f32 %v3356, %v3644
    %v3646 = vpop.f32.mrb[0].mxu0
    %3647 = vmatprep.mubr.bf16.mxu0 0
    %3648 = vmatmul.mubr.bf16.gmra.mrb[0].mxu0 %v1468
    %v3649 = vpop.f32.mrb[0].mxu0
    %v3650 = vadd.f32 %v3361, %v3649
    %v3651 = vpop.f32.mrb[0].mxu0
    %v3652 = vpop.f32.mrb[0].mxu0
    %v3653 = vadd.f32 %v3364, %v3652
    %v3654 = vpop.f32.mrb[0].mxu0
    %3655 = vmatprep.mubr.bf16.mxu0 0
    %3656 = vmatmul.mubr.bf16.gmra.mrb[0].mxu0 %v1477
    %v3657 = vpop.f32.mrb[0].mxu0
    %v3658 = vadd.f32 %v3369, %v3657
    %v3659 = vpop.f32.mrb[0].mxu0
    %v3660 = vpop.f32.mrb[0].mxu0
    %v3661 = vadd.f32 %v3372, %v3660
    %v3662 = vpop.f32.mrb[0].mxu0
    %3663 = vmatprep.mubr.bf16.mxu0 0
    %3664 = vmatmul.mubr.bf16.gmra.mrb[0].mxu0 %v1486
    %v3665 = vpop.f32.mrb[0].mxu0
    %v3666 = vadd.f32 %v3377, %v3665
    %v3667 = vpop.f32.mrb[0].mxu0
    %v3668 = vpop.f32.mrb[0].mxu0
    %v3669 = vadd.f32 %v3380, %v3668
    %v3670 = vpop.f32.mrb[0].mxu0
    %3671 = vmatprep.mubr.bf16.mxu0 0
    %3672 = vmatmul.mubr.bf16.gmra.mrb[0].mxu0 %v1495
    %v3673 = vpop.f32.mrb[0].mxu0
    %v3674 = vadd.f32 %v3385, %v3673
    %v3675 = vpop.f32.mrb[0].mxu0
    %v3676 = vpop.f32.mrb[0].mxu0
    %v3677 = vadd.f32 %v3388, %v3676
    %v3678 = vpop.f32.mrb[0].mxu0
    %3679 = vmatprep.mubr.bf16.mxu0 0
    %3680 = vmatmul.mubr.bf16.gmra.mrb[0].mxu0 %v1504
    %v3681 = vpop.f32.mrb[0].mxu0
    %v3682 = vadd.f32 %v3393, %v3681
    %v3683 = vpop.f32.mrb[0].mxu0
    %v3684 = vpop.f32.mrb[0].mxu0
    %v3685 = vadd.f32 %v3396, %v3684
    %v3686 = vpop.f32.mrb[0].mxu0
    %3687 = vmatprep.mubr.bf16.mxu0 0
    %3688 = vmatmul.mubr.bf16.gmra.mrb[0].mxu0 %v1513
    %v3689 = vpop.f32.mrb[0].mxu0
    %v3690 = vadd.f32 %v3401, %v3689
    %v3691 = vpop.f32.mrb[0].mxu0
    %v3692 = vpop.f32.mrb[0].mxu0
    %v3693 = vadd.f32 %v3404, %v3692
    %v3694 = vpop.f32.mrb[0].mxu0
    %3695 = vmatprep.mubr.bf16.mxu0 0
    %3696 = vmatmul.mubr.bf16.gmra.mrb[0].mxu0 %v1522
    %v3697 = vpop.f32.mrb[0].mxu0
    %v3698 = vadd.f32 %v3409, %v3697
    %v3699 = vpop.f32.mrb[0].mxu0
    %v3700 = vpop.f32.mrb[0].mxu0
    %v3701 = vadd.f32 %v3412, %v3700
    %v3702 = vpop.f32.mrb[0].mxu0
    %3703 = vmatprep.mubr.bf16.mxu0 0
    %3704 = vmatmul.mubr.bf16.gmra.mrb[0].mxu0 %v1531
    %v3705 = vpop.f32.mrb[0].mxu0
    %v3706 = vadd.f32 %v3417, %v3705
    %v3707 = vpop.f32.mrb[0].mxu0
    %v3708 = vpop.f32.mrb[0].mxu0
    %v3709 = vadd.f32 %v3420, %v3708
    %v3710 = vpop.f32.mrb[0].mxu0
    %3711 = vmatprep.mubr.bf16.mxu0 0
    %3712 = vmatmul.mubr.bf16.gmra.mrb[0].mxu0 %v1540
    %v3713 = vpop.f32.mrb[0].mxu0
    %v3714 = vadd.f32 %v3425, %v3713
    %v3715 = vpop.f32.mrb[0].mxu0
    %v3716 = vpop.f32.mrb[0].mxu0
    %v3717 = vadd.f32 %v3428, %v3716
    %v3718 = vpop.f32.mrb[0].mxu0
    %3719 = vmatprep.mubr.bf16.mxu0 0
    %3720 = vmatmul.mubr.bf16.gmra.mrb[0].mxu0 %v1549
    %v3721 = vpop.f32.mrb[0].mxu0
    %v3722 = vadd.f32 %v3433, %v3721
    %v3723 = vpop.f32.mrb[0].mxu0
    %v3724 = vpop.f32.mrb[0].mxu0
    %v3725 = vadd.f32 %v3436, %v3724
    %v3726 = vpop.f32.mrb[0].mxu0
    %3727 = vmatprep.mubr.bf16.mxu0 0
    %3728 = vmatmul.mubr.bf16.gmra.mrb[0].mxu0 %v1558
    %v3729 = vpop.f32.mrb[0].mxu0
    %v3730 = vadd.f32 %v3441, %v3729
    %v3731 = vpop.f32.mrb[0].mxu0
    %v3732 = vpop.f32.mrb[0].mxu0
    %v3733 = vadd.f32 %v3444, %v3732
    %v3734 = vpop.f32.mrb[0].mxu0
    %3735 = vmatprep.mubr.bf16.mxu0 0
    %3736 = vmatmul.mubr.bf16.gmra.mrb[0].mxu0 %v1567
    %v3737 = vpop.f32.mrb[0].mxu0
    %v3738 = vadd.f32 %v3449, %v3737
    %v3739 = vpop.f32.mrb[0].mxu0
    %v3740 = vpop.f32.mrb[0].mxu0
    %v3741 = vadd.f32 %v3452, %v3740
    %v3742 = vpop.f32.mrb[0].mxu0
    %3743 = vmatprep.mubr.bf16.mxu0 0
    %3744 = vmatmul.mubr.bf16.gmra.mrb[0].mxu0 %v1576
    %v3745 = vpop.f32.mrb[0].mxu0
    %v3746 = vadd.f32 %v3457, %v3745
    %v3747 = vpop.f32.mrb[0].mxu0
    %v3748 = vpop.f32.mrb[0].mxu0
    %v3749 = vadd.f32 %v3460, %v3748
    %v3750 = vpop.f32.mrb[0].mxu0
    %3751 = vmatprep.mubr.bf16.mxu0 0
    %3752 = vmatmul.mubr.bf16.gmra.mrb[0].mxu0 %v1585
    %v3753 = vpop.f32.mrb[0].mxu0
    %v3754 = vadd.f32 %v3465, %v3753
    %v3755 = vpop.f32.mrb[0].mxu0
    %v3756 = vpop.f32.mrb[0].mxu0
    %v3757 = vadd.f32 %v3468, %v3756
    %v3758 = vpop.f32.mrb[0].mxu0
    %3759 = vmatprep.mubr.bf16.mxu0 0
    %3760 = vmatmul.mubr.bf16.gmra.mrb[0].mxu0 %v1594
    %v3761 = vpop.f32.mrb[0].mxu0
    %v3762 = vadd.f32 %v3473, %v3761
    %v3763 = vpop.f32.mrb[0].mxu0
    %v3764 = vpop.f32.mrb[0].mxu0
    %v3765 = vadd.f32 %v3476, %v3764
    %v3766 = vpop.f32.mrb[0].mxu0
    %3767 = vmatprep.mubr.bf16.mxu0 0
    %3768 = vmatmul.mubr.bf16.gmra.mrb[0].mxu0 %v1603
    %v3769 = vpop.f32.mrb[0].mxu0
    %v3770 = vadd.f32 %v3481, %v3769
    %v3771 = vpop.f32.mrb[0].mxu0
    %v3772 = vpop.f32.mrb[0].mxu0
    %v3773 = vadd.f32 %v3484, %v3772
    %v3774 = vpop.f32.mrb[0].mxu0
    %3775 = vmatprep.mubr.bf16.mxu0 0
    %3776 = vmatmul.mubr.bf16.gmra.mrb[0].mxu0 %v1612
    %v3777 = vpop.f32.mrb[0].mxu0
    %v3778 = vadd.f32 %v3489, %v3777
    %v3779 = vpop.f32.mrb[0].mxu0
    %v3780 = vpop.f32.mrb[0].mxu0
    %v3781 = vadd.f32 %v3492, %v3780
    %v3782 = vpop.f32.mrb[0].mxu0
    %3783 = vmatprep.mubr.bf16.mxu0 0
    %3784 = vmatmul.mubr.bf16.gmra.mrb[0].mxu0 %v1621
    %v3785 = vpop.f32.mrb[0].mxu0
    %v3786 = vadd.f32 %v3497, %v3785
    %v3787 = vpop.f32.mrb[0].mxu0
    %v3788 = vpop.f32.mrb[0].mxu0
    %v3789 = vadd.f32 %v3500, %v3788
    %v3790 = vpop.f32.mrb[0].mxu0
    %3791 = vmatprep.mubr.bf16.mxu0 0
    %3792 = vmatmul.mubr.bf16.gmra.mrb[0].mxu0 %v1630
    %v3793 = vpop.f32.mrb[0].mxu0
    %v3794 = vadd.f32 %v3505, %v3793
    %v3795 = vpop.f32.mrb[0].mxu0
    %v3796 = vpop.f32.mrb[0].mxu0
    %v3797 = vadd.f32 %v3508, %v3796
    %v3798 = vpop.f32.mrb[0].mxu0
    %3799 = vmatprep.mubr.bf16.mxu0 0
    %3800 = vmatmul.mubr.bf16.gmra.mrb[0].mxu0 %v1639
    %v3801 = vpop.f32.mrb[0].mxu0
    %v3802 = vadd.f32 %v3513, %v3801
    %v3803 = vpop.f32.mrb[0].mxu0
    %v3804 = vpop.f32.mrb[0].mxu0
    %v3805 = vadd.f32 %v3516, %v3804
    %v3806 = vpop.f32.mrb[0].mxu0
    %3807 = vmatprep.mubr.bf16.mxu0 0
    %3808 = vmatmul.mubr.bf16.gmra.mrb[0].mxu0 %v1648
    %v3809 = vpop.f32.mrb[0].mxu0
    %v3810 = vadd.f32 %v3521, %v3809
    %v3811 = vpop.f32.mrb[0].mxu0
    %v3812 = vpop.f32.mrb[0].mxu0
    %v3813 = vadd.f32 %v3524, %v3812
    %v3814 = vpop.f32.mrb[0].mxu0
    %3815 = vmatprep.mubr.bf16.mxu0 0
    %3816 = vmatmul.mubr.bf16.gmra.mrb[0].mxu0 %v1657
    %v3817 = vpop.f32.mrb[0].mxu0
    %v3818 = vadd.f32 %v3529, %v3817
    %v3819 = vpop.f32.mrb[0].mxu0
    %v3820 = vpop.f32.mrb[0].mxu0
    %v3821 = vadd.f32 %v3532, %v3820
    %v3822 = vpop.f32.mrb[0].mxu0
    %3823 = vmatprep.mubr.bf16.mxu0 0
    %3824 = vmatmul.mubr.bf16.gmra.mrb[0].mxu0 %v1666
    %v3825 = vpop.f32.mrb[0].mxu0
    %v3826 = vadd.f32 %v3537, %v3825
    %v3827 = vpop.f32.mrb[0].mxu0
    %v3828 = vpop.f32.mrb[0].mxu0
    %v3829 = vadd.f32 %v3540, %v3828
    %v3830 = vpop.f32.mrb[0].mxu0
    %3831 = vdwg.mxu0
    %v3832 = vld [vmem:[%s1] sm:$0xff]
    %v3833 = vld [vmem:[%s1 + $0x8] sm:$0xff]
    %v3834 = vld [vmem:[%s1 + $0x10] sm:$0xff]
    %v3835 = vld [vmem:[%s1 + $0x18] sm:$0xff]
    %v3836 = vld [vmem:[%s1 + $0x20] sm:$0xff]
    %v3837 = vld [vmem:[%s1 + $0x28] sm:$0xff]
    %v3838 = vld [vmem:[%s1 + $0x30] sm:$0xff]
    %v3839 = vld [vmem:[%s1 + $0x38] sm:$0xff]
    %v3840 = vld [vmem:[%s1 + $0x40] sm:$0xff]
    %v3841 = vld [vmem:[%s1 + $0x48] sm:$0xff]
    %v3842 = vld [vmem:[%s1 + $0x50] sm:$0xff]
    %v3843 = vld [vmem:[%s1 + $0x58] sm:$0xff]
    %v3844 = vld [vmem:[%s1 + $0x60] sm:$0xff]
    %v3845 = vld [vmem:[%s1 + $0x68] sm:$0xff]
    %v3846 = vld [vmem:[%s1 + $0x70] sm:$0xff]
    %v3847 = vld [vmem:[%s1 + $0x78] sm:$0xff]
    %v3848 = vld [vmem:[%s1 + $0x80] sm:$0xff]
    %v3849 = vld [vmem:[%s1 + $0x88] sm:$0xff]
    %v3850 = vld [vmem:[%s1 + $0x90] sm:$0xff]
    %v3851 = vld [vmem:[%s1 + $0x98] sm:$0xff]
    %v3852 = vld [vmem:[%s1 + $0xa0] sm:$0xff]
    %v3853 = vld [vmem:[%s1 + $0xa8] sm:$0xff]
    %v3854 = vld [vmem:[%s1 + $0xb0] sm:$0xff]
    %v3855 = vld [vmem:[%s1 + $0xb8] sm:$0xff]
    %v3856 = vld [vmem:[%s1 + $0xc0] sm:$0xff]
    %v3857 = vld [vmem:[%s1 + $0xc8] sm:$0xff]
    %v3858 = vld [vmem:[%s1 + $0xd0] sm:$0xff]
    %v3859 = vld [vmem:[%s1 + $0xd8] sm:$0xff]
    %v3860 = vld [vmem:[%s1 + $0xe0] sm:$0xff]
    %v3861 = vld [vmem:[%s1 + $0xe8] sm:$0xff]
    %v3862 = vld [vmem:[%s1 + $0xf0] sm:$0xff]
    %v3863 = vld [vmem:[%s1 + $0xf8] sm:$0xff]
    %v3864 = vld [vmem:[%s1 + $0x100] sm:$0xff]
    %v3865 = vld [vmem:[%s1 + $0x108] sm:$0xff]
    %v3866 = vld [vmem:[%s1 + $0x110] sm:$0xff]
    %v3867 = vld [vmem:[%s1 + $0x118] sm:$0xff]
    %v3868 = vld [vmem:[%s1 + $0x120] sm:$0xff]
    %v3869 = vld [vmem:[%s1 + $0x128] sm:$0xff]
    %v3870 = vld [vmem:[%s1 + $0x130] sm:$0xff]
    %v3871 = vld [vmem:[%s1 + $0x138] sm:$0xff]
    %v3872 = vld [vmem:[%s1 + $0x140] sm:$0xff]
    %v3873 = vld [vmem:[%s1 + $0x148] sm:$0xff]
    %v3874 = vld [vmem:[%s1 + $0x150] sm:$0xff]
    %v3875 = vld [vmem:[%s1 + $0x158] sm:$0xff]
    %v3876 = vld [vmem:[%s1 + $0x160] sm:$0xff]
    %v3877 = vld [vmem:[%s1 + $0x168] sm:$0xff]
    %v3878 = vld [vmem:[%s1 + $0x170] sm:$0xff]
    %v3879 = vld [vmem:[%s1 + $0x178] sm:$0xff]
    %v3880 = vld [vmem:[%s1 + $0x180] sm:$0xff]
    %v3881 = vld [vmem:[%s1 + $0x188] sm:$0xff]
    %v3882 = vld [vmem:[%s1 + $0x190] sm:$0xff]
    %v3883 = vld [vmem:[%s1 + $0x198] sm:$0xff]
    %v3884 = vld [vmem:[%s1 + $0x1a0] sm:$0xff]
    %v3885 = vld [vmem:[%s1 + $0x1a8] sm:$0xff]
    %v3886 = vld [vmem:[%s1 + $0x1b0] sm:$0xff]
    %v3887 = vld [vmem:[%s1 + $0x1b8] sm:$0xff]
    %v3888 = vld [vmem:[%s1 + $0x1c0] sm:$0xff]
    %v3889 = vld [vmem:[%s1 + $0x1c8] sm:$0xff]
    %v3890 = vld [vmem:[%s1 + $0x1d0] sm:$0xff]
    %v3891 = vld [vmem:[%s1 + $0x1d8] sm:$0xff]
    %v3892 = vld [vmem:[%s1 + $0x1e0] sm:$0xff]
    %v3893 = vld [vmem:[%s1 + $0x1e8] sm:$0xff]
    %v3894 = vld [vmem:[%s1 + $0x1f0] sm:$0xff]
    %v3895 = vld [vmem:[%s1 + $0x1f8] sm:$0xff]
    %v3896 = vmax.f32 %v3832, 0.0
    %v3897 = vmax.f32 %v3833, 0.0
    %v3898 = vmax.f32 %v3834, 0.0
    %v3899 = vmax.f32 %v3835, 0.0
    %v3900 = vmax.f32 %v3836, 0.0
    %v3901 = vmax.f32 %v3837, 0.0
    %v3902 = vmax.f32 %v3838, 0.0
    %v3903 = vmax.f32 %v3839, 0.0
    %v3904 = vmax.f32 %v3840, 0.0
    %v3905 = vmax.f32 %v3841, 0.0
    %v3906 = vmax.f32 %v3842, 0.0
    %v3907 = vmax.f32 %v3843, 0.0
    %v3908 = vmax.f32 %v3844, 0.0
    %v3909 = vmax.f32 %v3845, 0.0
    %v3910 = vmax.f32 %v3846, 0.0
    %v3911 = vmax.f32 %v3847, 0.0
    %v3912 = vmax.f32 %v3848, 0.0
    %v3913 = vmax.f32 %v3849, 0.0
    %v3914 = vmax.f32 %v3850, 0.0
    %v3915 = vmax.f32 %v3851, 0.0
    %v3916 = vmax.f32 %v3852, 0.0
    %v3917 = vmax.f32 %v3853, 0.0
    %v3918 = vmax.f32 %v3854, 0.0
    %v3919 = vmax.f32 %v3855, 0.0
    %v3920 = vmax.f32 %v3856, 0.0
    %v3921 = vmax.f32 %v3857, 0.0
    %v3922 = vmax.f32 %v3858, 0.0
    %v3923 = vmax.f32 %v3859, 0.0
    %v3924 = vmax.f32 %v3860, 0.0
    %v3925 = vmax.f32 %v3861, 0.0
    %v3926 = vmax.f32 %v3862, 0.0
    %v3927 = vmax.f32 %v3863, 0.0
    %v3928 = vmax.f32 %v3864, 0.0
    %v3929 = vmax.f32 %v3865, 0.0
    %v3930 = vmax.f32 %v3866, 0.0
    %v3931 = vmax.f32 %v3867, 0.0
    %v3932 = vmax.f32 %v3868, 0.0
    %v3933 = vmax.f32 %v3869, 0.0
    %v3934 = vmax.f32 %v3870, 0.0
    %v3935 = vmax.f32 %v3871, 0.0
    %v3936 = vmax.f32 %v3872, 0.0
    %v3937 = vmax.f32 %v3873, 0.0
    %v3938 = vmax.f32 %v3874, 0.0
    %v3939 = vmax.f32 %v3875, 0.0
    %v3940 = vmax.f32 %v3876, 0.0
    %v3941 = vmax.f32 %v3877, 0.0
    %v3942 = vmax.f32 %v3878, 0.0
    %v3943 = vmax.f32 %v3879, 0.0
    %v3944 = vmax.f32 %v3880, 0.0
    %v3945 = vmax.f32 %v3881, 0.0
    %v3946 = vmax.f32 %v3882, 0.0
    %v3947 = vmax.f32 %v3883, 0.0
    %v3948 = vmax.f32 %v3884, 0.0
    %v3949 = vmax.f32 %v3885, 0.0
    %v3950 = vmax.f32 %v3886, 0.0
    %v3951 = vmax.f32 %v3887, 0.0
    %v3952 = vmax.f32 %v3888, 0.0
    %v3953 = vmax.f32 %v3889, 0.0
    %v3954 = vmax.f32 %v3890, 0.0
    %v3955 = vmax.f32 %v3891, 0.0
    %v3956 = vmax.f32 %v3892, 0.0
    %v3957 = vmax.f32 %v3893, 0.0
    %v3958 = vmax.f32 %v3894, 0.0
    %v3959 = vmax.f32 %v3895, 0.0
    %v3960 = vmin.f32 %v3896, 1.0
    %v3961 = vmin.f32 %v3897, 1.0
    %v3962 = vmin.f32 %v3898, 1.0
    %v3963 = vmin.f32 %v3899, 1.0
    %v3964 = vmin.f32 %v3900, 1.0
    %v3965 = vmin.f32 %v3901, 1.0
    %v3966 = vmin.f32 %v3902, 1.0
    %v3967 = vmin.f32 %v3903, 1.0
    %v3968 = vmin.f32 %v3904, 1.0
    %v3969 = vmin.f32 %v3905, 1.0
    %v3970 = vmin.f32 %v3906, 1.0
    %v3971 = vmin.f32 %v3907, 1.0
    %v3972 = vmin.f32 %v3908, 1.0
    %v3973 = vmin.f32 %v3909, 1.0
    %v3974 = vmin.f32 %v3910, 1.0
    %v3975 = vmin.f32 %v3911, 1.0
    %v3976 = vmin.f32 %v3912, 1.0
    %v3977 = vmin.f32 %v3913, 1.0
    %v3978 = vmin.f32 %v3914, 1.0
    %v3979 = vmin.f32 %v3915, 1.0
    %v3980 = vmin.f32 %v3916, 1.0
    %v3981 = vmin.f32 %v3917, 1.0
    %v3982 = vmin.f32 %v3918, 1.0
    %v3983 = vmin.f32 %v3919, 1.0
    %v3984 = vmin.f32 %v3920, 1.0
    %v3985 = vmin.f32 %v3921, 1.0
    %v3986 = vmin.f32 %v3922, 1.0
    %v3987 = vmin.f32 %v3923, 1.0
    %v3988 = vmin.f32 %v3924, 1.0
    %v3989 = vmin.f32 %v3925, 1.0
    %v3990 = vmin.f32 %v3926, 1.0
    %v3991 = vmin.f32 %v3927, 1.0
    %v3992 = vmin.f32 %v3928, 1.0
    %v3993 = vmin.f32 %v3929, 1.0
    %v3994 = vmin.f32 %v3930, 1.0
    %v3995 = vmin.f32 %v3931, 1.0
    %v3996 = vmin.f32 %v3932, 1.0
    %v3997 = vmin.f32 %v3933, 1.0
    %v3998 = vmin.f32 %v3934, 1.0
    %v3999 = vmin.f32 %v3935, 1.0
    %v4000 = vmin.f32 %v3936, 1.0
    %v4001 = vmin.f32 %v3937, 1.0
    %v4002 = vmin.f32 %v3938, 1.0
    %v4003 = vmin.f32 %v3939, 1.0
    %v4004 = vmin.f32 %v3940, 1.0
    %v4005 = vmin.f32 %v3941, 1.0
    %v4006 = vmin.f32 %v3942, 1.0
    %v4007 = vmin.f32 %v3943, 1.0
    %v4008 = vmin.f32 %v3944, 1.0
    %v4009 = vmin.f32 %v3945, 1.0
    %v4010 = vmin.f32 %v3946, 1.0
    %v4011 = vmin.f32 %v3947, 1.0
    %v4012 = vmin.f32 %v3948, 1.0
    %v4013 = vmin.f32 %v3949, 1.0
    %v4014 = vmin.f32 %v3950, 1.0
    %v4015 = vmin.f32 %v3951, 1.0
    %v4016 = vmin.f32 %v3952, 1.0
    %v4017 = vmin.f32 %v3953, 1.0
    %v4018 = vmin.f32 %v3954, 1.0
    %v4019 = vmin.f32 %v3955, 1.0
    %v4020 = vmin.f32 %v3956, 1.0
    %v4021 = vmin.f32 %v3957, 1.0
    %v4022 = vmin.f32 %v3958, 1.0
    %v4023 = vmin.f32 %v3959, 1.0
    %v4024 = vadd.f32 %v3832, 1e-08
    %v4025 = vadd.f32 %v3833, 1e-08
    %v4026 = vadd.f32 %v3834, 1e-08
    %v4027 = vadd.f32 %v3835, 1e-08
    %v4028 = vadd.f32 %v3836, 1e-08
    %v4029 = vadd.f32 %v3837, 1e-08
    %v4030 = vadd.f32 %v3838, 1e-08
    %v4031 = vadd.f32 %v3839, 1e-08
    %v4032 = vadd.f32 %v3840, 1e-08
    %v4033 = vadd.f32 %v3841, 1e-08
    %v4034 = vadd.f32 %v3842, 1e-08
    %v4035 = vadd.f32 %v3843, 1e-08
    %v4036 = vadd.f32 %v3844, 1e-08
    %v4037 = vadd.f32 %v3845, 1e-08
    %v4038 = vadd.f32 %v3846, 1e-08
    %v4039 = vadd.f32 %v3847, 1e-08
    %v4040 = vadd.f32 %v3848, 1e-08
    %v4041 = vadd.f32 %v3849, 1e-08
    %v4042 = vadd.f32 %v3850, 1e-08
    %v4043 = vadd.f32 %v3851, 1e-08
    %v4044 = vadd.f32 %v3852, 1e-08
    %v4045 = vadd.f32 %v3853, 1e-08
    %v4046 = vadd.f32 %v3854, 1e-08
    %v4047 = vadd.f32 %v3855, 1e-08
    %v4048 = vadd.f32 %v3856, 1e-08
    %v4049 = vadd.f32 %v3857, 1e-08
    %v4050 = vadd.f32 %v3858, 1e-08
    %v4051 = vadd.f32 %v3859, 1e-08
    %v4052 = vadd.f32 %v3860, 1e-08
    %v4053 = vadd.f32 %v3861, 1e-08
    %v4054 = vadd.f32 %v3862, 1e-08
    %v4055 = vadd.f32 %v3863, 1e-08
    %v4056 = vadd.f32 %v3864, 1e-08
    %v4057 = vadd.f32 %v3865, 1e-08
    %v4058 = vadd.f32 %v3866, 1e-08
    %v4059 = vadd.f32 %v3867, 1e-08
    %v4060 = vadd.f32 %v3868, 1e-08
    %v4061 = vadd.f32 %v3869, 1e-08
    %v4062 = vadd.f32 %v3870, 1e-08
    %v4063 = vadd.f32 %v3871, 1e-08
    %v4064 = vadd.f32 %v3872, 1e-08
    %v4065 = vadd.f32 %v3873, 1e-08
    %v4066 = vadd.f32 %v3874, 1e-08
    %v4067 = vadd.f32 %v3875, 1e-08
    %v4068 = vadd.f32 %v3876, 1e-08
    %v4069 = vadd.f32 %v3877, 1e-08
    %v4070 = vadd.f32 %v3878, 1e-08
    %v4071 = vadd.f32 %v3879, 1e-08
    %v4072 = vadd.f32 %v3880, 1e-08
    %v4073 = vadd.f32 %v3881, 1e-08
    %v4074 = vadd.f32 %v3882, 1e-08
    %v4075 = vadd.f32 %v3883, 1e-08
    %v4076 = vadd.f32 %v3884, 1e-08
    %v4077 = vadd.f32 %v3885, 1e-08
    %v4078 = vadd.f32 %v3886, 1e-08
    %v4079 = vadd.f32 %v3887, 1e-08
    %v4080 = vadd.f32 %v3888, 1e-08
    %v4081 = vadd.f32 %v3889, 1e-08
    %v4082 = vadd.f32 %v3890, 1e-08
    %v4083 = vadd.f32 %v3891, 1e-08
    %v4084 = vadd.f32 %v3892, 1e-08
    %v4085 = vadd.f32 %v3893, 1e-08
    %v4086 = vadd.f32 %v3894, 1e-08
    %v4087 = vadd.f32 %v3895, 1e-08
    %v4088 = vrcp.pop %v4024
    %v4089 = vrcp.pop %v4025
    %v4090 = vrcp.pop %v4026
    %v4091 = vrcp.pop %v4027
    %v4092 = vrcp.pop %v4028
    %v4093 = vrcp.pop %v4029
    %v4094 = vrcp.pop %v4030
    %v4095 = vrcp.pop %v4031
    %v4096 = vrcp.pop %v4032
    %v4097 = vrcp.pop %v4033
    %v4098 = vrcp.pop %v4034
    %v4099 = vrcp.pop %v4035
    %v4100 = vrcp.pop %v4036
    %v4101 = vrcp.pop %v4037
    %v4102 = vrcp.pop %v4038
    %v4103 = vrcp.pop %v4039
    %v4104 = vrcp.pop %v4040
    %v4105 = vrcp.pop %v4041
    %v4106 = vrcp.pop %v4042
    %v4107 = vrcp.pop %v4043
    %v4108 = vrcp.pop %v4044
    %v4109 = vrcp.pop %v4045
    %v4110 = vrcp.pop %v4046
    %v4111 = vrcp.pop %v4047
    %v4112 = vrcp.pop %v4048
    %v4113 = vrcp.pop %v4049
    %v4114 = vrcp.pop %v4050
    %v4115 = vrcp.pop %v4051
    %v4116 = vrcp.pop %v4052
    %v4117 = vrcp.pop %v4053
    %v4118 = vrcp.pop %v4054
    %v4119 = vrcp.pop %v4055
    %v4120 = vrcp.pop %v4056
    %v4121 = vrcp.pop %v4057
    %v4122 = vrcp.pop %v4058
    %v4123 = vrcp.pop %v4059
    %v4124 = vrcp.pop %v4060
    %v4125 = vrcp.pop %v4061
    %v4126 = vrcp.pop %v4062
    %v4127 = vrcp.pop %v4063
    %v4128 = vrcp.pop %v4064
    %v4129 = vrcp.pop %v4065
    %v4130 = vrcp.pop %v4066
    %v4131 = vrcp.pop %v4067
    %v4132 = vrcp.pop %v4068
    %v4133 = vrcp.pop %v4069
    %v4134 = vrcp.pop %v4070
    %v4135 = vrcp.pop %v4071
    %v4136 = vrcp.pop %v4072
    %v4137 = vrcp.pop %v4073
    %v4138 = vrcp.pop %v4074
    %v4139 = vrcp.pop %v4075
    %v4140 = vrcp.pop %v4076
    %v4141 = vrcp.pop %v4077
    %v4142 = vrcp.pop %v4078
    %v4143 = vrcp.pop %v4079
    %v4144 = vrcp.pop %v4080
    %v4145 = vrcp.pop %v4081
    %v4146 = vrcp.pop %v4082
    %v4147 = vrcp.pop %v4083
    %v4148 = vrcp.pop %v4084
    %v4149 = vrcp.pop %v4085
    %v4150 = vrcp.pop %v4086
    %v4151 = vrcp.pop %v4087
    %v4152 = vmul.f32 %v4088, 9.0
    %v4153 = vmul.f32 %v4089, 9.0
    %v4154 = vmul.f32 %v4090, 9.0
    %v4155 = vmul.f32 %v4091, 9.0
    %v4156 = vmul.f32 %v4092, 9.0
    %v4157 = vmul.f32 %v4093, 9.0
    %v4158 = vmul.f32 %v4094, 9.0
    %v4159 = vmul.f32 %v4095, 9.0
    %v4160 = vmul.f32 %v4096, 9.0
    %v4161 = vmul.f32 %v4097, 9.0
    %v4162 = vmul.f32 %v4098, 9.0
    %v4163 = vmul.f32 %v4099, 9.0
    %v4164 = vmul.f32 %v4100, 9.0
    %v4165 = vmul.f32 %v4101, 9.0
    %v4166 = vmul.f32 %v4102, 9.0
    %v4167 = vmul.f32 %v4103, 9.0
    %v4168 = vmul.f32 %v4104, 9.0
    %v4169 = vmul.f32 %v4105, 9.0
    %v4170 = vmul.f32 %v4106, 9.0
    %v4171 = vmul.f32 %v4107, 9.0
    %v4172 = vmul.f32 %v4108, 9.0
    %v4173 = vmul.f32 %v4109, 9.0
    %v4174 = vmul.f32 %v4110, 9.0
    %v4175 = vmul.f32 %v4111, 9.0
    %v4176 = vmul.f32 %v4112, 9.0
    %v4177 = vmul.f32 %v4113, 9.0
    %v4178 = vmul.f32 %v4114, 9.0
    %v4179 = vmul.f32 %v4115, 9.0
    %v4180 = vmul.f32 %v4116, 9.0
    %v4181 = vmul.f32 %v4117, 9.0
    %v4182 = vmul.f32 %v4118, 9.0
    %v4183 = vmul.f32 %v4119, 9.0
    %v4184 = vmul.f32 %v4120, 9.0
    %v4185 = vmul.f32 %v4121, 9.0
    %v4186 = vmul.f32 %v4122, 9.0
    %v4187 = vmul.f32 %v4123, 9.0
    %v4188 = vmul.f32 %v4124, 9.0
    %v4189 = vmul.f32 %v4125, 9.0
    %v4190 = vmul.f32 %v4126, 9.0
    %v4191 = vmul.f32 %v4127, 9.0
    %v4192 = vmul.f32 %v4128, 9.0
    %v4193 = vmul.f32 %v4129, 9.0
    %v4194 = vmul.f32 %v4130, 9.0
    %v4195 = vmul.f32 %v4131, 9.0
    %v4196 = vmul.f32 %v4132, 9.0
    %v4197 = vmul.f32 %v4133, 9.0
    %v4198 = vmul.f32 %v4134, 9.0
    %v4199 = vmul.f32 %v4135, 9.0
    %v4200 = vmul.f32 %v4136, 9.0
    %v4201 = vmul.f32 %v4137, 9.0
    %v4202 = vmul.f32 %v4138, 9.0
    %v4203 = vmul.f32 %v4139, 9.0
    %v4204 = vmul.f32 %v4140, 9.0
    %v4205 = vmul.f32 %v4141, 9.0
    %v4206 = vmul.f32 %v4142, 9.0
    %v4207 = vmul.f32 %v4143, 9.0
    %v4208 = vmul.f32 %v4144, 9.0
    %v4209 = vmul.f32 %v4145, 9.0
    %v4210 = vmul.f32 %v4146, 9.0
    %v4211 = vmul.f32 %v4147, 9.0
    %v4212 = vmul.f32 %v4148, 9.0
    %v4213 = vmul.f32 %v4149, 9.0
    %v4214 = vmul.f32 %v4150, 9.0
    %v4215 = vmul.f32 %v4151, 9.0
    %v4216 = vmul.f32 %v4152, %v3960
    %v4217 = vmul.f32 %v4153, %v3961
    %v4218 = vmul.f32 %v4154, %v3962
    %v4219 = vmul.f32 %v4155, %v3963
    %v4220 = vmul.f32 %v4156, %v3964
    %v4221 = vmul.f32 %v4157, %v3965
    %v4222 = vmul.f32 %v4158, %v3966
    %v4223 = vmul.f32 %v4159, %v3967
    %v4224 = vmul.f32 %v4160, %v3968
    %v4225 = vmul.f32 %v4161, %v3969
    %v4226 = vmul.f32 %v4162, %v3970
    %v4227 = vmul.f32 %v4163, %v3971
    %v4228 = vmul.f32 %v4164, %v3972
    %v4229 = vmul.f32 %v4165, %v3973
    %v4230 = vmul.f32 %v4166, %v3974
    %v4231 = vmul.f32 %v4167, %v3975
    %v4232 = vmul.f32 %v4168, %v3976
    %v4233 = vmul.f32 %v4169, %v3977
    %v4234 = vmul.f32 %v4170, %v3978
    %v4235 = vmul.f32 %v4171, %v3979
    %v4236 = vmul.f32 %v4172, %v3980
    %v4237 = vmul.f32 %v4173, %v3981
    %v4238 = vmul.f32 %v4174, %v3982
    %v4239 = vmul.f32 %v4175, %v3983
    %v4240 = vmul.f32 %v4176, %v3984
    %v4241 = vmul.f32 %v4177, %v3985
    %v4242 = vmul.f32 %v4178, %v3986
    %v4243 = vmul.f32 %v4179, %v3987
    %v4244 = vmul.f32 %v4180, %v3988
    %v4245 = vmul.f32 %v4181, %v3989
    %v4246 = vmul.f32 %v4182, %v3990
    %v4247 = vmul.f32 %v4183, %v3991
    %v4248 = vmul.f32 %v4184, %v3992
    %v4249 = vmul.f32 %v4185, %v3993
    %v4250 = vmul.f32 %v4186, %v3994
    %v4251 = vmul.f32 %v4187, %v3995
    %v4252 = vmul.f32 %v4188, %v3996
    %v4253 = vmul.f32 %v4189, %v3997
    %v4254 = vmul.f32 %v4190, %v3998
    %v4255 = vmul.f32 %v4191, %v3999
    %v4256 = vmul.f32 %v4192, %v4000
    %v4257 = vmul.f32 %v4193, %v4001
    %v4258 = vmul.f32 %v4194, %v4002
    %v4259 = vmul.f32 %v4195, %v4003
    %v4260 = vmul.f32 %v4196, %v4004
    %v4261 = vmul.f32 %v4197, %v4005
    %v4262 = vmul.f32 %v4198, %v4006
    %v4263 = vmul.f32 %v4199, %v4007
    %v4264 = vmul.f32 %v4200, %v4008
    %v4265 = vmul.f32 %v4201, %v4009
    %v4266 = vmul.f32 %v4202, %v4010
    %v4267 = vmul.f32 %v4203, %v4011
    %v4268 = vmul.f32 %v4204, %v4012
    %v4269 = vmul.f32 %v4205, %v4013
    %v4270 = vmul.f32 %v4206, %v4014
    %v4271 = vmul.f32 %v4207, %v4015
    %v4272 = vmul.f32 %v4208, %v4016
    %v4273 = vmul.f32 %v4209, %v4017
    %v4274 = vmul.f32 %v4210, %v4018
    %v4275 = vmul.f32 %v4211, %v4019
    %v4276 = vmul.f32 %v4212, %v4020
    %v4277 = vmul.f32 %v4213, %v4021
    %v4278 = vmul.f32 %v4214, %v4022
    %v4279 = vmul.f32 %v4215, %v4023
    %4281 = vset.pattern.permute.xlu0 0
    %4282 = vperm.xlu0 %4281, %v4216
    %v4283 = vpop.permute.xlu0 %4282
    %4286 = vset.pattern.permute.xlu0 0
    %4287 = vperm.xlu0 %4286, %v4217
    %v4288 = vpop.permute.xlu0 %4287
    %4291 = vset.pattern.permute.xlu0 0
    %4292 = vperm.xlu0 %4291, %v4218
    %v4293 = vpop.permute.xlu0 %4292
    %4296 = vset.pattern.permute.xlu0 0
    %4297 = vperm.xlu0 %4296, %v4219
    %v4298 = vpop.permute.xlu0 %4297
    %4301 = vset.pattern.permute.xlu0 0
    %4302 = vperm.xlu0 %4301, %v4220
    %v4303 = vpop.permute.xlu0 %4302
    %4306 = vset.pattern.permute.xlu0 0
    %4307 = vperm.xlu0 %4306, %v4221
    %v4308 = vpop.permute.xlu0 %4307
    %4311 = vset.pattern.permute.xlu0 0
    %4312 = vperm.xlu0 %4311, %v4222
    %v4313 = vpop.permute.xlu0 %4312
    %4316 = vset.pattern.permute.xlu0 0
    %4317 = vperm.xlu0 %4316, %v4223
    %v4318 = vpop.permute.xlu0 %4317
    %4321 = vset.pattern.permute.xlu0 0
    %4322 = vperm.xlu0 %4321, %v4224
    %v4323 = vpop.permute.xlu0 %4322
    %4326 = vset.pattern.permute.xlu0 0
    %4327 = vperm.xlu0 %4326, %v4225
    %v4328 = vpop.permute.xlu0 %4327
    %4331 = vset.pattern.permute.xlu0 0
    %4332 = vperm.xlu0 %4331, %v4226
    %v4333 = vpop.permute.xlu0 %4332
    %4336 = vset.pattern.permute.xlu0 0
    %4337 = vperm.xlu0 %4336, %v4227
    %v4338 = vpop.permute.xlu0 %4337
    %4341 = vset.pattern.permute.xlu0 0
    %4342 = vperm.xlu0 %4341, %v4228
    %v4343 = vpop.permute.xlu0 %4342
    %4346 = vset.pattern.permute.xlu0 0
    %4347 = vperm.xlu0 %4346, %v4229
    %v4348 = vpop.permute.xlu0 %4347
    %4351 = vset.pattern.permute.xlu0 0
    %4352 = vperm.xlu0 %4351, %v4230
    %v4353 = vpop.permute.xlu0 %4352
    %4356 = vset.pattern.permute.xlu0 0
    %4357 = vperm.xlu0 %4356, %v4231
    %v4358 = vpop.permute.xlu0 %4357
    %4361 = vset.pattern.permute.xlu0 0
    %4362 = vperm.xlu0 %4361, %v4232
    %v4363 = vpop.permute.xlu0 %4362
    %4366 = vset.pattern.permute.xlu0 0
    %4367 = vperm.xlu0 %4366, %v4233
    %v4368 = vpop.permute.xlu0 %4367
    %4371 = vset.pattern.permute.xlu0 0
    %4372 = vperm.xlu0 %4371, %v4234
    %v4373 = vpop.permute.xlu0 %4372
    %4376 = vset.pattern.permute.xlu0 0
    %4377 = vperm.xlu0 %4376, %v4235
    %v4378 = vpop.permute.xlu0 %4377
    %4381 = vset.pattern.permute.xlu0 0
    %4382 = vperm.xlu0 %4381, %v4236
    %v4383 = vpop.permute.xlu0 %4382
    %4386 = vset.pattern.permute.xlu0 0
    %4387 = vperm.xlu0 %4386, %v4237
    %v4388 = vpop.permute.xlu0 %4387
    %4391 = vset.pattern.permute.xlu0 0
    %4392 = vperm.xlu0 %4391, %v4238
    %v4393 = vpop.permute.xlu0 %4392
    %4396 = vset.pattern.permute.xlu0 0
    %4397 = vperm.xlu0 %4396, %v4239
    %v4398 = vpop.permute.xlu0 %4397
    %4401 = vset.pattern.permute.xlu0 0
    %4402 = vperm.xlu0 %4401, %v4240
    %v4403 = vpop.permute.xlu0 %4402
    %4406 = vset.pattern.permute.xlu0 0
    %4407 = vperm.xlu0 %4406, %v4241
    %v4408 = vpop.permute.xlu0 %4407
    %4411 = vset.pattern.permute.xlu0 0
    %4412 = vperm.xlu0 %4411, %v4242
    %v4413 = vpop.permute.xlu0 %4412
    %4416 = vset.pattern.permute.xlu0 0
    %4417 = vperm.xlu0 %4416, %v4243
    %v4418 = vpop.permute.xlu0 %4417
    %4421 = vset.pattern.permute.xlu0 0
    %4422 = vperm.xlu0 %4421, %v4244
    %v4423 = vpop.permute.xlu0 %4422
    %4426 = vset.pattern.permute.xlu0 0
    %4427 = vperm.xlu0 %4426, %v4245
    %v4428 = vpop.permute.xlu0 %4427
    %4431 = vset.pattern.permute.xlu0 0
    %4432 = vperm.xlu0 %4431, %v4246
    %v4433 = vpop.permute.xlu0 %4432
    %4436 = vset.pattern.permute.xlu0 0
    %4437 = vperm.xlu0 %4436, %v4247
    %v4438 = vpop.permute.xlu0 %4437
    %4441 = vset.pattern.permute.xlu0 0
    %4442 = vperm.xlu0 %4441, %v4248
    %v4443 = vpop.permute.xlu0 %4442
    %4446 = vset.pattern.permute.xlu0 0
    %4447 = vperm.xlu0 %4446, %v4249
    %v4448 = vpop.permute.xlu0 %4447
    %4451 = vset.pattern.permute.xlu0 0
    %4452 = vperm.xlu0 %4451, %v4250
    %v4453 = vpop.permute.xlu0 %4452
    %4456 = vset.pattern.permute.xlu0 0
    %4457 = vperm.xlu0 %4456, %v4251
    %v4458 = vpop.permute.xlu0 %4457
    %4461 = vset.pattern.permute.xlu0 0
    %4462 = vperm.xlu0 %4461, %v4252
    %v4463 = vpop.permute.xlu0 %4462
    %4466 = vset.pattern.permute.xlu0 0
    %4467 = vperm.xlu0 %4466, %v4253
    %v4468 = vpop.permute.xlu0 %4467
    %4471 = vset.pattern.permute.xlu0 0
    %4472 = vperm.xlu0 %4471, %v4254
    %v4473 = vpop.permute.xlu0 %4472
    %4476 = vset.pattern.permute.xlu0 0
    %4477 = vperm.xlu0 %4476, %v4255
    %v4478 = vpop.permute.xlu0 %4477
    %4481 = vset.pattern.permute.xlu0 0
    %4482 = vperm.xlu0 %4481, %v4256
    %v4483 = vpop.permute.xlu0 %4482
    %4486 = vset.pattern.permute.xlu0 0
    %4487 = vperm.xlu0 %4486, %v4257
    %v4488 = vpop.permute.xlu0 %4487
    %4491 = vset.pattern.permute.xlu0 0
    %4492 = vperm.xlu0 %4491, %v4258
    %v4493 = vpop.permute.xlu0 %4492
    %4496 = vset.pattern.permute.xlu0 0
    %4497 = vperm.xlu0 %4496, %v4259
    %v4498 = vpop.permute.xlu0 %4497
    %4501 = vset.pattern.permute.xlu0 0
    %4502 = vperm.xlu0 %4501, %v4260
    %v4503 = vpop.permute.xlu0 %4502
    %4506 = vset.pattern.permute.xlu0 0
    %4507 = vperm.xlu0 %4506, %v4261
    %v4508 = vpop.permute.xlu0 %4507
    %4511 = vset.pattern.permute.xlu0 0
    %4512 = vperm.xlu0 %4511, %v4262
    %v4513 = vpop.permute.xlu0 %4512
    %4516 = vset.pattern.permute.xlu0 0
    %4517 = vperm.xlu0 %4516, %v4263
    %v4518 = vpop.permute.xlu0 %4517
    %4521 = vset.pattern.permute.xlu0 0
    %4522 = vperm.xlu0 %4521, %v4264
    %v4523 = vpop.permute.xlu0 %4522
    %4526 = vset.pattern.permute.xlu0 0
    %4527 = vperm.xlu0 %4526, %v4265
    %v4528 = vpop.permute.xlu0 %4527
    %4531 = vset.pattern.permute.xlu0 0
    %4532 = vperm.xlu0 %4531, %v4266
    %v4533 = vpop.permute.xlu0 %4532
    %4536 = vset.pattern.permute.xlu0 0
    %4537 = vperm.xlu0 %4536, %v4267
    %v4538 = vpop.permute.xlu0 %4537
    %4541 = vset.pattern.permute.xlu0 0
    %4542 = vperm.xlu0 %4541, %v4268
    %v4543 = vpop.permute.xlu0 %4542
    %4546 = vset.pattern.permute.xlu0 0
    %4547 = vperm.xlu0 %4546, %v4269
    %v4548 = vpop.permute.xlu0 %4547
    %4551 = vset.pattern.permute.xlu0 0
    %4552 = vperm.xlu0 %4551, %v4270
    %v4553 = vpop.permute.xlu0 %4552
    %4556 = vset.pattern.permute.xlu0 0
    %4557 = vperm.xlu0 %4556, %v4271
    %v4558 = vpop.permute.xlu0 %4557
    %4561 = vset.pattern.permute.xlu0 0
    %4562 = vperm.xlu0 %4561, %v4272
    %v4563 = vpop.permute.xlu0 %4562
    %4566 = vset.pattern.permute.xlu0 0
    %4567 = vperm.xlu0 %4566, %v4273
    %v4568 = vpop.permute.xlu0 %4567
    %4571 = vset.pattern.permute.xlu0 0
    %4572 = vperm.xlu0 %4571, %v4274
    %v4573 = vpop.permute.xlu0 %4572
    %4576 = vset.pattern.permute.xlu0 0
    %4577 = vperm.xlu0 %4576, %v4275
    %v4578 = vpop.permute.xlu0 %4577
    %4581 = vset.pattern.permute.xlu0 0
    %4582 = vperm.xlu0 %4581, %v4276
    %v4583 = vpop.permute.xlu0 %4582
    %4586 = vset.pattern.permute.xlu0 0
    %4587 = vperm.xlu0 %4586, %v4277
    %v4588 = vpop.permute.xlu0 %4587
    %4591 = vset.pattern.permute.xlu0 0
    %4592 = vperm.xlu0 %4591, %v4278
    %v4593 = vpop.permute.xlu0 %4592
    %4596 = vset.pattern.permute.xlu0 0
    %4597 = vperm.xlu0 %4596, %v4279
    %v4598 = vpop.permute.xlu0 %4597
    %v4600 = vmul.f32 %v3578, %v4283
    %v4601 = vmul.f32 %v3581, %v4288
    %v4602 = vmul.f32 %v3586, %v4293
    %v4603 = vmul.f32 %v3589, %v4298
    %v4604 = vmul.f32 %v3594, %v4303
    %v4605 = vmul.f32 %v3597, %v4308
    %v4606 = vmul.f32 %v3602, %v4313
    %v4607 = vmul.f32 %v3605, %v4318
    %v4608 = vmul.f32 %v3610, %v4323
    %v4609 = vmul.f32 %v3613, %v4328
    %v4610 = vmul.f32 %v3618, %v4333
    %v4611 = vmul.f32 %v3621, %v4338
    %v4612 = vmul.f32 %v3626, %v4343
    %v4613 = vmul.f32 %v3629, %v4348
    %v4614 = vmul.f32 %v3634, %v4353
    %v4615 = vmul.f32 %v3637, %v4358
    %v4616 = vmul.f32 %v3642, %v4363
    %v4617 = vmul.f32 %v3645, %v4368
    %v4618 = vmul.f32 %v3650, %v4373
    %v4619 = vmul.f32 %v3653, %v4378
    %v4620 = vmul.f32 %v3658, %v4383
    %v4621 = vmul.f32 %v3661, %v4388
    %v4622 = vmul.f32 %v3666, %v4393
    %v4623 = vmul.f32 %v3669, %v4398
    %v4624 = vmul.f32 %v3674, %v4403
    %v4625 = vmul.f32 %v3677, %v4408
    %v4626 = vmul.f32 %v3682, %v4413
    %v4627 = vmul.f32 %v3685, %v4418
    %v4628 = vmul.f32 %v3690, %v4423
    %v4629 = vmul.f32 %v3693, %v4428
    %v4630 = vmul.f32 %v3698, %v4433
    %v4631 = vmul.f32 %v3701, %v4438
    %v4632 = vmul.f32 %v3706, %v4443
    %v4633 = vmul.f32 %v3709, %v4448
    %v4634 = vmul.f32 %v3714, %v4453
    %v4635 = vmul.f32 %v3717, %v4458
    %v4636 = vmul.f32 %v3722, %v4463
    %v4637 = vmul.f32 %v3725, %v4468
    %v4638 = vmul.f32 %v3730, %v4473
    %v4639 = vmul.f32 %v3733, %v4478
    %v4640 = vmul.f32 %v3738, %v4483
    %v4641 = vmul.f32 %v3741, %v4488
    %v4642 = vmul.f32 %v3746, %v4493
    %v4643 = vmul.f32 %v3749, %v4498
    %v4644 = vmul.f32 %v3754, %v4503
    %v4645 = vmul.f32 %v3757, %v4508
    %v4646 = vmul.f32 %v3762, %v4513
    %v4647 = vmul.f32 %v3765, %v4518
    %v4648 = vmul.f32 %v3770, %v4523
    %v4649 = vmul.f32 %v3773, %v4528
    %v4650 = vmul.f32 %v3778, %v4533
    %v4651 = vmul.f32 %v3781, %v4538
    %v4652 = vmul.f32 %v3786, %v4543
    %v4653 = vmul.f32 %v3789, %v4548
    %v4654 = vmul.f32 %v3794, %v4553
    %v4655 = vmul.f32 %v3797, %v4558
    %v4656 = vmul.f32 %v3802, %v4563
    %v4657 = vmul.f32 %v3805, %v4568
    %v4658 = vmul.f32 %v3810, %v4573
    %v4659 = vmul.f32 %v3813, %v4578
    %v4660 = vmul.f32 %v3818, %v4583
    %v4661 = vmul.f32 %v3821, %v4588
    %v4662 = vmul.f32 %v3826, %v4593
    %v4663 = vmul.f32 %v3829, %v4598
    %v4664 = vld [vmem:[%s3] sm:$0x1]
    %v4666 = vlaneseq
    %v4667 = vshrl.u32 %v4666, 7
    %v4668 = vsub.s32 0, %v4667
    %v4669 = vrot.slane %v4664, %v4668
    %v4671 = vadd.f32 %v4600, %v4669
    %v4672 = vadd.f32 %v4601, %v4669
    %v4673 = vadd.f32 %v4602, %v4669
    %v4674 = vadd.f32 %v4603, %v4669
    %v4675 = vadd.f32 %v4604, %v4669
    %v4676 = vadd.f32 %v4605, %v4669
    %v4677 = vadd.f32 %v4606, %v4669
    %v4678 = vadd.f32 %v4607, %v4669
    %v4679 = vadd.f32 %v4608, %v4669
    %v4680 = vadd.f32 %v4609, %v4669
    %v4681 = vadd.f32 %v4610, %v4669
    %v4682 = vadd.f32 %v4611, %v4669
    %v4683 = vadd.f32 %v4612, %v4669
    %v4684 = vadd.f32 %v4613, %v4669
    %v4685 = vadd.f32 %v4614, %v4669
    %v4686 = vadd.f32 %v4615, %v4669
    %v4687 = vadd.f32 %v4616, %v4669
    %v4688 = vadd.f32 %v4617, %v4669
    %v4689 = vadd.f32 %v4618, %v4669
    %v4690 = vadd.f32 %v4619, %v4669
    %v4691 = vadd.f32 %v4620, %v4669
    %v4692 = vadd.f32 %v4621, %v4669
    %v4693 = vadd.f32 %v4622, %v4669
    %v4694 = vadd.f32 %v4623, %v4669
    %v4695 = vadd.f32 %v4624, %v4669
    %v4696 = vadd.f32 %v4625, %v4669
    %v4697 = vadd.f32 %v4626, %v4669
    %v4698 = vadd.f32 %v4627, %v4669
    %v4699 = vadd.f32 %v4628, %v4669
    %v4700 = vadd.f32 %v4629, %v4669
    %v4701 = vadd.f32 %v4630, %v4669
    %v4702 = vadd.f32 %v4631, %v4669
    %v4703 = vadd.f32 %v4632, %v4669
    %v4704 = vadd.f32 %v4633, %v4669
    %v4705 = vadd.f32 %v4634, %v4669
    %v4706 = vadd.f32 %v4635, %v4669
    %v4707 = vadd.f32 %v4636, %v4669
    %v4708 = vadd.f32 %v4637, %v4669
    %v4709 = vadd.f32 %v4638, %v4669
    %v4710 = vadd.f32 %v4639, %v4669
    %v4711 = vadd.f32 %v4640, %v4669
    %v4712 = vadd.f32 %v4641, %v4669
    %v4713 = vadd.f32 %v4642, %v4669
    %v4714 = vadd.f32 %v4643, %v4669
    %v4715 = vadd.f32 %v4644, %v4669
    %v4716 = vadd.f32 %v4645, %v4669
    %v4717 = vadd.f32 %v4646, %v4669
    %v4718 = vadd.f32 %v4647, %v4669
    %v4719 = vadd.f32 %v4648, %v4669
    %v4720 = vadd.f32 %v4649, %v4669
    %v4721 = vadd.f32 %v4650, %v4669
    %v4722 = vadd.f32 %v4651, %v4669
    %v4723 = vadd.f32 %v4652, %v4669
    %v4724 = vadd.f32 %v4653, %v4669
    %v4725 = vadd.f32 %v4654, %v4669
    %v4726 = vadd.f32 %v4655, %v4669
    %v4727 = vadd.f32 %v4656, %v4669
    %v4728 = vadd.f32 %v4657, %v4669
    %v4729 = vadd.f32 %v4658, %v4669
    %v4730 = vadd.f32 %v4659, %v4669
    %v4731 = vadd.f32 %v4660, %v4669
    %v4732 = vadd.f32 %v4661, %v4669
    %v4733 = vadd.f32 %v4662, %v4669
    %v4734 = vadd.f32 %v4663, %v4669
    %4736 = vset.pattern.permute.xlu0 0
    %4737 = vperm.xlu0 %4736, %v3960
    %v4738 = vpop.permute.xlu0 %4737
    %4741 = vset.pattern.permute.xlu0 0
    %4742 = vperm.xlu0 %4741, %v3961
    %v4743 = vpop.permute.xlu0 %4742
    %4746 = vset.pattern.permute.xlu0 0
    %4747 = vperm.xlu0 %4746, %v3962
    %v4748 = vpop.permute.xlu0 %4747
    %4751 = vset.pattern.permute.xlu0 0
    %4752 = vperm.xlu0 %4751, %v3963
    %v4753 = vpop.permute.xlu0 %4752
    %4756 = vset.pattern.permute.xlu0 0
    %4757 = vperm.xlu0 %4756, %v3964
    %v4758 = vpop.permute.xlu0 %4757
    %4761 = vset.pattern.permute.xlu0 0
    %4762 = vperm.xlu0 %4761, %v3965
    %v4763 = vpop.permute.xlu0 %4762
    %4766 = vset.pattern.permute.xlu0 0
    %4767 = vperm.xlu0 %4766, %v3966
    %v4768 = vpop.permute.xlu0 %4767
    %4771 = vset.pattern.permute.xlu0 0
    %4772 = vperm.xlu0 %4771, %v3967
    %v4773 = vpop.permute.xlu0 %4772
    %4776 = vset.pattern.permute.xlu0 0
    %4777 = vperm.xlu0 %4776, %v3968
    %v4778 = vpop.permute.xlu0 %4777
    %4781 = vset.pattern.permute.xlu0 0
    %4782 = vperm.xlu0 %4781, %v3969
    %v4783 = vpop.permute.xlu0 %4782
    %4786 = vset.pattern.permute.xlu0 0
    %4787 = vperm.xlu0 %4786, %v3970
    %v4788 = vpop.permute.xlu0 %4787
    %4791 = vset.pattern.permute.xlu0 0
    %4792 = vperm.xlu0 %4791, %v3971
    %v4793 = vpop.permute.xlu0 %4792
    %4796 = vset.pattern.permute.xlu0 0
    %4797 = vperm.xlu0 %4796, %v3972
    %v4798 = vpop.permute.xlu0 %4797
    %4801 = vset.pattern.permute.xlu0 0
    %4802 = vperm.xlu0 %4801, %v3973
    %v4803 = vpop.permute.xlu0 %4802
    %4806 = vset.pattern.permute.xlu0 0
    %4807 = vperm.xlu0 %4806, %v3974
    %v4808 = vpop.permute.xlu0 %4807
    %4811 = vset.pattern.permute.xlu0 0
    %4812 = vperm.xlu0 %4811, %v3975
    %v4813 = vpop.permute.xlu0 %4812
    %4816 = vset.pattern.permute.xlu0 0
    %4817 = vperm.xlu0 %4816, %v3976
    %v4818 = vpop.permute.xlu0 %4817
    %4821 = vset.pattern.permute.xlu0 0
    %4822 = vperm.xlu0 %4821, %v3977
    %v4823 = vpop.permute.xlu0 %4822
    %4826 = vset.pattern.permute.xlu0 0
    %4827 = vperm.xlu0 %4826, %v3978
    %v4828 = vpop.permute.xlu0 %4827
    %4831 = vset.pattern.permute.xlu0 0
    %4832 = vperm.xlu0 %4831, %v3979
    %v4833 = vpop.permute.xlu0 %4832
    %4836 = vset.pattern.permute.xlu0 0
    %4837 = vperm.xlu0 %4836, %v3980
    %v4838 = vpop.permute.xlu0 %4837
    %4841 = vset.pattern.permute.xlu0 0
    %4842 = vperm.xlu0 %4841, %v3981
    %v4843 = vpop.permute.xlu0 %4842
    %4846 = vset.pattern.permute.xlu0 0
    %4847 = vperm.xlu0 %4846, %v3982
    %v4848 = vpop.permute.xlu0 %4847
    %4851 = vset.pattern.permute.xlu0 0
    %4852 = vperm.xlu0 %4851, %v3983
    %v4853 = vpop.permute.xlu0 %4852
    %4856 = vset.pattern.permute.xlu0 0
    %4857 = vperm.xlu0 %4856, %v3984
    %v4858 = vpop.permute.xlu0 %4857
    %4861 = vset.pattern.permute.xlu0 0
    %4862 = vperm.xlu0 %4861, %v3985
    %v4863 = vpop.permute.xlu0 %4862
    %4866 = vset.pattern.permute.xlu0 0
    %4867 = vperm.xlu0 %4866, %v3986
    %v4868 = vpop.permute.xlu0 %4867
    %4871 = vset.pattern.permute.xlu0 0
    %4872 = vperm.xlu0 %4871, %v3987
    %v4873 = vpop.permute.xlu0 %4872
    %4876 = vset.pattern.permute.xlu0 0
    %4877 = vperm.xlu0 %4876, %v3988
    %v4878 = vpop.permute.xlu0 %4877
    %4881 = vset.pattern.permute.xlu0 0
    %4882 = vperm.xlu0 %4881, %v3989
    %v4883 = vpop.permute.xlu0 %4882
    %4886 = vset.pattern.permute.xlu0 0
    %4887 = vperm.xlu0 %4886, %v3990
    %v4888 = vpop.permute.xlu0 %4887
    %4891 = vset.pattern.permute.xlu0 0
    %4892 = vperm.xlu0 %4891, %v3991
    %v4893 = vpop.permute.xlu0 %4892
    %4896 = vset.pattern.permute.xlu0 0
    %4897 = vperm.xlu0 %4896, %v3992
    %v4898 = vpop.permute.xlu0 %4897
    %4901 = vset.pattern.permute.xlu0 0
    %4902 = vperm.xlu0 %4901, %v3993
    %v4903 = vpop.permute.xlu0 %4902
    %4906 = vset.pattern.permute.xlu0 0
    %4907 = vperm.xlu0 %4906, %v3994
    %v4908 = vpop.permute.xlu0 %4907
    %4911 = vset.pattern.permute.xlu0 0
    %4912 = vperm.xlu0 %4911, %v3995
    %v4913 = vpop.permute.xlu0 %4912
    %4916 = vset.pattern.permute.xlu0 0
    %4917 = vperm.xlu0 %4916, %v3996
    %v4918 = vpop.permute.xlu0 %4917
    %4921 = vset.pattern.permute.xlu0 0
    %4922 = vperm.xlu0 %4921, %v3997
    %v4923 = vpop.permute.xlu0 %4922
    %4926 = vset.pattern.permute.xlu0 0
    %4927 = vperm.xlu0 %4926, %v3998
    %v4928 = vpop.permute.xlu0 %4927
    %4931 = vset.pattern.permute.xlu0 0
    %4932 = vperm.xlu0 %4931, %v3999
    %v4933 = vpop.permute.xlu0 %4932
    %4936 = vset.pattern.permute.xlu0 0
    %4937 = vperm.xlu0 %4936, %v4000
    %v4938 = vpop.permute.xlu0 %4937
    %4941 = vset.pattern.permute.xlu0 0
    %4942 = vperm.xlu0 %4941, %v4001
    %v4943 = vpop.permute.xlu0 %4942
    %4946 = vset.pattern.permute.xlu0 0
    %4947 = vperm.xlu0 %4946, %v4002
    %v4948 = vpop.permute.xlu0 %4947
    %4951 = vset.pattern.permute.xlu0 0
    %4952 = vperm.xlu0 %4951, %v4003
    %v4953 = vpop.permute.xlu0 %4952
    %4956 = vset.pattern.permute.xlu0 0
    %4957 = vperm.xlu0 %4956, %v4004
    %v4958 = vpop.permute.xlu0 %4957
    %4961 = vset.pattern.permute.xlu0 0
    %4962 = vperm.xlu0 %4961, %v4005
    %v4963 = vpop.permute.xlu0 %4962
    %4966 = vset.pattern.permute.xlu0 0
    %4967 = vperm.xlu0 %4966, %v4006
    %v4968 = vpop.permute.xlu0 %4967
    %4971 = vset.pattern.permute.xlu0 0
    %4972 = vperm.xlu0 %4971, %v4007
    %v4973 = vpop.permute.xlu0 %4972
    %4976 = vset.pattern.permute.xlu0 0
    %4977 = vperm.xlu0 %4976, %v4008
    %v4978 = vpop.permute.xlu0 %4977
    %4981 = vset.pattern.permute.xlu0 0
    %4982 = vperm.xlu0 %4981, %v4009
    %v4983 = vpop.permute.xlu0 %4982
    %4986 = vset.pattern.permute.xlu0 0
    %4987 = vperm.xlu0 %4986, %v4010
    %v4988 = vpop.permute.xlu0 %4987
    %4991 = vset.pattern.permute.xlu0 0
    %4992 = vperm.xlu0 %4991, %v4011
    %v4993 = vpop.permute.xlu0 %4992
    %4996 = vset.pattern.permute.xlu0 0
    %4997 = vperm.xlu0 %4996, %v4012
    %v4998 = vpop.permute.xlu0 %4997
    %5001 = vset.pattern.permute.xlu0 0
    %5002 = vperm.xlu0 %5001, %v4013
    %v5003 = vpop.permute.xlu0 %5002
    %5006 = vset.pattern.permute.xlu0 0
    %5007 = vperm.xlu0 %5006, %v4014
    %v5008 = vpop.permute.xlu0 %5007
    %5011 = vset.pattern.permute.xlu0 0
    %5012 = vperm.xlu0 %5011, %v4015
    %v5013 = vpop.permute.xlu0 %5012
    %5016 = vset.pattern.permute.xlu0 0
    %5017 = vperm.xlu0 %5016, %v4016
    %v5018 = vpop.permute.xlu0 %5017
    %5021 = vset.pattern.permute.xlu0 0
    %5022 = vperm.xlu0 %5021, %v4017
    %v5023 = vpop.permute.xlu0 %5022
    %5026 = vset.pattern.permute.xlu0 0
    %5027 = vperm.xlu0 %5026, %v4018
    %v5028 = vpop.permute.xlu0 %5027
    %5031 = vset.pattern.permute.xlu0 0
    %5032 = vperm.xlu0 %5031, %v4019
    %v5033 = vpop.permute.xlu0 %5032
    %5036 = vset.pattern.permute.xlu0 0
    %5037 = vperm.xlu0 %5036, %v4020
    %v5038 = vpop.permute.xlu0 %5037
    %5041 = vset.pattern.permute.xlu0 0
    %5042 = vperm.xlu0 %5041, %v4021
    %v5043 = vpop.permute.xlu0 %5042
    %5046 = vset.pattern.permute.xlu0 0
    %5047 = vperm.xlu0 %5046, %v4022
    %v5048 = vpop.permute.xlu0 %5047
    %5051 = vset.pattern.permute.xlu0 0
    %5052 = vperm.xlu0 %5051, %v4023
    %v5053 = vpop.permute.xlu0 %5052
    %v5055 = vmul.f32 %v4671, %v4738
    %v5056 = vmul.f32 %v4672, %v4743
    %v5057 = vmul.f32 %v4673, %v4748
    %v5058 = vmul.f32 %v4674, %v4753
    %v5059 = vmul.f32 %v4675, %v4758
    %v5060 = vmul.f32 %v4676, %v4763
    %v5061 = vmul.f32 %v4677, %v4768
    %v5062 = vmul.f32 %v4678, %v4773
    %v5063 = vmul.f32 %v4679, %v4778
    %v5064 = vmul.f32 %v4680, %v4783
    %v5065 = vmul.f32 %v4681, %v4788
    %v5066 = vmul.f32 %v4682, %v4793
    %v5067 = vmul.f32 %v4683, %v4798
    %v5068 = vmul.f32 %v4684, %v4803
    %v5069 = vmul.f32 %v4685, %v4808
    %v5070 = vmul.f32 %v4686, %v4813
    %v5071 = vmul.f32 %v4687, %v4818
    %v5072 = vmul.f32 %v4688, %v4823
    %v5073 = vmul.f32 %v4689, %v4828
    %v5074 = vmul.f32 %v4690, %v4833
    %v5075 = vmul.f32 %v4691, %v4838
    %v5076 = vmul.f32 %v4692, %v4843
    %v5077 = vmul.f32 %v4693, %v4848
    %v5078 = vmul.f32 %v4694, %v4853
    %v5079 = vmul.f32 %v4695, %v4858
    %v5080 = vmul.f32 %v4696, %v4863
    %v5081 = vmul.f32 %v4697, %v4868
    %v5082 = vmul.f32 %v4698, %v4873
    %v5083 = vmul.f32 %v4699, %v4878
    %v5084 = vmul.f32 %v4700, %v4883
    %v5085 = vmul.f32 %v4701, %v4888
    %v5086 = vmul.f32 %v4702, %v4893
    %v5087 = vmul.f32 %v4703, %v4898
    %v5088 = vmul.f32 %v4704, %v4903
    %v5089 = vmul.f32 %v4705, %v4908
    %v5090 = vmul.f32 %v4706, %v4913
    %v5091 = vmul.f32 %v4707, %v4918
    %v5092 = vmul.f32 %v4708, %v4923
    %v5093 = vmul.f32 %v4709, %v4928
    %v5094 = vmul.f32 %v4710, %v4933
    %v5095 = vmul.f32 %v4711, %v4938
    %v5096 = vmul.f32 %v4712, %v4943
    %v5097 = vmul.f32 %v4713, %v4948
    %v5098 = vmul.f32 %v4714, %v4953
    %v5099 = vmul.f32 %v4715, %v4958
    %v5100 = vmul.f32 %v4716, %v4963
    %v5101 = vmul.f32 %v4717, %v4968
    %v5102 = vmul.f32 %v4718, %v4973
    %v5103 = vmul.f32 %v4719, %v4978
    %v5104 = vmul.f32 %v4720, %v4983
    %v5105 = vmul.f32 %v4721, %v4988
    %v5106 = vmul.f32 %v4722, %v4993
    %v5107 = vmul.f32 %v4723, %v4998
    %v5108 = vmul.f32 %v4724, %v5003
    %v5109 = vmul.f32 %v4725, %v5008
    %v5110 = vmul.f32 %v4726, %v5013
    %v5111 = vmul.f32 %v4727, %v5018
    %v5112 = vmul.f32 %v4728, %v5023
    %v5113 = vmul.f32 %v4729, %v5028
    %v5114 = vmul.f32 %v4730, %v5033
    %v5115 = vmul.f32 %v4731, %v5038
    %v5116 = vmul.f32 %v4732, %v5043
    %v5117 = vmul.f32 %v4733, %v5048
    %v5118 = vmul.f32 %v4734, %v5053
    %v5119 = vmax.f32 %v5055, 0.0
    %v5120 = vmax.f32 %v5056, 0.0
    %v5121 = vmax.f32 %v5057, 0.0
    %v5122 = vmax.f32 %v5058, 0.0
    %v5123 = vmax.f32 %v5059, 0.0
    %v5124 = vmax.f32 %v5060, 0.0
    %v5125 = vmax.f32 %v5061, 0.0
    %v5126 = vmax.f32 %v5062, 0.0
    %v5127 = vmax.f32 %v5063, 0.0
    %v5128 = vmax.f32 %v5064, 0.0
    %v5129 = vmax.f32 %v5065, 0.0
    %v5130 = vmax.f32 %v5066, 0.0
    %v5131 = vmax.f32 %v5067, 0.0
    %v5132 = vmax.f32 %v5068, 0.0
    %v5133 = vmax.f32 %v5069, 0.0
    %v5134 = vmax.f32 %v5070, 0.0
    %v5135 = vmax.f32 %v5071, 0.0
    %v5136 = vmax.f32 %v5072, 0.0
    %v5137 = vmax.f32 %v5073, 0.0
    %v5138 = vmax.f32 %v5074, 0.0
    %v5139 = vmax.f32 %v5075, 0.0
    %v5140 = vmax.f32 %v5076, 0.0
    %v5141 = vmax.f32 %v5077, 0.0
    %v5142 = vmax.f32 %v5078, 0.0
    %v5143 = vmax.f32 %v5079, 0.0
    %v5144 = vmax.f32 %v5080, 0.0
    %v5145 = vmax.f32 %v5081, 0.0
    %v5146 = vmax.f32 %v5082, 0.0
    %v5147 = vmax.f32 %v5083, 0.0
    %v5148 = vmax.f32 %v5084, 0.0
    %v5149 = vmax.f32 %v5085, 0.0
    %v5150 = vmax.f32 %v5086, 0.0
    %v5151 = vmax.f32 %v5087, 0.0
    %v5152 = vmax.f32 %v5088, 0.0
    %v5153 = vmax.f32 %v5089, 0.0
    %v5154 = vmax.f32 %v5090, 0.0
    %v5155 = vmax.f32 %v5091, 0.0
    %v5156 = vmax.f32 %v5092, 0.0
    %v5157 = vmax.f32 %v5093, 0.0
    %v5158 = vmax.f32 %v5094, 0.0
    %v5159 = vmax.f32 %v5095, 0.0
    %v5160 = vmax.f32 %v5096, 0.0
    %v5161 = vmax.f32 %v5097, 0.0
    %v5162 = vmax.f32 %v5098, 0.0
    %v5163 = vmax.f32 %v5099, 0.0
    %v5164 = vmax.f32 %v5100, 0.0
    %v5165 = vmax.f32 %v5101, 0.0
    %v5166 = vmax.f32 %v5102, 0.0
    %v5167 = vmax.f32 %v5103, 0.0
    %v5168 = vmax.f32 %v5104, 0.0
    %v5169 = vmax.f32 %v5105, 0.0
    %v5170 = vmax.f32 %v5106, 0.0
    %v5171 = vmax.f32 %v5107, 0.0
    %v5172 = vmax.f32 %v5108, 0.0
    %v5173 = vmax.f32 %v5109, 0.0
    %v5174 = vmax.f32 %v5110, 0.0
    %v5175 = vmax.f32 %v5111, 0.0
    %v5176 = vmax.f32 %v5112, 0.0
    %v5177 = vmax.f32 %v5113, 0.0
    %v5178 = vmax.f32 %v5114, 0.0
    %v5179 = vmax.f32 %v5115, 0.0
    %v5180 = vmax.f32 %v5116, 0.0
    %v5181 = vmax.f32 %v5117, 0.0
    %v5182 = vmax.f32 %v5118, 0.0
    %5183 = vst [vmem:[#allocation2] sm:$0xff] %v5119
    %5184 = vst [vmem:[#allocation2 + $0x8] sm:$0xff] %v5120
    %5185 = vst [vmem:[#allocation2 + $0x10] sm:$0xff] %v5121
    %5186 = vst [vmem:[#allocation2 + $0x18] sm:$0xff] %v5122
    %5187 = vst [vmem:[#allocation2 + $0x20] sm:$0xff] %v5123
    %5188 = vst [vmem:[#allocation2 + $0x28] sm:$0xff] %v5124
    %5189 = vst [vmem:[#allocation2 + $0x30] sm:$0xff] %v5125
    %5190 = vst [vmem:[#allocation2 + $0x38] sm:$0xff] %v5126
    %5191 = vst [vmem:[#allocation2 + $0x40] sm:$0xff] %v5127
    %5192 = vst [vmem:[#allocation2 + $0x48] sm:$0xff] %v5128
    %5193 = vst [vmem:[#allocation2 + $0x50] sm:$0xff] %v5129
    %5194 = vst [vmem:[#allocation2 + $0x58] sm:$0xff] %v5130
    %5195 = vst [vmem:[#allocation2 + $0x60] sm:$0xff] %v5131
    %5196 = vst [vmem:[#allocation2 + $0x68] sm:$0xff] %v5132
    %5197 = vst [vmem:[#allocation2 + $0x70] sm:$0xff] %v5133
    %5198 = vst [vmem:[#allocation2 + $0x78] sm:$0xff] %v5134
    %5199 = vst [vmem:[#allocation2 + $0x80] sm:$0xff] %v5135
    %5200 = vst [vmem:[#allocation2 + $0x88] sm:$0xff] %v5136
    %5201 = vst [vmem:[#allocation2 + $0x90] sm:$0xff] %v5137
    %5202 = vst [vmem:[#allocation2 + $0x98] sm:$0xff] %v5138
    %5203 = vst [vmem:[#allocation2 + $0xa0] sm:$0xff] %v5139
    %5204 = vst [vmem:[#allocation2 + $0xa8] sm:$0xff] %v5140
    %5205 = vst [vmem:[#allocation2 + $0xb0] sm:$0xff] %v5141
    %5206 = vst [vmem:[#allocation2 + $0xb8] sm:$0xff] %v5142
    %5207 = vst [vmem:[#allocation2 + $0xc0] sm:$0xff] %v5143
    %5208 = vst [vmem:[#allocation2 + $0xc8] sm:$0xff] %v5144
    %5209 = vst [vmem:[#allocation2 + $0xd0] sm:$0xff] %v5145
    %5210 = vst [vmem:[#allocation2 + $0xd8] sm:$0xff] %v5146
    %5211 = vst [vmem:[#allocation2 + $0xe0] sm:$0xff] %v5147
    %5212 = vst [vmem:[#allocation2 + $0xe8] sm:$0xff] %v5148
    %5213 = vst [vmem:[#allocation2 + $0xf0] sm:$0xff] %v5149
    %5214 = vst [vmem:[#allocation2 + $0xf8] sm:$0xff] %v5150
    %5215 = vst [vmem:[#allocation2 + $0x100] sm:$0xff] %v5151
    %5216 = vst [vmem:[#allocation2 + $0x108] sm:$0xff] %v5152
    %5217 = vst [vmem:[#allocation2 + $0x110] sm:$0xff] %v5153
    %5218 = vst [vmem:[#allocation2 + $0x118] sm:$0xff] %v5154
    %5219 = vst [vmem:[#allocation2 + $0x120] sm:$0xff] %v5155
    %5220 = vst [vmem:[#allocation2 + $0x128] sm:$0xff] %v5156
    %5221 = vst [vmem:[#allocation2 + $0x130] sm:$0xff] %v5157
    %5222 = vst [vmem:[#allocation2 + $0x138] sm:$0xff] %v5158
    %5223 = vst [vmem:[#allocation2 + $0x140] sm:$0xff] %v5159
    %5224 = vst [vmem:[#allocation2 + $0x148] sm:$0xff] %v5160
    %5225 = vst [vmem:[#allocation2 + $0x150] sm:$0xff] %v5161
    %5226 = vst [vmem:[#allocation2 + $0x158] sm:$0xff] %v5162
    %5227 = vst [vmem:[#allocation2 + $0x160] sm:$0xff] %v5163
    %5228 = vst [vmem:[#allocation2 + $0x168] sm:$0xff] %v5164
    %5229 = vst [vmem:[#allocation2 + $0x170] sm:$0xff] %v5165
    %5230 = vst [vmem:[#allocation2 + $0x178] sm:$0xff] %v5166
    %5231 = vst [vmem:[#allocation2 + $0x180] sm:$0xff] %v5167
    %5232 = vst [vmem:[#allocation2 + $0x188] sm:$0xff] %v5168
    %5233 = vst [vmem:[#allocation2 + $0x190] sm:$0xff] %v5169
    %5234 = vst [vmem:[#allocation2 + $0x198] sm:$0xff] %v5170
    %5235 = vst [vmem:[#allocation2 + $0x1a0] sm:$0xff] %v5171
    %5236 = vst [vmem:[#allocation2 + $0x1a8] sm:$0xff] %v5172
    %5237 = vst [vmem:[#allocation2 + $0x1b0] sm:$0xff] %v5173
    %5238 = vst [vmem:[#allocation2 + $0x1b8] sm:$0xff] %v5174
    %5239 = vst [vmem:[#allocation2 + $0x1c0] sm:$0xff] %v5175
    %5240 = vst [vmem:[#allocation2 + $0x1c8] sm:$0xff] %v5176
    %5241 = vst [vmem:[#allocation2 + $0x1d0] sm:$0xff] %v5177
    %5242 = vst [vmem:[#allocation2 + $0x1d8] sm:$0xff] %v5178
    %5243 = vst [vmem:[#allocation2 + $0x1e0] sm:$0xff] %v5179
    %5244 = vst [vmem:[#allocation2 + $0x1e8] sm:$0xff] %v5180
    %5245 = vst [vmem:[#allocation2 + $0x1f0] sm:$0xff] %v5181
    %5246 = vst [vmem:[#allocation2 + $0x1f8] sm:$0xff] %v5182
    // Predicated region
    $region18: #{upsample_partial_block.3} parent=1 // pred_check
      _
    $region19: #{upsample_partial_block.3} parent=1 // pred_check_branch
      %5248 = sbr.rel (0) target = $region21
    $region20: #{upsample_partial_block.3} parent=1 // pred_region
      %s5250 = ssub.s32 8192, 8192
      %5251 = vsyncadd [#allocation3], %s5250
      %s5252 = sshll.u32 [#allocation2], 4
      %s5253 = int_to_ptr.vmem [resolvable:$true] %s5252
      %5258 = dma.vmem_to_hbm [thread:$0]  %s5253, 8192, %s4, [#allocation3], 128, 128, 8
    $region21: #{upsample_partial_block.3} parent=1 // pred_fallthru
      _
    // Predicated region
    $region22: #{upsample_partial_block.3} parent=1 // pred_check
      _
    $region23: #{upsample_partial_block.3} parent=1 // pred_check_branch
      %5260 = sbr.rel (0) target = $region25
    $region24: #{upsample_partial_block.3} parent=1 // pred_region
      %5261 = dma.done [#allocation3], 8192
    $region25: #{upsample_partial_block.3} parent=1 // pred_fallthru
      _
    %5262 = vsyncpa [#allocation3], 1

</llo_original>
